<compile_context>
chip_gen: v5e
topology: v5e:2x2
jax: 0.10.0
libtpu: 0.0.40
codegen_flags: <defaults>
</compile_context>

<pallas_src>
import jax
import jax.numpy as jnp
from jax import lax
from jax.experimental import pallas as pl
from jax.experimental.pallas import tpu as pltpu

WF = 18          # frame row stride: max spatial W (16) + 2 zero-pad columns
MARGIN = 128     # zero lane margin so every 3x3 tap window is in bounds
_VMEM_LIMIT = 32 * 1024 * 1024   # tiny problem; re-derive per chip when tiling

_TAP_MODE = "slice"   # overwritten by the one-time pltpu.roll probe in __main__
_ROLL_SIGN = -1


def _rup(n, m):
    return ((n + m - 1) // m) * m


# ----------------------------------------------------------------------------
# One-time probe: is pltpu.roll usable, and which direction does it rotate?
# ----------------------------------------------------------------------------
def _probe_tap_mode():
    try:
        def k(x_ref, o_ref):
            o_ref[...] = pltpu.roll(x_ref[...], 1, axis=1)

        x = jnp.tile(jnp.arange(256, dtype=jnp.float32)[None, :], (8, 1))
        y = pl.pallas_call(
            k, out_shape=jax.ShapeDtypeStruct((8, 256), jnp.float32))(x)
        first = int(y[0, 0])
        if first == 255:          # np.roll semantics: out[i] = x[i - shift]
            return "roll", -1
        if first == 1:            # opposite rotation direction
            return "roll", 1
        return "slice", -1
    except Exception:             # roll unavailable -> correct fallback path
        return "slice", -1


# ----------------------------------------------------------------------------
# In-kernel helpers
# ----------------------------------------------------------------------------
def _prelu(v, a):
    return jnp.where(v >= 0.0, v, v * a)


def _conv3x3(src_ref, w9, nf):
    """3x3 conv as 9 accumulating MXU dots over lane-shifted tap windows.

    src_ref: (CR, NTOT) bf16 VMEM ref holding zero-bordered frames (+margins).
    w9:      (9, CoutP, CR) bf16 per-tap weights (Cout and Cin zero-padded).
    Returns  (CoutP, nf) f32 for the interior window.
    """
    ntot = src_ref.shape[1]
    buf = src_ref[...] if _TAP_MODE == "roll" else None
    acc = None
    k = 0
    for dy in range(3):
        for dx in range(3):
            s = (dy - 1) * WF + (dx - 1)
            if _TAP_MODE == "roll":
                if s == 0:
                    tap = buf[:, MARGIN:MARGIN + nf]
                else:
                    tap = pltpu.roll(buf, (_ROLL_SIGN * s) % ntot,
                                     axis=1)[:, MARGIN:MARGIN + nf]
            else:
                tap = src_ref[:, MARGIN + s:MARGIN + s + nf]
            y = jnp.dot(w9[k], tap, preferred_element_type=jnp.float32)
            acc = y if acc is None else acc + y
            k += 1
    return acc


# ----------------------------------------------------------------------------
# Fused backbone kernel: conv_stem + depth x Resblock, all scale branches
# packed along the lane axis, bf16 activations resident in VMEM scratch.
# ----------------------------------------------------------------------------
def _backbone_kernel(z_ref, valid_ref, sw_ref, sb_ref, sa_ref,
                     w1_ref, p1_ref, w2_ref, p2_ref,
                     o_ref, h_ref, t_ref):
    coutp, nf = o_ref.shape
    valid = valid_ref[...]                                 # (1, nf) f32

    # Only the margins need zeroing: the interior window is fully overwritten
    # every layer, and padded Cout rows come out exactly zero (zero weights).
    for buf in (h_ref, t_ref):
        buf[:, 0:MARGIN] = jnp.zeros((coutp, MARGIN), buf.dtype)
        buf[:, MARGIN + nf:MARGIN + nf + MARGIN] = jnp.zeros(
            (coutp, MARGIN), buf.dtype)

    # conv_stem = Conv3x3(3c+7 -> c) + PReLU, epilogue in f32.
    y = _conv3x3(z_ref, sw_ref[...], nf)
    h0 = valid * _prelu(y + sb_ref[...], sa_ref[...])
    h_ref[:, MARGIN:MARGIN + nf] = h0.astype(h_ref.dtype)

    depth = w1_ref.shape[0]

    def _layer(d, carry):
        # Resblock: prelu(conv2(prelu(conv1(h))) * beta + h)
        y1 = _conv3x3(h_ref, w1_ref[d], nf)
        p1 = p1_ref[d]                                     # (2, coutp, 1) f32
        t = valid * _prelu(y1 + p1[0], p1[1])
        t_ref[:, MARGIN:MARGIN + nf] = t.astype(t_ref.dtype)

        y2 = _conv3x3(t_ref, w2_ref[d], nf)
        p2 = p2_ref[d]                                     # (3, coutp, 1) f32
        h_prev = h_ref[:, MARGIN:MARGIN + nf].astype(jnp.float32)
        h_new = valid * _prelu((y2 + p2[0]) * p2[1] + h_prev, p2[2])

        @pl.when(d < depth - 1)
        def _():
            h_ref[:, MARGIN:MARGIN + nf] = h_new.astype(h_ref.dtype)

        @pl.when(d == depth - 1)        # last layer: skip the bf16 writeback
        def _():
            o_ref[...] = h_new

        return carry

    lax.fori_loop(0, depth, _layer, 0)


def _head_kernel(f_ref, w_ref, b_ref, o_ref):
    # Linear 3x3 conv c -> 6 (padded to 8 rows): the synthetic `convflow` head.
    nf = o_ref.shape[1]
    o_ref[...] = _conv3x3(f_ref, w_ref[...], nf) + b_ref[...]


# ----------------------------------------------------------------------------
# Frame packing glue (plain JAX): NCHW -> zero-bordered frames flat on lanes.
# ----------------------------------------------------------------------------
def _pack_frames(xs, cr, dtype):
    """xs: list of NCHW arrays (same C) -> ((cr, MARGIN+nf+MARGIN) dtype, nf)."""
    C = xs[0].shape[1]
    segs = []
    for xb in xs:
        B, _, H, W = xb.shape
        xp = jnp.pad(xb, ((0, 0), (0, 0), (1, 1), (1, WF - W - 1)))
        segs.append(jnp.transpose(xp, (1, 0, 2, 3)).reshape(C, -1))
    flat = jnp.concatenate(segs, axis=1)
    nf = _rup(flat.shape[1], 128)
    flat = jnp.pad(flat, ((0, cr - C), (0, nf - flat.shape[1])))
    flat = jnp.pad(flat, ((0, 0), (MARGIN, MARGIN)))
    return flat.astype(dtype), nf


def _valid_mask(shapes, nf):
    segs = []
    for (B, _, H, W) in shapes:
        m = jnp.zeros((1, B, H + 2, WF), jnp.float32)
        m = m.at[:, :, 1:H + 1, 1:W + 1].set(1.0)
        segs.append(m.reshape(1, -1))
    v = jnp.concatenate(segs, axis=1)
    return jnp.pad(v, ((0, 0), (0, nf - v.shape[1])))


def _unpack_frames(y, shapes, cout):
    """y: (CoutP, nf) kernel output -> list of NCHW arrays (first cout rows)."""
    outs, off = [], 0
    for (B, _, H, W) in shapes:
        size = B * (H + 2) * WF
        seg = y[:cout, off:off + size].reshape(cout, B, H + 2, WF)
        outs.append(jnp.transpose(seg[:, :, 1:H + 1, 1:W + 1], (1, 0, 2, 3)))
        off += size
    return outs


def _pack_w9(w9, cr, coutp):
    """(9, cin, cout) f32 conv taps -> (9, coutp, cr) bf16, zero-padded."""
    _, cin, cout = w9.shape
    wp = jnp.pad(w9, ((0, 0), (0, cr - cin), (0, coutp - cout)))
    return jnp.transpose(wp, (0, 2, 1)).astype(jnp.bfloat16)


def _pack_vec(v, coutp):
    """(cout,) f32 -> (coutp, 1) f32 column, zero-padded."""
    return jnp.pad(v, (0, coutp - v.shape[0]))[:, None].astype(jnp.float32)


# ----------------------------------------------------------------------------
# pallas_call wrappers
# ----------------------------------------------------------------------------
def backbone_all_scales(params, xcat, c_out):
    """conv_stem + Resblocks on the 1x, 1/2, 1/4 branches in ONE fused call."""
    B, cin, H, W = xcat.shape
    branches = [xcat,
                bilinear_resize_nchw(xcat, H // 2, W // 2),
                bilinear_resize_nchw(xcat, H // 4, W // 4)]
    shapes = [b.shape for b in branches]
    cr_stem = params["stem_w"].shape[2]
    coutp = params["stem_w"].shape[1]
    z, nf = _pack_frames(branches, cr_stem, jnp.bfloat16)     # bf16 DMA input
    valid = _valid_mask(shapes, nf)
    ntot = z.shape[1]

    out = pl.pallas_call(
        _backbone_kernel,
        out_shape=jax.ShapeDtypeStruct((coutp, nf), jnp.float32),
        scratch_shapes=[pltpu.VMEM((coutp, ntot), jnp.bfloat16),   # h
                        pltpu.VMEM((coutp, ntot), jnp.bfloat16)],  # t
        compiler_params=pltpu.CompilerParams(vmem_limit_bytes=_VMEM_LIMIT),
    )(z, valid, params["stem_w"], params["stem_b"], params["stem_a"],
      params["w1"], params["p1"], params["w2"], params["p2"])
    return _unpack_frames(out, shapes, c_out)


def convflow_apply(params, feat):
    # Synthetic `convflow` (external callable in torch): linear 3x3 conv c->6
    # then 2x bilinear upsample to the flow resolution.
    B, c, H, W = feat.shape
    cr = params["cf_w"].shape[2]
    coutp = params["cf_w"].shape[1]
    f, nf = _pack_frames([feat], cr, jnp.bfloat16)
    y = pl.pallas_call(
        _head_kernel,
        out_shape=jax.ShapeDtypeStruct((coutp, nf), jnp.float32),
        compiler_params=pltpu.CompilerParams(vmem_limit_bytes=_VMEM_LIMIT),
    )(f, params["cf_w"], params["cf_b"])
    y = _unpack_frames(y, [(B, 6, H, W)], 6)[0]
    return bilinear_resize_nchw(y, 2 * H, 2 * W)


# ----------------------------------------------------------------------------
# Plain-JAX glue: bilinear resize (align_corners=False) and backward warp.
# ----------------------------------------------------------------------------
def bilinear_resize_nchw(x, out_h, out_w):
    _, _, H, W = x.shape

    def axis(out_size, in_size):
        i = jnp.arange(out_size, dtype=jnp.float32)
        src = (i + 0.5) * (in_size / out_size) - 0.5
        src = jnp.clip(src, 0.0, in_size - 1.0)
        lo = jnp.floor(src).astype(jnp.int32)
        hi = jnp.minimum(lo + 1, in_size - 1)
        frac = src - lo.astype(jnp.float32)
        return lo, hi, frac

    ylo, yhi, wy = axis(out_h, H)
    xlo, xhi, wx = axis(out_w, W)
    top = (x[:, :, ylo, :] * (1.0 - wy)[None, None, :, None]
           + x[:, :, yhi, :] * wy[None, None, :, None])
    out = (top[:, :, :, xlo] * (1.0 - wx)[None, None, None, :]
           + top[:, :, :, xhi] * wx[None, None, None, :])
    return out


def warp_nchw(img, flow):
    # TODO(synk): backward warp clamps to the border; torch grid_sample default
    # is padding_mode='zeros' (the module's external `warp` is unspecified).
    B, C, H, W = img.shape
    gy, gx = jnp.meshgrid(jnp.arange(H, dtype=jnp.float32),
                          jnp.arange(W, dtype=jnp.float32), indexing="ij")
    sx = jnp.clip(gx[None] + flow[:, 0], 0.0, W - 1.0)
    sy = jnp.clip(gy[None] + flow[:, 1], 0.0, H - 1.0)
    x0 = jnp.floor(sx).astype(jnp.int32)
    y0 = jnp.floor(sy).astype(jnp.int32)
    x1 = jnp.minimum(x0 + 1, W - 1)
    y1 = jnp.minimum(y0 + 1, H - 1)
    wx = sx - x0.astype(jnp.float32)
    wy = sy - y0.astype(jnp.float32)

    flat = img.reshape(B, C, H * W)

    def gather(yy, xx):
        idx = (yy * W + xx).reshape(B, 1, H * W)
        return jnp.take_along_axis(flat, idx, axis=2).reshape(B, C, H, W)

    w00 = ((1 - wy) * (1 - wx))[:, None]
    w01 = ((1 - wy) * wx)[:, None]
    w10 = (wy * (1 - wx))[:, None]
    w11 = (wy * wx)[:, None]
    return (gather(y0, x0) * w00 + gather(y0, x1) * w01
            + gather(y1, x0) * w10 + gather(y1, x1) * w11)


# ----------------------------------------------------------------------------
# Parameters (deterministic synthetic init; shapes follow the torch __init__).
# Returns (packed kernel params, raw f32 params for the pure-JAX reference).
# ----------------------------------------------------------------------------
def init_params(key, c, depth):
    cin_stem = 3 * c + 7      # cat(x[c], flow_down[6], i0[c], i1[c], t[1])
    cr_stem, cr_blk = _rup(cin_stem, 8), _rup(c, 8)
    coutp = _rup(c, 8)        # backbone output rows: full 8-sublane stores
    coutp_head = _rup(6, 8)   # convflow head output rows
    keys = jax.random.split(key, 3 + depth)

    def w9(k, cin, cout, s=0.1):
        return jax.random.normal(k, (9, cin, cout), jnp.float32) * s

    raw = {
        "stem_w": w9(keys[0], cin_stem, c),
        "stem_b": jnp.zeros((c,), jnp.float32),
        "stem_a": jnp.full((c,), 0.25, jnp.float32),     # torch PReLU init
        "cf_w": w9(keys[1], c, 6),
        "cf_b": jnp.zeros((6,), jnp.float32),
    }
    w1, w2, b1, a1, b2, beta, a2 = [], [], [], [], [], [], []
    for i in range(depth):
        bk = jax.random.split(keys[3 + i], 3)
        w1.append(w9(bk[0], c, c))
        w2.append(w9(bk[1], c, c))
        b1.append(jnp.zeros((c,), jnp.float32))
        a1.append(jnp.full((c,), 0.25, jnp.float32))
        b2.append(jnp.zeros((c,), jnp.float32))
        # torch inits beta to zeros; small nonzero values keep the whole
        # Resblock compute path live / verifiable against the reference.
        beta.append(jax.random.normal(bk[2], (c,), jnp.float32) * 0.1)
        a2.append(jnp.full((c,), 0.25, jnp.float32))
    raw.update(w1=jnp.stack(w1), w2=jnp.stack(w2), b1=jnp.stack(b1),
               a1=jnp.stack(a1), b2=jnp.stack(b2), beta=jnp.stack(beta),
               a2=jnp.stack(a2))

    params = {
        "stem_w": _pack_w9(raw["stem_w"], cr_stem, coutp),
        "stem_b": _pack_vec(raw["stem_b"], coutp),
        "stem_a": _pack_vec(raw["stem_a"], coutp),
        "w1": jnp.stack([_pack_w9(raw["w1"][i], cr_blk, coutp)
                         for i in range(depth)]),
        "w2": jnp.stack([_pack_w9(raw["w2"][i], cr_blk, coutp)
                         for i in range(depth)]),
        "p1": jnp.stack([jnp.stack([_pack_vec(raw["b1"][i], coutp),
                                    _pack_vec(raw["a1"][i], coutp)])
                         for i in range(depth)]),
        "p2": jnp.stack([jnp.stack([_pack_vec(raw["b2"][i], coutp),
                                    _pack_vec(raw["beta"][i], coutp),
                                    _pack_vec(raw["a2"][i], coutp)])
                         for i in range(depth)]),
        "cf_w": _pack_w9(raw["cf_w"], cr_blk, coutp_head),
        "cf_b": _pack_vec(raw["cf_b"], coutp_head),
        "gs_w": jax.random.normal(keys[2], (cin_stem, 2), jnp.float32) * 0.1,
        "gs_b": jnp.zeros((2,), jnp.float32),
    }
    return params, raw


# ----------------------------------------------------------------------------
# Pure-JAX reference (used only for the in-script correctness check).
# ----------------------------------------------------------------------------
def _conv3x3_ref(x, w9, b):
    w = w9.reshape(3, 3, w9.shape[1], w9.shape[2])        # HWIO, k = dy*3+dx
    y = lax.conv_general_dilated(x, w, (1, 1), "SAME",
                                 dimension_numbers=("NCHW", "HWIO", "NCHW"),
                                 precision=lax.Precision.HIGHEST)
    return y + b[None, :, None, None]


def _prelu_ref(v, a):
    return jnp.where(v >= 0.0, v, v * a[None, :, None, None])


def backbone_ref(raw, x):
    h = _prelu_ref(_conv3x3_ref(x, raw["stem_w"], raw["stem_b"]), raw["stem_a"])
    for d in range(raw["w1"].shape[0]):
        t = _prelu_ref(_conv3x3_ref(h, raw["w1"][d], raw["b1"][d]), raw["a1"][d])
        y = _conv3x3_ref(t, raw["w2"][d], raw["b2"][d])
        h = _prelu_ref(y * raw["beta"][d][None, :, None, None] + h, raw["a2"][d])
    return h


# ----------------------------------------------------------------------------
# Module forward
# ----------------------------------------------------------------------------
def recurrent_block_forward(params, x, i0, i1, flow, timestep, key):
    B, c, H, W = x.shape
    flow_down = bilinear_resize_nchw(flow, H, W)
    i0w = warp_nchw(i0, flow_down[:, :2] * 0.5)
    i1w = warp_nchw(i1, flow_down[:, 2:4] * 0.5)
    xcat = jnp.concatenate([x, flow_down, i0w, i1w, timestep], axis=1)

    # getscale (external callable, synthesized): avgpool -> linear -> sigmoid;
    # RoundSTE forward is a bernoulli draw, exactly as in the torch reference.
    pooled = xcat.mean(axis=(2, 3))
    probs = jax.nn.sigmoid(pooled @ params["gs_w"] + params["gs_b"])
    scale = jax.random.bernoulli(key, probs).astype(jnp.float32)[:, :, None, None]
    s0, s1 = scale[:, 0:1], scale[:, 1:2]

    # batch > 1  =>  torch executes all three scale branches; with binary
    # scales the blended sum is identical.  All three run (shared weights)
    # inside ONE fused pallas_call.
    x0, x1b, x2b = backbone_all_scales(params, xcat, c)
    feat = (x0 * s0 * s1
            + bilinear_resize_nchw(x1b, H, W) * (1.0 - s0) * s1
            + bilinear_resize_nchw(x2b, H, W) * (1.0 - s1))
    # TODO(synk): keep feat in the packed (C, Nflat) frame layout through the
    # blend so the head consumes the backbone output without an unpack/re-pack
    # round trip (matters at production resolutions, not at 16x16).

    flow_out = convflow_apply(params, feat) + flow
    return feat, flow_out, i0w, i1w, scale


# ----------------------------------------------------------------------------
if __name__ == "__main__":
    c, depth = 4, 6
    B, H, W = 2, 16, 16

    # Probe pltpu.roll direction/availability once (sets the tap strategy).
    _TAP_MODE, _ROLL_SIGN = _probe_tap_mode()

    key = jax.random.PRNGKey(0)
    kp, kx, ki0, ki1, kf, kb = jax.random.split(key, 6)

    params, raw = init_params(kp, c, depth)
    x = jax.random.normal(kx, (B, c, H, W), jnp.float32)
    i0 = jax.random.normal(ki0, (B, c, H, W), jnp.float32)
    i1 = jax.random.normal(ki1, (B, c, H, W), jnp.float32)
    flow = jax.random.normal(kf, (B, 6, 2 * H, 2 * W), jnp.float32)
    timestep = jnp.full((B, 1, H, W), 0.5, jnp.float32)

    fwd = jax.jit(recurrent_block_forward)
    feat, flow_out, i0w, i1w, scale = fwd(params, x, i0, i1, flow, timestep, kb)
    jax.block_until_ready((feat, flow_out, i0w, i1w, scale))

    assert feat.shape == (B, c, H, W)
    assert flow_out.shape == (B, 6, 2 * H, 2 * W)
    assert scale.shape == (B, 2, 1, 1)
    assert bool(jnp.all(jnp.isfinite(feat)))
    assert bool(jnp.all(jnp.isfinite(flow_out)))

    # Correctness check: fused Pallas backbone / head vs. a pure-JAX lax.conv
    # reference (bf16 weights + resident activations => small tolerance).
    flow_down = bilinear_resize_nchw(flow, H, W)
    xcat = jnp.concatenate([x, flow_down,
                            warp_nchw(i0, flow_down[:, :2] * 0.5),
                            warp_nchw(i1, flow_down[:, 2:4] * 0.5),
                            timestep], axis=1)
    got = backbone_all_scales(params, xcat, c)
    want = [backbone_ref(raw, xcat),
            backbone_ref(raw, bilinear_resize_nchw(xcat, H // 2, W // 2)),
            backbone_ref(raw, bilinear_resize_nchw(xcat, H // 4, W // 4))]
    for g, r in zip(got, want):
        err = float(jnp.max(jnp.abs(g - r)))
        assert err < 0.2, f"backbone mismatch vs reference: max|err|={err}"

    head_ref = bilinear_resize_nchw(
        _conv3x3_ref(feat, raw["cf_w"], raw["cf_b"]), 2 * H, 2 * W)
    err = float(jnp.max(jnp.abs(convflow_apply(params, feat) - head_ref)))
    assert err < 0.1, f"convflow head mismatch vs reference: max|err|={err}"

    print("KERNEL_OK")
</pallas_src>

<mosaic_0001>
module attributes {stable_mosaic.version = 11 : i64} {
  func.func @k(%arg0: memref<8x256xf32, #tpu.memory_space<vmem>>, %arg1: memref<8x256xf32, #tpu.memory_space<vmem>>) attributes {dimension_semantics = [], scalar_prefetch = 0 : i64, scratch_operands = 0 : i64, tpu.core_type = #tpu.core_type<tc>} {
    %c0 = arith.constant 0 : index
    %c0_0 = arith.constant 0 : index
    %0 = vector.load %arg0[%c0, %c0_0] : memref<8x256xf32, #tpu.memory_space<vmem>>, vector<8x256xf32>
    %c1_i32 = arith.constant 1 : i32
    %1 = tpu.dynamic_rotate %0 by %c1_i32 dim 1 : vector<8x256xf32>, i32 -> vector<8x256xf32>
    %c0_1 = arith.constant 0 : index
    %c0_2 = arith.constant 0 : index
    %2 = vector.load %arg1[%c0_1, %c0_2] : memref<8x256xf32, #tpu.memory_space<vmem>>, vector<8x256xf32>
    tpu.vector_store %arg1[%c0_1, %c0_2], %1 {strides = array<i32>} : memref<8x256xf32, #tpu.memory_space<vmem>>, vector<8x256xf32>,
    return
  }
}

module attributes {stable_mosaic.version = 11 : i64} {
  func.func @_backbone_kernel(%arg0: memref<24x1536xbf16, #tpu.memory_space<vmem>>, %arg1: memref<1x1280xf32, #tpu.memory_space<vmem>>, %arg2: memref<9x8x24xbf16, #tpu.memory_space<vmem>>, %arg3: memref<8x1xf32, #tpu.memory_space<vmem>>, %arg4: memref<8x1xf32, #tpu.memory_space<vmem>>, %arg5: memref<6x9x8x8xbf16, #tpu.memory_space<vmem>>, %arg6: memref<6x2x8x1xf32, #tpu.memory_space<vmem>>, %arg7: memref<6x9x8x8xbf16, #tpu.memory_space<vmem>>, %arg8: memref<6x3x8x1xf32, #tpu.memory_space<vmem>>, %arg9: memref<8x1280xf32, #tpu.memory_space<vmem>>, %arg10: memref<8x1536xbf16, #tpu.memory_space<vmem>>, %arg11: memref<8x1536xbf16, #tpu.memory_space<vmem>>) attributes {dimension_semantics = [], scalar_prefetch = 0 : i64, scratch_operands = 2 : i64, tpu.core_type = #tpu.core_type<tc>} {
    %c0 = arith.constant 0 : index
    %c0_0 = arith.constant 0 : index
    %0 = vector.load %arg1[%c0, %c0_0] : memref<1x1280xf32, #tpu.memory_space<vmem>>, vector<1x1280xf32>
    %cst = arith.constant 0.000000e+00 : bf16
    %1 = vector.broadcast %cst : bf16 to vector<8x128xbf16>
    %c0_1 = arith.constant 0 : index
    %c0_2 = arith.constant 0 : index
    %2 = vector.load %arg10[%c0_1, %c0_2] : memref<8x1536xbf16, #tpu.memory_space<vmem>>, vector<8x128xbf16>
    tpu.vector_store %arg10[%c0_1, %c0_2], %1 {strides = array<i32>} : memref<8x1536xbf16, #tpu.memory_space<vmem>>, vector<8x128xbf16>,
    %cst_3 = arith.constant 0.000000e+00 : bf16
    %3 = vector.broadcast %cst_3 : bf16 to vector<8x128xbf16>
    %c0_4 = arith.constant 0 : index
    %c1408 = arith.constant 1408 : index
    %4 = vector.load %arg10[%c0_4, %c1408] : memref<8x1536xbf16, #tpu.memory_space<vmem>>, vector<8x128xbf16>
    tpu.vector_store %arg10[%c0_4, %c1408], %3 {strides = array<i32>} : memref<8x1536xbf16, #tpu.memory_space<vmem>>, vector<8x128xbf16>,
    %cst_5 = arith.constant 0.000000e+00 : bf16
    %5 = vector.broadcast %cst_5 : bf16 to vector<8x128xbf16>
    %c0_6 = arith.constant 0 : index
    %c0_7 = arith.constant 0 : index
    %6 = vector.load %arg11[%c0_6, %c0_7] : memref<8x1536xbf16, #tpu.memory_space<vmem>>, vector<8x128xbf16>
    tpu.vector_store %arg11[%c0_6, %c0_7], %5 {strides = array<i32>} : memref<8x1536xbf16, #tpu.memory_space<vmem>>, vector<8x128xbf16>,
    %cst_8 = arith.constant 0.000000e+00 : bf16
    %7 = vector.broadcast %cst_8 : bf16 to vector<8x128xbf16>
    %c0_9 = arith.constant 0 : index
    %c1408_10 = arith.constant 1408 : index
    %8 = vector.load %arg11[%c0_9, %c1408_10] : memref<8x1536xbf16, #tpu.memory_space<vmem>>, vector<8x128xbf16>
    tpu.vector_store %arg11[%c0_9, %c1408_10], %7 {strides = array<i32>} : memref<8x1536xbf16, #tpu.memory_space<vmem>>, vector<8x128xbf16>,
    %c0_11 = arith.constant 0 : index
    %c0_12 = arith.constant 0 : index
    %c0_13 = arith.constant 0 : index
    %9 = vector.load %arg2[%c0_11, %c0_12, %c0_13] : memref<9x8x24xbf16, #tpu.memory_space<vmem>>, vector<9x8x24xbf16>
    %c0_14 = arith.constant 0 : index
    %c109 = arith.constant 109 : index
    %10 = vector.load %arg0[%c0_14, %c109] : memref<24x1536xbf16, #tpu.memory_space<vmem>>, vector<24x1280xbf16>
    %11 = vector.extract_strided_slice %9 {offsets = [0, 0, 0], sizes = [1, 8, 24], strides = [1, 1, 1]} : vector<9x8x24xbf16> to vector<1x8x24xbf16>
    %12 = vector.shape_cast %11 : vector<1x8x24xbf16> to vector<8x24xbf16>
    %cst_15 = arith.constant dense<0.000000e+00> : vector<8x1280xf32>
    %13 = tpu.matmul %12, %10, %cst_15 {dimension_numbers = #tpu.dot_dimension_numbers<[1], [0], [0], [1], [0, 0, 1, 1], [], []>} : vector<8x24xbf16>, vector<24x1280xbf16>, vector<8x1280xf32> -> vector<8x1280xf32>
    %c0_16 = arith.constant 0 : index
    %c110 = arith.constant 110 : index
    %14 = vector.load %arg0[%c0_16, %c110] : memref<24x1536xbf16, #tpu.memory_space<vmem>>, vector<24x1280xbf16>
    %15 = vector.extract_strided_slice %9 {offsets = [1, 0, 0], sizes = [1, 8, 24], strides = [1, 1, 1]} : vector<9x8x24xbf16> to vector<1x8x24xbf16>
    %16 = vector.shape_cast %15 : vector<1x8x24xbf16> to vector<8x24xbf16>
    %cst_17 = arith.constant dense<0.000000e+00> : vector<8x1280xf32>
    %17 = tpu.matmul %16, %14, %cst_17 {dimension_numbers = #tpu.dot_dimension_numbers<[1], [0], [0], [1], [0, 0, 1, 1], [], []>} : vector<8x24xbf16>, vector<24x1280xbf16>, vector<8x1280xf32> -> vector<8x1280xf32>
    %18 = arith.addf %13, %17 : vector<8x1280xf32>
    %c0_18 = arith.constant 0 : index
    %c111 = arith.constant 111 : index
    %19 = vector.load %arg0[%c0_18, %c111] : memref<24x1536xbf16, #tpu.memory_space<vmem>>, vector<24x1280xbf16>
    %20 = vector.extract_strided_slice %9 {offsets = [2, 0, 0], sizes = [1, 8, 24], strides = [1, 1, 1]} : vector<9x8x24xbf16> to vector<1x8x24xbf16>
    %21 = vector.shape_cast %20 : vector<1x8x24xbf16> to vector<8x24xbf16>
    %cst_19 = arith.constant dense<0.000000e+00> : vector<8x1280xf32>
    %22 = tpu.matmul %21, %19, %cst_19 {dimension_numbers = #tpu.dot_dimension_numbers<[1], [0], [0], [1], [0, 0, 1, 1], [], []>} : vector<8x24xbf16>, vector<24x1280xbf16>, vector<8x1280xf32> -> vector<8x1280xf32>
    %23 = arith.addf %18, %22 : vector<8x1280xf32>
    %c0_20 = arith.constant 0 : index
    %c127 = arith.constant 127 : index
    %24 = vector.load %arg0[%c0_20, %c127] : memref<24x1536xbf16, #tpu.memory_space<vmem>>, vector<24x1280xbf16>
    %25 = vector.extract_strided_slice %9 {offsets = [3, 0, 0], sizes = [1, 8, 24], strides = [1, 1, 1]} : vector<9x8x24xbf16> to vector<1x8x24xbf16>
    %26 = vector.shape_cast %25 : vector<1x8x24xbf16> to vector<8x24xbf16>
    %cst_21 = arith.constant dense<0.000000e+00> : vector<8x1280xf32>
    %27 = tpu.matmul %26, %24, %cst_21 {dimension_numbers = #tpu.dot_dimension_numbers<[1], [0], [0], [1], [0, 0, 1, 1], [], []>} : vector<8x24xbf16>, vector<24x1280xbf16>, vector<8x1280xf32> -> vector<8x1280xf32>
    %28 = arith.addf %23, %27 : vector<8x1280xf32>
    %c0_22 = arith.constant 0 : index
    %c128 = arith.constant 128 : index
    %29 = vector.load %arg0[%c0_22, %c128] : memref<24x1536xbf16, #tpu.memory_space<vmem>>, vector<24x1280xbf16>
    %30 = vector.extract_strided_slice %9 {offsets = [4, 0, 0], sizes = [1, 8, 24], strides = [1, 1, 1]} : vector<9x8x24xbf16> to vector<1x8x24xbf16>
    %31 = vector.shape_cast %30 : vector<1x8x24xbf16> to vector<8x24xbf16>
    %cst_23 = arith.constant dense<0.000000e+00> : vector<8x1280xf32>
    %32 = tpu.matmul %31, %29, %cst_23 {dimension_numbers = #tpu.dot_dimension_numbers<[1], [0], [0], [1], [0, 0, 1, 1], [], []>} : vector<8x24xbf16>, vector<24x1280xbf16>, vector<8x1280xf32> -> vector<8x1280xf32>
    %33 = arith.addf %28, %32 : vector<8x1280xf32>
    %c0_24 = arith.constant 0 : index
    %c129 = arith.constant 129 : index
    %34 = vector.load %arg0[%c0_24, %c129] : memref<24x1536xbf16, #tpu.memory_space<vmem>>, vector<24x1280xbf16>
    %35 = vector.extract_strided_slice %9 {offsets = [5, 0, 0], sizes = [1, 8, 24], strides = [1, 1, 1]} : vector<9x8x24xbf16> to vector<1x8x24xbf16>
    %36 = vector.shape_cast %35 : vector<1x8x24xbf16> to vector<8x24xbf16>
    %cst_25 = arith.constant dense<0.000000e+00> : vector<8x1280xf32>
    %37 = tpu.matmul %36, %34, %cst_25 {dimension_numbers = #tpu.dot_dimension_numbers<[1], [0], [0], [1], [0, 0, 1, 1], [], []>} : vector<8x24xbf16>, vector<24x1280xbf16>, vector<8x1280xf32> -> vector<8x1280xf32>
    %38 = arith.addf %33, %37 : vector<8x1280xf32>
    %c0_26 = arith.constant 0 : index
    %c145 = arith.constant 145 : index
    %39 = vector.load %arg0[%c0_26, %c145] : memref<24x1536xbf16, #tpu.memory_space<vmem>>, vector<24x1280xbf16>
    %40 = vector.extract_strided_slice %9 {offsets = [6, 0, 0], sizes = [1, 8, 24], strides = [1, 1, 1]} : vector<9x8x24xbf16> to vector<1x8x24xbf16>
    %41 = vector.shape_cast %40 : vector<1x8x24xbf16> to vector<8x24xbf16>
    %cst_27 = arith.constant dense<0.000000e+00> : vector<8x1280xf32>
    %42 = tpu.matmul %41, %39, %cst_27 {dimension_numbers = #tpu.dot_dimension_numbers<[1], [0], [0], [1], [0, 0, 1, 1], [], []>} : vector<8x24xbf16>, vector<24x1280xbf16>, vector<8x1280xf32> -> vector<8x1280xf32>
    %43 = arith.addf %38, %42 : vector<8x1280xf32>
    %c0_28 = arith.constant 0 : index
    %c146 = arith.constant 146 : index
    %44 = vector.load %arg0[%c0_28, %c146] : memref<24x1536xbf16, #tpu.memory_space<vmem>>, vector<24x1280xbf16>
    %45 = vector.extract_strided_slice %9 {offsets = [7, 0, 0], sizes = [1, 8, 24], strides = [1, 1, 1]} : vector<9x8x24xbf16> to vector<1x8x24xbf16>
    %46 = vector.shape_cast %45 : vector<1x8x24xbf16> to vector<8x24xbf16>
    %cst_29 = arith.constant dense<0.000000e+00> : vector<8x1280xf32>
    %47 = tpu.matmul %46, %44, %cst_29 {dimension_numbers = #tpu.dot_dimension_numbers<[1], [0], [0], [1], [0, 0, 1, 1], [], []>} : vector<8x24xbf16>, vector<24x1280xbf16>, vector<8x1280xf32> -> vector<8x1280xf32>
    %48 = arith.addf %43, %47 : vector<8x1280xf32>
    %c0_30 = arith.constant 0 : index
    %c147 = arith.constant 147 : index
    %49 = vector.load %arg0[%c0_30, %c147] : memref<24x1536xbf16, #tpu.memory_space<vmem>>, vector<24x1280xbf16>
    %50 = vector.extract_strided_slice %9 {offsets = [8, 0, 0], sizes = [1, 8, 24], strides = [1, 1, 1]} : vector<9x8x24xbf16> to vector<1x8x24xbf16>
    %51 = vector.shape_cast %50 : vector<1x8x24xbf16> to vector<8x24xbf16>
    %cst_31 = arith.constant dense<0.000000e+00> : vector<8x1280xf32>
    %52 = tpu.matmul %51, %49, %cst_31 {dimension_numbers = #tpu.dot_dimension_numbers<[1], [0], [0], [1], [0, 0, 1, 1], [], []>} : vector<8x24xbf16>, vector<24x1280xbf16>, vector<8x1280xf32> -> vector<8x1280xf32>
    %53 = arith.addf %48, %52 : vector<8x1280xf32>
    %c0_32 = arith.constant 0 : index
    %c0_33 = arith.constant 0 : index
    %54 = vector.load %arg3[%c0_32, %c0_33] : memref<8x1xf32, #tpu.memory_space<vmem>>, vector<8x1xf32>
    %55 = vector.broadcast %54 : vector<8x1xf32> to vector<8x1280xf32>
    %56 = arith.addf %53, %55 : vector<8x1280xf32>
    %c0_34 = arith.constant 0 : index
    %c0_35 = arith.constant 0 : index
    %57 = vector.load %arg4[%c0_34, %c0_35] : memref<8x1xf32, #tpu.memory_space<vmem>>, vector<8x1xf32>
    %cst_36 = arith.constant 0.000000e+00 : f32
    %58 = vector.broadcast %cst_36 : f32 to vector<8x1280xf32>
    %59 = arith.cmpf oge, %56, %58 : vector<8x1280xf32>
    %60 = vector.broadcast %57 : vector<8x1xf32> to vector<8x1280xf32>
    %61 = arith.mulf %56, %60 : vector<8x1280xf32>
    %62 = arith.select %59, %56, %61 : vector<8x1280xi1>, vector<8x1280xf32>
    %63 = vector.broadcast %0 : vector<1x1280xf32> to vector<8x1280xf32>
    %64 = arith.mulf %63, %62 : vector<8x1280xf32>
    %65 = arith.truncf %64 : vector<8x1280xf32> to vector<8x1280xbf16>
    %c0_37 = arith.constant 0 : index
    %c128_38 = arith.constant 128 : index
    %66 = vector.load %arg10[%c0_37, %c128_38] : memref<8x1536xbf16, #tpu.memory_space<vmem>>, vector<8x1280xbf16>
    tpu.vector_store %arg10[%c0_37, %c128_38], %65 {strides = array<i32>} : memref<8x1536xbf16, #tpu.memory_space<vmem>>, vector<8x1280xbf16>,
    %c0_i32 = arith.constant 0 : i32
    %c6_i32 = arith.constant 6 : i32
    %67 = arith.addi %c0_i32, %c6_i32 : i32
    %c1_i32 = arith.constant 1 : i32
    scf.for %arg12 = %c0_i32 to %67 step %c1_i32  : i32 {
      %68 = arith.index_cast %arg12 : i32 to index
      %c0_40 = arith.constant 0 : index
      %c0_41 = arith.constant 0 : index
      %c0_42 = arith.constant 0 : index
      %69 = vector.load %arg5[%68, %c0_40, %c0_41, %c0_42] : memref<6x9x8x8xbf16, #tpu.memory_space<vmem>>, vector<1x9x8x8xbf16>
      %70 = vector.shape_cast %69 : vector<1x9x8x8xbf16> to vector<9x8x8xbf16>
      %c0_43 = arith.constant 0 : index
      %c109_44 = arith.constant 109 : index
      %71 = vector.load %arg10[%c0_43, %c109_44] : memref<8x1536xbf16, #tpu.memory_space<vmem>>, vector<8x1280xbf16>
      %72 = vector.extract_strided_slice %70 {offsets = [0, 0, 0], sizes = [1, 8, 8], strides = [1, 1, 1]} : vector<9x8x8xbf16> to vector<1x8x8xbf16>
      %73 = vector.shape_cast %72 : vector<1x8x8xbf16> to vector<8x8xbf16>
      %cst_45 = arith.constant dense<0.000000e+00> : vector<8x1280xf32>
      %74 = tpu.matmul %73, %71, %cst_45 {dimension_numbers = #tpu.dot_dimension_numbers<[1], [0], [0], [1], [0, 0, 1, 1], [], []>} : vector<8x8xbf16>, vector<8x1280xbf16>, vector<8x1280xf32> -> vector<8x1280xf32>
      %c0_46 = arith.constant 0 : index
      %c110_47 = arith.constant 110 : index
      %75 = vector.load %arg10[%c0_46, %c110_47] : memref<8x1536xbf16, #tpu.memory_space<vmem>>, vector<8x1280xbf16>
      %76 = vector.extract_strided_slice %70 {offsets = [1, 0, 0], sizes = [1, 8, 8], strides = [1, 1, 1]} : vector<9x8x8xbf16> to vector<1x8x8xbf16>
      %77 = vector.shape_cast %76 : vector<1x8x8xbf16> to vector<8x8xbf16>
      %cst_48 = arith.constant dense<0.000000e+00> : vector<8x1280xf32>
      %78 = tpu.matmul %77, %75, %cst_48 {dimension_numbers = #tpu.dot_dimension_numbers<[1], [0], [0], [1], [0, 0, 1, 1], [], []>} : vector<8x8xbf16>, vector<8x1280xbf16>, vector<8x1280xf32> -> vector<8x1280xf32>
      %79 = arith.addf %74, %78 : vector<8x1280xf32>
      %c0_49 = arith.constant 0 : index
      %c111_50 = arith.constant 111 : index
      %80 = vector.load %arg10[%c0_49, %c111_50] : memref<8x1536xbf16, #tpu.memory_space<vmem>>, vector<8x1280xbf16>
      %81 = vector.extract_strided_slice %70 {offsets = [2, 0, 0], sizes = [1, 8, 8], strides = [1, 1, 1]} : vector<9x8x8xbf16> to vector<1x8x8xbf16>
      %82 = vector.shape_cast %81 : vector<1x8x8xbf16> to vector<8x8xbf16>
      %cst_51 = arith.constant dense<0.000000e+00> : vector<8x1280xf32>
      %83 = tpu.matmul %82, %80, %cst_51 {dimension_numbers = #tpu.dot_dimension_numbers<[1], [0], [0], [1], [0, 0, 1, 1], [], []>} : vector<8x8xbf16>, vector<8x1280xbf16>, vector<8x1280xf32> -> vector<8x1280xf32>
      %84 = arith.addf %79, %83 : vector<8x1280xf32>
      %c0_52 = arith.constant 0 : index
      %c127_53 = arith.constant 127 : index
      %85 = vector.load %arg10[%c0_52, %c127_53] : memref<8x1536xbf16, #tpu.memory_space<vmem>>, vector<8x1280xbf16>
      %86 = vector.extract_strided_slice %70 {offsets = [3, 0, 0], sizes = [1, 8, 8], strides = [1, 1, 1]} : vector<9x8x8xbf16> to vector<1x8x8xbf16>
      %87 = vector.shape_cast %86 : vector<1x8x8xbf16> to vector<8x8xbf16>
      %cst_54 = arith.constant dense<0.000000e+00> : vector<8x1280xf32>
      %88 = tpu.matmul %87, %85, %cst_54 {dimension_numbers = #tpu.dot_dimension_numbers<[1], [0], [0], [1], [0, 0, 1, 1], [], []>} : vector<8x8xbf16>, vector<8x1280xbf16>, vector<8x1280xf32> -> vector<8x1280xf32>
      %89 = arith.addf %84, %88 : vector<8x1280xf32>
      %c0_55 = arith.constant 0 : index
      %c128_56 = arith.constant 128 : index
      %90 = vector.load %arg10[%c0_55, %c128_56] : memref<8x1536xbf16, #tpu.memory_space<vmem>>, vector<8x1280xbf16>
      %91 = vector.extract_strided_slice %70 {offsets = [4, 0, 0], sizes = [1, 8, 8], strides = [1, 1, 1]} : vector<9x8x8xbf16> to vector<1x8x8xbf16>
      %92 = vector.shape_cast %91 : vector<1x8x8xbf16> to vector<8x8xbf16>
      %cst_57 = arith.constant dense<0.000000e+00> : vector<8x1280xf32>
      %93 = tpu.matmul %92, %90, %cst_57 {dimension_numbers = #tpu.dot_dimension_numbers<[1], [0], [0], [1], [0, 0, 1, 1], [], []>} : vector<8x8xbf16>, vector<8x1280xbf16>, vector<8x1280xf32> -> vector<8x1280xf32>
      %94 = arith.addf %89, %93 : vector<8x1280xf32>
      %c0_58 = arith.constant 0 : index
      %c129_59 = arith.constant 129 : index
      %95 = vector.load %arg10[%c0_58, %c129_59] : memref<8x1536xbf16, #tpu.memory_space<vmem>>, vector<8x1280xbf16>
      %96 = vector.extract_strided_slice %70 {offsets = [5, 0, 0], sizes = [1, 8, 8], strides = [1, 1, 1]} : vector<9x8x8xbf16> to vector<1x8x8xbf16>
      %97 = vector.shape_cast %96 : vector<1x8x8xbf16> to vector<8x8xbf16>
      %cst_60 = arith.constant dense<0.000000e+00> : vector<8x1280xf32>
      %98 = tpu.matmul %97, %95, %cst_60 {dimension_numbers = #tpu.dot_dimension_numbers<[1], [0], [0], [1], [0, 0, 1, 1], [], []>} : vector<8x8xbf16>, vector<8x1280xbf16>, vector<8x1280xf32> -> vector<8x1280xf32>
      %99 = arith.addf %94, %98 : vector<8x1280xf32>
      %c0_61 = arith.constant 0 : index
      %c145_62 = arith.constant 145 : index
      %100 = vector.load %arg10[%c0_61, %c145_62] : memref<8x1536xbf16, #tpu.memory_space<vmem>>, vector<8x1280xbf16>
      %101 = vector.extract_strided_slice %70 {offsets = [6, 0, 0], sizes = [1, 8, 8], strides = [1, 1, 1]} : vector<9x8x8xbf16> to vector<1x8x8xbf16>
      %102 = vector.shape_cast %101 : vector<1x8x8xbf16> to vector<8x8xbf16>
      %cst_63 = arith.constant dense<0.000000e+00> : vector<8x1280xf32>
      %103 = tpu.matmul %102, %100, %cst_63 {dimension_numbers = #tpu.dot_dimension_numbers<[1], [0], [0], [1], [0, 0, 1, 1], [], []>} : vector<8x8xbf16>, vector<8x1280xbf16>, vector<8x1280xf32> -> vector<8x1280xf32>
      %104 = arith.addf %99, %103 : vector<8x1280xf32>
      %c0_64 = arith.constant 0 : index
      %c146_65 = arith.constant 146 : index
      %105 = vector.load %arg10[%c0_64, %c146_65] : memref<8x1536xbf16, #tpu.memory_space<vmem>>, vector<8x1280xbf16>
      %106 = vector.extract_strided_slice %70 {offsets = [7, 0, 0], sizes = [1, 8, 8], strides = [1, 1, 1]} : vector<9x8x8xbf16> to vector<1x8x8xbf16>
      %107 = vector.shape_cast %106 : vector<1x8x8xbf16> to vector<8x8xbf16>
      %cst_66 = arith.constant dense<0.000000e+00> : vector<8x1280xf32>
      %108 = tpu.matmul %107, %105, %cst_66 {dimension_numbers = #tpu.dot_dimension_numbers<[1], [0], [0], [1], [0, 0, 1, 1], [], []>} : vector<8x8xbf16>, vector<8x1280xbf16>, vector<8x1280xf32> -> vector<8x1280xf32>
      %109 = arith.addf %104, %108 : vector<8x1280xf32>
      %c0_67 = arith.constant 0 : index
      %c147_68 = arith.constant 147 : index
      %110 = vector.load %arg10[%c0_67, %c147_68] : memref<8x1536xbf16, #tpu.memory_space<vmem>>, vector<8x1280xbf16>
      %111 = vector.extract_strided_slice %70 {offsets = [8, 0, 0], sizes = [1, 8, 8], strides = [1, 1, 1]} : vector<9x8x8xbf16> to vector<1x8x8xbf16>
      %112 = vector.shape_cast %111 : vector<1x8x8xbf16> to vector<8x8xbf16>
      %cst_69 = arith.constant dense<0.000000e+00> : vector<8x1280xf32>
      %113 = tpu.matmul %112, %110, %cst_69 {dimension_numbers = #tpu.dot_dimension_numbers<[1], [0], [0], [1], [0, 0, 1, 1], [], []>} : vector<8x8xbf16>, vector<8x1280xbf16>, vector<8x1280xf32> -> vector<8x1280xf32>
      %114 = arith.addf %109, %113 : vector<8x1280xf32>
      %115 = arith.index_cast %arg12 : i32 to index
      %c0_70 = arith.constant 0 : index
      %c0_71 = arith.constant 0 : index
      %c0_72 = arith.constant 0 : index
      %116 = vector.load %arg6[%115, %c0_70, %c0_71, %c0_72] : memref<6x2x8x1xf32, #tpu.memory_space<vmem>>, vector<1x2x8x1xf32>
      %117 = vector.shape_cast %116 : vector<1x2x8x1xf32> to vector<2x8x1xf32>
      %118 = vector.extract_strided_slice %117 {offsets = [0, 0, 0], sizes = [1, 8, 1], strides = [1, 1, 1]} : vector<2x8x1xf32> to vector<1x8x1xf32>
      %119 = vector.shape_cast %118 : vector<1x8x1xf32> to vector<8x1xf32>
      %120 = vector.broadcast %119 : vector<8x1xf32> to vector<8x1280xf32>
      %121 = arith.addf %114, %120 : vector<8x1280xf32>
      %122 = vector.extract_strided_slice %117 {offsets = [1, 0, 0], sizes = [1, 8, 1], strides = [1, 1, 1]} : vector<2x8x1xf32> to vector<1x8x1xf32>
      %123 = vector.shape_cast %122 : vector<1x8x1xf32> to vector<8x1xf32>
      %cst_73 = arith.constant 0.000000e+00 : f32
      %124 = vector.broadcast %cst_73 : f32 to vector<8x1280xf32>
      %125 = arith.cmpf oge, %121, %124 : vector<8x1280xf32>
      %126 = vector.broadcast %123 : vector<8x1xf32> to vector<8x1280xf32>
      %127 = arith.mulf %121, %126 : vector<8x1280xf32>
      %128 = arith.select %125, %121, %127 : vector<8x1280xi1>, vector<8x1280xf32>
      %129 = vector.broadcast %0 : vector<1x1280xf32> to vector<8x1280xf32>
      %130 = arith.mulf %129, %128 : vector<8x1280xf32>
      %131 = arith.truncf %130 : vector<8x1280xf32> to vector<8x1280xbf16>
      %c0_74 = arith.constant 0 : index
      %c128_75 = arith.constant 128 : index
      %132 = vector.load %arg11[%c0_74, %c128_75] : memref<8x1536xbf16, #tpu.memory_space<vmem>>, vector<8x1280xbf16>
      tpu.vector_store %arg11[%c0_74, %c128_75], %131 {strides = array<i32>} : memref<8x1536xbf16, #tpu.memory_space<vmem>>, vector<8x1280xbf16>,
      %133 = arith.index_cast %arg12 : i32 to index
      %c0_76 = arith.constant 0 : index
      %c0_77 = arith.constant 0 : index
      %c0_78 = arith.constant 0 : index
      %134 = vector.load %arg7[%133, %c0_76, %c0_77, %c0_78] : memref<6x9x8x8xbf16, #tpu.memory_space<vmem>>, vector<1x9x8x8xbf16>
      %135 = vector.shape_cast %134 : vector<1x9x8x8xbf16> to vector<9x8x8xbf16>
      %c0_79 = arith.constant 0 : index
      %c109_80 = arith.constant 109 : index
      %136 = vector.load %arg11[%c0_79, %c109_80] : memref<8x1536xbf16, #tpu.memory_space<vmem>>, vector<8x1280xbf16>
      %137 = vector.extract_strided_slice %135 {offsets = [0, 0, 0], sizes = [1, 8, 8], strides = [1, 1, 1]} : vector<9x8x8xbf16> to vector<1x8x8xbf16>
      %138 = vector.shape_cast %137 : vector<1x8x8xbf16> to vector<8x8xbf16>
      %cst_81 = arith.constant dense<0.000000e+00> : vector<8x1280xf32>
      %139 = tpu.matmul %138, %136, %cst_81 {dimension_numbers = #tpu.dot_dimension_numbers<[1], [0], [0], [1], [0, 0, 1, 1], [], []>} : vector<8x8xbf16>, vector<8x1280xbf16>, vector<8x1280xf32> -> vector<8x1280xf32>
      %c0_82 = arith.constant 0 : index
      %c110_83 = arith.constant 110 : index
      %140 = vector.load %arg11[%c0_82, %c110_83] : memref<8x1536xbf16, #tpu.memory_space<vmem>>, vector<8x1280xbf16>
      %141 = vector.extract_strided_slice %135 {offsets = [1, 0, 0], sizes = [1, 8, 8], strides = [1, 1, 1]} : vector<9x8x8xbf16> to vector<1x8x8xbf16>
      %142 = vector.shape_cast %141 : vector<1x8x8xbf16> to vector<8x8xbf16>
      %cst_84 = arith.constant dense<0.000000e+00> : vector<8x1280xf32>
      %143 = tpu.matmul %142, %140, %cst_84 {dimension_numbers = #tpu.dot_dimension_numbers<[1], [0], [0], [1], [0, 0, 1, 1], [], []>} : vector<8x8xbf16>, vector<8x1280xbf16>, vector<8x1280xf32> -> vector<8x1280xf32>
      %144 = arith.addf %139, %143 : vector<8x1280xf32>
      %c0_85 = arith.constant 0 : index
      %c111_86 = arith.constant 111 : index
      %145 = vector.load %arg11[%c0_85, %c111_86] : memref<8x1536xbf16, #tpu.memory_space<vmem>>, vector<8x1280xbf16>
      %146 = vector.extract_strided_slice %135 {offsets = [2, 0, 0], sizes = [1, 8, 8], strides = [1, 1, 1]} : vector<9x8x8xbf16> to vector<1x8x8xbf16>
      %147 = vector.shape_cast %146 : vector<1x8x8xbf16> to vector<8x8xbf16>
      %cst_87 = arith.constant dense<0.000000e+00> : vector<8x1280xf32>
      %148 = tpu.matmul %147, %145, %cst_87 {dimension_numbers = #tpu.dot_dimension_numbers<[1], [0], [0], [1], [0, 0, 1, 1], [], []>} : vector<8x8xbf16>, vector<8x1280xbf16>, vector<8x1280xf32> -> vector<8x1280xf32>
      %149 = arith.addf %144, %148 : vector<8x1280xf32>
      %c0_88 = arith.constant 0 : index
      %c127_89 = arith.constant 127 : index
      %150 = vector.load %arg11[%c0_88, %c127_89] : memref<8x1536xbf16, #tpu.memory_space<vmem>>, vector<8x1280xbf16>
      %151 = vector.extract_strided_slice %135 {offsets = [3, 0, 0], sizes = [1, 8, 8], strides = [1, 1, 1]} : vector<9x8x8xbf16> to vector<1x8x8xbf16>
      %152 = vector.shape_cast %151 : vector<1x8x8xbf16> to vector<8x8xbf16>
      %cst_90 = arith.constant dense<0.000000e+00> : vector<8x1280xf32>
      %153 = tpu.matmul %152, %150, %cst_90 {dimension_numbers = #tpu.dot_dimension_numbers<[1], [0], [0], [1], [0, 0, 1, 1], [], []>} : vector<8x8xbf16>, vector<8x1280xbf16>, vector<8x1280xf32> -> vector<8x1280xf32>
      %154 = arith.addf %149, %153 : vector<8x1280xf32>
      %c0_91 = arith.constant 0 : index
      %c128_92 = arith.constant 128 : index
      %155 = vector.load %arg11[%c0_91, %c128_92] : memref<8x1536xbf16, #tpu.memory_space<vmem>>, vector<8x1280xbf16>
      %156 = vector.extract_strided_slice %135 {offsets = [4, 0, 0], sizes = [1, 8, 8], strides = [1, 1, 1]} : vector<9x8x8xbf16> to vector<1x8x8xbf16>
      %157 = vector.shape_cast %156 : vector<1x8x8xbf16> to vector<8x8xbf16>
      %cst_93 = arith.constant dense<0.000000e+00> : vector<8x1280xf32>
      %158 = tpu.matmul %157, %155, %cst_93 {dimension_numbers = #tpu.dot_dimension_numbers<[1], [0], [0], [1], [0, 0, 1, 1], [], []>} : vector<8x8xbf16>, vector<8x1280xbf16>, vector<8x1280xf32> -> vector<8x1280xf32>
      %159 = arith.addf %154, %158 : vector<8x1280xf32>
      %c0_94 = arith.constant 0 : index
      %c129_95 = arith.constant 129 : index
      %160 = vector.load %arg11[%c0_94, %c129_95] : memref<8x1536xbf16, #tpu.memory_space<vmem>>, vector<8x1280xbf16>
      %161 = vector.extract_strided_slice %135 {offsets = [5, 0, 0], sizes = [1, 8, 8], strides = [1, 1, 1]} : vector<9x8x8xbf16> to vector<1x8x8xbf16>
      %162 = vector.shape_cast %161 : vector<1x8x8xbf16> to vector<8x8xbf16>
      %cst_96 = arith.constant dense<0.000000e+00> : vector<8x1280xf32>
      %163 = tpu.matmul %162, %160, %cst_96 {dimension_numbers = #tpu.dot_dimension_numbers<[1], [0], [0], [1], [0, 0, 1, 1], [], []>} : vector<8x8xbf16>, vector<8x1280xbf16>, vector<8x1280xf32> -> vector<8x1280xf32>
      %164 = arith.addf %159, %163 : vector<8x1280xf32>
      %c0_97 = arith.constant 0 : index
      %c145_98 = arith.constant 145 : index
      %165 = vector.load %arg11[%c0_97, %c145_98] : memref<8x1536xbf16, #tpu.memory_space<vmem>>, vector<8x1280xbf16>
      %166 = vector.extract_strided_slice %135 {offsets = [6, 0, 0], sizes = [1, 8, 8], strides = [1, 1, 1]} : vector<9x8x8xbf16> to vector<1x8x8xbf16>
      %167 = vector.shape_cast %166 : vector<1x8x8xbf16> to vector<8x8xbf16>
      %cst_99 = arith.constant dense<0.000000e+00> : vector<8x1280xf32>
      %168 = tpu.matmul %167, %165, %cst_99 {dimension_numbers = #tpu.dot_dimension_numbers<[1], [0], [0], [1], [0, 0, 1, 1], [], []>} : vector<8x8xbf16>, vector<8x1280xbf16>, vector<8x1280xf32> -> vector<8x1280xf32>
      %169 = arith.addf %164, %168 : vector<8x1280xf32>
      %c0_100 = arith.constant 0 : index
      %c146_101 = arith.constant 146 : index
      %170 = vector.load %arg11[%c0_100, %c146_101] : memref<8x1536xbf16, #tpu.memory_space<vmem>>, vector<8x1280xbf16>
      %171 = vector.extract_strided_slice %135 {offsets = [7, 0, 0], sizes = [1, 8, 8], strides = [1, 1, 1]} : vector<9x8x8xbf16> to vector<1x8x8xbf16>
      %172 = vector.shape_cast %171 : vector<1x8x8xbf16> to vector<8x8xbf16>
      %cst_102 = arith.constant dense<0.000000e+00> : vector<8x1280xf32>
      %173 = tpu.matmul %172, %170, %cst_102 {dimension_numbers = #tpu.dot_dimension_numbers<[1], [0], [0], [1], [0, 0, 1, 1], [], []>} : vector<8x8xbf16>, vector<8x1280xbf16>, vector<8x1280xf32> -> vector<8x1280xf32>
      %174 = arith.addf %169, %173 : vector<8x1280xf32>
      %c0_103 = arith.constant 0 : index
      %c147_104 = arith.constant 147 : index
      %175 = vector.load %arg11[%c0_103, %c147_104] : memref<8x1536xbf16, #tpu.memory_space<vmem>>, vector<8x1280xbf16>
      %176 = vector.extract_strided_slice %135 {offsets = [8, 0, 0], sizes = [1, 8, 8], strides = [1, 1, 1]} : vector<9x8x8xbf16> to vector<1x8x8xbf16>
      %177 = vector.shape_cast %176 : vector<1x8x8xbf16> to vector<8x8xbf16>
      %cst_105 = arith.constant dense<0.000000e+00> : vector<8x1280xf32>
      %178 = tpu.matmul %177, %175, %cst_105 {dimension_numbers = #tpu.dot_dimension_numbers<[1], [0], [0], [1], [0, 0, 1, 1], [], []>} : vector<8x8xbf16>, vector<8x1280xbf16>, vector<8x1280xf32> -> vector<8x1280xf32>
      %179 = arith.addf %174, %178 : vector<8x1280xf32>
      %180 = arith.index_cast %arg12 : i32 to index
      %c0_106 = arith.constant 0 : index
      %c0_107 = arith.constant 0 : index
      %c0_108 = arith.constant 0 : index
      %181 = vector.load %arg8[%180, %c0_106, %c0_107, %c0_108] : memref<6x3x8x1xf32, #tpu.memory_space<vmem>>, vector<1x3x8x1xf32>
      %182 = vector.shape_cast %181 : vector<1x3x8x1xf32> to vector<3x8x1xf32>
      %c0_109 = arith.constant 0 : index
      %c128_110 = arith.constant 128 : index
      %183 = vector.load %arg10[%c0_109, %c128_110] : memref<8x1536xbf16, #tpu.memory_space<vmem>>, vector<8x1280xbf16>
      %184 = arith.extf %183 : vector<8x1280xbf16> to vector<8x1280xf32>
      %185 = vector.extract_strided_slice %182 {offsets = [0, 0, 0], sizes = [1, 8, 1], strides = [1, 1, 1]} : vector<3x8x1xf32> to vector<1x8x1xf32>
      %186 = vector.shape_cast %185 : vector<1x8x1xf32> to vector<8x1xf32>
      %187 = vector.broadcast %186 : vector<8x1xf32> to vector<8x1280xf32>
      %188 = arith.addf %179, %187 : vector<8x1280xf32>
      %189 = vector.extract_strided_slice %182 {offsets = [1, 0, 0], sizes = [1, 8, 1], strides = [1, 1, 1]} : vector<3x8x1xf32> to vector<1x8x1xf32>
      %190 = vector.shape_cast %189 : vector<1x8x1xf32> to vector<8x1xf32>
      %191 = vector.broadcast %190 : vector<8x1xf32> to vector<8x1280xf32>
      %192 = arith.mulf %188, %191 : vector<8x1280xf32>
      %193 = arith.addf %192, %184 : vector<8x1280xf32>
      %194 = vector.extract_strided_slice %182 {offsets = [2, 0, 0], sizes = [1, 8, 1], strides = [1, 1, 1]} : vector<3x8x1xf32> to vector<1x8x1xf32>
      %195 = vector.shape_cast %194 : vector<1x8x1xf32> to vector<8x1xf32>
      %cst_111 = arith.constant 0.000000e+00 : f32
      %196 = vector.broadcast %cst_111 : f32 to vector<8x1280xf32>
      %197 = arith.cmpf oge, %193, %196 : vector<8x1280xf32>
      %198 = vector.broadcast %195 : vector<8x1xf32> to vector<8x1280xf32>
      %199 = arith.mulf %193, %198 : vector<8x1280xf32>
      %200 = arith.select %197, %193, %199 : vector<8x1280xi1>, vector<8x1280xf32>
      %201 = vector.broadcast %0 : vector<1x1280xf32> to vector<8x1280xf32>
      %202 = arith.mulf %201, %200 : vector<8x1280xf32>
      %c5_i32 = arith.constant 5 : i32
      %203 = arith.cmpi slt, %arg12, %c5_i32 : i32
      %204 = arith.extui %203 : i1 to i32
      %c0_i32_112 = arith.constant 0 : i32
      %205 = arith.cmpi ne, %204, %c0_i32_112 : i32
      scf.if %205 {
        %209 = arith.truncf %202 : vector<8x1280xf32> to vector<8x1280xbf16>
        %c0_115 = arith.constant 0 : index
        %c128_116 = arith.constant 128 : index
        %210 = vector.load %arg10[%c0_115, %c128_116] : memref<8x1536xbf16, #tpu.memory_space<vmem>>, vector<8x1280xbf16>
        tpu.vector_store %arg10[%c0_115, %c128_116], %209 {strides = array<i32>} : memref<8x1536xbf16, #tpu.memory_space<vmem>>, vector<8x1280xbf16>,
      } else {
      }
      %c5_i32_113 = arith.constant 5 : i32
      %206 = arith.cmpi eq, %arg12, %c5_i32_113 : i32
      %207 = arith.extui %206 : i1 to i32
      %c0_i32_114 = arith.constant 0 : i32
      %208 = arith.cmpi ne, %207, %c0_i32_114 : i32
      scf.if %208 {
        %c0_115 = arith.constant 0 : index
        %c0_116 = arith.constant 0 : index
        %209 = vector.load %arg9[%c0_115, %c0_116] : memref<8x1280xf32, #tpu.memory_space<vmem>>, vector<8x1280xf32>
        tpu.vector_store %arg9[%c0_115, %c0_116], %202 {strides = array<i32>} : memref<8x1280xf32, #tpu.memory_space<vmem>>, vector<8x1280xf32>,
      } else {
      }
    }
    %c6_i32_39 = arith.constant 6 : i32
    return
  }
}

module attributes {stable_mosaic.version = 11 : i64} {
  func.func @_head_kernel(%arg0: memref<8x1024xbf16, #tpu.memory_space<vmem>>, %arg1: memref<9x8x8xbf16, #tpu.memory_space<vmem>>, %arg2: memref<8x1xf32, #tpu.memory_space<vmem>>, %arg3: memref<8x768xf32, #tpu.memory_space<vmem>>) attributes {dimension_semantics = [], scalar_prefetch = 0 : i64, scratch_operands = 0 : i64, tpu.core_type = #tpu.core_type<tc>} {
    %c0 = arith.constant 0 : index
    %c0_0 = arith.constant 0 : index
    %c0_1 = arith.constant 0 : index
    %0 = vector.load %arg1[%c0, %c0_0, %c0_1] : memref<9x8x8xbf16, #tpu.memory_space<vmem>>, vector<9x8x8xbf16>
    %c0_2 = arith.constant 0 : index
    %c109 = arith.constant 109 : index
    %1 = vector.load %arg0[%c0_2, %c109] : memref<8x1024xbf16, #tpu.memory_space<vmem>>, vector<8x768xbf16>
    %2 = vector.extract_strided_slice %0 {offsets = [0, 0, 0], sizes = [1, 8, 8], strides = [1, 1, 1]} : vector<9x8x8xbf16> to vector<1x8x8xbf16>
    %3 = vector.shape_cast %2 : vector<1x8x8xbf16> to vector<8x8xbf16>
    %cst = arith.constant dense<0.000000e+00> : vector<8x768xf32>
    %4 = tpu.matmul %3, %1, %cst {dimension_numbers = #tpu.dot_dimension_numbers<[1], [0], [0], [1], [0, 0, 1, 1], [], []>} : vector<8x8xbf16>, vector<8x768xbf16>, vector<8x768xf32> -> vector<8x768xf32>
    %c0_3 = arith.constant 0 : index
    %c110 = arith.constant 110 : index
    %5 = vector.load %arg0[%c0_3, %c110] : memref<8x1024xbf16, #tpu.memory_space<vmem>>, vector<8x768xbf16>
    %6 = vector.extract_strided_slice %0 {offsets = [1, 0, 0], sizes = [1, 8, 8], strides = [1, 1, 1]} : vector<9x8x8xbf16> to vector<1x8x8xbf16>
    %7 = vector.shape_cast %6 : vector<1x8x8xbf16> to vector<8x8xbf16>
    %cst_4 = arith.constant dense<0.000000e+00> : vector<8x768xf32>
    %8 = tpu.matmul %7, %5, %cst_4 {dimension_numbers = #tpu.dot_dimension_numbers<[1], [0], [0], [1], [0, 0, 1, 1], [], []>} : vector<8x8xbf16>, vector<8x768xbf16>, vector<8x768xf32> -> vector<8x768xf32>
    %9 = arith.addf %4, %8 : vector<8x768xf32>
    %c0_5 = arith.constant 0 : index
    %c111 = arith.constant 111 : index
    %10 = vector.load %arg0[%c0_5, %c111] : memref<8x1024xbf16, #tpu.memory_space<vmem>>, vector<8x768xbf16>
    %11 = vector.extract_strided_slice %0 {offsets = [2, 0, 0], sizes = [1, 8, 8], strides = [1, 1, 1]} : vector<9x8x8xbf16> to vector<1x8x8xbf16>
    %12 = vector.shape_cast %11 : vector<1x8x8xbf16> to vector<8x8xbf16>
    %cst_6 = arith.constant dense<0.000000e+00> : vector<8x768xf32>
    %13 = tpu.matmul %12, %10, %cst_6 {dimension_numbers = #tpu.dot_dimension_numbers<[1], [0], [0], [1], [0, 0, 1, 1], [], []>} : vector<8x8xbf16>, vector<8x768xbf16>, vector<8x768xf32> -> vector<8x768xf32>
    %14 = arith.addf %9, %13 : vector<8x768xf32>
    %c0_7 = arith.constant 0 : index
    %c127 = arith.constant 127 : index
    %15 = vector.load %arg0[%c0_7, %c127] : memref<8x1024xbf16, #tpu.memory_space<vmem>>, vector<8x768xbf16>
    %16 = vector.extract_strided_slice %0 {offsets = [3, 0, 0], sizes = [1, 8, 8], strides = [1, 1, 1]} : vector<9x8x8xbf16> to vector<1x8x8xbf16>
    %17 = vector.shape_cast %16 : vector<1x8x8xbf16> to vector<8x8xbf16>
    %cst_8 = arith.constant dense<0.000000e+00> : vector<8x768xf32>
    %18 = tpu.matmul %17, %15, %cst_8 {dimension_numbers = #tpu.dot_dimension_numbers<[1], [0], [0], [1], [0, 0, 1, 1], [], []>} : vector<8x8xbf16>, vector<8x768xbf16>, vector<8x768xf32> -> vector<8x768xf32>
    %19 = arith.addf %14, %18 : vector<8x768xf32>
    %c0_9 = arith.constant 0 : index
    %c128 = arith.constant 128 : index
    %20 = vector.load %arg0[%c0_9, %c128] : memref<8x1024xbf16, #tpu.memory_space<vmem>>, vector<8x768xbf16>
    %21 = vector.extract_strided_slice %0 {offsets = [4, 0, 0], sizes = [1, 8, 8], strides = [1, 1, 1]} : vector<9x8x8xbf16> to vector<1x8x8xbf16>
    %22 = vector.shape_cast %21 : vector<1x8x8xbf16> to vector<8x8xbf16>
    %cst_10 = arith.constant dense<0.000000e+00> : vector<8x768xf32>
    %23 = tpu.matmul %22, %20, %cst_10 {dimension_numbers = #tpu.dot_dimension_numbers<[1], [0], [0], [1], [0, 0, 1, 1], [], []>} : vector<8x8xbf16>, vector<8x768xbf16>, vector<8x768xf32> -> vector<8x768xf32>
    %24 = arith.addf %19, %23 : vector<8x768xf32>
    %c0_11 = arith.constant 0 : index
    %c129 = arith.constant 129 : index
    %25 = vector.load %arg0[%c0_11, %c129] : memref<8x1024xbf16, #tpu.memory_space<vmem>>, vector<8x768xbf16>
    %26 = vector.extract_strided_slice %0 {offsets = [5, 0, 0], sizes = [1, 8, 8], strides = [1, 1, 1]} : vector<9x8x8xbf16> to vector<1x8x8xbf16>
    %27 = vector.shape_cast %26 : vector<1x8x8xbf16> to vector<8x8xbf16>
    %cst_12 = arith.constant dense<0.000000e+00> : vector<8x768xf32>
    %28 = tpu.matmul %27, %25, %cst_12 {dimension_numbers = #tpu.dot_dimension_numbers<[1], [0], [0], [1], [0, 0, 1, 1], [], []>} : vector<8x8xbf16>, vector<8x768xbf16>, vector<8x768xf32> -> vector<8x768xf32>
    %29 = arith.addf %24, %28 : vector<8x768xf32>
    %c0_13 = arith.constant 0 : index
    %c145 = arith.constant 145 : index
    %30 = vector.load %arg0[%c0_13, %c145] : memref<8x1024xbf16, #tpu.memory_space<vmem>>, vector<8x768xbf16>
    %31 = vector.extract_strided_slice %0 {offsets = [6, 0, 0], sizes = [1, 8, 8], strides = [1, 1, 1]} : vector<9x8x8xbf16> to vector<1x8x8xbf16>
    %32 = vector.shape_cast %31 : vector<1x8x8xbf16> to vector<8x8xbf16>
    %cst_14 = arith.constant dense<0.000000e+00> : vector<8x768xf32>
    %33 = tpu.matmul %32, %30, %cst_14 {dimension_numbers = #tpu.dot_dimension_numbers<[1], [0], [0], [1], [0, 0, 1, 1], [], []>} : vector<8x8xbf16>, vector<8x768xbf16>, vector<8x768xf32> -> vector<8x768xf32>
    %34 = arith.addf %29, %33 : vector<8x768xf32>
    %c0_15 = arith.constant 0 : index
    %c146 = arith.constant 146 : index
    %35 = vector.load %arg0[%c0_15, %c146] : memref<8x1024xbf16, #tpu.memory_space<vmem>>, vector<8x768xbf16>
    %36 = vector.extract_strided_slice %0 {offsets = [7, 0, 0], sizes = [1, 8, 8], strides = [1, 1, 1]} : vector<9x8x8xbf16> to vector<1x8x8xbf16>
    %37 = vector.shape_cast %36 : vector<1x8x8xbf16> to vector<8x8xbf16>
    %cst_16 = arith.constant dense<0.000000e+00> : vector<8x768xf32>
    %38 = tpu.matmul %37, %35, %cst_16 {dimension_numbers = #tpu.dot_dimension_numbers<[1], [0], [0], [1], [0, 0, 1, 1], [], []>} : vector<8x8xbf16>, vector<8x768xbf16>, vector<8x768xf32> -> vector<8x768xf32>
    %39 = arith.addf %34, %38 : vector<8x768xf32>
    %c0_17 = arith.constant 0 : index
    %c147 = arith.constant 147 : index
    %40 = vector.load %arg0[%c0_17, %c147] : memref<8x1024xbf16, #tpu.memory_space<vmem>>, vector<8x768xbf16>
    %41 = vector.extract_strided_slice %0 {offsets = [8, 0, 0], sizes = [1, 8, 8], strides = [1, 1, 1]} : vector<9x8x8xbf16> to vector<1x8x8xbf16>
    %42 = vector.shape_cast %41 : vector<1x8x8xbf16> to vector<8x8xbf16>
    %cst_18 = arith.constant dense<0.000000e+00> : vector<8x768xf32>
    %43 = tpu.matmul %42, %40, %cst_18 {dimension_numbers = #tpu.dot_dimension_numbers<[1], [0], [0], [1], [0, 0, 1, 1], [], []>} : vector<8x8xbf16>, vector<8x768xbf16>, vector<8x768xf32> -> vector<8x768xf32>
    %44 = arith.addf %39, %43 : vector<8x768xf32>
    %c0_19 = arith.constant 0 : index
    %c0_20 = arith.constant 0 : index
    %45 = vector.load %arg2[%c0_19, %c0_20] : memref<8x1xf32, #tpu.memory_space<vmem>>, vector<8x1xf32>
    %46 = vector.broadcast %45 : vector<8x1xf32> to vector<8x768xf32>
    %47 = arith.addf %44, %46 : vector<8x768xf32>
    %c0_21 = arith.constant 0 : index
    %c0_22 = arith.constant 0 : index
    %48 = vector.load %arg3[%c0_21, %c0_22] : memref<8x768xf32, #tpu.memory_space<vmem>>, vector<8x768xf32>
    tpu.vector_store %arg3[%c0_21, %c0_22], %47 {strides = array<i32>} : memref<8x768xf32, #tpu.memory_space<vmem>>, vector<8x768xf32>,
    return
  }
}

</mosaic_0001>

<llo_original>
// kernel: tpu_custom_call.1
$region0: #{tpu_custom_call.1}
  #allocation0 [shape = 'u32[]', space=smem, size = 0x4, offset = 0x4, fixed_abs, tag = 'smem constant byte address 0x4 - core index']
  #allocation1 [shape = 'u32[72,128]{1,0:T(1,128)}', space=vmem, size = 0x9000, scoped, tag = 'internal scratch']
  %s0 = inlined_call_operand.hbm [shape: f32[8,256], index: 0, kind: input, shape index: {}]
  %s1 = inlined_call_operand.hbm [shape: f32[8,256], index: 1, kind: output, shape index: {}]
  %s2 = sld [smem:[#allocation0]]
  $region18: #{tpu_custom_call.1} parent=0
    _
  %s4 = ssub.s32 1, %s2
  %s5 = scalar_select 0, %s4, %s2
  $region1: #{tpu_custom_call.1} parent=0
    #allocation2 [shape = 'u8[8192]{0}', space=vmem, size = 0x2000, scoped, tag = 'input window, operand 0, single buffered']
    #allocation3 [shape = 's32[1]{0}', space=sflag, size = 0x4, scoped, tag = 'scoped memory for tpu_custom_call.1']
    #allocation4 [shape = 's32[1]{0}', space=sflag, size = 0x4, scoped, tag = 'scoped memory for tpu_custom_call.1']
    #allocation5 [shape = 'u8[8192]{0}', space=vmem, size = 0x2000, scoped, tag = 'output window, operand 0, single buffered']
    %6 = vsyncpa [#allocation3], 0
    %7 = vsyncpa [#allocation4], 0
    // Predicated region
    $region2: #{tpu_custom_call.1} parent=1 // pred_check
      _
    $region3: #{tpu_custom_call.1} parent=1 // pred_check_branch
      %9 = sbr.rel (0) target = $region5
    $region4: #{tpu_custom_call.1} parent=1 // pred_region
      %11 = vsyncadd [#allocation3], 0
      %s13 = sshll.u32 %s0, 4
      %s14 = int_to_ptr.hbm [resolvable:$true] %s13
      %s15 = sshll.u32 [#allocation2], 4
      %s16 = int_to_ptr.vmem [resolvable:$true] %s15
      %18 = dma.hbm_to_vmem [thread:$0]  %s14, 256, %s16, [#allocation3]
    $region5: #{tpu_custom_call.1} parent=1 // pred_fallthru
      _
    // Predicated region
    $region6: #{tpu_custom_call.1} parent=1 // pred_check
      _
    $region7: #{tpu_custom_call.1} parent=1 // pred_check_branch
      %20 = sbr.rel (0) target = $region9
    $region8: #{tpu_custom_call.1} parent=1 // pred_region
      %22 = dma.done [#allocation3], 256
    $region9: #{tpu_custom_call.1} parent=1 // pred_fallthru
      _
    %v23 = vld [vmem:[#allocation2] sm:$0xff]
    %v24 = vld [vmem:[#allocation2 + $0x8] sm:$0xff]
    %25 = vrot.lane.b32.xlu0 %v23, 1
    %v26 = vpop.permute.xlu0 %25
    %27 = vrot.lane.b32.xlu0 %v24, 1
    %v28 = vpop.permute.xlu0 %27
    %v29 = vlaneseq
    %v30 = vand.u32 %v29, 127
    %vm31 = vcmp.lt.s32.totalorder %v30, 1
    %v32 = vsel %vm31, %v26, %v28
    %v33 = vsel %vm31, %v28, %v26
    %34 = vst [vmem:[#allocation5] sm:$0xff] %v33
    %35 = vst [vmem:[#allocation5 + $0x8] sm:$0xff] %v32
    // Predicated region
    $region10: #{tpu_custom_call.1} parent=1 // pred_check
      _
    $region11: #{tpu_custom_call.1} parent=1 // pred_check_branch
      %37 = sbr.rel (0) target = $region13
    $region12: #{tpu_custom_call.1} parent=1 // pred_region
      %39 = vsyncadd [#allocation4], 0
      %s41 = sshll.u32 [#allocation5], 4
      %s42 = int_to_ptr.vmem [resolvable:$true] %s41
      %s43 = sshll.u32 %s1, 4
      %s44 = int_to_ptr.hbm [resolvable:$true] %s43
      %46 = dma.vmem_to_hbm [thread:$0]  %s42, 256, %s44, [#allocation4]
    $region13: #{tpu_custom_call.1} parent=1 // pred_fallthru
      _
    // Predicated region
    $region14: #{tpu_custom_call.1} parent=1 // pred_check
      _
    $region15: #{tpu_custom_call.1} parent=1 // pred_check_branch
      %48 = sbr.rel (0) target = $region17
    $region16: #{tpu_custom_call.1} parent=1 // pred_region
      %50 = dma.done [#allocation4], 256
    $region17: #{tpu_custom_call.1} parent=1 // pred_fallthru
      _
    %51 = vsyncpa [#allocation3], 1
    %52 = vsyncpa [#allocation4], 1

// kernel: recurrent_block_forward.3
$region0: #{recurrent_block_forward.3}
  #allocation0 [shape = 'u32[]', space=smem, size = 0x4, offset = 0x4, fixed_abs, tag = 'smem constant byte address 0x4 - core index']
  #allocation1 [shape = 'u32[72,128]{1,0:T(1,128)}', space=vmem, size = 0x9000, scoped, tag = 'internal scratch']
  %s0 = inlined_call_operand.vmem [shape: bf16[8,1024], index: 0, kind: input, shape index: {}]
  %s1 = inlined_call_operand.vmem [shape: bf16[9,8,8], index: 1, kind: input, shape index: {}]
  %s2 = inlined_call_operand.vmem [shape: f32[8,1], index: 2, kind: input, shape index: {}]
  %s3 = inlined_call_operand.vmem [shape: f32[8,768], index: 3, kind: output, shape index: {}]
  %s4 = sld [smem:[#allocation0]]
  $region22: #{recurrent_block_forward.3} parent=0
    _
  %s6 = ssub.s32 1, %s4
  %s7 = scalar_select 0, %s6, %s4
  // Predicated region
  $region2: #{recurrent_block_forward.3} parent=0 // pred_check
    _
  $region3: #{recurrent_block_forward.3} parent=0 // pred_check_branch
    %9 = sbr.rel (0) target = $region5
  $region4: #{recurrent_block_forward.3} parent=0 // pred_region
    _
  $region5: #{recurrent_block_forward.3} parent=0 // pred_fallthru
    _
  // Predicated region
  $region6: #{recurrent_block_forward.3} parent=0 // pred_check
    _
  $region7: #{recurrent_block_forward.3} parent=0 // pred_check_branch
    %11 = sbr.rel (0) target = $region9
  $region8: #{recurrent_block_forward.3} parent=0 // pred_region
    _
  $region9: #{recurrent_block_forward.3} parent=0 // pred_fallthru
    _
  // Predicated region
  $region10: #{recurrent_block_forward.3} parent=0 // pred_check
    _
  $region11: #{recurrent_block_forward.3} parent=0 // pred_check_branch
    %13 = sbr.rel (0) target = $region13
  $region12: #{recurrent_block_forward.3} parent=0 // pred_region
    _
  $region13: #{recurrent_block_forward.3} parent=0 // pred_fallthru
    _
  %v15 = vld [vmem:[%s1] sm:$0xf]
  %v16 = vld [vmem:[%s1 + $0x4] sm:$0xf]
  %v17 = vld [vmem:[%s1 + $0x8] sm:$0xf]
  %v18 = vld [vmem:[%s1 + $0xc] sm:$0xf]
  %v19 = vld [vmem:[%s1 + $0x10] sm:$0xf]
  %v20 = vld [vmem:[%s1 + $0x14] sm:$0xf]
  %v21 = vld [vmem:[%s1 + $0x18] sm:$0xf]
  %v22 = vld [vmem:[%s1 + $0x1c] sm:$0xf]
  %v23 = vld [vmem:[%s1 + $0x20] sm:$0xf]
  %v24 = vld [vmem:[%s0] sm:$0xff]
  %v25 = vld [vmem:[%s0 + $0x8] sm:$0xff]
  %v26 = vld [vmem:[%s0 + $0x10] sm:$0xff]
  %v27 = vld [vmem:[%s0 + $0x18] sm:$0xf]
  %v32 = vunpack.c.l.b16 %v24
  %v33 = vunpack.c.h.b16 %v24
  %v34 = vunpack.c.l.b16 %v25
  %v35 = vunpack.c.h.b16 %v25
  %v36 = vunpack.c.l.b16 %v26
  %v37 = vunpack.c.h.b16 %v26
  %v38 = vunpack.c.l.b16 %v27
  %v39 = vpack.c.b16 %v32, %v32
  %v40 = vpack.c.b16 %v33, %v33
  %v41 = vpack.c.b16 %v34, %v34
  %v42 = vpack.c.b16 %v35, %v35
  %v43 = vpack.c.b16 %v36, %v36
  %v44 = vpack.c.b16 %v37, %v37
  %v45 = vpack.c.b16 %v38, %v38
  %46 = vrot.lane.b32.xlu0 %v39, 18
  %v47 = vpop.permute.xlu0 %46
  %48 = vrot.lane.b32.xlu0 %v40, 18
  %v49 = vpop.permute.xlu0 %48
  %50 = vrot.lane.b32.xlu0 %v41, 18
  %v51 = vpop.permute.xlu0 %50
  %52 = vrot.lane.b32.xlu0 %v42, 18
  %v53 = vpop.permute.xlu0 %52
  %54 = vrot.lane.b32.xlu0 %v43, 18
  %v55 = vpop.permute.xlu0 %54
  %56 = vrot.lane.b32.xlu0 %v44, 18
  %v57 = vpop.permute.xlu0 %56
  %58 = vrot.lane.b32.xlu0 %v45, 18
  %v59 = vpop.permute.xlu0 %58
  %vm60 = vcmask 146432
  %v61 = vsel %vm60, %v47, %v49
  %v62 = vsel %vm60, %v49, %v51
  %v63 = vsel %vm60, %v51, %v53
  %v64 = vsel %vm60, %v53, %v55
  %v65 = vsel %vm60, %v55, %v57
  %v66 = vsel %vm60, %v57, %v59
  %vm67 = vcmask 64512
  %v69 = vsel %vm67, %v16, 0
  %vm71 = vcmask 1043456
  %v73 = vsel %vm71, %v61, 0
  %v76 = vsel %vm71, %v62, 0
  %v79 = vsel %vm71, %v63, 0
  %v82 = vsel %vm71, %v64, 0
  %v85 = vsel %vm71, %v65, 0
  %v88 = vsel %vm71, %v66, 0
  %90 = vmatpush.bf16.msra.mxu0 0
  %91 = vmatpush.bf16.msra.mxu0 0
  %92 = vmatpush.bf16.msra.mxu0 0
  %93 = vmatpush.bf16.msra.mxu0 0
  %94 = vmatpush.bf16.msra.mxu0 0
  %95 = vmatpush.bf16.msra.mxu0 0
  %96 = vmatpush.bf16.msra.mxu0 0
  %97 = vmatpush.bf16.msra.mxu0 %v73
  %98 = vmatmul.bf16.gmra.mxu0 %v69
  %v99 = vpop.f32.mrf.mxu0
  %v100 = vadd.f32 0.0, %v99
  %v101 = vpop.f32.mrf.mxu0
  %102 = vdwg.mxu0
  %103 = vmatpush.bf16.msra.mxu0 0
  %104 = vmatpush.bf16.msra.mxu0 0
  %105 = vmatpush.bf16.msra.mxu0 0
  %106 = vmatpush.bf16.msra.mxu0 0
  %107 = vmatpush.bf16.msra.mxu0 0
  %108 = vmatpush.bf16.msra.mxu0 0
  %109 = vmatpush.bf16.msra.mxu0 0
  %110 = vmatpush.bf16.msra.mxu0 %v76
  %111 = vmatmul.bf16.gmra.mxu0 %v69
  %v112 = vpop.f32.mrf.mxu0
  %v113 = vadd.f32 0.0, %v112
  %v114 = vpop.f32.mrf.mxu0
  %115 = vdwg.mxu0
  %116 = vmatpush.bf16.msra.mxu0 0
  %117 = vmatpush.bf16.msra.mxu0 0
  %118 = vmatpush.bf16.msra.mxu0 0
  %119 = vmatpush.bf16.msra.mxu0 0
  %120 = vmatpush.bf16.msra.mxu0 0
  %121 = vmatpush.bf16.msra.mxu0 0
  %122 = vmatpush.bf16.msra.mxu0 0
  %123 = vmatpush.bf16.msra.mxu0 %v79
  %124 = vmatmul.bf16.gmra.mxu0 %v69
  %v125 = vpop.f32.mrf.mxu0
  %v126 = vadd.f32 0.0, %v125
  %v127 = vpop.f32.mrf.mxu0
  %128 = vdwg.mxu0
  %129 = vmatpush.bf16.msra.mxu0 0
  %130 = vmatpush.bf16.msra.mxu0 0
  %131 = vmatpush.bf16.msra.mxu0 0
  %132 = vmatpush.bf16.msra.mxu0 0
  %133 = vmatpush.bf16.msra.mxu0 0
  %134 = vmatpush.bf16.msra.mxu0 0
  %135 = vmatpush.bf16.msra.mxu0 0
  %136 = vmatpush.bf16.msra.mxu0 %v82
  %137 = vmatmul.bf16.gmra.mxu0 %v69
  %v138 = vpop.f32.mrf.mxu0
  %v139 = vadd.f32 0.0, %v138
  %v140 = vpop.f32.mrf.mxu0
  %141 = vdwg.mxu0
  %142 = vmatpush.bf16.msra.mxu0 0
  %143 = vmatpush.bf16.msra.mxu0 0
  %144 = vmatpush.bf16.msra.mxu0 0
  %145 = vmatpush.bf16.msra.mxu0 0
  %146 = vmatpush.bf16.msra.mxu0 0
  %147 = vmatpush.bf16.msra.mxu0 0
  %148 = vmatpush.bf16.msra.mxu0 0
  %149 = vmatpush.bf16.msra.mxu0 %v85
  %150 = vmatmul.bf16.gmra.mxu0 %v69
  %v151 = vpop.f32.mrf.mxu0
  %v152 = vadd.f32 0.0, %v151
  %v153 = vpop.f32.mrf.mxu0
  %154 = vdwg.mxu0
  %155 = vmatpush.bf16.msra.mxu0 0
  %156 = vmatpush.bf16.msra.mxu0 0
  %157 = vmatpush.bf16.msra.mxu0 0
  %158 = vmatpush.bf16.msra.mxu0 0
  %159 = vmatpush.bf16.msra.mxu0 0
  %160 = vmatpush.bf16.msra.mxu0 0
  %161 = vmatpush.bf16.msra.mxu0 0
  %162 = vmatpush.bf16.msra.mxu0 %v88
  %163 = vmatmul.bf16.gmra.mxu0 %v69
  %v164 = vpop.f32.mrf.mxu0
  %v165 = vadd.f32 0.0, %v164
  %v166 = vpop.f32.mrf.mxu0
  %167 = vdwg.mxu0
  %168 = vrot.lane.b32.xlu0 %v39, 19
  %v169 = vpop.permute.xlu0 %168
  %170 = vrot.lane.b32.xlu0 %v40, 19
  %v171 = vpop.permute.xlu0 %170
  %172 = vrot.lane.b32.xlu0 %v41, 19
  %v173 = vpop.permute.xlu0 %172
  %174 = vrot.lane.b32.xlu0 %v42, 19
  %v175 = vpop.permute.xlu0 %174
  %176 = vrot.lane.b32.xlu0 %v43, 19
  %v177 = vpop.permute.xlu0 %176
  %178 = vrot.lane.b32.xlu0 %v44, 19
  %v179 = vpop.permute.xlu0 %178
  %180 = vrot.lane.b32.xlu0 %v45, 19
  %v181 = vpop.permute.xlu0 %180
  %vm182 = vcmask 154624
  %v183 = vsel %vm182, %v169, %v171
  %v184 = vsel %vm182, %v171, %v173
  %v185 = vsel %vm182, %v173, %v175
  %v186 = vsel %vm182, %v175, %v177
  %v187 = vsel %vm182, %v177, %v179
  %v188 = vsel %vm182, %v179, %v181
  %v190 = vsel %vm67, %v15, 0
  %v193 = vsel %vm71, %v183, 0
  %v196 = vsel %vm71, %v184, 0
  %v199 = vsel %vm71, %v185, 0
  %v202 = vsel %vm71, %v186, 0
  %v205 = vsel %vm71, %v187, 0
  %v208 = vsel %vm71, %v188, 0
  %210 = vmatpush.bf16.msra.mxu0 0
  %211 = vmatpush.bf16.msra.mxu0 0
  %212 = vmatpush.bf16.msra.mxu0 0
  %213 = vmatpush.bf16.msra.mxu0 0
  %214 = vmatpush.bf16.msra.mxu0 0
  %215 = vmatpush.bf16.msra.mxu0 0
  %216 = vmatpush.bf16.msra.mxu0 0
  %217 = vmatpush.bf16.msra.mxu0 %v193
  %218 = vmatmul.bf16.gmra.mxu0 %v190
  %v219 = vpop.f32.mrf.mxu0
  %v220 = vadd.f32 %v100, %v219
  %v221 = vpop.f32.mrf.mxu0
  %222 = vdwg.mxu0
  %223 = vmatpush.bf16.msra.mxu0 0
  %224 = vmatpush.bf16.msra.mxu0 0
  %225 = vmatpush.bf16.msra.mxu0 0
  %226 = vmatpush.bf16.msra.mxu0 0
  %227 = vmatpush.bf16.msra.mxu0 0
  %228 = vmatpush.bf16.msra.mxu0 0
  %229 = vmatpush.bf16.msra.mxu0 0
  %230 = vmatpush.bf16.msra.mxu0 %v196
  %231 = vmatmul.bf16.gmra.mxu0 %v190
  %v232 = vpop.f32.mrf.mxu0
  %v233 = vadd.f32 %v113, %v232
  %v234 = vpop.f32.mrf.mxu0
  %235 = vdwg.mxu0
  %236 = vmatpush.bf16.msra.mxu0 0
  %237 = vmatpush.bf16.msra.mxu0 0
  %238 = vmatpush.bf16.msra.mxu0 0
  %239 = vmatpush.bf16.msra.mxu0 0
  %240 = vmatpush.bf16.msra.mxu0 0
  %241 = vmatpush.bf16.msra.mxu0 0
  %242 = vmatpush.bf16.msra.mxu0 0
  %243 = vmatpush.bf16.msra.mxu0 %v199
  %244 = vmatmul.bf16.gmra.mxu0 %v190
  %v245 = vpop.f32.mrf.mxu0
  %v246 = vadd.f32 %v126, %v245
  %v247 = vpop.f32.mrf.mxu0
  %248 = vdwg.mxu0
  %249 = vmatpush.bf16.msra.mxu0 0
  %250 = vmatpush.bf16.msra.mxu0 0
  %251 = vmatpush.bf16.msra.mxu0 0
  %252 = vmatpush.bf16.msra.mxu0 0
  %253 = vmatpush.bf16.msra.mxu0 0
  %254 = vmatpush.bf16.msra.mxu0 0
  %255 = vmatpush.bf16.msra.mxu0 0
  %256 = vmatpush.bf16.msra.mxu0 %v202
  %257 = vmatmul.bf16.gmra.mxu0 %v190
  %v258 = vpop.f32.mrf.mxu0
  %v259 = vadd.f32 %v139, %v258
  %v260 = vpop.f32.mrf.mxu0
  %261 = vdwg.mxu0
  %262 = vmatpush.bf16.msra.mxu0 0
  %263 = vmatpush.bf16.msra.mxu0 0
  %264 = vmatpush.bf16.msra.mxu0 0
  %265 = vmatpush.bf16.msra.mxu0 0
  %266 = vmatpush.bf16.msra.mxu0 0
  %267 = vmatpush.bf16.msra.mxu0 0
  %268 = vmatpush.bf16.msra.mxu0 0
  %269 = vmatpush.bf16.msra.mxu0 %v205
  %270 = vmatmul.bf16.gmra.mxu0 %v190
  %v271 = vpop.f32.mrf.mxu0
  %v272 = vadd.f32 %v152, %v271
  %v273 = vpop.f32.mrf.mxu0
  %274 = vdwg.mxu0
  %275 = vmatpush.bf16.msra.mxu0 0
  %276 = vmatpush.bf16.msra.mxu0 0
  %277 = vmatpush.bf16.msra.mxu0 0
  %278 = vmatpush.bf16.msra.mxu0 0
  %279 = vmatpush.bf16.msra.mxu0 0
  %280 = vmatpush.bf16.msra.mxu0 0
  %281 = vmatpush.bf16.msra.mxu0 0
  %282 = vmatpush.bf16.msra.mxu0 %v208
  %283 = vmatmul.bf16.gmra.mxu0 %v190
  %v284 = vpop.f32.mrf.mxu0
  %v285 = vadd.f32 %v165, %v284
  %v286 = vpop.f32.mrf.mxu0
  %287 = vdwg.mxu0
  %288 = vrot.lane.b32.xlu0 %v39, 17
  %v289 = vpop.permute.xlu0 %288
  %290 = vrot.lane.b32.xlu0 %v40, 17
  %v291 = vpop.permute.xlu0 %290
  %292 = vrot.lane.b32.xlu0 %v41, 17
  %v293 = vpop.permute.xlu0 %292
  %294 = vrot.lane.b32.xlu0 %v42, 17
  %v295 = vpop.permute.xlu0 %294
  %296 = vrot.lane.b32.xlu0 %v43, 17
  %v297 = vpop.permute.xlu0 %296
  %298 = vrot.lane.b32.xlu0 %v44, 17
  %v299 = vpop.permute.xlu0 %298
  %300 = vrot.lane.b32.xlu0 %v45, 17
  %v301 = vpop.permute.xlu0 %300
  %vm302 = vcmask 138240
  %v303 = vsel %vm302, %v289, %v291
  %v304 = vsel %vm302, %v291, %v293
  %v305 = vsel %vm302, %v293, %v295
  %v306 = vsel %vm302, %v295, %v297
  %v307 = vsel %vm302, %v297, %v299
  %v308 = vsel %vm302, %v299, %v301
  %v310 = vsel %vm67, %v17, 0
  %v313 = vsel %vm71, %v303, 0
  %v316 = vsel %vm71, %v304, 0
  %v319 = vsel %vm71, %v305, 0
  %v322 = vsel %vm71, %v306, 0
  %v325 = vsel %vm71, %v307, 0
  %v328 = vsel %vm71, %v308, 0
  %330 = vmatpush.bf16.msra.mxu0 0
  %331 = vmatpush.bf16.msra.mxu0 0
  %332 = vmatpush.bf16.msra.mxu0 0
  %333 = vmatpush.bf16.msra.mxu0 0
  %334 = vmatpush.bf16.msra.mxu0 0
  %335 = vmatpush.bf16.msra.mxu0 0
  %336 = vmatpush.bf16.msra.mxu0 0
  %337 = vmatpush.bf16.msra.mxu0 %v313
  %338 = vmatmul.bf16.gmra.mxu0 %v310
  %v339 = vpop.f32.mrf.mxu0
  %v340 = vadd.f32 0.0, %v339
  %v341 = vpop.f32.mrf.mxu0
  %342 = vdwg.mxu0
  %343 = vmatpush.bf16.msra.mxu0 0
  %344 = vmatpush.bf16.msra.mxu0 0
  %345 = vmatpush.bf16.msra.mxu0 0
  %346 = vmatpush.bf16.msra.mxu0 0
  %347 = vmatpush.bf16.msra.mxu0 0
  %348 = vmatpush.bf16.msra.mxu0 0
  %349 = vmatpush.bf16.msra.mxu0 0
  %350 = vmatpush.bf16.msra.mxu0 %v316
  %351 = vmatmul.bf16.gmra.mxu0 %v310
  %v352 = vpop.f32.mrf.mxu0
  %v353 = vadd.f32 0.0, %v352
  %v354 = vpop.f32.mrf.mxu0
  %355 = vdwg.mxu0
  %356 = vmatpush.bf16.msra.mxu0 0
  %357 = vmatpush.bf16.msra.mxu0 0
  %358 = vmatpush.bf16.msra.mxu0 0
  %359 = vmatpush.bf16.msra.mxu0 0
  %360 = vmatpush.bf16.msra.mxu0 0
  %361 = vmatpush.bf16.msra.mxu0 0
  %362 = vmatpush.bf16.msra.mxu0 0
  %363 = vmatpush.bf16.msra.mxu0 %v319
  %364 = vmatmul.bf16.gmra.mxu0 %v310
  %v365 = vpop.f32.mrf.mxu0
  %v366 = vadd.f32 0.0, %v365
  %v367 = vpop.f32.mrf.mxu0
  %368 = vdwg.mxu0
  %369 = vmatpush.bf16.msra.mxu0 0
  %370 = vmatpush.bf16.msra.mxu0 0
  %371 = vmatpush.bf16.msra.mxu0 0
  %372 = vmatpush.bf16.msra.mxu0 0
  %373 = vmatpush.bf16.msra.mxu0 0
  %374 = vmatpush.bf16.msra.mxu0 0
  %375 = vmatpush.bf16.msra.mxu0 0
  %376 = vmatpush.bf16.msra.mxu0 %v322
  %377 = vmatmul.bf16.gmra.mxu0 %v310
  %v378 = vpop.f32.mrf.mxu0
  %v379 = vadd.f32 0.0, %v378
  %v380 = vpop.f32.mrf.mxu0
  %381 = vdwg.mxu0
  %382 = vmatpush.bf16.msra.mxu0 0
  %383 = vmatpush.bf16.msra.mxu0 0
  %384 = vmatpush.bf16.msra.mxu0 0
  %385 = vmatpush.bf16.msra.mxu0 0
  %386 = vmatpush.bf16.msra.mxu0 0
  %387 = vmatpush.bf16.msra.mxu0 0
  %388 = vmatpush.bf16.msra.mxu0 0
  %389 = vmatpush.bf16.msra.mxu0 %v325
  %390 = vmatmul.bf16.gmra.mxu0 %v310
  %v391 = vpop.f32.mrf.mxu0
  %v392 = vadd.f32 0.0, %v391
  %v393 = vpop.f32.mrf.mxu0
  %394 = vdwg.mxu0
  %395 = vmatpush.bf16.msra.mxu0 0
  %396 = vmatpush.bf16.msra.mxu0 0
  %397 = vmatpush.bf16.msra.mxu0 0
  %398 = vmatpush.bf16.msra.mxu0 0
  %399 = vmatpush.bf16.msra.mxu0 0
  %400 = vmatpush.bf16.msra.mxu0 0
  %401 = vmatpush.bf16.msra.mxu0 0
  %402 = vmatpush.bf16.msra.mxu0 %v328
  %403 = vmatmul.bf16.gmra.mxu0 %v310
  %v404 = vpop.f32.mrf.mxu0
  %v405 = vadd.f32 0.0, %v404
  %v406 = vpop.f32.mrf.mxu0
  %407 = vdwg.mxu0
  %v408 = vadd.f32 %v220, %v340
  %v409 = vadd.f32 %v233, %v353
  %v410 = vadd.f32 %v246, %v366
  %v411 = vadd.f32 %v259, %v379
  %v412 = vadd.f32 %v272, %v392
  %v413 = vadd.f32 %v285, %v405
  %414 = vrot.lane.b32.xlu0 %v39, 1
  %v415 = vpop.permute.xlu0 %414
  %416 = vrot.lane.b32.xlu0 %v40, 1
  %v417 = vpop.permute.xlu0 %416
  %418 = vrot.lane.b32.xlu0 %v41, 1
  %v419 = vpop.permute.xlu0 %418
  %420 = vrot.lane.b32.xlu0 %v42, 1
  %v421 = vpop.permute.xlu0 %420
  %422 = vrot.lane.b32.xlu0 %v43, 1
  %v423 = vpop.permute.xlu0 %422
  %424 = vrot.lane.b32.xlu0 %v44, 1
  %v425 = vpop.permute.xlu0 %424
  %426 = vrot.lane.b32.xlu0 %v45, 1
  %v427 = vpop.permute.xlu0 %426
  %vm428 = vcmask 7168
  %v429 = vsel %vm428, %v415, %v417
  %v430 = vsel %vm428, %v417, %v419
  %v431 = vsel %vm428, %v419, %v421
  %v432 = vsel %vm428, %v421, %v423
  %v433 = vsel %vm428, %v423, %v425
  %v434 = vsel %vm428, %v425, %v427
  %v436 = vsel %vm67, %v18, 0
  %v439 = vsel %vm71, %v429, 0
  %v442 = vsel %vm71, %v430, 0
  %v445 = vsel %vm71, %v431, 0
  %v448 = vsel %vm71, %v432, 0
  %v451 = vsel %vm71, %v433, 0
  %v454 = vsel %vm71, %v434, 0
  %456 = vmatpush.bf16.msra.mxu0 0
  %457 = vmatpush.bf16.msra.mxu0 0
  %458 = vmatpush.bf16.msra.mxu0 0
  %459 = vmatpush.bf16.msra.mxu0 0
  %460 = vmatpush.bf16.msra.mxu0 0
  %461 = vmatpush.bf16.msra.mxu0 0
  %462 = vmatpush.bf16.msra.mxu0 0
  %463 = vmatpush.bf16.msra.mxu0 %v439
  %464 = vmatmul.bf16.gmra.mxu0 %v436
  %v465 = vpop.f32.mrf.mxu0
  %v466 = vadd.f32 0.0, %v465
  %v467 = vpop.f32.mrf.mxu0
  %468 = vdwg.mxu0
  %469 = vmatpush.bf16.msra.mxu0 0
  %470 = vmatpush.bf16.msra.mxu0 0
  %471 = vmatpush.bf16.msra.mxu0 0
  %472 = vmatpush.bf16.msra.mxu0 0
  %473 = vmatpush.bf16.msra.mxu0 0
  %474 = vmatpush.bf16.msra.mxu0 0
  %475 = vmatpush.bf16.msra.mxu0 0
  %476 = vmatpush.bf16.msra.mxu0 %v442
  %477 = vmatmul.bf16.gmra.mxu0 %v436
  %v478 = vpop.f32.mrf.mxu0
  %v479 = vadd.f32 0.0, %v478
  %v480 = vpop.f32.mrf.mxu0
  %481 = vdwg.mxu0
  %482 = vmatpush.bf16.msra.mxu0 0
  %483 = vmatpush.bf16.msra.mxu0 0
  %484 = vmatpush.bf16.msra.mxu0 0
  %485 = vmatpush.bf16.msra.mxu0 0
  %486 = vmatpush.bf16.msra.mxu0 0
  %487 = vmatpush.bf16.msra.mxu0 0
  %488 = vmatpush.bf16.msra.mxu0 0
  %489 = vmatpush.bf16.msra.mxu0 %v445
  %490 = vmatmul.bf16.gmra.mxu0 %v436
  %v491 = vpop.f32.mrf.mxu0
  %v492 = vadd.f32 0.0, %v491
  %v493 = vpop.f32.mrf.mxu0
  %494 = vdwg.mxu0
  %495 = vmatpush.bf16.msra.mxu0 0
  %496 = vmatpush.bf16.msra.mxu0 0
  %497 = vmatpush.bf16.msra.mxu0 0
  %498 = vmatpush.bf16.msra.mxu0 0
  %499 = vmatpush.bf16.msra.mxu0 0
  %500 = vmatpush.bf16.msra.mxu0 0
  %501 = vmatpush.bf16.msra.mxu0 0
  %502 = vmatpush.bf16.msra.mxu0 %v448
  %503 = vmatmul.bf16.gmra.mxu0 %v436
  %v504 = vpop.f32.mrf.mxu0
  %v505 = vadd.f32 0.0, %v504
  %v506 = vpop.f32.mrf.mxu0
  %507 = vdwg.mxu0
  %508 = vmatpush.bf16.msra.mxu0 0
  %509 = vmatpush.bf16.msra.mxu0 0
  %510 = vmatpush.bf16.msra.mxu0 0
  %511 = vmatpush.bf16.msra.mxu0 0
  %512 = vmatpush.bf16.msra.mxu0 0
  %513 = vmatpush.bf16.msra.mxu0 0
  %514 = vmatpush.bf16.msra.mxu0 0
  %515 = vmatpush.bf16.msra.mxu0 %v451
  %516 = vmatmul.bf16.gmra.mxu0 %v436
  %v517 = vpop.f32.mrf.mxu0
  %v518 = vadd.f32 0.0, %v517
  %v519 = vpop.f32.mrf.mxu0
  %520 = vdwg.mxu0
  %521 = vmatpush.bf16.msra.mxu0 0
  %522 = vmatpush.bf16.msra.mxu0 0
  %523 = vmatpush.bf16.msra.mxu0 0
  %524 = vmatpush.bf16.msra.mxu0 0
  %525 = vmatpush.bf16.msra.mxu0 0
  %526 = vmatpush.bf16.msra.mxu0 0
  %527 = vmatpush.bf16.msra.mxu0 0
  %528 = vmatpush.bf16.msra.mxu0 %v454
  %529 = vmatmul.bf16.gmra.mxu0 %v436
  %v530 = vpop.f32.mrf.mxu0
  %v531 = vadd.f32 0.0, %v530
  %v532 = vpop.f32.mrf.mxu0
  %533 = vdwg.mxu0
  %v534 = vadd.f32 %v408, %v466
  %v535 = vadd.f32 %v409, %v479
  %v536 = vadd.f32 %v410, %v492
  %v537 = vadd.f32 %v411, %v505
  %v538 = vadd.f32 %v412, %v518
  %v539 = vadd.f32 %v413, %v531
  %v540 = vld [vmem:[%s0 + $0x4] sm:$0xff]
  %v541 = vld [vmem:[%s0 + $0xc] sm:$0xff]
  %v542 = vld [vmem:[%s0 + $0x14] sm:$0xff]
  %v546 = vunpack.c.l.b16 %v540
  %v547 = vunpack.c.h.b16 %v540
  %v548 = vunpack.c.l.b16 %v541
  %v549 = vunpack.c.h.b16 %v541
  %v550 = vunpack.c.l.b16 %v542
  %v551 = vunpack.c.h.b16 %v542
  %v552 = vpack.c.b16 %v546, %v546
  %v553 = vpack.c.b16 %v547, %v547
  %v554 = vpack.c.b16 %v548, %v548
  %v555 = vpack.c.b16 %v549, %v549
  %v556 = vpack.c.b16 %v550, %v550
  %v557 = vpack.c.b16 %v551, %v551
  %v559 = vsel %vm67, %v19, 0
  %v562 = vsel %vm71, %v552, 0
  %v565 = vsel %vm71, %v553, 0
  %v568 = vsel %vm71, %v554, 0
  %v571 = vsel %vm71, %v555, 0
  %v574 = vsel %vm71, %v556, 0
  %v577 = vsel %vm71, %v557, 0
  %579 = vmatpush.bf16.msra.mxu0 0
  %580 = vmatpush.bf16.msra.mxu0 0
  %581 = vmatpush.bf16.msra.mxu0 0
  %582 = vmatpush.bf16.msra.mxu0 0
  %583 = vmatpush.bf16.msra.mxu0 0
  %584 = vmatpush.bf16.msra.mxu0 0
  %585 = vmatpush.bf16.msra.mxu0 0
  %586 = vmatpush.bf16.msra.mxu0 %v562
  %587 = vmatmul.bf16.gmra.mxu0 %v559
  %v588 = vpop.f32.mrf.mxu0
  %v589 = vadd.f32 0.0, %v588
  %v590 = vpop.f32.mrf.mxu0
  %591 = vdwg.mxu0
  %592 = vmatpush.bf16.msra.mxu0 0
  %593 = vmatpush.bf16.msra.mxu0 0
  %594 = vmatpush.bf16.msra.mxu0 0
  %595 = vmatpush.bf16.msra.mxu0 0
  %596 = vmatpush.bf16.msra.mxu0 0
  %597 = vmatpush.bf16.msra.mxu0 0
  %598 = vmatpush.bf16.msra.mxu0 0
  %599 = vmatpush.bf16.msra.mxu0 %v565
  %600 = vmatmul.bf16.gmra.mxu0 %v559
  %v601 = vpop.f32.mrf.mxu0
  %v602 = vadd.f32 0.0, %v601
  %v603 = vpop.f32.mrf.mxu0
  %604 = vdwg.mxu0
  %605 = vmatpush.bf16.msra.mxu0 0
  %606 = vmatpush.bf16.msra.mxu0 0
  %607 = vmatpush.bf16.msra.mxu0 0
  %608 = vmatpush.bf16.msra.mxu0 0
  %609 = vmatpush.bf16.msra.mxu0 0
  %610 = vmatpush.bf16.msra.mxu0 0
  %611 = vmatpush.bf16.msra.mxu0 0
  %612 = vmatpush.bf16.msra.mxu0 %v568
  %613 = vmatmul.bf16.gmra.mxu0 %v559
  %v614 = vpop.f32.mrf.mxu0
  %v615 = vadd.f32 0.0, %v614
  %v616 = vpop.f32.mrf.mxu0
  %617 = vdwg.mxu0
  %618 = vmatpush.bf16.msra.mxu0 0
  %619 = vmatpush.bf16.msra.mxu0 0
  %620 = vmatpush.bf16.msra.mxu0 0
  %621 = vmatpush.bf16.msra.mxu0 0
  %622 = vmatpush.bf16.msra.mxu0 0
  %623 = vmatpush.bf16.msra.mxu0 0
  %624 = vmatpush.bf16.msra.mxu0 0
  %625 = vmatpush.bf16.msra.mxu0 %v571
  %626 = vmatmul.bf16.gmra.mxu0 %v559
  %v627 = vpop.f32.mrf.mxu0
  %v628 = vadd.f32 0.0, %v627
  %v629 = vpop.f32.mrf.mxu0
  %630 = vdwg.mxu0
  %631 = vmatpush.bf16.msra.mxu0 0
  %632 = vmatpush.bf16.msra.mxu0 0
  %633 = vmatpush.bf16.msra.mxu0 0
  %634 = vmatpush.bf16.msra.mxu0 0
  %635 = vmatpush.bf16.msra.mxu0 0
  %636 = vmatpush.bf16.msra.mxu0 0
  %637 = vmatpush.bf16.msra.mxu0 0
  %638 = vmatpush.bf16.msra.mxu0 %v574
  %639 = vmatmul.bf16.gmra.mxu0 %v559
  %v640 = vpop.f32.mrf.mxu0
  %v641 = vadd.f32 0.0, %v640
  %v642 = vpop.f32.mrf.mxu0
  %643 = vdwg.mxu0
  %644 = vmatpush.bf16.msra.mxu0 0
  %645 = vmatpush.bf16.msra.mxu0 0
  %646 = vmatpush.bf16.msra.mxu0 0
  %647 = vmatpush.bf16.msra.mxu0 0
  %648 = vmatpush.bf16.msra.mxu0 0
  %649 = vmatpush.bf16.msra.mxu0 0
  %650 = vmatpush.bf16.msra.mxu0 0
  %651 = vmatpush.bf16.msra.mxu0 %v577
  %652 = vmatmul.bf16.gmra.mxu0 %v559
  %v653 = vpop.f32.mrf.mxu0
  %v654 = vadd.f32 0.0, %v653
  %v655 = vpop.f32.mrf.mxu0
  %656 = vdwg.mxu0
  %v657 = vadd.f32 %v534, %v589
  %v658 = vadd.f32 %v535, %v602
  %v659 = vadd.f32 %v536, %v615
  %v660 = vadd.f32 %v537, %v628
  %v661 = vadd.f32 %v538, %v641
  %v662 = vadd.f32 %v539, %v654
  %v663 = vld [vmem:[%s0 + $0x4] sm:$0xff]
  %v664 = vld [vmem:[%s0 + $0xc] sm:$0xff]
  %v665 = vld [vmem:[%s0 + $0x14] sm:$0xff]
  %v666 = vld [vmem:[%s0 + $0x1c] sm:$0xf]
  %v671 = vunpack.c.l.b16 %v663
  %v672 = vunpack.c.h.b16 %v663
  %v673 = vunpack.c.l.b16 %v664
  %v674 = vunpack.c.h.b16 %v664
  %v675 = vunpack.c.l.b16 %v665
  %v676 = vunpack.c.h.b16 %v665
  %v677 = vunpack.c.l.b16 %v666
  %v678 = vpack.c.b16 %v671, %v671
  %v679 = vpack.c.b16 %v672, %v672
  %v680 = vpack.c.b16 %v673, %v673
  %v681 = vpack.c.b16 %v674, %v674
  %v682 = vpack.c.b16 %v675, %v675
  %v683 = vpack.c.b16 %v676, %v676
  %v684 = vpack.c.b16 %v677, %v677
  %685 = vrot.lane.b32.xlu0 %v678, 127
  %v686 = vpop.permute.xlu0 %685
  %687 = vrot.lane.b32.xlu0 %v679, 127
  %v688 = vpop.permute.xlu0 %687
  %689 = vrot.lane.b32.xlu0 %v680, 127
  %v690 = vpop.permute.xlu0 %689
  %691 = vrot.lane.b32.xlu0 %v681, 127
  %v692 = vpop.permute.xlu0 %691
  %693 = vrot.lane.b32.xlu0 %v682, 127
  %v694 = vpop.permute.xlu0 %693
  %695 = vrot.lane.b32.xlu0 %v683, 127
  %v696 = vpop.permute.xlu0 %695
  %697 = vrot.lane.b32.xlu0 %v684, 127
  %v698 = vpop.permute.xlu0 %697
  %vm699 = vcmask 1039360
  %v700 = vsel %vm699, %v686, %v688
  %v701 = vsel %vm699, %v688, %v690
  %v702 = vsel %vm699, %v690, %v692
  %v703 = vsel %vm699, %v692, %v694
  %v704 = vsel %vm699, %v694, %v696
  %v705 = vsel %vm699, %v696, %v698
  %v707 = vsel %vm67, %v20, 0
  %v710 = vsel %vm71, %v700, 0
  %v713 = vsel %vm71, %v701, 0
  %v716 = vsel %vm71, %v702, 0
  %v719 = vsel %vm71, %v703, 0
  %v722 = vsel %vm71, %v704, 0
  %v725 = vsel %vm71, %v705, 0
  %727 = vmatpush.bf16.msra.mxu0 0
  %728 = vmatpush.bf16.msra.mxu0 0
  %729 = vmatpush.bf16.msra.mxu0 0
  %730 = vmatpush.bf16.msra.mxu0 0
  %731 = vmatpush.bf16.msra.mxu0 0
  %732 = vmatpush.bf16.msra.mxu0 0
  %733 = vmatpush.bf16.msra.mxu0 0
  %734 = vmatpush.bf16.msra.mxu0 %v710
  %735 = vmatmul.bf16.gmra.mxu0 %v707
  %v736 = vpop.f32.mrf.mxu0
  %v737 = vadd.f32 0.0, %v736
  %v738 = vpop.f32.mrf.mxu0
  %739 = vdwg.mxu0
  %740 = vmatpush.bf16.msra.mxu0 0
  %741 = vmatpush.bf16.msra.mxu0 0
  %742 = vmatpush.bf16.msra.mxu0 0
  %743 = vmatpush.bf16.msra.mxu0 0
  %744 = vmatpush.bf16.msra.mxu0 0
  %745 = vmatpush.bf16.msra.mxu0 0
  %746 = vmatpush.bf16.msra.mxu0 0
  %747 = vmatpush.bf16.msra.mxu0 %v713
  %748 = vmatmul.bf16.gmra.mxu0 %v707
  %v749 = vpop.f32.mrf.mxu0
  %v750 = vadd.f32 0.0, %v749
  %v751 = vpop.f32.mrf.mxu0
  %752 = vdwg.mxu0
  %753 = vmatpush.bf16.msra.mxu0 0
  %754 = vmatpush.bf16.msra.mxu0 0
  %755 = vmatpush.bf16.msra.mxu0 0
  %756 = vmatpush.bf16.msra.mxu0 0
  %757 = vmatpush.bf16.msra.mxu0 0
  %758 = vmatpush.bf16.msra.mxu0 0
  %759 = vmatpush.bf16.msra.mxu0 0
  %760 = vmatpush.bf16.msra.mxu0 %v716
  %761 = vmatmul.bf16.gmra.mxu0 %v707
  %v762 = vpop.f32.mrf.mxu0
  %v763 = vadd.f32 0.0, %v762
  %v764 = vpop.f32.mrf.mxu0
  %765 = vdwg.mxu0
  %766 = vmatpush.bf16.msra.mxu0 0
  %767 = vmatpush.bf16.msra.mxu0 0
  %768 = vmatpush.bf16.msra.mxu0 0
  %769 = vmatpush.bf16.msra.mxu0 0
  %770 = vmatpush.bf16.msra.mxu0 0
  %771 = vmatpush.bf16.msra.mxu0 0
  %772 = vmatpush.bf16.msra.mxu0 0
  %773 = vmatpush.bf16.msra.mxu0 %v719
  %774 = vmatmul.bf16.gmra.mxu0 %v707
  %v775 = vpop.f32.mrf.mxu0
  %v776 = vadd.f32 0.0, %v775
  %v777 = vpop.f32.mrf.mxu0
  %778 = vdwg.mxu0
  %779 = vmatpush.bf16.msra.mxu0 0
  %780 = vmatpush.bf16.msra.mxu0 0
  %781 = vmatpush.bf16.msra.mxu0 0
  %782 = vmatpush.bf16.msra.mxu0 0
  %783 = vmatpush.bf16.msra.mxu0 0
  %784 = vmatpush.bf16.msra.mxu0 0
  %785 = vmatpush.bf16.msra.mxu0 0
  %786 = vmatpush.bf16.msra.mxu0 %v722
  %787 = vmatmul.bf16.gmra.mxu0 %v707
  %v788 = vpop.f32.mrf.mxu0
  %v789 = vadd.f32 0.0, %v788
  %v790 = vpop.f32.mrf.mxu0
  %791 = vdwg.mxu0
  %792 = vmatpush.bf16.msra.mxu0 0
  %793 = vmatpush.bf16.msra.mxu0 0
  %794 = vmatpush.bf16.msra.mxu0 0
  %795 = vmatpush.bf16.msra.mxu0 0
  %796 = vmatpush.bf16.msra.mxu0 0
  %797 = vmatpush.bf16.msra.mxu0 0
  %798 = vmatpush.bf16.msra.mxu0 0
  %799 = vmatpush.bf16.msra.mxu0 %v725
  %800 = vmatmul.bf16.gmra.mxu0 %v707
  %v801 = vpop.f32.mrf.mxu0
  %v802 = vadd.f32 0.0, %v801
  %v803 = vpop.f32.mrf.mxu0
  %804 = vdwg.mxu0
  %v805 = vadd.f32 %v657, %v737
  %v806 = vadd.f32 %v658, %v750
  %v807 = vadd.f32 %v659, %v763
  %v808 = vadd.f32 %v660, %v776
  %v809 = vadd.f32 %v661, %v789
  %v810 = vadd.f32 %v662, %v802
  %811 = vrot.lane.b32.xlu0 %v678, 111
  %v812 = vpop.permute.xlu0 %811
  %813 = vrot.lane.b32.xlu0 %v679, 111
  %v814 = vpop.permute.xlu0 %813
  %815 = vrot.lane.b32.xlu0 %v680, 111
  %v816 = vpop.permute.xlu0 %815
  %817 = vrot.lane.b32.xlu0 %v681, 111
  %v818 = vpop.permute.xlu0 %817
  %819 = vrot.lane.b32.xlu0 %v682, 111
  %v820 = vpop.permute.xlu0 %819
  %821 = vrot.lane.b32.xlu0 %v683, 111
  %v822 = vpop.permute.xlu0 %821
  %823 = vrot.lane.b32.xlu0 %v684, 111
  %v824 = vpop.permute.xlu0 %823
  %vm825 = vcmask 908288
  %v826 = vsel %vm825, %v812, %v814
  %v827 = vsel %vm825, %v814, %v816
  %v828 = vsel %vm825, %v816, %v818
  %v829 = vsel %vm825, %v818, %v820
  %v830 = vsel %vm825, %v820, %v822
  %v831 = vsel %vm825, %v822, %v824
  %v833 = vsel %vm67, %v21, 0
  %v836 = vsel %vm71, %v826, 0
  %v839 = vsel %vm71, %v827, 0
  %v842 = vsel %vm71, %v828, 0
  %v845 = vsel %vm71, %v829, 0
  %v848 = vsel %vm71, %v830, 0
  %v851 = vsel %vm71, %v831, 0
  %853 = vmatpush.bf16.msra.mxu0 0
  %854 = vmatpush.bf16.msra.mxu0 0
  %855 = vmatpush.bf16.msra.mxu0 0
  %856 = vmatpush.bf16.msra.mxu0 0
  %857 = vmatpush.bf16.msra.mxu0 0
  %858 = vmatpush.bf16.msra.mxu0 0
  %859 = vmatpush.bf16.msra.mxu0 0
  %860 = vmatpush.bf16.msra.mxu0 %v836
  %861 = vmatmul.bf16.gmra.mxu0 %v833
  %v862 = vpop.f32.mrf.mxu0
  %v863 = vadd.f32 0.0, %v862
  %v864 = vpop.f32.mrf.mxu0
  %865 = vdwg.mxu0
  %866 = vmatpush.bf16.msra.mxu0 0
  %867 = vmatpush.bf16.msra.mxu0 0
  %868 = vmatpush.bf16.msra.mxu0 0
  %869 = vmatpush.bf16.msra.mxu0 0
  %870 = vmatpush.bf16.msra.mxu0 0
  %871 = vmatpush.bf16.msra.mxu0 0
  %872 = vmatpush.bf16.msra.mxu0 0
  %873 = vmatpush.bf16.msra.mxu0 %v839
  %874 = vmatmul.bf16.gmra.mxu0 %v833
  %v875 = vpop.f32.mrf.mxu0
  %v876 = vadd.f32 0.0, %v875
  %v877 = vpop.f32.mrf.mxu0
  %878 = vdwg.mxu0
  %879 = vmatpush.bf16.msra.mxu0 0
  %880 = vmatpush.bf16.msra.mxu0 0
  %881 = vmatpush.bf16.msra.mxu0 0
  %882 = vmatpush.bf16.msra.mxu0 0
  %883 = vmatpush.bf16.msra.mxu0 0
  %884 = vmatpush.bf16.msra.mxu0 0
  %885 = vmatpush.bf16.msra.mxu0 0
  %886 = vmatpush.bf16.msra.mxu0 %v842
  %887 = vmatmul.bf16.gmra.mxu0 %v833
  %v888 = vpop.f32.mrf.mxu0
  %v889 = vadd.f32 0.0, %v888
  %v890 = vpop.f32.mrf.mxu0
  %891 = vdwg.mxu0
  %892 = vmatpush.bf16.msra.mxu0 0
  %893 = vmatpush.bf16.msra.mxu0 0
  %894 = vmatpush.bf16.msra.mxu0 0
  %895 = vmatpush.bf16.msra.mxu0 0
  %896 = vmatpush.bf16.msra.mxu0 0
  %897 = vmatpush.bf16.msra.mxu0 0
  %898 = vmatpush.bf16.msra.mxu0 0
  %899 = vmatpush.bf16.msra.mxu0 %v845
  %900 = vmatmul.bf16.gmra.mxu0 %v833
  %v901 = vpop.f32.mrf.mxu0
  %v902 = vadd.f32 0.0, %v901
  %v903 = vpop.f32.mrf.mxu0
  %904 = vdwg.mxu0
  %905 = vmatpush.bf16.msra.mxu0 0
  %906 = vmatpush.bf16.msra.mxu0 0
  %907 = vmatpush.bf16.msra.mxu0 0
  %908 = vmatpush.bf16.msra.mxu0 0
  %909 = vmatpush.bf16.msra.mxu0 0
  %910 = vmatpush.bf16.msra.mxu0 0
  %911 = vmatpush.bf16.msra.mxu0 0
  %912 = vmatpush.bf16.msra.mxu0 %v848
  %913 = vmatmul.bf16.gmra.mxu0 %v833
  %v914 = vpop.f32.mrf.mxu0
  %v915 = vadd.f32 0.0, %v914
  %v916 = vpop.f32.mrf.mxu0
  %917 = vdwg.mxu0
  %918 = vmatpush.bf16.msra.mxu0 0
  %919 = vmatpush.bf16.msra.mxu0 0
  %920 = vmatpush.bf16.msra.mxu0 0
  %921 = vmatpush.bf16.msra.mxu0 0
  %922 = vmatpush.bf16.msra.mxu0 0
  %923 = vmatpush.bf16.msra.mxu0 0
  %924 = vmatpush.bf16.msra.mxu0 0
  %925 = vmatpush.bf16.msra.mxu0 %v851
  %926 = vmatmul.bf16.gmra.mxu0 %v833
  %v927 = vpop.f32.mrf.mxu0
  %v928 = vadd.f32 0.0, %v927
  %v929 = vpop.f32.mrf.mxu0
  %930 = vdwg.mxu0
  %v931 = vadd.f32 %v805, %v863
  %v932 = vadd.f32 %v806, %v876
  %v933 = vadd.f32 %v807, %v889
  %v934 = vadd.f32 %v808, %v902
  %v935 = vadd.f32 %v809, %v915
  %v936 = vadd.f32 %v810, %v928
  %937 = vrot.lane.b32.xlu0 %v678, 110
  %v938 = vpop.permute.xlu0 %937
  %939 = vrot.lane.b32.xlu0 %v679, 110
  %v940 = vpop.permute.xlu0 %939
  %941 = vrot.lane.b32.xlu0 %v680, 110
  %v942 = vpop.permute.xlu0 %941
  %943 = vrot.lane.b32.xlu0 %v681, 110
  %v944 = vpop.permute.xlu0 %943
  %945 = vrot.lane.b32.xlu0 %v682, 110
  %v946 = vpop.permute.xlu0 %945
  %947 = vrot.lane.b32.xlu0 %v683, 110
  %v948 = vpop.permute.xlu0 %947
  %949 = vrot.lane.b32.xlu0 %v684, 110
  %v950 = vpop.permute.xlu0 %949
  %vm951 = vcmask 900096
  %v952 = vsel %vm951, %v938, %v940
  %v953 = vsel %vm951, %v940, %v942
  %v954 = vsel %vm951, %v942, %v944
  %v955 = vsel %vm951, %v944, %v946
  %v956 = vsel %vm951, %v946, %v948
  %v957 = vsel %vm951, %v948, %v950
  %v959 = vsel %vm67, %v22, 0
  %v962 = vsel %vm71, %v952, 0
  %v965 = vsel %vm71, %v953, 0
  %v968 = vsel %vm71, %v954, 0
  %v971 = vsel %vm71, %v955, 0
  %v974 = vsel %vm71, %v956, 0
  %v977 = vsel %vm71, %v957, 0
  %979 = vmatpush.bf16.msra.mxu0 0
  %980 = vmatpush.bf16.msra.mxu0 0
  %981 = vmatpush.bf16.msra.mxu0 0
  %982 = vmatpush.bf16.msra.mxu0 0
  %983 = vmatpush.bf16.msra.mxu0 0
  %984 = vmatpush.bf16.msra.mxu0 0
  %985 = vmatpush.bf16.msra.mxu0 0
  %986 = vmatpush.bf16.msra.mxu0 %v962
  %987 = vmatmul.bf16.gmra.mxu0 %v959
  %v988 = vpop.f32.mrf.mxu0
  %v989 = vadd.f32 0.0, %v988
  %v990 = vpop.f32.mrf.mxu0
  %991 = vdwg.mxu0
  %992 = vmatpush.bf16.msra.mxu0 0
  %993 = vmatpush.bf16.msra.mxu0 0
  %994 = vmatpush.bf16.msra.mxu0 0
  %995 = vmatpush.bf16.msra.mxu0 0
  %996 = vmatpush.bf16.msra.mxu0 0
  %997 = vmatpush.bf16.msra.mxu0 0
  %998 = vmatpush.bf16.msra.mxu0 0
  %999 = vmatpush.bf16.msra.mxu0 %v965
  %1000 = vmatmul.bf16.gmra.mxu0 %v959
  %v1001 = vpop.f32.mrf.mxu0
  %v1002 = vadd.f32 0.0, %v1001
  %v1003 = vpop.f32.mrf.mxu0
  %1004 = vdwg.mxu0
  %1005 = vmatpush.bf16.msra.mxu0 0
  %1006 = vmatpush.bf16.msra.mxu0 0
  %1007 = vmatpush.bf16.msra.mxu0 0
  %1008 = vmatpush.bf16.msra.mxu0 0
  %1009 = vmatpush.bf16.msra.mxu0 0
  %1010 = vmatpush.bf16.msra.mxu0 0
  %1011 = vmatpush.bf16.msra.mxu0 0
  %1012 = vmatpush.bf16.msra.mxu0 %v968
  %1013 = vmatmul.bf16.gmra.mxu0 %v959
  %v1014 = vpop.f32.mrf.mxu0
  %v1015 = vadd.f32 0.0, %v1014
  %v1016 = vpop.f32.mrf.mxu0
  %1017 = vdwg.mxu0
  %1018 = vmatpush.bf16.msra.mxu0 0
  %1019 = vmatpush.bf16.msra.mxu0 0
  %1020 = vmatpush.bf16.msra.mxu0 0
  %1021 = vmatpush.bf16.msra.mxu0 0
  %1022 = vmatpush.bf16.msra.mxu0 0
  %1023 = vmatpush.bf16.msra.mxu0 0
  %1024 = vmatpush.bf16.msra.mxu0 0
  %1025 = vmatpush.bf16.msra.mxu0 %v971
  %1026 = vmatmul.bf16.gmra.mxu0 %v959
  %v1027 = vpop.f32.mrf.mxu0
  %v1028 = vadd.f32 0.0, %v1027
  %v1029 = vpop.f32.mrf.mxu0
  %1030 = vdwg.mxu0
  %1031 = vmatpush.bf16.msra.mxu0 0
  %1032 = vmatpush.bf16.msra.mxu0 0
  %1033 = vmatpush.bf16.msra.mxu0 0
  %1034 = vmatpush.bf16.msra.mxu0 0
  %1035 = vmatpush.bf16.msra.mxu0 0
  %1036 = vmatpush.bf16.msra.mxu0 0
  %1037 = vmatpush.bf16.msra.mxu0 0
  %1038 = vmatpush.bf16.msra.mxu0 %v974
  %1039 = vmatmul.bf16.gmra.mxu0 %v959
  %v1040 = vpop.f32.mrf.mxu0
  %v1041 = vadd.f32 0.0, %v1040
  %v1042 = vpop.f32.mrf.mxu0
  %1043 = vdwg.mxu0
  %1044 = vmatpush.bf16.msra.mxu0 0
  %1045 = vmatpush.bf16.msra.mxu0 0
  %1046 = vmatpush.bf16.msra.mxu0 0
  %1047 = vmatpush.bf16.msra.mxu0 0
  %1048 = vmatpush.bf16.msra.mxu0 0
  %1049 = vmatpush.bf16.msra.mxu0 0
  %1050 = vmatpush.bf16.msra.mxu0 0
  %1051 = vmatpush.bf16.msra.mxu0 %v977
  %1052 = vmatmul.bf16.gmra.mxu0 %v959
  %v1053 = vpop.f32.mrf.mxu0
  %v1054 = vadd.f32 0.0, %v1053
  %v1055 = vpop.f32.mrf.mxu0
  %1056 = vdwg.mxu0
  %v1057 = vadd.f32 %v931, %v989
  %v1058 = vadd.f32 %v932, %v1002
  %v1059 = vadd.f32 %v933, %v1015
  %v1060 = vadd.f32 %v934, %v1028
  %v1061 = vadd.f32 %v935, %v1041
  %v1062 = vadd.f32 %v936, %v1054
  %1063 = vrot.lane.b32.xlu0 %v678, 109
  %v1064 = vpop.permute.xlu0 %1063
  %1065 = vrot.lane.b32.xlu0 %v679, 109
  %v1066 = vpop.permute.xlu0 %1065
  %1067 = vrot.lane.b32.xlu0 %v680, 109
  %v1068 = vpop.permute.xlu0 %1067
  %1069 = vrot.lane.b32.xlu0 %v681, 109
  %v1070 = vpop.permute.xlu0 %1069
  %1071 = vrot.lane.b32.xlu0 %v682, 109
  %v1072 = vpop.permute.xlu0 %1071
  %1073 = vrot.lane.b32.xlu0 %v683, 109
  %v1074 = vpop.permute.xlu0 %1073
  %1075 = vrot.lane.b32.xlu0 %v684, 109
  %v1076 = vpop.permute.xlu0 %1075
  %vm1077 = vcmask 891904
  %v1078 = vsel %vm1077, %v1064, %v1066
  %v1079 = vsel %vm1077, %v1066, %v1068
  %v1080 = vsel %vm1077, %v1068, %v1070
  %v1081 = vsel %vm1077, %v1070, %v1072
  %v1082 = vsel %vm1077, %v1072, %v1074
  %v1083 = vsel %vm1077, %v1074, %v1076
  %v1085 = vsel %vm67, %v23, 0
  %v1088 = vsel %vm71, %v1078, 0
  %v1091 = vsel %vm71, %v1079, 0
  %v1094 = vsel %vm71, %v1080, 0
  %v1097 = vsel %vm71, %v1081, 0
  %v1100 = vsel %vm71, %v1082, 0
  %v1103 = vsel %vm71, %v1083, 0
  %1105 = vmatpush.bf16.msra.mxu0 0
  %1106 = vmatpush.bf16.msra.mxu0 0
  %1107 = vmatpush.bf16.msra.mxu0 0
  %1108 = vmatpush.bf16.msra.mxu0 0
  %1109 = vmatpush.bf16.msra.mxu0 0
  %1110 = vmatpush.bf16.msra.mxu0 0
  %1111 = vmatpush.bf16.msra.mxu0 0
  %1112 = vmatpush.bf16.msra.mxu0 %v1088
  %1113 = vmatmul.bf16.gmra.mxu0 %v1085
  %v1114 = vpop.f32.mrf.mxu0
  %v1115 = vadd.f32 0.0, %v1114
  %v1116 = vpop.f32.mrf.mxu0
  %1117 = vdwg.mxu0
  %1118 = vmatpush.bf16.msra.mxu0 0
  %1119 = vmatpush.bf16.msra.mxu0 0
  %1120 = vmatpush.bf16.msra.mxu0 0
  %1121 = vmatpush.bf16.msra.mxu0 0
  %1122 = vmatpush.bf16.msra.mxu0 0
  %1123 = vmatpush.bf16.msra.mxu0 0
  %1124 = vmatpush.bf16.msra.mxu0 0
  %1125 = vmatpush.bf16.msra.mxu0 %v1091
  %1126 = vmatmul.bf16.gmra.mxu0 %v1085
  %v1127 = vpop.f32.mrf.mxu0
  %v1128 = vadd.f32 0.0, %v1127
  %v1129 = vpop.f32.mrf.mxu0
  %1130 = vdwg.mxu0
  %1131 = vmatpush.bf16.msra.mxu0 0
  %1132 = vmatpush.bf16.msra.mxu0 0
  %1133 = vmatpush.bf16.msra.mxu0 0
  %1134 = vmatpush.bf16.msra.mxu0 0
  %1135 = vmatpush.bf16.msra.mxu0 0
  %1136 = vmatpush.bf16.msra.mxu0 0
  %1137 = vmatpush.bf16.msra.mxu0 0
  %1138 = vmatpush.bf16.msra.mxu0 %v1094
  %1139 = vmatmul.bf16.gmra.mxu0 %v1085
  %v1140 = vpop.f32.mrf.mxu0
  %v1141 = vadd.f32 0.0, %v1140
  %v1142 = vpop.f32.mrf.mxu0
  %1143 = vdwg.mxu0
  %1144 = vmatpush.bf16.msra.mxu0 0
  %1145 = vmatpush.bf16.msra.mxu0 0
  %1146 = vmatpush.bf16.msra.mxu0 0
  %1147 = vmatpush.bf16.msra.mxu0 0
  %1148 = vmatpush.bf16.msra.mxu0 0
  %1149 = vmatpush.bf16.msra.mxu0 0
  %1150 = vmatpush.bf16.msra.mxu0 0
  %1151 = vmatpush.bf16.msra.mxu0 %v1097
  %1152 = vmatmul.bf16.gmra.mxu0 %v1085
  %v1153 = vpop.f32.mrf.mxu0
  %v1154 = vadd.f32 0.0, %v1153
  %v1155 = vpop.f32.mrf.mxu0
  %1156 = vdwg.mxu0
  %1157 = vmatpush.bf16.msra.mxu0 0
  %1158 = vmatpush.bf16.msra.mxu0 0
  %1159 = vmatpush.bf16.msra.mxu0 0
  %1160 = vmatpush.bf16.msra.mxu0 0
  %1161 = vmatpush.bf16.msra.mxu0 0
  %1162 = vmatpush.bf16.msra.mxu0 0
  %1163 = vmatpush.bf16.msra.mxu0 0
  %1164 = vmatpush.bf16.msra.mxu0 %v1100
  %1165 = vmatmul.bf16.gmra.mxu0 %v1085
  %v1166 = vpop.f32.mrf.mxu0
  %v1167 = vadd.f32 0.0, %v1166
  %v1168 = vpop.f32.mrf.mxu0
  %1169 = vdwg.mxu0
  %1170 = vmatpush.bf16.msra.mxu0 0
  %1171 = vmatpush.bf16.msra.mxu0 0
  %1172 = vmatpush.bf16.msra.mxu0 0
  %1173 = vmatpush.bf16.msra.mxu0 0
  %1174 = vmatpush.bf16.msra.mxu0 0
  %1175 = vmatpush.bf16.msra.mxu0 0
  %1176 = vmatpush.bf16.msra.mxu0 0
  %1177 = vmatpush.bf16.msra.mxu0 %v1103
  %1178 = vmatmul.bf16.gmra.mxu0 %v1085
  %v1179 = vpop.f32.mrf.mxu0
  %v1180 = vadd.f32 0.0, %v1179
  %v1181 = vpop.f32.mrf.mxu0
  %1182 = vdwg.mxu0
  %v1183 = vadd.f32 %v1057, %v1115
  %v1184 = vadd.f32 %v1058, %v1128
  %v1185 = vadd.f32 %v1059, %v1141
  %v1186 = vadd.f32 %v1060, %v1154
  %v1187 = vadd.f32 %v1061, %v1167
  %v1188 = vadd.f32 %v1062, %v1180
  %v1189 = vld [vmem:[%s2] sm:$0xff]
  %1191 = vset.pattern.permute.xlu0 0
  %1192 = vperm.xlu0 %1191, %v1189
  %v1193 = vpop.permute.xlu0 %1192
  %v1195 = vadd.f32 %v1183, %v1193
  %v1196 = vadd.f32 %v1184, %v1193
  %v1197 = vadd.f32 %v1185, %v1193
  %v1198 = vadd.f32 %v1186, %v1193
  %v1199 = vadd.f32 %v1187, %v1193
  %v1200 = vadd.f32 %v1188, %v1193
  %1201 = vst [vmem:[%s3] sm:$0xff] %v1195
  %1202 = vst [vmem:[%s3 + $0x8] sm:$0xff] %v1196
  %1203 = vst [vmem:[%s3 + $0x10] sm:$0xff] %v1197
  %1204 = vst [vmem:[%s3 + $0x18] sm:$0xff] %v1198
  %1205 = vst [vmem:[%s3 + $0x20] sm:$0xff] %v1199
  %1206 = vst [vmem:[%s3 + $0x28] sm:$0xff] %v1200
  // Predicated region
  $region14: #{recurrent_block_forward.3} parent=0 // pred_check
    _
  $region15: #{recurrent_block_forward.3} parent=0 // pred_check_branch
    %1208 = sbr.rel (0) target = $region17
  $region16: #{recurrent_block_forward.3} parent=0 // pred_region
    _
  $region17: #{recurrent_block_forward.3} parent=0 // pred_fallthru
    _
  // Predicated region
  $region18: #{recurrent_block_forward.3} parent=0 // pred_check
    _
  $region19: #{recurrent_block_forward.3} parent=0 // pred_check_branch
    %1210 = sbr.rel (0) target = $region21
  $region20: #{recurrent_block_forward.3} parent=0 // pred_region
    _
  $region21: #{recurrent_block_forward.3} parent=0 // pred_fallthru
    _

// kernel: recurrent_block_forward.2
$region0: #{recurrent_block_forward.2}
  #allocation0 [shape = 'u32[]', space=smem, size = 0x4, offset = 0x4, fixed_abs, tag = 'smem constant byte address 0x4 - core index']
  #allocation1 [shape = 'u32[72,128]{1,0:T(1,128)}', space=vmem, size = 0x9000, scoped, tag = 'internal scratch']
  #allocation2 [shape = 'bf16[8,1536]{1,0:T(8,128)(2,1)}', space=vmem, size = 0x6000, scoped, tag = 'scratch operand']
  #allocation3 [shape = 'bf16[8,1536]{1,0:T(8,128)(2,1)}', space=vmem, size = 0x6000, scoped, tag = 'scratch operand']
  %s0 = inlined_call_operand.vmem [shape: bf16[24,1536], index: 0, kind: input, shape index: {}]
  %s1 = inlined_call_operand.vmem [shape: f32[1,1280], index: 1, kind: input, shape index: {}]
  %s2 = inlined_call_operand.vmem [shape: bf16[9,8,24], index: 2, kind: input, shape index: {}]
  %s3 = inlined_call_operand.vmem [shape: f32[8,1], index: 3, kind: input, shape index: {}]
  %s4 = inlined_call_operand.vmem [shape: f32[8,1], index: 4, kind: input, shape index: {}]
  %s5 = inlined_call_operand.vmem [shape: bf16[6,9,8,8], index: 5, kind: input, shape index: {}]
  %s6 = inlined_call_operand.vmem [shape: f32[6,2,8,1], index: 6, kind: input, shape index: {}]
  %s7 = inlined_call_operand.vmem [shape: bf16[6,9,8,8], index: 7, kind: input, shape index: {}]
  %s8 = inlined_call_operand.vmem [shape: f32[6,3,8,1], index: 8, kind: input, shape index: {}]
  %s9 = inlined_call_operand.vmem [shape: f32[8,1280], index: 9, kind: output, shape index: {}]
  %s10 = sld [smem:[#allocation0]]
  $region61: #{recurrent_block_forward.2} parent=0
    _
  %s12 = ssub.s32 1, %s10
  %s13 = scalar_select 0, %s12, %s10
  // Predicated region
  $region2: #{recurrent_block_forward.2} parent=0 // pred_check
    _
  $region3: #{recurrent_block_forward.2} parent=0 // pred_check_branch
    %15 = sbr.rel (0) target = $region5
  $region4: #{recurrent_block_forward.2} parent=0 // pred_region
    _
  $region5: #{recurrent_block_forward.2} parent=0 // pred_fallthru
    _
  // Predicated region
  $region6: #{recurrent_block_forward.2} parent=0 // pred_check
    _
  $region7: #{recurrent_block_forward.2} parent=0 // pred_check_branch
    %17 = sbr.rel (0) target = $region9
  $region8: #{recurrent_block_forward.2} parent=0 // pred_region
    _
  $region9: #{recurrent_block_forward.2} parent=0 // pred_fallthru
    _
  // Predicated region
  $region10: #{recurrent_block_forward.2} parent=0 // pred_check
    _
  $region11: #{recurrent_block_forward.2} parent=0 // pred_check_branch
    %19 = sbr.rel (0) target = $region13
  $region12: #{recurrent_block_forward.2} parent=0 // pred_region
    _
  $region13: #{recurrent_block_forward.2} parent=0 // pred_fallthru
    _
  // Predicated region
  $region14: #{recurrent_block_forward.2} parent=0 // pred_check
    _
  $region15: #{recurrent_block_forward.2} parent=0 // pred_check_branch
    %21 = sbr.rel (0) target = $region17
  $region16: #{recurrent_block_forward.2} parent=0 // pred_region
    _
  $region17: #{recurrent_block_forward.2} parent=0 // pred_fallthru
    _
  // Predicated region
  $region18: #{recurrent_block_forward.2} parent=0 // pred_check
    _
  $region19: #{recurrent_block_forward.2} parent=0 // pred_check_branch
    %23 = sbr.rel (0) target = $region21
  $region20: #{recurrent_block_forward.2} parent=0 // pred_region
    _
  $region21: #{recurrent_block_forward.2} parent=0 // pred_fallthru
    _
  // Predicated region
  $region22: #{recurrent_block_forward.2} parent=0 // pred_check
    _
  $region23: #{recurrent_block_forward.2} parent=0 // pred_check_branch
    %25 = sbr.rel (0) target = $region25
  $region24: #{recurrent_block_forward.2} parent=0 // pred_region
    _
  $region25: #{recurrent_block_forward.2} parent=0 // pred_fallthru
    _
  // Predicated region
  $region26: #{recurrent_block_forward.2} parent=0 // pred_check
    _
  $region27: #{recurrent_block_forward.2} parent=0 // pred_check_branch
    %27 = sbr.rel (0) target = $region29
  $region28: #{recurrent_block_forward.2} parent=0 // pred_region
    _
  $region29: #{recurrent_block_forward.2} parent=0 // pred_fallthru
    _
  // Predicated region
  $region30: #{recurrent_block_forward.2} parent=0 // pred_check
    _
  $region31: #{recurrent_block_forward.2} parent=0 // pred_check_branch
    %29 = sbr.rel (0) target = $region33
  $region32: #{recurrent_block_forward.2} parent=0 // pred_region
    _
  $region33: #{recurrent_block_forward.2} parent=0 // pred_fallthru
    _
  // Predicated region
  $region34: #{recurrent_block_forward.2} parent=0 // pred_check
    _
  $region35: #{recurrent_block_forward.2} parent=0 // pred_check_branch
    %31 = sbr.rel (0) target = $region37
  $region36: #{recurrent_block_forward.2} parent=0 // pred_region
    _
  $region37: #{recurrent_block_forward.2} parent=0 // pred_fallthru
    _
  %v33 = vld [vmem:[%s1] sm:$0xff]
  %v34 = vld [vmem:[%s1 + $0x8] sm:$0x3]
  %35 = vst [vmem:[#allocation2] sm:$0xf] 0
  %36 = vst [vmem:[#allocation2 + $0x2c] sm:$0xf] 0
  %37 = vst [vmem:[#allocation3] sm:$0xf] 0
  %38 = vst [vmem:[#allocation3 + $0x2c] sm:$0xf] 0
  %v39 = vld [vmem:[%s2] sm:$0xf]
  %v40 = vld [vmem:[%s2 + $0x4] sm:$0xf]
  %v41 = vld [vmem:[%s2 + $0x8] sm:$0xf]
  %v42 = vld [vmem:[%s2 + $0xc] sm:$0xf]
  %v43 = vld [vmem:[%s2 + $0x10] sm:$0xf]
  %v44 = vld [vmem:[%s2 + $0x14] sm:$0xf]
  %v45 = vld [vmem:[%s2 + $0x18] sm:$0xf]
  %v46 = vld [vmem:[%s2 + $0x1c] sm:$0xf]
  %v47 = vld [vmem:[%s2 + $0x20] sm:$0xf]
  %v48 = vld [vmem:[%s0] sm:$0xff]
  %v49 = vld [vmem:[%s0 + $0x8] sm:$0xff]
  %v50 = vld [vmem:[%s0 + $0x10] sm:$0xff]
  %v51 = vld [vmem:[%s0 + $0x18] sm:$0xff]
  %v52 = vld [vmem:[%s0 + $0x20] sm:$0xff]
  %v53 = vld [vmem:[%s0 + $0x28] sm:$0xf]
  %v54 = vld [vmem:[%s0 + $0x30] sm:$0xff]
  %v55 = vld [vmem:[%s0 + $0x38] sm:$0xff]
  %v56 = vld [vmem:[%s0 + $0x40] sm:$0xff]
  %v57 = vld [vmem:[%s0 + $0x48] sm:$0xff]
  %v58 = vld [vmem:[%s0 + $0x50] sm:$0xff]
  %v59 = vld [vmem:[%s0 + $0x58] sm:$0xf]
  %v60 = vld [vmem:[%s0 + $0x60] sm:$0xff]
  %v61 = vld [vmem:[%s0 + $0x68] sm:$0xff]
  %v62 = vld [vmem:[%s0 + $0x70] sm:$0xff]
  %v63 = vld [vmem:[%s0 + $0x78] sm:$0xff]
  %v64 = vld [vmem:[%s0 + $0x80] sm:$0xff]
  %v65 = vld [vmem:[%s0 + $0x88] sm:$0xf]
  %v84 = vunpack.c.l.b16 %v48
  %v85 = vunpack.c.h.b16 %v48
  %v86 = vunpack.c.l.b16 %v49
  %v87 = vunpack.c.h.b16 %v49
  %v88 = vunpack.c.l.b16 %v50
  %v89 = vunpack.c.h.b16 %v50
  %v90 = vunpack.c.l.b16 %v51
  %v91 = vunpack.c.h.b16 %v51
  %v92 = vunpack.c.l.b16 %v52
  %v93 = vunpack.c.h.b16 %v52
  %v94 = vunpack.c.l.b16 %v53
  %v95 = vunpack.c.l.b16 %v54
  %v96 = vunpack.c.h.b16 %v54
  %v97 = vunpack.c.l.b16 %v55
  %v98 = vunpack.c.h.b16 %v55
  %v99 = vunpack.c.l.b16 %v56
  %v100 = vunpack.c.h.b16 %v56
  %v101 = vunpack.c.l.b16 %v57
  %v102 = vunpack.c.h.b16 %v57
  %v103 = vunpack.c.l.b16 %v58
  %v104 = vunpack.c.h.b16 %v58
  %v105 = vunpack.c.l.b16 %v59
  %v106 = vunpack.c.l.b16 %v60
  %v107 = vunpack.c.h.b16 %v60
  %v108 = vunpack.c.l.b16 %v61
  %v109 = vunpack.c.h.b16 %v61
  %v110 = vunpack.c.l.b16 %v62
  %v111 = vunpack.c.h.b16 %v62
  %v112 = vunpack.c.l.b16 %v63
  %v113 = vunpack.c.h.b16 %v63
  %v114 = vunpack.c.l.b16 %v64
  %v115 = vunpack.c.h.b16 %v64
  %v116 = vunpack.c.l.b16 %v65
  %v117 = vpack.c.b16 %v95, %v84
  %v118 = vpack.c.b16 %v96, %v85
  %v119 = vpack.c.b16 %v97, %v86
  %v120 = vpack.c.b16 %v98, %v87
  %v121 = vpack.c.b16 %v99, %v88
  %v122 = vpack.c.b16 %v100, %v89
  %v123 = vpack.c.b16 %v101, %v90
  %v124 = vpack.c.b16 %v102, %v91
  %v125 = vpack.c.b16 %v103, %v92
  %v126 = vpack.c.b16 %v104, %v93
  %v127 = vpack.c.b16 %v105, %v94
  %v128 = vpack.c.b16 %v106, %v106
  %v129 = vpack.c.b16 %v107, %v107
  %v130 = vpack.c.b16 %v108, %v108
  %v131 = vpack.c.b16 %v109, %v109
  %v132 = vpack.c.b16 %v110, %v110
  %v133 = vpack.c.b16 %v111, %v111
  %v134 = vpack.c.b16 %v112, %v112
  %v135 = vpack.c.b16 %v113, %v113
  %v136 = vpack.c.b16 %v114, %v114
  %v137 = vpack.c.b16 %v115, %v115
  %v138 = vpack.c.b16 %v116, %v116
  %139 = vrot.lane.b32.xlu0 %v117, 18
  %v140 = vpop.permute.xlu0 %139
  %141 = vrot.lane.b32.xlu0 %v118, 18
  %v142 = vpop.permute.xlu0 %141
  %143 = vrot.lane.b32.xlu0 %v119, 18
  %v144 = vpop.permute.xlu0 %143
  %145 = vrot.lane.b32.xlu0 %v120, 18
  %v146 = vpop.permute.xlu0 %145
  %147 = vrot.lane.b32.xlu0 %v121, 18
  %v148 = vpop.permute.xlu0 %147
  %149 = vrot.lane.b32.xlu0 %v122, 18
  %v150 = vpop.permute.xlu0 %149
  %151 = vrot.lane.b32.xlu0 %v123, 18
  %v152 = vpop.permute.xlu0 %151
  %153 = vrot.lane.b32.xlu0 %v124, 18
  %v154 = vpop.permute.xlu0 %153
  %155 = vrot.lane.b32.xlu0 %v125, 18
  %v156 = vpop.permute.xlu0 %155
  %157 = vrot.lane.b32.xlu0 %v126, 18
  %v158 = vpop.permute.xlu0 %157
  %159 = vrot.lane.b32.xlu0 %v127, 18
  %v160 = vpop.permute.xlu0 %159
  %161 = vrot.lane.b32.xlu0 %v128, 18
  %v162 = vpop.permute.xlu0 %161
  %163 = vrot.lane.b32.xlu0 %v129, 18
  %v164 = vpop.permute.xlu0 %163
  %165 = vrot.lane.b32.xlu0 %v130, 18
  %v166 = vpop.permute.xlu0 %165
  %167 = vrot.lane.b32.xlu0 %v131, 18
  %v168 = vpop.permute.xlu0 %167
  %169 = vrot.lane.b32.xlu0 %v132, 18
  %v170 = vpop.permute.xlu0 %169
  %171 = vrot.lane.b32.xlu0 %v133, 18
  %v172 = vpop.permute.xlu0 %171
  %173 = vrot.lane.b32.xlu0 %v134, 18
  %v174 = vpop.permute.xlu0 %173
  %175 = vrot.lane.b32.xlu0 %v135, 18
  %v176 = vpop.permute.xlu0 %175
  %177 = vrot.lane.b32.xlu0 %v136, 18
  %v178 = vpop.permute.xlu0 %177
  %179 = vrot.lane.b32.xlu0 %v137, 18
  %v180 = vpop.permute.xlu0 %179
  %181 = vrot.lane.b32.xlu0 %v138, 18
  %v182 = vpop.permute.xlu0 %181
  %vm183 = vcmask 146432
  %v184 = vsel %vm183, %v140, %v142
  %v185 = vsel %vm183, %v142, %v144
  %v186 = vsel %vm183, %v144, %v146
  %v187 = vsel %vm183, %v146, %v148
  %v188 = vsel %vm183, %v148, %v150
  %v189 = vsel %vm183, %v150, %v152
  %v190 = vsel %vm183, %v152, %v154
  %v191 = vsel %vm183, %v154, %v156
  %v192 = vsel %vm183, %v156, %v158
  %v193 = vsel %vm183, %v158, %v160
  %v194 = vsel %vm183, %v162, %v164
  %v195 = vsel %vm183, %v164, %v166
  %v196 = vsel %vm183, %v166, %v168
  %v197 = vsel %vm183, %v168, %v170
  %v198 = vsel %vm183, %v170, %v172
  %v199 = vsel %vm183, %v172, %v174
  %v200 = vsel %vm183, %v174, %v176
  %v201 = vsel %vm183, %v176, %v178
  %v202 = vsel %vm183, %v178, %v180
  %v203 = vsel %vm183, %v180, %v182
  %vm214 = vcmask 195584
  %v216 = vsel %vm214, %v40, 0
  %vm218 = vcmask 1043456
  %v220 = vsel %vm218, %v194, 0
  %v223 = vsel %vm218, %v195, 0
  %v226 = vsel %vm218, %v196, 0
  %v229 = vsel %vm218, %v197, 0
  %v232 = vsel %vm218, %v198, 0
  %v235 = vsel %vm218, %v199, 0
  %v238 = vsel %vm218, %v200, 0
  %v241 = vsel %vm218, %v201, 0
  %v244 = vsel %vm218, %v202, 0
  %v247 = vsel %vm218, %v203, 0
  %249 = vmatpush.bf16.msra.mxu0 0
  %250 = vmatpush.bf16.msra.mxu0 0
  %251 = vmatpush.bf16.msra.mxu0 0
  %252 = vmatpush.bf16.msra.mxu0 0
  %253 = vmatpush.bf16.msra.mxu0 0
  %254 = vmatpush.bf16.msra.mxu0 0
  %255 = vmatpush.bf16.msra.mxu0 %v220
  %256 = vmatpush.bf16.msra.mxu0 %v184
  %257 = vmatmul.bf16.gmra.mxu0 %v216
  %v258 = vpop.f32.mrf.mxu0
  %v259 = vadd.f32 0.0, %v258
  %v260 = vpop.f32.mrf.mxu0
  %261 = vdwg.mxu0
  %262 = vmatpush.bf16.msra.mxu0 0
  %263 = vmatpush.bf16.msra.mxu0 0
  %264 = vmatpush.bf16.msra.mxu0 0
  %265 = vmatpush.bf16.msra.mxu0 0
  %266 = vmatpush.bf16.msra.mxu0 0
  %267 = vmatpush.bf16.msra.mxu0 0
  %268 = vmatpush.bf16.msra.mxu0 %v223
  %269 = vmatpush.bf16.msra.mxu0 %v185
  %270 = vmatmul.bf16.gmra.mxu0 %v216
  %v271 = vpop.f32.mrf.mxu0
  %v272 = vadd.f32 0.0, %v271
  %v273 = vpop.f32.mrf.mxu0
  %274 = vdwg.mxu0
  %275 = vmatpush.bf16.msra.mxu0 0
  %276 = vmatpush.bf16.msra.mxu0 0
  %277 = vmatpush.bf16.msra.mxu0 0
  %278 = vmatpush.bf16.msra.mxu0 0
  %279 = vmatpush.bf16.msra.mxu0 0
  %280 = vmatpush.bf16.msra.mxu0 0
  %281 = vmatpush.bf16.msra.mxu0 %v226
  %282 = vmatpush.bf16.msra.mxu0 %v186
  %283 = vmatmul.bf16.gmra.mxu0 %v216
  %v284 = vpop.f32.mrf.mxu0
  %v285 = vadd.f32 0.0, %v284
  %v286 = vpop.f32.mrf.mxu0
  %287 = vdwg.mxu0
  %288 = vmatpush.bf16.msra.mxu0 0
  %289 = vmatpush.bf16.msra.mxu0 0
  %290 = vmatpush.bf16.msra.mxu0 0
  %291 = vmatpush.bf16.msra.mxu0 0
  %292 = vmatpush.bf16.msra.mxu0 0
  %293 = vmatpush.bf16.msra.mxu0 0
  %294 = vmatpush.bf16.msra.mxu0 %v229
  %295 = vmatpush.bf16.msra.mxu0 %v187
  %296 = vmatmul.bf16.gmra.mxu0 %v216
  %v297 = vpop.f32.mrf.mxu0
  %v298 = vadd.f32 0.0, %v297
  %v299 = vpop.f32.mrf.mxu0
  %300 = vdwg.mxu0
  %301 = vmatpush.bf16.msra.mxu0 0
  %302 = vmatpush.bf16.msra.mxu0 0
  %303 = vmatpush.bf16.msra.mxu0 0
  %304 = vmatpush.bf16.msra.mxu0 0
  %305 = vmatpush.bf16.msra.mxu0 0
  %306 = vmatpush.bf16.msra.mxu0 0
  %307 = vmatpush.bf16.msra.mxu0 %v232
  %308 = vmatpush.bf16.msra.mxu0 %v188
  %309 = vmatmul.bf16.gmra.mxu0 %v216
  %v310 = vpop.f32.mrf.mxu0
  %v311 = vadd.f32 0.0, %v310
  %v312 = vpop.f32.mrf.mxu0
  %313 = vdwg.mxu0
  %314 = vmatpush.bf16.msra.mxu0 0
  %315 = vmatpush.bf16.msra.mxu0 0
  %316 = vmatpush.bf16.msra.mxu0 0
  %317 = vmatpush.bf16.msra.mxu0 0
  %318 = vmatpush.bf16.msra.mxu0 0
  %319 = vmatpush.bf16.msra.mxu0 0
  %320 = vmatpush.bf16.msra.mxu0 %v235
  %321 = vmatpush.bf16.msra.mxu0 %v189
  %322 = vmatmul.bf16.gmra.mxu0 %v216
  %v323 = vpop.f32.mrf.mxu0
  %v324 = vadd.f32 0.0, %v323
  %v325 = vpop.f32.mrf.mxu0
  %326 = vdwg.mxu0
  %327 = vmatpush.bf16.msra.mxu0 0
  %328 = vmatpush.bf16.msra.mxu0 0
  %329 = vmatpush.bf16.msra.mxu0 0
  %330 = vmatpush.bf16.msra.mxu0 0
  %331 = vmatpush.bf16.msra.mxu0 0
  %332 = vmatpush.bf16.msra.mxu0 0
  %333 = vmatpush.bf16.msra.mxu0 %v238
  %334 = vmatpush.bf16.msra.mxu0 %v190
  %335 = vmatmul.bf16.gmra.mxu0 %v216
  %v336 = vpop.f32.mrf.mxu0
  %v337 = vadd.f32 0.0, %v336
  %v338 = vpop.f32.mrf.mxu0
  %339 = vdwg.mxu0
  %340 = vmatpush.bf16.msra.mxu0 0
  %341 = vmatpush.bf16.msra.mxu0 0
  %342 = vmatpush.bf16.msra.mxu0 0
  %343 = vmatpush.bf16.msra.mxu0 0
  %344 = vmatpush.bf16.msra.mxu0 0
  %345 = vmatpush.bf16.msra.mxu0 0
  %346 = vmatpush.bf16.msra.mxu0 %v241
  %347 = vmatpush.bf16.msra.mxu0 %v191
  %348 = vmatmul.bf16.gmra.mxu0 %v216
  %v349 = vpop.f32.mrf.mxu0
  %v350 = vadd.f32 0.0, %v349
  %v351 = vpop.f32.mrf.mxu0
  %352 = vdwg.mxu0
  %353 = vmatpush.bf16.msra.mxu0 0
  %354 = vmatpush.bf16.msra.mxu0 0
  %355 = vmatpush.bf16.msra.mxu0 0
  %356 = vmatpush.bf16.msra.mxu0 0
  %357 = vmatpush.bf16.msra.mxu0 0
  %358 = vmatpush.bf16.msra.mxu0 0
  %359 = vmatpush.bf16.msra.mxu0 %v244
  %360 = vmatpush.bf16.msra.mxu0 %v192
  %361 = vmatmul.bf16.gmra.mxu0 %v216
  %v362 = vpop.f32.mrf.mxu0
  %v363 = vadd.f32 0.0, %v362
  %v364 = vpop.f32.mrf.mxu0
  %365 = vdwg.mxu0
  %366 = vmatpush.bf16.msra.mxu0 0
  %367 = vmatpush.bf16.msra.mxu0 0
  %368 = vmatpush.bf16.msra.mxu0 0
  %369 = vmatpush.bf16.msra.mxu0 0
  %370 = vmatpush.bf16.msra.mxu0 0
  %371 = vmatpush.bf16.msra.mxu0 0
  %372 = vmatpush.bf16.msra.mxu0 %v247
  %373 = vmatpush.bf16.msra.mxu0 %v193
  %374 = vmatmul.bf16.gmra.mxu0 %v216
  %v375 = vpop.f32.mrf.mxu0
  %v376 = vadd.f32 0.0, %v375
  %v377 = vpop.f32.mrf.mxu0
  %378 = vdwg.mxu0
  %379 = vrot.lane.b32.xlu0 %v117, 19
  %v380 = vpop.permute.xlu0 %379
  %381 = vrot.lane.b32.xlu0 %v118, 19
  %v382 = vpop.permute.xlu0 %381
  %383 = vrot.lane.b32.xlu0 %v119, 19
  %v384 = vpop.permute.xlu0 %383
  %385 = vrot.lane.b32.xlu0 %v120, 19
  %v386 = vpop.permute.xlu0 %385
  %387 = vrot.lane.b32.xlu0 %v121, 19
  %v388 = vpop.permute.xlu0 %387
  %389 = vrot.lane.b32.xlu0 %v122, 19
  %v390 = vpop.permute.xlu0 %389
  %391 = vrot.lane.b32.xlu0 %v123, 19
  %v392 = vpop.permute.xlu0 %391
  %393 = vrot.lane.b32.xlu0 %v124, 19
  %v394 = vpop.permute.xlu0 %393
  %395 = vrot.lane.b32.xlu0 %v125, 19
  %v396 = vpop.permute.xlu0 %395
  %397 = vrot.lane.b32.xlu0 %v126, 19
  %v398 = vpop.permute.xlu0 %397
  %399 = vrot.lane.b32.xlu0 %v127, 19
  %v400 = vpop.permute.xlu0 %399
  %401 = vrot.lane.b32.xlu0 %v128, 19
  %v402 = vpop.permute.xlu0 %401
  %403 = vrot.lane.b32.xlu0 %v129, 19
  %v404 = vpop.permute.xlu0 %403
  %405 = vrot.lane.b32.xlu0 %v130, 19
  %v406 = vpop.permute.xlu0 %405
  %407 = vrot.lane.b32.xlu0 %v131, 19
  %v408 = vpop.permute.xlu0 %407
  %409 = vrot.lane.b32.xlu0 %v132, 19
  %v410 = vpop.permute.xlu0 %409
  %411 = vrot.lane.b32.xlu0 %v133, 19
  %v412 = vpop.permute.xlu0 %411
  %413 = vrot.lane.b32.xlu0 %v134, 19
  %v414 = vpop.permute.xlu0 %413
  %415 = vrot.lane.b32.xlu0 %v135, 19
  %v416 = vpop.permute.xlu0 %415
  %417 = vrot.lane.b32.xlu0 %v136, 19
  %v418 = vpop.permute.xlu0 %417
  %419 = vrot.lane.b32.xlu0 %v137, 19
  %v420 = vpop.permute.xlu0 %419
  %421 = vrot.lane.b32.xlu0 %v138, 19
  %v422 = vpop.permute.xlu0 %421
  %vm423 = vcmask 154624
  %v424 = vsel %vm423, %v380, %v382
  %v425 = vsel %vm423, %v382, %v384
  %v426 = vsel %vm423, %v384, %v386
  %v427 = vsel %vm423, %v386, %v388
  %v428 = vsel %vm423, %v388, %v390
  %v429 = vsel %vm423, %v390, %v392
  %v430 = vsel %vm423, %v392, %v394
  %v431 = vsel %vm423, %v394, %v396
  %v432 = vsel %vm423, %v396, %v398
  %v433 = vsel %vm423, %v398, %v400
  %v434 = vsel %vm423, %v402, %v404
  %v435 = vsel %vm423, %v404, %v406
  %v436 = vsel %vm423, %v406, %v408
  %v437 = vsel %vm423, %v408, %v410
  %v438 = vsel %vm423, %v410, %v412
  %v439 = vsel %vm423, %v412, %v414
  %v440 = vsel %vm423, %v414, %v416
  %v441 = vsel %vm423, %v416, %v418
  %v442 = vsel %vm423, %v418, %v420
  %v443 = vsel %vm423, %v420, %v422
  %v455 = vsel %vm214, %v39, 0
  %v458 = vsel %vm218, %v434, 0
  %v461 = vsel %vm218, %v435, 0
  %v464 = vsel %vm218, %v436, 0
  %v467 = vsel %vm218, %v437, 0
  %v470 = vsel %vm218, %v438, 0
  %v473 = vsel %vm218, %v439, 0
  %v476 = vsel %vm218, %v440, 0
  %v479 = vsel %vm218, %v441, 0
  %v482 = vsel %vm218, %v442, 0
  %v485 = vsel %vm218, %v443, 0
  %487 = vmatpush.bf16.msra.mxu0 0
  %488 = vmatpush.bf16.msra.mxu0 0
  %489 = vmatpush.bf16.msra.mxu0 0
  %490 = vmatpush.bf16.msra.mxu0 0
  %491 = vmatpush.bf16.msra.mxu0 0
  %492 = vmatpush.bf16.msra.mxu0 0
  %493 = vmatpush.bf16.msra.mxu0 %v458
  %494 = vmatpush.bf16.msra.mxu0 %v424
  %495 = vmatmul.bf16.gmra.mxu0 %v455
  %v496 = vpop.f32.mrf.mxu0
  %v497 = vadd.f32 %v259, %v496
  %v498 = vpop.f32.mrf.mxu0
  %499 = vdwg.mxu0
  %500 = vmatpush.bf16.msra.mxu0 0
  %501 = vmatpush.bf16.msra.mxu0 0
  %502 = vmatpush.bf16.msra.mxu0 0
  %503 = vmatpush.bf16.msra.mxu0 0
  %504 = vmatpush.bf16.msra.mxu0 0
  %505 = vmatpush.bf16.msra.mxu0 0
  %506 = vmatpush.bf16.msra.mxu0 %v461
  %507 = vmatpush.bf16.msra.mxu0 %v425
  %508 = vmatmul.bf16.gmra.mxu0 %v455
  %v509 = vpop.f32.mrf.mxu0
  %v510 = vadd.f32 %v272, %v509
  %v511 = vpop.f32.mrf.mxu0
  %512 = vdwg.mxu0
  %513 = vmatpush.bf16.msra.mxu0 0
  %514 = vmatpush.bf16.msra.mxu0 0
  %515 = vmatpush.bf16.msra.mxu0 0
  %516 = vmatpush.bf16.msra.mxu0 0
  %517 = vmatpush.bf16.msra.mxu0 0
  %518 = vmatpush.bf16.msra.mxu0 0
  %519 = vmatpush.bf16.msra.mxu0 %v464
  %520 = vmatpush.bf16.msra.mxu0 %v426
  %521 = vmatmul.bf16.gmra.mxu0 %v455
  %v522 = vpop.f32.mrf.mxu0
  %v523 = vadd.f32 %v285, %v522
  %v524 = vpop.f32.mrf.mxu0
  %525 = vdwg.mxu0
  %526 = vmatpush.bf16.msra.mxu0 0
  %527 = vmatpush.bf16.msra.mxu0 0
  %528 = vmatpush.bf16.msra.mxu0 0
  %529 = vmatpush.bf16.msra.mxu0 0
  %530 = vmatpush.bf16.msra.mxu0 0
  %531 = vmatpush.bf16.msra.mxu0 0
  %532 = vmatpush.bf16.msra.mxu0 %v467
  %533 = vmatpush.bf16.msra.mxu0 %v427
  %534 = vmatmul.bf16.gmra.mxu0 %v455
  %v535 = vpop.f32.mrf.mxu0
  %v536 = vadd.f32 %v298, %v535
  %v537 = vpop.f32.mrf.mxu0
  %538 = vdwg.mxu0
  %539 = vmatpush.bf16.msra.mxu0 0
  %540 = vmatpush.bf16.msra.mxu0 0
  %541 = vmatpush.bf16.msra.mxu0 0
  %542 = vmatpush.bf16.msra.mxu0 0
  %543 = vmatpush.bf16.msra.mxu0 0
  %544 = vmatpush.bf16.msra.mxu0 0
  %545 = vmatpush.bf16.msra.mxu0 %v470
  %546 = vmatpush.bf16.msra.mxu0 %v428
  %547 = vmatmul.bf16.gmra.mxu0 %v455
  %v548 = vpop.f32.mrf.mxu0
  %v549 = vadd.f32 %v311, %v548
  %v550 = vpop.f32.mrf.mxu0
  %551 = vdwg.mxu0
  %552 = vmatpush.bf16.msra.mxu0 0
  %553 = vmatpush.bf16.msra.mxu0 0
  %554 = vmatpush.bf16.msra.mxu0 0
  %555 = vmatpush.bf16.msra.mxu0 0
  %556 = vmatpush.bf16.msra.mxu0 0
  %557 = vmatpush.bf16.msra.mxu0 0
  %558 = vmatpush.bf16.msra.mxu0 %v473
  %559 = vmatpush.bf16.msra.mxu0 %v429
  %560 = vmatmul.bf16.gmra.mxu0 %v455
  %v561 = vpop.f32.mrf.mxu0
  %v562 = vadd.f32 %v324, %v561
  %v563 = vpop.f32.mrf.mxu0
  %564 = vdwg.mxu0
  %565 = vmatpush.bf16.msra.mxu0 0
  %566 = vmatpush.bf16.msra.mxu0 0
  %567 = vmatpush.bf16.msra.mxu0 0
  %568 = vmatpush.bf16.msra.mxu0 0
  %569 = vmatpush.bf16.msra.mxu0 0
  %570 = vmatpush.bf16.msra.mxu0 0
  %571 = vmatpush.bf16.msra.mxu0 %v476
  %572 = vmatpush.bf16.msra.mxu0 %v430
  %573 = vmatmul.bf16.gmra.mxu0 %v455
  %v574 = vpop.f32.mrf.mxu0
  %v575 = vadd.f32 %v337, %v574
  %v576 = vpop.f32.mrf.mxu0
  %577 = vdwg.mxu0
  %578 = vmatpush.bf16.msra.mxu0 0
  %579 = vmatpush.bf16.msra.mxu0 0
  %580 = vmatpush.bf16.msra.mxu0 0
  %581 = vmatpush.bf16.msra.mxu0 0
  %582 = vmatpush.bf16.msra.mxu0 0
  %583 = vmatpush.bf16.msra.mxu0 0
  %584 = vmatpush.bf16.msra.mxu0 %v479
  %585 = vmatpush.bf16.msra.mxu0 %v431
  %586 = vmatmul.bf16.gmra.mxu0 %v455
  %v587 = vpop.f32.mrf.mxu0
  %v588 = vadd.f32 %v350, %v587
  %v589 = vpop.f32.mrf.mxu0
  %590 = vdwg.mxu0
  %591 = vmatpush.bf16.msra.mxu0 0
  %592 = vmatpush.bf16.msra.mxu0 0
  %593 = vmatpush.bf16.msra.mxu0 0
  %594 = vmatpush.bf16.msra.mxu0 0
  %595 = vmatpush.bf16.msra.mxu0 0
  %596 = vmatpush.bf16.msra.mxu0 0
  %597 = vmatpush.bf16.msra.mxu0 %v482
  %598 = vmatpush.bf16.msra.mxu0 %v432
  %599 = vmatmul.bf16.gmra.mxu0 %v455
  %v600 = vpop.f32.mrf.mxu0
  %v601 = vadd.f32 %v363, %v600
  %v602 = vpop.f32.mrf.mxu0
  %603 = vdwg.mxu0
  %604 = vmatpush.bf16.msra.mxu0 0
  %605 = vmatpush.bf16.msra.mxu0 0
  %606 = vmatpush.bf16.msra.mxu0 0
  %607 = vmatpush.bf16.msra.mxu0 0
  %608 = vmatpush.bf16.msra.mxu0 0
  %609 = vmatpush.bf16.msra.mxu0 0
  %610 = vmatpush.bf16.msra.mxu0 %v485
  %611 = vmatpush.bf16.msra.mxu0 %v433
  %612 = vmatmul.bf16.gmra.mxu0 %v455
  %v613 = vpop.f32.mrf.mxu0
  %v614 = vadd.f32 %v376, %v613
  %v615 = vpop.f32.mrf.mxu0
  %616 = vdwg.mxu0
  %617 = vrot.lane.b32.xlu0 %v117, 17
  %v618 = vpop.permute.xlu0 %617
  %619 = vrot.lane.b32.xlu0 %v118, 17
  %v620 = vpop.permute.xlu0 %619
  %621 = vrot.lane.b32.xlu0 %v119, 17
  %v622 = vpop.permute.xlu0 %621
  %623 = vrot.lane.b32.xlu0 %v120, 17
  %v624 = vpop.permute.xlu0 %623
  %625 = vrot.lane.b32.xlu0 %v121, 17
  %v626 = vpop.permute.xlu0 %625
  %627 = vrot.lane.b32.xlu0 %v122, 17
  %v628 = vpop.permute.xlu0 %627
  %629 = vrot.lane.b32.xlu0 %v123, 17
  %v630 = vpop.permute.xlu0 %629
  %631 = vrot.lane.b32.xlu0 %v124, 17
  %v632 = vpop.permute.xlu0 %631
  %633 = vrot.lane.b32.xlu0 %v125, 17
  %v634 = vpop.permute.xlu0 %633
  %635 = vrot.lane.b32.xlu0 %v126, 17
  %v636 = vpop.permute.xlu0 %635
  %637 = vrot.lane.b32.xlu0 %v127, 17
  %v638 = vpop.permute.xlu0 %637
  %639 = vrot.lane.b32.xlu0 %v128, 17
  %v640 = vpop.permute.xlu0 %639
  %641 = vrot.lane.b32.xlu0 %v129, 17
  %v642 = vpop.permute.xlu0 %641
  %643 = vrot.lane.b32.xlu0 %v130, 17
  %v644 = vpop.permute.xlu0 %643
  %645 = vrot.lane.b32.xlu0 %v131, 17
  %v646 = vpop.permute.xlu0 %645
  %647 = vrot.lane.b32.xlu0 %v132, 17
  %v648 = vpop.permute.xlu0 %647
  %649 = vrot.lane.b32.xlu0 %v133, 17
  %v650 = vpop.permute.xlu0 %649
  %651 = vrot.lane.b32.xlu0 %v134, 17
  %v652 = vpop.permute.xlu0 %651
  %653 = vrot.lane.b32.xlu0 %v135, 17
  %v654 = vpop.permute.xlu0 %653
  %655 = vrot.lane.b32.xlu0 %v136, 17
  %v656 = vpop.permute.xlu0 %655
  %657 = vrot.lane.b32.xlu0 %v137, 17
  %v658 = vpop.permute.xlu0 %657
  %659 = vrot.lane.b32.xlu0 %v138, 17
  %v660 = vpop.permute.xlu0 %659
  %vm661 = vcmask 138240
  %v662 = vsel %vm661, %v618, %v620
  %v663 = vsel %vm661, %v620, %v622
  %v664 = vsel %vm661, %v622, %v624
  %v665 = vsel %vm661, %v624, %v626
  %v666 = vsel %vm661, %v626, %v628
  %v667 = vsel %vm661, %v628, %v630
  %v668 = vsel %vm661, %v630, %v632
  %v669 = vsel %vm661, %v632, %v634
  %v670 = vsel %vm661, %v634, %v636
  %v671 = vsel %vm661, %v636, %v638
  %v672 = vsel %vm661, %v640, %v642
  %v673 = vsel %vm661, %v642, %v644
  %v674 = vsel %vm661, %v644, %v646
  %v675 = vsel %vm661, %v646, %v648
  %v676 = vsel %vm661, %v648, %v650
  %v677 = vsel %vm661, %v650, %v652
  %v678 = vsel %vm661, %v652, %v654
  %v679 = vsel %vm661, %v654, %v656
  %v680 = vsel %vm661, %v656, %v658
  %v681 = vsel %vm661, %v658, %v660
  %v693 = vsel %vm214, %v41, 0
  %v696 = vsel %vm218, %v672, 0
  %v699 = vsel %vm218, %v673, 0
  %v702 = vsel %vm218, %v674, 0
  %v705 = vsel %vm218, %v675, 0
  %v708 = vsel %vm218, %v676, 0
  %v711 = vsel %vm218, %v677, 0
  %v714 = vsel %vm218, %v678, 0
  %v717 = vsel %vm218, %v679, 0
  %v720 = vsel %vm218, %v680, 0
  %v723 = vsel %vm218, %v681, 0
  %725 = vmatpush.bf16.msra.mxu0 0
  %726 = vmatpush.bf16.msra.mxu0 0
  %727 = vmatpush.bf16.msra.mxu0 0
  %728 = vmatpush.bf16.msra.mxu0 0
  %729 = vmatpush.bf16.msra.mxu0 0
  %730 = vmatpush.bf16.msra.mxu0 0
  %731 = vmatpush.bf16.msra.mxu0 %v696
  %732 = vmatpush.bf16.msra.mxu0 %v662
  %733 = vmatmul.bf16.gmra.mxu0 %v693
  %v734 = vpop.f32.mrf.mxu0
  %v735 = vadd.f32 0.0, %v734
  %v736 = vpop.f32.mrf.mxu0
  %737 = vdwg.mxu0
  %738 = vmatpush.bf16.msra.mxu0 0
  %739 = vmatpush.bf16.msra.mxu0 0
  %740 = vmatpush.bf16.msra.mxu0 0
  %741 = vmatpush.bf16.msra.mxu0 0
  %742 = vmatpush.bf16.msra.mxu0 0
  %743 = vmatpush.bf16.msra.mxu0 0
  %744 = vmatpush.bf16.msra.mxu0 %v699
  %745 = vmatpush.bf16.msra.mxu0 %v663
  %746 = vmatmul.bf16.gmra.mxu0 %v693
  %v747 = vpop.f32.mrf.mxu0
  %v748 = vadd.f32 0.0, %v747
  %v749 = vpop.f32.mrf.mxu0
  %750 = vdwg.mxu0
  %751 = vmatpush.bf16.msra.mxu0 0
  %752 = vmatpush.bf16.msra.mxu0 0
  %753 = vmatpush.bf16.msra.mxu0 0
  %754 = vmatpush.bf16.msra.mxu0 0
  %755 = vmatpush.bf16.msra.mxu0 0
  %756 = vmatpush.bf16.msra.mxu0 0
  %757 = vmatpush.bf16.msra.mxu0 %v702
  %758 = vmatpush.bf16.msra.mxu0 %v664
  %759 = vmatmul.bf16.gmra.mxu0 %v693
  %v760 = vpop.f32.mrf.mxu0
  %v761 = vadd.f32 0.0, %v760
  %v762 = vpop.f32.mrf.mxu0
  %763 = vdwg.mxu0
  %764 = vmatpush.bf16.msra.mxu0 0
  %765 = vmatpush.bf16.msra.mxu0 0
  %766 = vmatpush.bf16.msra.mxu0 0
  %767 = vmatpush.bf16.msra.mxu0 0
  %768 = vmatpush.bf16.msra.mxu0 0
  %769 = vmatpush.bf16.msra.mxu0 0
  %770 = vmatpush.bf16.msra.mxu0 %v705
  %771 = vmatpush.bf16.msra.mxu0 %v665
  %772 = vmatmul.bf16.gmra.mxu0 %v693
  %v773 = vpop.f32.mrf.mxu0
  %v774 = vadd.f32 0.0, %v773
  %v775 = vpop.f32.mrf.mxu0
  %776 = vdwg.mxu0
  %777 = vmatpush.bf16.msra.mxu0 0
  %778 = vmatpush.bf16.msra.mxu0 0
  %779 = vmatpush.bf16.msra.mxu0 0
  %780 = vmatpush.bf16.msra.mxu0 0
  %781 = vmatpush.bf16.msra.mxu0 0
  %782 = vmatpush.bf16.msra.mxu0 0
  %783 = vmatpush.bf16.msra.mxu0 %v708
  %784 = vmatpush.bf16.msra.mxu0 %v666
  %785 = vmatmul.bf16.gmra.mxu0 %v693
  %v786 = vpop.f32.mrf.mxu0
  %v787 = vadd.f32 0.0, %v786
  %v788 = vpop.f32.mrf.mxu0
  %789 = vdwg.mxu0
  %790 = vmatpush.bf16.msra.mxu0 0
  %791 = vmatpush.bf16.msra.mxu0 0
  %792 = vmatpush.bf16.msra.mxu0 0
  %793 = vmatpush.bf16.msra.mxu0 0
  %794 = vmatpush.bf16.msra.mxu0 0
  %795 = vmatpush.bf16.msra.mxu0 0
  %796 = vmatpush.bf16.msra.mxu0 %v711
  %797 = vmatpush.bf16.msra.mxu0 %v667
  %798 = vmatmul.bf16.gmra.mxu0 %v693
  %v799 = vpop.f32.mrf.mxu0
  %v800 = vadd.f32 0.0, %v799
  %v801 = vpop.f32.mrf.mxu0
  %802 = vdwg.mxu0
  %803 = vmatpush.bf16.msra.mxu0 0
  %804 = vmatpush.bf16.msra.mxu0 0
  %805 = vmatpush.bf16.msra.mxu0 0
  %806 = vmatpush.bf16.msra.mxu0 0
  %807 = vmatpush.bf16.msra.mxu0 0
  %808 = vmatpush.bf16.msra.mxu0 0
  %809 = vmatpush.bf16.msra.mxu0 %v714
  %810 = vmatpush.bf16.msra.mxu0 %v668
  %811 = vmatmul.bf16.gmra.mxu0 %v693
  %v812 = vpop.f32.mrf.mxu0
  %v813 = vadd.f32 0.0, %v812
  %v814 = vpop.f32.mrf.mxu0
  %815 = vdwg.mxu0
  %816 = vmatpush.bf16.msra.mxu0 0
  %817 = vmatpush.bf16.msra.mxu0 0
  %818 = vmatpush.bf16.msra.mxu0 0
  %819 = vmatpush.bf16.msra.mxu0 0
  %820 = vmatpush.bf16.msra.mxu0 0
  %821 = vmatpush.bf16.msra.mxu0 0
  %822 = vmatpush.bf16.msra.mxu0 %v717
  %823 = vmatpush.bf16.msra.mxu0 %v669
  %824 = vmatmul.bf16.gmra.mxu0 %v693
  %v825 = vpop.f32.mrf.mxu0
  %v826 = vadd.f32 0.0, %v825
  %v827 = vpop.f32.mrf.mxu0
  %828 = vdwg.mxu0
  %829 = vmatpush.bf16.msra.mxu0 0
  %830 = vmatpush.bf16.msra.mxu0 0
  %831 = vmatpush.bf16.msra.mxu0 0
  %832 = vmatpush.bf16.msra.mxu0 0
  %833 = vmatpush.bf16.msra.mxu0 0
  %834 = vmatpush.bf16.msra.mxu0 0
  %835 = vmatpush.bf16.msra.mxu0 %v720
  %836 = vmatpush.bf16.msra.mxu0 %v670
  %837 = vmatmul.bf16.gmra.mxu0 %v693
  %v838 = vpop.f32.mrf.mxu0
  %v839 = vadd.f32 0.0, %v838
  %v840 = vpop.f32.mrf.mxu0
  %841 = vdwg.mxu0
  %842 = vmatpush.bf16.msra.mxu0 0
  %843 = vmatpush.bf16.msra.mxu0 0
  %844 = vmatpush.bf16.msra.mxu0 0
  %845 = vmatpush.bf16.msra.mxu0 0
  %846 = vmatpush.bf16.msra.mxu0 0
  %847 = vmatpush.bf16.msra.mxu0 0
  %848 = vmatpush.bf16.msra.mxu0 %v723
  %849 = vmatpush.bf16.msra.mxu0 %v671
  %850 = vmatmul.bf16.gmra.mxu0 %v693
  %v851 = vpop.f32.mrf.mxu0
  %v852 = vadd.f32 0.0, %v851
  %v853 = vpop.f32.mrf.mxu0
  %854 = vdwg.mxu0
  %v855 = vadd.f32 %v497, %v735
  %v856 = vadd.f32 %v510, %v748
  %v857 = vadd.f32 %v523, %v761
  %v858 = vadd.f32 %v536, %v774
  %v859 = vadd.f32 %v549, %v787
  %v860 = vadd.f32 %v562, %v800
  %v861 = vadd.f32 %v575, %v813
  %v862 = vadd.f32 %v588, %v826
  %v863 = vadd.f32 %v601, %v839
  %v864 = vadd.f32 %v614, %v852
  %865 = vrot.lane.b32.xlu0 %v117, 1
  %v866 = vpop.permute.xlu0 %865
  %867 = vrot.lane.b32.xlu0 %v118, 1
  %v868 = vpop.permute.xlu0 %867
  %869 = vrot.lane.b32.xlu0 %v119, 1
  %v870 = vpop.permute.xlu0 %869
  %871 = vrot.lane.b32.xlu0 %v120, 1
  %v872 = vpop.permute.xlu0 %871
  %873 = vrot.lane.b32.xlu0 %v121, 1
  %v874 = vpop.permute.xlu0 %873
  %875 = vrot.lane.b32.xlu0 %v122, 1
  %v876 = vpop.permute.xlu0 %875
  %877 = vrot.lane.b32.xlu0 %v123, 1
  %v878 = vpop.permute.xlu0 %877
  %879 = vrot.lane.b32.xlu0 %v124, 1
  %v880 = vpop.permute.xlu0 %879
  %881 = vrot.lane.b32.xlu0 %v125, 1
  %v882 = vpop.permute.xlu0 %881
  %883 = vrot.lane.b32.xlu0 %v126, 1
  %v884 = vpop.permute.xlu0 %883
  %885 = vrot.lane.b32.xlu0 %v127, 1
  %v886 = vpop.permute.xlu0 %885
  %887 = vrot.lane.b32.xlu0 %v128, 1
  %v888 = vpop.permute.xlu0 %887
  %889 = vrot.lane.b32.xlu0 %v129, 1
  %v890 = vpop.permute.xlu0 %889
  %891 = vrot.lane.b32.xlu0 %v130, 1
  %v892 = vpop.permute.xlu0 %891
  %893 = vrot.lane.b32.xlu0 %v131, 1
  %v894 = vpop.permute.xlu0 %893
  %895 = vrot.lane.b32.xlu0 %v132, 1
  %v896 = vpop.permute.xlu0 %895
  %897 = vrot.lane.b32.xlu0 %v133, 1
  %v898 = vpop.permute.xlu0 %897
  %899 = vrot.lane.b32.xlu0 %v134, 1
  %v900 = vpop.permute.xlu0 %899
  %901 = vrot.lane.b32.xlu0 %v135, 1
  %v902 = vpop.permute.xlu0 %901
  %903 = vrot.lane.b32.xlu0 %v136, 1
  %v904 = vpop.permute.xlu0 %903
  %905 = vrot.lane.b32.xlu0 %v137, 1
  %v906 = vpop.permute.xlu0 %905
  %907 = vrot.lane.b32.xlu0 %v138, 1
  %v908 = vpop.permute.xlu0 %907
  %vm909 = vcmask 7168
  %v910 = vsel %vm909, %v866, %v868
  %v911 = vsel %vm909, %v868, %v870
  %v912 = vsel %vm909, %v870, %v872
  %v913 = vsel %vm909, %v872, %v874
  %v914 = vsel %vm909, %v874, %v876
  %v915 = vsel %vm909, %v876, %v878
  %v916 = vsel %vm909, %v878, %v880
  %v917 = vsel %vm909, %v880, %v882
  %v918 = vsel %vm909, %v882, %v884
  %v919 = vsel %vm909, %v884, %v886
  %v920 = vsel %vm909, %v888, %v890
  %v921 = vsel %vm909, %v890, %v892
  %v922 = vsel %vm909, %v892, %v894
  %v923 = vsel %vm909, %v894, %v896
  %v924 = vsel %vm909, %v896, %v898
  %v925 = vsel %vm909, %v898, %v900
  %v926 = vsel %vm909, %v900, %v902
  %v927 = vsel %vm909, %v902, %v904
  %v928 = vsel %vm909, %v904, %v906
  %v929 = vsel %vm909, %v906, %v908
  %v941 = vsel %vm214, %v42, 0
  %v944 = vsel %vm218, %v920, 0
  %v947 = vsel %vm218, %v921, 0
  %v950 = vsel %vm218, %v922, 0
  %v953 = vsel %vm218, %v923, 0
  %v956 = vsel %vm218, %v924, 0
  %v959 = vsel %vm218, %v925, 0
  %v962 = vsel %vm218, %v926, 0
  %v965 = vsel %vm218, %v927, 0
  %v968 = vsel %vm218, %v928, 0
  %v971 = vsel %vm218, %v929, 0
  %973 = vmatpush.bf16.msra.mxu0 0
  %974 = vmatpush.bf16.msra.mxu0 0
  %975 = vmatpush.bf16.msra.mxu0 0
  %976 = vmatpush.bf16.msra.mxu0 0
  %977 = vmatpush.bf16.msra.mxu0 0
  %978 = vmatpush.bf16.msra.mxu0 0
  %979 = vmatpush.bf16.msra.mxu0 %v944
  %980 = vmatpush.bf16.msra.mxu0 %v910
  %981 = vmatmul.bf16.gmra.mxu0 %v941
  %v982 = vpop.f32.mrf.mxu0
  %v983 = vadd.f32 0.0, %v982
  %v984 = vpop.f32.mrf.mxu0
  %985 = vdwg.mxu0
  %986 = vmatpush.bf16.msra.mxu0 0
  %987 = vmatpush.bf16.msra.mxu0 0
  %988 = vmatpush.bf16.msra.mxu0 0
  %989 = vmatpush.bf16.msra.mxu0 0
  %990 = vmatpush.bf16.msra.mxu0 0
  %991 = vmatpush.bf16.msra.mxu0 0
  %992 = vmatpush.bf16.msra.mxu0 %v947
  %993 = vmatpush.bf16.msra.mxu0 %v911
  %994 = vmatmul.bf16.gmra.mxu0 %v941
  %v995 = vpop.f32.mrf.mxu0
  %v996 = vadd.f32 0.0, %v995
  %v997 = vpop.f32.mrf.mxu0
  %998 = vdwg.mxu0
  %999 = vmatpush.bf16.msra.mxu0 0
  %1000 = vmatpush.bf16.msra.mxu0 0
  %1001 = vmatpush.bf16.msra.mxu0 0
  %1002 = vmatpush.bf16.msra.mxu0 0
  %1003 = vmatpush.bf16.msra.mxu0 0
  %1004 = vmatpush.bf16.msra.mxu0 0
  %1005 = vmatpush.bf16.msra.mxu0 %v950
  %1006 = vmatpush.bf16.msra.mxu0 %v912
  %1007 = vmatmul.bf16.gmra.mxu0 %v941
  %v1008 = vpop.f32.mrf.mxu0
  %v1009 = vadd.f32 0.0, %v1008
  %v1010 = vpop.f32.mrf.mxu0
  %1011 = vdwg.mxu0
  %1012 = vmatpush.bf16.msra.mxu0 0
  %1013 = vmatpush.bf16.msra.mxu0 0
  %1014 = vmatpush.bf16.msra.mxu0 0
  %1015 = vmatpush.bf16.msra.mxu0 0
  %1016 = vmatpush.bf16.msra.mxu0 0
  %1017 = vmatpush.bf16.msra.mxu0 0
  %1018 = vmatpush.bf16.msra.mxu0 %v953
  %1019 = vmatpush.bf16.msra.mxu0 %v913
  %1020 = vmatmul.bf16.gmra.mxu0 %v941
  %v1021 = vpop.f32.mrf.mxu0
  %v1022 = vadd.f32 0.0, %v1021
  %v1023 = vpop.f32.mrf.mxu0
  %1024 = vdwg.mxu0
  %1025 = vmatpush.bf16.msra.mxu0 0
  %1026 = vmatpush.bf16.msra.mxu0 0
  %1027 = vmatpush.bf16.msra.mxu0 0
  %1028 = vmatpush.bf16.msra.mxu0 0
  %1029 = vmatpush.bf16.msra.mxu0 0
  %1030 = vmatpush.bf16.msra.mxu0 0
  %1031 = vmatpush.bf16.msra.mxu0 %v956
  %1032 = vmatpush.bf16.msra.mxu0 %v914
  %1033 = vmatmul.bf16.gmra.mxu0 %v941
  %v1034 = vpop.f32.mrf.mxu0
  %v1035 = vadd.f32 0.0, %v1034
  %v1036 = vpop.f32.mrf.mxu0
  %1037 = vdwg.mxu0
  %1038 = vmatpush.bf16.msra.mxu0 0
  %1039 = vmatpush.bf16.msra.mxu0 0
  %1040 = vmatpush.bf16.msra.mxu0 0
  %1041 = vmatpush.bf16.msra.mxu0 0
  %1042 = vmatpush.bf16.msra.mxu0 0
  %1043 = vmatpush.bf16.msra.mxu0 0
  %1044 = vmatpush.bf16.msra.mxu0 %v959
  %1045 = vmatpush.bf16.msra.mxu0 %v915
  %1046 = vmatmul.bf16.gmra.mxu0 %v941
  %v1047 = vpop.f32.mrf.mxu0
  %v1048 = vadd.f32 0.0, %v1047
  %v1049 = vpop.f32.mrf.mxu0
  %1050 = vdwg.mxu0
  %1051 = vmatpush.bf16.msra.mxu0 0
  %1052 = vmatpush.bf16.msra.mxu0 0
  %1053 = vmatpush.bf16.msra.mxu0 0
  %1054 = vmatpush.bf16.msra.mxu0 0
  %1055 = vmatpush.bf16.msra.mxu0 0
  %1056 = vmatpush.bf16.msra.mxu0 0
  %1057 = vmatpush.bf16.msra.mxu0 %v962
  %1058 = vmatpush.bf16.msra.mxu0 %v916
  %1059 = vmatmul.bf16.gmra.mxu0 %v941
  %v1060 = vpop.f32.mrf.mxu0
  %v1061 = vadd.f32 0.0, %v1060
  %v1062 = vpop.f32.mrf.mxu0
  %1063 = vdwg.mxu0
  %1064 = vmatpush.bf16.msra.mxu0 0
  %1065 = vmatpush.bf16.msra.mxu0 0
  %1066 = vmatpush.bf16.msra.mxu0 0
  %1067 = vmatpush.bf16.msra.mxu0 0
  %1068 = vmatpush.bf16.msra.mxu0 0
  %1069 = vmatpush.bf16.msra.mxu0 0
  %1070 = vmatpush.bf16.msra.mxu0 %v965
  %1071 = vmatpush.bf16.msra.mxu0 %v917
  %1072 = vmatmul.bf16.gmra.mxu0 %v941
  %v1073 = vpop.f32.mrf.mxu0
  %v1074 = vadd.f32 0.0, %v1073
  %v1075 = vpop.f32.mrf.mxu0
  %1076 = vdwg.mxu0
  %1077 = vmatpush.bf16.msra.mxu0 0
  %1078 = vmatpush.bf16.msra.mxu0 0
  %1079 = vmatpush.bf16.msra.mxu0 0
  %1080 = vmatpush.bf16.msra.mxu0 0
  %1081 = vmatpush.bf16.msra.mxu0 0
  %1082 = vmatpush.bf16.msra.mxu0 0
  %1083 = vmatpush.bf16.msra.mxu0 %v968
  %1084 = vmatpush.bf16.msra.mxu0 %v918
  %1085 = vmatmul.bf16.gmra.mxu0 %v941
  %v1086 = vpop.f32.mrf.mxu0
  %v1087 = vadd.f32 0.0, %v1086
  %v1088 = vpop.f32.mrf.mxu0
  %1089 = vdwg.mxu0
  %1090 = vmatpush.bf16.msra.mxu0 0
  %1091 = vmatpush.bf16.msra.mxu0 0
  %1092 = vmatpush.bf16.msra.mxu0 0
  %1093 = vmatpush.bf16.msra.mxu0 0
  %1094 = vmatpush.bf16.msra.mxu0 0
  %1095 = vmatpush.bf16.msra.mxu0 0
  %1096 = vmatpush.bf16.msra.mxu0 %v971
  %1097 = vmatpush.bf16.msra.mxu0 %v919
  %1098 = vmatmul.bf16.gmra.mxu0 %v941
  %v1099 = vpop.f32.mrf.mxu0
  %v1100 = vadd.f32 0.0, %v1099
  %v1101 = vpop.f32.mrf.mxu0
  %1102 = vdwg.mxu0
  %v1103 = vadd.f32 %v855, %v983
  %v1104 = vadd.f32 %v856, %v996
  %v1105 = vadd.f32 %v857, %v1009
  %v1106 = vadd.f32 %v858, %v1022
  %v1107 = vadd.f32 %v859, %v1035
  %v1108 = vadd.f32 %v860, %v1048
  %v1109 = vadd.f32 %v861, %v1061
  %v1110 = vadd.f32 %v862, %v1074
  %v1111 = vadd.f32 %v863, %v1087
  %v1112 = vadd.f32 %v864, %v1100
  %v1113 = vld [vmem:[%s0 + $0x4] sm:$0xff]
  %v1114 = vld [vmem:[%s0 + $0xc] sm:$0xff]
  %v1115 = vld [vmem:[%s0 + $0x14] sm:$0xff]
  %v1116 = vld [vmem:[%s0 + $0x1c] sm:$0xff]
  %v1117 = vld [vmem:[%s0 + $0x24] sm:$0xff]
  %v1118 = vld [vmem:[%s0 + $0x34] sm:$0xff]
  %v1119 = vld [vmem:[%s0 + $0x3c] sm:$0xff]
  %v1120 = vld [vmem:[%s0 + $0x44] sm:$0xff]
  %v1121 = vld [vmem:[%s0 + $0x4c] sm:$0xff]
  %v1122 = vld [vmem:[%s0 + $0x54] sm:$0xff]
  %v1123 = vld [vmem:[%s0 + $0x64] sm:$0xff]
  %v1124 = vld [vmem:[%s0 + $0x6c] sm:$0xff]
  %v1125 = vld [vmem:[%s0 + $0x74] sm:$0xff]
  %v1126 = vld [vmem:[%s0 + $0x7c] sm:$0xff]
  %v1127 = vld [vmem:[%s0 + $0x84] sm:$0xff]
  %v1143 = vunpack.c.l.b16 %v1113
  %v1144 = vunpack.c.h.b16 %v1113
  %v1145 = vunpack.c.l.b16 %v1114
  %v1146 = vunpack.c.h.b16 %v1114
  %v1147 = vunpack.c.l.b16 %v1115
  %v1148 = vunpack.c.h.b16 %v1115
  %v1149 = vunpack.c.l.b16 %v1116
  %v1150 = vunpack.c.h.b16 %v1116
  %v1151 = vunpack.c.l.b16 %v1117
  %v1152 = vunpack.c.h.b16 %v1117
  %v1153 = vunpack.c.l.b16 %v1118
  %v1154 = vunpack.c.h.b16 %v1118
  %v1155 = vunpack.c.l.b16 %v1119
  %v1156 = vunpack.c.h.b16 %v1119
  %v1157 = vunpack.c.l.b16 %v1120
  %v1158 = vunpack.c.h.b16 %v1120
  %v1159 = vunpack.c.l.b16 %v1121
  %v1160 = vunpack.c.h.b16 %v1121
  %v1161 = vunpack.c.l.b16 %v1122
  %v1162 = vunpack.c.h.b16 %v1122
  %v1163 = vunpack.c.l.b16 %v1123
  %v1164 = vunpack.c.h.b16 %v1123
  %v1165 = vunpack.c.l.b16 %v1124
  %v1166 = vunpack.c.h.b16 %v1124
  %v1167 = vunpack.c.l.b16 %v1125
  %v1168 = vunpack.c.h.b16 %v1125
  %v1169 = vunpack.c.l.b16 %v1126
  %v1170 = vunpack.c.h.b16 %v1126
  %v1171 = vunpack.c.l.b16 %v1127
  %v1172 = vunpack.c.h.b16 %v1127
  %v1173 = vpack.c.b16 %v1153, %v1143
  %v1174 = vpack.c.b16 %v1154, %v1144
  %v1175 = vpack.c.b16 %v1155, %v1145
  %v1176 = vpack.c.b16 %v1156, %v1146
  %v1177 = vpack.c.b16 %v1157, %v1147
  %v1178 = vpack.c.b16 %v1158, %v1148
  %v1179 = vpack.c.b16 %v1159, %v1149
  %v1180 = vpack.c.b16 %v1160, %v1150
  %v1181 = vpack.c.b16 %v1161, %v1151
  %v1182 = vpack.c.b16 %v1162, %v1152
  %v1183 = vpack.c.b16 %v1163, %v1163
  %v1184 = vpack.c.b16 %v1164, %v1164
  %v1185 = vpack.c.b16 %v1165, %v1165
  %v1186 = vpack.c.b16 %v1166, %v1166
  %v1187 = vpack.c.b16 %v1167, %v1167
  %v1188 = vpack.c.b16 %v1168, %v1168
  %v1189 = vpack.c.b16 %v1169, %v1169
  %v1190 = vpack.c.b16 %v1170, %v1170
  %v1191 = vpack.c.b16 %v1171, %v1171
  %v1192 = vpack.c.b16 %v1172, %v1172
  %v1204 = vsel %vm214, %v43, 0
  %v1207 = vsel %vm218, %v1183, 0
  %v1210 = vsel %vm218, %v1184, 0
  %v1213 = vsel %vm218, %v1185, 0
  %v1216 = vsel %vm218, %v1186, 0
  %v1219 = vsel %vm218, %v1187, 0
  %v1222 = vsel %vm218, %v1188, 0
  %v1225 = vsel %vm218, %v1189, 0
  %v1228 = vsel %vm218, %v1190, 0
  %v1231 = vsel %vm218, %v1191, 0
  %v1234 = vsel %vm218, %v1192, 0
  %1236 = vmatpush.bf16.msra.mxu0 0
  %1237 = vmatpush.bf16.msra.mxu0 0
  %1238 = vmatpush.bf16.msra.mxu0 0
  %1239 = vmatpush.bf16.msra.mxu0 0
  %1240 = vmatpush.bf16.msra.mxu0 0
  %1241 = vmatpush.bf16.msra.mxu0 0
  %1242 = vmatpush.bf16.msra.mxu0 %v1207
  %1243 = vmatpush.bf16.msra.mxu0 %v1173
  %1244 = vmatmul.bf16.gmra.mxu0 %v1204
  %v1245 = vpop.f32.mrf.mxu0
  %v1246 = vadd.f32 0.0, %v1245
  %v1247 = vpop.f32.mrf.mxu0
  %1248 = vdwg.mxu0
  %1249 = vmatpush.bf16.msra.mxu0 0
  %1250 = vmatpush.bf16.msra.mxu0 0
  %1251 = vmatpush.bf16.msra.mxu0 0
  %1252 = vmatpush.bf16.msra.mxu0 0
  %1253 = vmatpush.bf16.msra.mxu0 0
  %1254 = vmatpush.bf16.msra.mxu0 0
  %1255 = vmatpush.bf16.msra.mxu0 %v1210
  %1256 = vmatpush.bf16.msra.mxu0 %v1174
  %1257 = vmatmul.bf16.gmra.mxu0 %v1204
  %v1258 = vpop.f32.mrf.mxu0
  %v1259 = vadd.f32 0.0, %v1258
  %v1260 = vpop.f32.mrf.mxu0
  %1261 = vdwg.mxu0
  %1262 = vmatpush.bf16.msra.mxu0 0
  %1263 = vmatpush.bf16.msra.mxu0 0
  %1264 = vmatpush.bf16.msra.mxu0 0
  %1265 = vmatpush.bf16.msra.mxu0 0
  %1266 = vmatpush.bf16.msra.mxu0 0
  %1267 = vmatpush.bf16.msra.mxu0 0
  %1268 = vmatpush.bf16.msra.mxu0 %v1213
  %1269 = vmatpush.bf16.msra.mxu0 %v1175
  %1270 = vmatmul.bf16.gmra.mxu0 %v1204
  %v1271 = vpop.f32.mrf.mxu0
  %v1272 = vadd.f32 0.0, %v1271
  %v1273 = vpop.f32.mrf.mxu0
  %1274 = vdwg.mxu0
  %1275 = vmatpush.bf16.msra.mxu0 0
  %1276 = vmatpush.bf16.msra.mxu0 0
  %1277 = vmatpush.bf16.msra.mxu0 0
  %1278 = vmatpush.bf16.msra.mxu0 0
  %1279 = vmatpush.bf16.msra.mxu0 0
  %1280 = vmatpush.bf16.msra.mxu0 0
  %1281 = vmatpush.bf16.msra.mxu0 %v1216
  %1282 = vmatpush.bf16.msra.mxu0 %v1176
  %1283 = vmatmul.bf16.gmra.mxu0 %v1204
  %v1284 = vpop.f32.mrf.mxu0
  %v1285 = vadd.f32 0.0, %v1284
  %v1286 = vpop.f32.mrf.mxu0
  %1287 = vdwg.mxu0
  %1288 = vmatpush.bf16.msra.mxu0 0
  %1289 = vmatpush.bf16.msra.mxu0 0
  %1290 = vmatpush.bf16.msra.mxu0 0
  %1291 = vmatpush.bf16.msra.mxu0 0
  %1292 = vmatpush.bf16.msra.mxu0 0
  %1293 = vmatpush.bf16.msra.mxu0 0
  %1294 = vmatpush.bf16.msra.mxu0 %v1219
  %1295 = vmatpush.bf16.msra.mxu0 %v1177
  %1296 = vmatmul.bf16.gmra.mxu0 %v1204
  %v1297 = vpop.f32.mrf.mxu0
  %v1298 = vadd.f32 0.0, %v1297
  %v1299 = vpop.f32.mrf.mxu0
  %1300 = vdwg.mxu0
  %1301 = vmatpush.bf16.msra.mxu0 0
  %1302 = vmatpush.bf16.msra.mxu0 0
  %1303 = vmatpush.bf16.msra.mxu0 0
  %1304 = vmatpush.bf16.msra.mxu0 0
  %1305 = vmatpush.bf16.msra.mxu0 0
  %1306 = vmatpush.bf16.msra.mxu0 0
  %1307 = vmatpush.bf16.msra.mxu0 %v1222
  %1308 = vmatpush.bf16.msra.mxu0 %v1178
  %1309 = vmatmul.bf16.gmra.mxu0 %v1204
  %v1310 = vpop.f32.mrf.mxu0
  %v1311 = vadd.f32 0.0, %v1310
  %v1312 = vpop.f32.mrf.mxu0
  %1313 = vdwg.mxu0
  %1314 = vmatpush.bf16.msra.mxu0 0
  %1315 = vmatpush.bf16.msra.mxu0 0
  %1316 = vmatpush.bf16.msra.mxu0 0
  %1317 = vmatpush.bf16.msra.mxu0 0
  %1318 = vmatpush.bf16.msra.mxu0 0
  %1319 = vmatpush.bf16.msra.mxu0 0
  %1320 = vmatpush.bf16.msra.mxu0 %v1225
  %1321 = vmatpush.bf16.msra.mxu0 %v1179
  %1322 = vmatmul.bf16.gmra.mxu0 %v1204
  %v1323 = vpop.f32.mrf.mxu0
  %v1324 = vadd.f32 0.0, %v1323
  %v1325 = vpop.f32.mrf.mxu0
  %1326 = vdwg.mxu0
  %1327 = vmatpush.bf16.msra.mxu0 0
  %1328 = vmatpush.bf16.msra.mxu0 0
  %1329 = vmatpush.bf16.msra.mxu0 0
  %1330 = vmatpush.bf16.msra.mxu0 0
  %1331 = vmatpush.bf16.msra.mxu0 0
  %1332 = vmatpush.bf16.msra.mxu0 0
  %1333 = vmatpush.bf16.msra.mxu0 %v1228
  %1334 = vmatpush.bf16.msra.mxu0 %v1180
  %1335 = vmatmul.bf16.gmra.mxu0 %v1204
  %v1336 = vpop.f32.mrf.mxu0
  %v1337 = vadd.f32 0.0, %v1336
  %v1338 = vpop.f32.mrf.mxu0
  %1339 = vdwg.mxu0
  %1340 = vmatpush.bf16.msra.mxu0 0
  %1341 = vmatpush.bf16.msra.mxu0 0
  %1342 = vmatpush.bf16.msra.mxu0 0
  %1343 = vmatpush.bf16.msra.mxu0 0
  %1344 = vmatpush.bf16.msra.mxu0 0
  %1345 = vmatpush.bf16.msra.mxu0 0
  %1346 = vmatpush.bf16.msra.mxu0 %v1231
  %1347 = vmatpush.bf16.msra.mxu0 %v1181
  %1348 = vmatmul.bf16.gmra.mxu0 %v1204
  %v1349 = vpop.f32.mrf.mxu0
  %v1350 = vadd.f32 0.0, %v1349
  %v1351 = vpop.f32.mrf.mxu0
  %1352 = vdwg.mxu0
  %1353 = vmatpush.bf16.msra.mxu0 0
  %1354 = vmatpush.bf16.msra.mxu0 0
  %1355 = vmatpush.bf16.msra.mxu0 0
  %1356 = vmatpush.bf16.msra.mxu0 0
  %1357 = vmatpush.bf16.msra.mxu0 0
  %1358 = vmatpush.bf16.msra.mxu0 0
  %1359 = vmatpush.bf16.msra.mxu0 %v1234
  %1360 = vmatpush.bf16.msra.mxu0 %v1182
  %1361 = vmatmul.bf16.gmra.mxu0 %v1204
  %v1362 = vpop.f32.mrf.mxu0
  %v1363 = vadd.f32 0.0, %v1362
  %v1364 = vpop.f32.mrf.mxu0
  %1365 = vdwg.mxu0
  %v1366 = vadd.f32 %v1103, %v1246
  %v1367 = vadd.f32 %v1104, %v1259
  %v1368 = vadd.f32 %v1105, %v1272
  %v1369 = vadd.f32 %v1106, %v1285
  %v1370 = vadd.f32 %v1107, %v1298
  %v1371 = vadd.f32 %v1108, %v1311
  %v1372 = vadd.f32 %v1109, %v1324
  %v1373 = vadd.f32 %v1110, %v1337
  %v1374 = vadd.f32 %v1111, %v1350
  %v1375 = vadd.f32 %v1112, %v1363
  %v1376 = vld [vmem:[%s0 + $0x4] sm:$0xff]
  %v1377 = vld [vmem:[%s0 + $0xc] sm:$0xff]
  %v1378 = vld [vmem:[%s0 + $0x14] sm:$0xff]
  %v1379 = vld [vmem:[%s0 + $0x1c] sm:$0xff]
  %v1380 = vld [vmem:[%s0 + $0x24] sm:$0xff]
  %v1381 = vld [vmem:[%s0 + $0x2c] sm:$0xf]
  %v1382 = vld [vmem:[%s0 + $0x34] sm:$0xff]
  %v1383 = vld [vmem:[%s0 + $0x3c] sm:$0xff]
  %v1384 = vld [vmem:[%s0 + $0x44] sm:$0xff]
  %v1385 = vld [vmem:[%s0 + $0x4c] sm:$0xff]
  %v1386 = vld [vmem:[%s0 + $0x54] sm:$0xff]
  %v1387 = vld [vmem:[%s0 + $0x5c] sm:$0xf]
  %v1388 = vld [vmem:[%s0 + $0x64] sm:$0xff]
  %v1389 = vld [vmem:[%s0 + $0x6c] sm:$0xff]
  %v1390 = vld [vmem:[%s0 + $0x74] sm:$0xff]
  %v1391 = vld [vmem:[%s0 + $0x7c] sm:$0xff]
  %v1392 = vld [vmem:[%s0 + $0x84] sm:$0xff]
  %v1393 = vld [vmem:[%s0 + $0x8c] sm:$0xf]
  %v1412 = vunpack.c.l.b16 %v1376
  %v1413 = vunpack.c.h.b16 %v1376
  %v1414 = vunpack.c.l.b16 %v1377
  %v1415 = vunpack.c.h.b16 %v1377
  %v1416 = vunpack.c.l.b16 %v1378
  %v1417 = vunpack.c.h.b16 %v1378
  %v1418 = vunpack.c.l.b16 %v1379
  %v1419 = vunpack.c.h.b16 %v1379
  %v1420 = vunpack.c.l.b16 %v1380
  %v1421 = vunpack.c.h.b16 %v1380
  %v1422 = vunpack.c.l.b16 %v1381
  %v1423 = vunpack.c.l.b16 %v1382
  %v1424 = vunpack.c.h.b16 %v1382
  %v1425 = vunpack.c.l.b16 %v1383
  %v1426 = vunpack.c.h.b16 %v1383
  %v1427 = vunpack.c.l.b16 %v1384
  %v1428 = vunpack.c.h.b16 %v1384
  %v1429 = vunpack.c.l.b16 %v1385
  %v1430 = vunpack.c.h.b16 %v1385
  %v1431 = vunpack.c.l.b16 %v1386
  %v1432 = vunpack.c.h.b16 %v1386
  %v1433 = vunpack.c.l.b16 %v1387
  %v1434 = vunpack.c.l.b16 %v1388
  %v1435 = vunpack.c.h.b16 %v1388
  %v1436 = vunpack.c.l.b16 %v1389
  %v1437 = vunpack.c.h.b16 %v1389
  %v1438 = vunpack.c.l.b16 %v1390
  %v1439 = vunpack.c.h.b16 %v1390
  %v1440 = vunpack.c.l.b16 %v1391
  %v1441 = vunpack.c.h.b16 %v1391
  %v1442 = vunpack.c.l.b16 %v1392
  %v1443 = vunpack.c.h.b16 %v1392
  %v1444 = vunpack.c.l.b16 %v1393
  %v1445 = vpack.c.b16 %v1423, %v1412
  %v1446 = vpack.c.b16 %v1424, %v1413
  %v1447 = vpack.c.b16 %v1425, %v1414
  %v1448 = vpack.c.b16 %v1426, %v1415
  %v1449 = vpack.c.b16 %v1427, %v1416
  %v1450 = vpack.c.b16 %v1428, %v1417
  %v1451 = vpack.c.b16 %v1429, %v1418
  %v1452 = vpack.c.b16 %v1430, %v1419
  %v1453 = vpack.c.b16 %v1431, %v1420
  %v1454 = vpack.c.b16 %v1432, %v1421
  %v1455 = vpack.c.b16 %v1433, %v1422
  %v1456 = vpack.c.b16 %v1434, %v1434
  %v1457 = vpack.c.b16 %v1435, %v1435
  %v1458 = vpack.c.b16 %v1436, %v1436
  %v1459 = vpack.c.b16 %v1437, %v1437
  %v1460 = vpack.c.b16 %v1438, %v1438
  %v1461 = vpack.c.b16 %v1439, %v1439
  %v1462 = vpack.c.b16 %v1440, %v1440
  %v1463 = vpack.c.b16 %v1441, %v1441
  %v1464 = vpack.c.b16 %v1442, %v1442
  %v1465 = vpack.c.b16 %v1443, %v1443
  %v1466 = vpack.c.b16 %v1444, %v1444
  %1467 = vrot.lane.b32.xlu0 %v1445, 127
  %v1468 = vpop.permute.xlu0 %1467
  %1469 = vrot.lane.b32.xlu0 %v1446, 127
  %v1470 = vpop.permute.xlu0 %1469
  %1471 = vrot.lane.b32.xlu0 %v1447, 127
  %v1472 = vpop.permute.xlu0 %1471
  %1473 = vrot.lane.b32.xlu0 %v1448, 127
  %v1474 = vpop.permute.xlu0 %1473
  %1475 = vrot.lane.b32.xlu0 %v1449, 127
  %v1476 = vpop.permute.xlu0 %1475
  %1477 = vrot.lane.b32.xlu0 %v1450, 127
  %v1478 = vpop.permute.xlu0 %1477
  %1479 = vrot.lane.b32.xlu0 %v1451, 127
  %v1480 = vpop.permute.xlu0 %1479
  %1481 = vrot.lane.b32.xlu0 %v1452, 127
  %v1482 = vpop.permute.xlu0 %1481
  %1483 = vrot.lane.b32.xlu0 %v1453, 127
  %v1484 = vpop.permute.xlu0 %1483
  %1485 = vrot.lane.b32.xlu0 %v1454, 127
  %v1486 = vpop.permute.xlu0 %1485
  %1487 = vrot.lane.b32.xlu0 %v1455, 127
  %v1488 = vpop.permute.xlu0 %1487
  %1489 = vrot.lane.b32.xlu0 %v1456, 127
  %v1490 = vpop.permute.xlu0 %1489
  %1491 = vrot.lane.b32.xlu0 %v1457, 127
  %v1492 = vpop.permute.xlu0 %1491
  %1493 = vrot.lane.b32.xlu0 %v1458, 127
  %v1494 = vpop.permute.xlu0 %1493
  %1495 = vrot.lane.b32.xlu0 %v1459, 127
  %v1496 = vpop.permute.xlu0 %1495
  %1497 = vrot.lane.b32.xlu0 %v1460, 127
  %v1498 = vpop.permute.xlu0 %1497
  %1499 = vrot.lane.b32.xlu0 %v1461, 127
  %v1500 = vpop.permute.xlu0 %1499
  %1501 = vrot.lane.b32.xlu0 %v1462, 127
  %v1502 = vpop.permute.xlu0 %1501
  %1503 = vrot.lane.b32.xlu0 %v1463, 127
  %v1504 = vpop.permute.xlu0 %1503
  %1505 = vrot.lane.b32.xlu0 %v1464, 127
  %v1506 = vpop.permute.xlu0 %1505
  %1507 = vrot.lane.b32.xlu0 %v1465, 127
  %v1508 = vpop.permute.xlu0 %1507
  %1509 = vrot.lane.b32.xlu0 %v1466, 127
  %v1510 = vpop.permute.xlu0 %1509
  %vm1511 = vcmask 1039360
  %v1512 = vsel %vm1511, %v1468, %v1470
  %v1513 = vsel %vm1511, %v1470, %v1472
  %v1514 = vsel %vm1511, %v1472, %v1474
  %v1515 = vsel %vm1511, %v1474, %v1476
  %v1516 = vsel %vm1511, %v1476, %v1478
  %v1517 = vsel %vm1511, %v1478, %v1480
  %v1518 = vsel %vm1511, %v1480, %v1482
  %v1519 = vsel %vm1511, %v1482, %v1484
  %v1520 = vsel %vm1511, %v1484, %v1486
  %v1521 = vsel %vm1511, %v1486, %v1488
  %v1522 = vsel %vm1511, %v1490, %v1492
  %v1523 = vsel %vm1511, %v1492, %v1494
  %v1524 = vsel %vm1511, %v1494, %v1496
  %v1525 = vsel %vm1511, %v1496, %v1498
  %v1526 = vsel %vm1511, %v1498, %v1500
  %v1527 = vsel %vm1511, %v1500, %v1502
  %v1528 = vsel %vm1511, %v1502, %v1504
  %v1529 = vsel %vm1511, %v1504, %v1506
  %v1530 = vsel %vm1511, %v1506, %v1508
  %v1531 = vsel %vm1511, %v1508, %v1510
  %v1543 = vsel %vm214, %v44, 0
  %v1546 = vsel %vm218, %v1522, 0
  %v1549 = vsel %vm218, %v1523, 0
  %v1552 = vsel %vm218, %v1524, 0
  %v1555 = vsel %vm218, %v1525, 0
  %v1558 = vsel %vm218, %v1526, 0
  %v1561 = vsel %vm218, %v1527, 0
  %v1564 = vsel %vm218, %v1528, 0
  %v1567 = vsel %vm218, %v1529, 0
  %v1570 = vsel %vm218, %v1530, 0
  %v1573 = vsel %vm218, %v1531, 0
  %1575 = vmatpush.bf16.msra.mxu0 0
  %1576 = vmatpush.bf16.msra.mxu0 0
  %1577 = vmatpush.bf16.msra.mxu0 0
  %1578 = vmatpush.bf16.msra.mxu0 0
  %1579 = vmatpush.bf16.msra.mxu0 0
  %1580 = vmatpush.bf16.msra.mxu0 0
  %1581 = vmatpush.bf16.msra.mxu0 %v1546
  %1582 = vmatpush.bf16.msra.mxu0 %v1512
  %1583 = vmatmul.bf16.gmra.mxu0 %v1543
  %v1584 = vpop.f32.mrf.mxu0
  %v1585 = vadd.f32 0.0, %v1584
  %v1586 = vpop.f32.mrf.mxu0
  %1587 = vdwg.mxu0
  %1588 = vmatpush.bf16.msra.mxu0 0
  %1589 = vmatpush.bf16.msra.mxu0 0
  %1590 = vmatpush.bf16.msra.mxu0 0
  %1591 = vmatpush.bf16.msra.mxu0 0
  %1592 = vmatpush.bf16.msra.mxu0 0
  %1593 = vmatpush.bf16.msra.mxu0 0
  %1594 = vmatpush.bf16.msra.mxu0 %v1549
  %1595 = vmatpush.bf16.msra.mxu0 %v1513
  %1596 = vmatmul.bf16.gmra.mxu0 %v1543
  %v1597 = vpop.f32.mrf.mxu0
  %v1598 = vadd.f32 0.0, %v1597
  %v1599 = vpop.f32.mrf.mxu0
  %1600 = vdwg.mxu0
  %1601 = vmatpush.bf16.msra.mxu0 0
  %1602 = vmatpush.bf16.msra.mxu0 0
  %1603 = vmatpush.bf16.msra.mxu0 0
  %1604 = vmatpush.bf16.msra.mxu0 0
  %1605 = vmatpush.bf16.msra.mxu0 0
  %1606 = vmatpush.bf16.msra.mxu0 0
  %1607 = vmatpush.bf16.msra.mxu0 %v1552
  %1608 = vmatpush.bf16.msra.mxu0 %v1514
  %1609 = vmatmul.bf16.gmra.mxu0 %v1543
  %v1610 = vpop.f32.mrf.mxu0
  %v1611 = vadd.f32 0.0, %v1610
  %v1612 = vpop.f32.mrf.mxu0
  %1613 = vdwg.mxu0
  %1614 = vmatpush.bf16.msra.mxu0 0
  %1615 = vmatpush.bf16.msra.mxu0 0
  %1616 = vmatpush.bf16.msra.mxu0 0
  %1617 = vmatpush.bf16.msra.mxu0 0
  %1618 = vmatpush.bf16.msra.mxu0 0
  %1619 = vmatpush.bf16.msra.mxu0 0
  %1620 = vmatpush.bf16.msra.mxu0 %v1555
  %1621 = vmatpush.bf16.msra.mxu0 %v1515
  %1622 = vmatmul.bf16.gmra.mxu0 %v1543
  %v1623 = vpop.f32.mrf.mxu0
  %v1624 = vadd.f32 0.0, %v1623
  %v1625 = vpop.f32.mrf.mxu0
  %1626 = vdwg.mxu0
  %1627 = vmatpush.bf16.msra.mxu0 0
  %1628 = vmatpush.bf16.msra.mxu0 0
  %1629 = vmatpush.bf16.msra.mxu0 0
  %1630 = vmatpush.bf16.msra.mxu0 0
  %1631 = vmatpush.bf16.msra.mxu0 0
  %1632 = vmatpush.bf16.msra.mxu0 0
  %1633 = vmatpush.bf16.msra.mxu0 %v1558
  %1634 = vmatpush.bf16.msra.mxu0 %v1516
  %1635 = vmatmul.bf16.gmra.mxu0 %v1543
  %v1636 = vpop.f32.mrf.mxu0
  %v1637 = vadd.f32 0.0, %v1636
  %v1638 = vpop.f32.mrf.mxu0
  %1639 = vdwg.mxu0
  %1640 = vmatpush.bf16.msra.mxu0 0
  %1641 = vmatpush.bf16.msra.mxu0 0
  %1642 = vmatpush.bf16.msra.mxu0 0
  %1643 = vmatpush.bf16.msra.mxu0 0
  %1644 = vmatpush.bf16.msra.mxu0 0
  %1645 = vmatpush.bf16.msra.mxu0 0
  %1646 = vmatpush.bf16.msra.mxu0 %v1561
  %1647 = vmatpush.bf16.msra.mxu0 %v1517
  %1648 = vmatmul.bf16.gmra.mxu0 %v1543
  %v1649 = vpop.f32.mrf.mxu0
  %v1650 = vadd.f32 0.0, %v1649
  %v1651 = vpop.f32.mrf.mxu0
  %1652 = vdwg.mxu0
  %1653 = vmatpush.bf16.msra.mxu0 0
  %1654 = vmatpush.bf16.msra.mxu0 0
  %1655 = vmatpush.bf16.msra.mxu0 0
  %1656 = vmatpush.bf16.msra.mxu0 0
  %1657 = vmatpush.bf16.msra.mxu0 0
  %1658 = vmatpush.bf16.msra.mxu0 0
  %1659 = vmatpush.bf16.msra.mxu0 %v1564
  %1660 = vmatpush.bf16.msra.mxu0 %v1518
  %1661 = vmatmul.bf16.gmra.mxu0 %v1543
  %v1662 = vpop.f32.mrf.mxu0
  %v1663 = vadd.f32 0.0, %v1662
  %v1664 = vpop.f32.mrf.mxu0
  %1665 = vdwg.mxu0
  %1666 = vmatpush.bf16.msra.mxu0 0
  %1667 = vmatpush.bf16.msra.mxu0 0
  %1668 = vmatpush.bf16.msra.mxu0 0
  %1669 = vmatpush.bf16.msra.mxu0 0
  %1670 = vmatpush.bf16.msra.mxu0 0
  %1671 = vmatpush.bf16.msra.mxu0 0
  %1672 = vmatpush.bf16.msra.mxu0 %v1567
  %1673 = vmatpush.bf16.msra.mxu0 %v1519
  %1674 = vmatmul.bf16.gmra.mxu0 %v1543
  %v1675 = vpop.f32.mrf.mxu0
  %v1676 = vadd.f32 0.0, %v1675
  %v1677 = vpop.f32.mrf.mxu0
  %1678 = vdwg.mxu0
  %1679 = vmatpush.bf16.msra.mxu0 0
  %1680 = vmatpush.bf16.msra.mxu0 0
  %1681 = vmatpush.bf16.msra.mxu0 0
  %1682 = vmatpush.bf16.msra.mxu0 0
  %1683 = vmatpush.bf16.msra.mxu0 0
  %1684 = vmatpush.bf16.msra.mxu0 0
  %1685 = vmatpush.bf16.msra.mxu0 %v1570
  %1686 = vmatpush.bf16.msra.mxu0 %v1520
  %1687 = vmatmul.bf16.gmra.mxu0 %v1543
  %v1688 = vpop.f32.mrf.mxu0
  %v1689 = vadd.f32 0.0, %v1688
  %v1690 = vpop.f32.mrf.mxu0
  %1691 = vdwg.mxu0
  %1692 = vmatpush.bf16.msra.mxu0 0
  %1693 = vmatpush.bf16.msra.mxu0 0
  %1694 = vmatpush.bf16.msra.mxu0 0
  %1695 = vmatpush.bf16.msra.mxu0 0
  %1696 = vmatpush.bf16.msra.mxu0 0
  %1697 = vmatpush.bf16.msra.mxu0 0
  %1698 = vmatpush.bf16.msra.mxu0 %v1573
  %1699 = vmatpush.bf16.msra.mxu0 %v1521
  %1700 = vmatmul.bf16.gmra.mxu0 %v1543
  %v1701 = vpop.f32.mrf.mxu0
  %v1702 = vadd.f32 0.0, %v1701
  %v1703 = vpop.f32.mrf.mxu0
  %1704 = vdwg.mxu0
  %v1705 = vadd.f32 %v1366, %v1585
  %v1706 = vadd.f32 %v1367, %v1598
  %v1707 = vadd.f32 %v1368, %v1611
  %v1708 = vadd.f32 %v1369, %v1624
  %v1709 = vadd.f32 %v1370, %v1637
  %v1710 = vadd.f32 %v1371, %v1650
  %v1711 = vadd.f32 %v1372, %v1663
  %v1712 = vadd.f32 %v1373, %v1676
  %v1713 = vadd.f32 %v1374, %v1689
  %v1714 = vadd.f32 %v1375, %v1702
  %1715 = vrot.lane.b32.xlu0 %v1445, 111
  %v1716 = vpop.permute.xlu0 %1715
  %1717 = vrot.lane.b32.xlu0 %v1446, 111
  %v1718 = vpop.permute.xlu0 %1717
  %1719 = vrot.lane.b32.xlu0 %v1447, 111
  %v1720 = vpop.permute.xlu0 %1719
  %1721 = vrot.lane.b32.xlu0 %v1448, 111
  %v1722 = vpop.permute.xlu0 %1721
  %1723 = vrot.lane.b32.xlu0 %v1449, 111
  %v1724 = vpop.permute.xlu0 %1723
  %1725 = vrot.lane.b32.xlu0 %v1450, 111
  %v1726 = vpop.permute.xlu0 %1725
  %1727 = vrot.lane.b32.xlu0 %v1451, 111
  %v1728 = vpop.permute.xlu0 %1727
  %1729 = vrot.lane.b32.xlu0 %v1452, 111
  %v1730 = vpop.permute.xlu0 %1729
  %1731 = vrot.lane.b32.xlu0 %v1453, 111
  %v1732 = vpop.permute.xlu0 %1731
  %1733 = vrot.lane.b32.xlu0 %v1454, 111
  %v1734 = vpop.permute.xlu0 %1733
  %1735 = vrot.lane.b32.xlu0 %v1455, 111
  %v1736 = vpop.permute.xlu0 %1735
  %1737 = vrot.lane.b32.xlu0 %v1456, 111
  %v1738 = vpop.permute.xlu0 %1737
  %1739 = vrot.lane.b32.xlu0 %v1457, 111
  %v1740 = vpop.permute.xlu0 %1739
  %1741 = vrot.lane.b32.xlu0 %v1458, 111
  %v1742 = vpop.permute.xlu0 %1741
  %1743 = vrot.lane.b32.xlu0 %v1459, 111
  %v1744 = vpop.permute.xlu0 %1743
  %1745 = vrot.lane.b32.xlu0 %v1460, 111
  %v1746 = vpop.permute.xlu0 %1745
  %1747 = vrot.lane.b32.xlu0 %v1461, 111
  %v1748 = vpop.permute.xlu0 %1747
  %1749 = vrot.lane.b32.xlu0 %v1462, 111
  %v1750 = vpop.permute.xlu0 %1749
  %1751 = vrot.lane.b32.xlu0 %v1463, 111
  %v1752 = vpop.permute.xlu0 %1751
  %1753 = vrot.lane.b32.xlu0 %v1464, 111
  %v1754 = vpop.permute.xlu0 %1753
  %1755 = vrot.lane.b32.xlu0 %v1465, 111
  %v1756 = vpop.permute.xlu0 %1755
  %1757 = vrot.lane.b32.xlu0 %v1466, 111
  %v1758 = vpop.permute.xlu0 %1757
  %vm1759 = vcmask 908288
  %v1760 = vsel %vm1759, %v1716, %v1718
  %v1761 = vsel %vm1759, %v1718, %v1720
  %v1762 = vsel %vm1759, %v1720, %v1722
  %v1763 = vsel %vm1759, %v1722, %v1724
  %v1764 = vsel %vm1759, %v1724, %v1726
  %v1765 = vsel %vm1759, %v1726, %v1728
  %v1766 = vsel %vm1759, %v1728, %v1730
  %v1767 = vsel %vm1759, %v1730, %v1732
  %v1768 = vsel %vm1759, %v1732, %v1734
  %v1769 = vsel %vm1759, %v1734, %v1736
  %v1770 = vsel %vm1759, %v1738, %v1740
  %v1771 = vsel %vm1759, %v1740, %v1742
  %v1772 = vsel %vm1759, %v1742, %v1744
  %v1773 = vsel %vm1759, %v1744, %v1746
  %v1774 = vsel %vm1759, %v1746, %v1748
  %v1775 = vsel %vm1759, %v1748, %v1750
  %v1776 = vsel %vm1759, %v1750, %v1752
  %v1777 = vsel %vm1759, %v1752, %v1754
  %v1778 = vsel %vm1759, %v1754, %v1756
  %v1779 = vsel %vm1759, %v1756, %v1758
  %v1791 = vsel %vm214, %v45, 0
  %v1794 = vsel %vm218, %v1770, 0
  %v1797 = vsel %vm218, %v1771, 0
  %v1800 = vsel %vm218, %v1772, 0
  %v1803 = vsel %vm218, %v1773, 0
  %v1806 = vsel %vm218, %v1774, 0
  %v1809 = vsel %vm218, %v1775, 0
  %v1812 = vsel %vm218, %v1776, 0
  %v1815 = vsel %vm218, %v1777, 0
  %v1818 = vsel %vm218, %v1778, 0
  %v1821 = vsel %vm218, %v1779, 0
  %1823 = vmatpush.bf16.msra.mxu0 0
  %1824 = vmatpush.bf16.msra.mxu0 0
  %1825 = vmatpush.bf16.msra.mxu0 0
  %1826 = vmatpush.bf16.msra.mxu0 0
  %1827 = vmatpush.bf16.msra.mxu0 0
  %1828 = vmatpush.bf16.msra.mxu0 0
  %1829 = vmatpush.bf16.msra.mxu0 %v1794
  %1830 = vmatpush.bf16.msra.mxu0 %v1760
  %1831 = vmatmul.bf16.gmra.mxu0 %v1791
  %v1832 = vpop.f32.mrf.mxu0
  %v1833 = vadd.f32 0.0, %v1832
  %v1834 = vpop.f32.mrf.mxu0
  %1835 = vdwg.mxu0
  %1836 = vmatpush.bf16.msra.mxu0 0
  %1837 = vmatpush.bf16.msra.mxu0 0
  %1838 = vmatpush.bf16.msra.mxu0 0
  %1839 = vmatpush.bf16.msra.mxu0 0
  %1840 = vmatpush.bf16.msra.mxu0 0
  %1841 = vmatpush.bf16.msra.mxu0 0
  %1842 = vmatpush.bf16.msra.mxu0 %v1797
  %1843 = vmatpush.bf16.msra.mxu0 %v1761
  %1844 = vmatmul.bf16.gmra.mxu0 %v1791
  %v1845 = vpop.f32.mrf.mxu0
  %v1846 = vadd.f32 0.0, %v1845
  %v1847 = vpop.f32.mrf.mxu0
  %1848 = vdwg.mxu0
  %1849 = vmatpush.bf16.msra.mxu0 0
  %1850 = vmatpush.bf16.msra.mxu0 0
  %1851 = vmatpush.bf16.msra.mxu0 0
  %1852 = vmatpush.bf16.msra.mxu0 0
  %1853 = vmatpush.bf16.msra.mxu0 0
  %1854 = vmatpush.bf16.msra.mxu0 0
  %1855 = vmatpush.bf16.msra.mxu0 %v1800
  %1856 = vmatpush.bf16.msra.mxu0 %v1762
  %1857 = vmatmul.bf16.gmra.mxu0 %v1791
  %v1858 = vpop.f32.mrf.mxu0
  %v1859 = vadd.f32 0.0, %v1858
  %v1860 = vpop.f32.mrf.mxu0
  %1861 = vdwg.mxu0
  %1862 = vmatpush.bf16.msra.mxu0 0
  %1863 = vmatpush.bf16.msra.mxu0 0
  %1864 = vmatpush.bf16.msra.mxu0 0
  %1865 = vmatpush.bf16.msra.mxu0 0
  %1866 = vmatpush.bf16.msra.mxu0 0
  %1867 = vmatpush.bf16.msra.mxu0 0
  %1868 = vmatpush.bf16.msra.mxu0 %v1803
  %1869 = vmatpush.bf16.msra.mxu0 %v1763
  %1870 = vmatmul.bf16.gmra.mxu0 %v1791
  %v1871 = vpop.f32.mrf.mxu0
  %v1872 = vadd.f32 0.0, %v1871
  %v1873 = vpop.f32.mrf.mxu0
  %1874 = vdwg.mxu0
  %1875 = vmatpush.bf16.msra.mxu0 0
  %1876 = vmatpush.bf16.msra.mxu0 0
  %1877 = vmatpush.bf16.msra.mxu0 0
  %1878 = vmatpush.bf16.msra.mxu0 0
  %1879 = vmatpush.bf16.msra.mxu0 0
  %1880 = vmatpush.bf16.msra.mxu0 0
  %1881 = vmatpush.bf16.msra.mxu0 %v1806
  %1882 = vmatpush.bf16.msra.mxu0 %v1764
  %1883 = vmatmul.bf16.gmra.mxu0 %v1791
  %v1884 = vpop.f32.mrf.mxu0
  %v1885 = vadd.f32 0.0, %v1884
  %v1886 = vpop.f32.mrf.mxu0
  %1887 = vdwg.mxu0
  %1888 = vmatpush.bf16.msra.mxu0 0
  %1889 = vmatpush.bf16.msra.mxu0 0
  %1890 = vmatpush.bf16.msra.mxu0 0
  %1891 = vmatpush.bf16.msra.mxu0 0
  %1892 = vmatpush.bf16.msra.mxu0 0
  %1893 = vmatpush.bf16.msra.mxu0 0
  %1894 = vmatpush.bf16.msra.mxu0 %v1809
  %1895 = vmatpush.bf16.msra.mxu0 %v1765
  %1896 = vmatmul.bf16.gmra.mxu0 %v1791
  %v1897 = vpop.f32.mrf.mxu0
  %v1898 = vadd.f32 0.0, %v1897
  %v1899 = vpop.f32.mrf.mxu0
  %1900 = vdwg.mxu0
  %1901 = vmatpush.bf16.msra.mxu0 0
  %1902 = vmatpush.bf16.msra.mxu0 0
  %1903 = vmatpush.bf16.msra.mxu0 0
  %1904 = vmatpush.bf16.msra.mxu0 0
  %1905 = vmatpush.bf16.msra.mxu0 0
  %1906 = vmatpush.bf16.msra.mxu0 0
  %1907 = vmatpush.bf16.msra.mxu0 %v1812
  %1908 = vmatpush.bf16.msra.mxu0 %v1766
  %1909 = vmatmul.bf16.gmra.mxu0 %v1791
  %v1910 = vpop.f32.mrf.mxu0
  %v1911 = vadd.f32 0.0, %v1910
  %v1912 = vpop.f32.mrf.mxu0
  %1913 = vdwg.mxu0
  %1914 = vmatpush.bf16.msra.mxu0 0
  %1915 = vmatpush.bf16.msra.mxu0 0
  %1916 = vmatpush.bf16.msra.mxu0 0
  %1917 = vmatpush.bf16.msra.mxu0 0
  %1918 = vmatpush.bf16.msra.mxu0 0
  %1919 = vmatpush.bf16.msra.mxu0 0
  %1920 = vmatpush.bf16.msra.mxu0 %v1815
  %1921 = vmatpush.bf16.msra.mxu0 %v1767
  %1922 = vmatmul.bf16.gmra.mxu0 %v1791
  %v1923 = vpop.f32.mrf.mxu0
  %v1924 = vadd.f32 0.0, %v1923
  %v1925 = vpop.f32.mrf.mxu0
  %1926 = vdwg.mxu0
  %1927 = vmatpush.bf16.msra.mxu0 0
  %1928 = vmatpush.bf16.msra.mxu0 0
  %1929 = vmatpush.bf16.msra.mxu0 0
  %1930 = vmatpush.bf16.msra.mxu0 0
  %1931 = vmatpush.bf16.msra.mxu0 0
  %1932 = vmatpush.bf16.msra.mxu0 0
  %1933 = vmatpush.bf16.msra.mxu0 %v1818
  %1934 = vmatpush.bf16.msra.mxu0 %v1768
  %1935 = vmatmul.bf16.gmra.mxu0 %v1791
  %v1936 = vpop.f32.mrf.mxu0
  %v1937 = vadd.f32 0.0, %v1936
  %v1938 = vpop.f32.mrf.mxu0
  %1939 = vdwg.mxu0
  %1940 = vmatpush.bf16.msra.mxu0 0
  %1941 = vmatpush.bf16.msra.mxu0 0
  %1942 = vmatpush.bf16.msra.mxu0 0
  %1943 = vmatpush.bf16.msra.mxu0 0
  %1944 = vmatpush.bf16.msra.mxu0 0
  %1945 = vmatpush.bf16.msra.mxu0 0
  %1946 = vmatpush.bf16.msra.mxu0 %v1821
  %1947 = vmatpush.bf16.msra.mxu0 %v1769
  %1948 = vmatmul.bf16.gmra.mxu0 %v1791
  %v1949 = vpop.f32.mrf.mxu0
  %v1950 = vadd.f32 0.0, %v1949
  %v1951 = vpop.f32.mrf.mxu0
  %1952 = vdwg.mxu0
  %v1953 = vadd.f32 %v1705, %v1833
  %v1954 = vadd.f32 %v1706, %v1846
  %v1955 = vadd.f32 %v1707, %v1859
  %v1956 = vadd.f32 %v1708, %v1872
  %v1957 = vadd.f32 %v1709, %v1885
  %v1958 = vadd.f32 %v1710, %v1898
  %v1959 = vadd.f32 %v1711, %v1911
  %v1960 = vadd.f32 %v1712, %v1924
  %v1961 = vadd.f32 %v1713, %v1937
  %v1962 = vadd.f32 %v1714, %v1950
  %1963 = vrot.lane.b32.xlu0 %v1445, 110
  %v1964 = vpop.permute.xlu0 %1963
  %1965 = vrot.lane.b32.xlu0 %v1446, 110
  %v1966 = vpop.permute.xlu0 %1965
  %1967 = vrot.lane.b32.xlu0 %v1447, 110
  %v1968 = vpop.permute.xlu0 %1967
  %1969 = vrot.lane.b32.xlu0 %v1448, 110
  %v1970 = vpop.permute.xlu0 %1969
  %1971 = vrot.lane.b32.xlu0 %v1449, 110
  %v1972 = vpop.permute.xlu0 %1971
  %1973 = vrot.lane.b32.xlu0 %v1450, 110
  %v1974 = vpop.permute.xlu0 %1973
  %1975 = vrot.lane.b32.xlu0 %v1451, 110
  %v1976 = vpop.permute.xlu0 %1975
  %1977 = vrot.lane.b32.xlu0 %v1452, 110
  %v1978 = vpop.permute.xlu0 %1977
  %1979 = vrot.lane.b32.xlu0 %v1453, 110
  %v1980 = vpop.permute.xlu0 %1979
  %1981 = vrot.lane.b32.xlu0 %v1454, 110
  %v1982 = vpop.permute.xlu0 %1981
  %1983 = vrot.lane.b32.xlu0 %v1455, 110
  %v1984 = vpop.permute.xlu0 %1983
  %1985 = vrot.lane.b32.xlu0 %v1456, 110
  %v1986 = vpop.permute.xlu0 %1985
  %1987 = vrot.lane.b32.xlu0 %v1457, 110
  %v1988 = vpop.permute.xlu0 %1987
  %1989 = vrot.lane.b32.xlu0 %v1458, 110
  %v1990 = vpop.permute.xlu0 %1989
  %1991 = vrot.lane.b32.xlu0 %v1459, 110
  %v1992 = vpop.permute.xlu0 %1991
  %1993 = vrot.lane.b32.xlu0 %v1460, 110
  %v1994 = vpop.permute.xlu0 %1993
  %1995 = vrot.lane.b32.xlu0 %v1461, 110
  %v1996 = vpop.permute.xlu0 %1995
  %1997 = vrot.lane.b32.xlu0 %v1462, 110
  %v1998 = vpop.permute.xlu0 %1997
  %1999 = vrot.lane.b32.xlu0 %v1463, 110
  %v2000 = vpop.permute.xlu0 %1999
  %2001 = vrot.lane.b32.xlu0 %v1464, 110
  %v2002 = vpop.permute.xlu0 %2001
  %2003 = vrot.lane.b32.xlu0 %v1465, 110
  %v2004 = vpop.permute.xlu0 %2003
  %2005 = vrot.lane.b32.xlu0 %v1466, 110
  %v2006 = vpop.permute.xlu0 %2005
  %vm2007 = vcmask 900096
  %v2008 = vsel %vm2007, %v1964, %v1966
  %v2009 = vsel %vm2007, %v1966, %v1968
  %v2010 = vsel %vm2007, %v1968, %v1970
  %v2011 = vsel %vm2007, %v1970, %v1972
  %v2012 = vsel %vm2007, %v1972, %v1974
  %v2013 = vsel %vm2007, %v1974, %v1976
  %v2014 = vsel %vm2007, %v1976, %v1978
  %v2015 = vsel %vm2007, %v1978, %v1980
  %v2016 = vsel %vm2007, %v1980, %v1982
  %v2017 = vsel %vm2007, %v1982, %v1984
  %v2018 = vsel %vm2007, %v1986, %v1988
  %v2019 = vsel %vm2007, %v1988, %v1990
  %v2020 = vsel %vm2007, %v1990, %v1992
  %v2021 = vsel %vm2007, %v1992, %v1994
  %v2022 = vsel %vm2007, %v1994, %v1996
  %v2023 = vsel %vm2007, %v1996, %v1998
  %v2024 = vsel %vm2007, %v1998, %v2000
  %v2025 = vsel %vm2007, %v2000, %v2002
  %v2026 = vsel %vm2007, %v2002, %v2004
  %v2027 = vsel %vm2007, %v2004, %v2006
  %v2039 = vsel %vm214, %v46, 0
  %v2042 = vsel %vm218, %v2018, 0
  %v2045 = vsel %vm218, %v2019, 0
  %v2048 = vsel %vm218, %v2020, 0
  %v2051 = vsel %vm218, %v2021, 0
  %v2054 = vsel %vm218, %v2022, 0
  %v2057 = vsel %vm218, %v2023, 0
  %v2060 = vsel %vm218, %v2024, 0
  %v2063 = vsel %vm218, %v2025, 0
  %v2066 = vsel %vm218, %v2026, 0
  %v2069 = vsel %vm218, %v2027, 0
  %2071 = vmatpush.bf16.msra.mxu0 0
  %2072 = vmatpush.bf16.msra.mxu0 0
  %2073 = vmatpush.bf16.msra.mxu0 0
  %2074 = vmatpush.bf16.msra.mxu0 0
  %2075 = vmatpush.bf16.msra.mxu0 0
  %2076 = vmatpush.bf16.msra.mxu0 0
  %2077 = vmatpush.bf16.msra.mxu0 %v2042
  %2078 = vmatpush.bf16.msra.mxu0 %v2008
  %2079 = vmatmul.bf16.gmra.mxu0 %v2039
  %v2080 = vpop.f32.mrf.mxu0
  %v2081 = vadd.f32 0.0, %v2080
  %v2082 = vpop.f32.mrf.mxu0
  %2083 = vdwg.mxu0
  %2084 = vmatpush.bf16.msra.mxu0 0
  %2085 = vmatpush.bf16.msra.mxu0 0
  %2086 = vmatpush.bf16.msra.mxu0 0
  %2087 = vmatpush.bf16.msra.mxu0 0
  %2088 = vmatpush.bf16.msra.mxu0 0
  %2089 = vmatpush.bf16.msra.mxu0 0
  %2090 = vmatpush.bf16.msra.mxu0 %v2045
  %2091 = vmatpush.bf16.msra.mxu0 %v2009
  %2092 = vmatmul.bf16.gmra.mxu0 %v2039
  %v2093 = vpop.f32.mrf.mxu0
  %v2094 = vadd.f32 0.0, %v2093
  %v2095 = vpop.f32.mrf.mxu0
  %2096 = vdwg.mxu0
  %2097 = vmatpush.bf16.msra.mxu0 0
  %2098 = vmatpush.bf16.msra.mxu0 0
  %2099 = vmatpush.bf16.msra.mxu0 0
  %2100 = vmatpush.bf16.msra.mxu0 0
  %2101 = vmatpush.bf16.msra.mxu0 0
  %2102 = vmatpush.bf16.msra.mxu0 0
  %2103 = vmatpush.bf16.msra.mxu0 %v2048
  %2104 = vmatpush.bf16.msra.mxu0 %v2010
  %2105 = vmatmul.bf16.gmra.mxu0 %v2039
  %v2106 = vpop.f32.mrf.mxu0
  %v2107 = vadd.f32 0.0, %v2106
  %v2108 = vpop.f32.mrf.mxu0
  %2109 = vdwg.mxu0
  %2110 = vmatpush.bf16.msra.mxu0 0
  %2111 = vmatpush.bf16.msra.mxu0 0
  %2112 = vmatpush.bf16.msra.mxu0 0
  %2113 = vmatpush.bf16.msra.mxu0 0
  %2114 = vmatpush.bf16.msra.mxu0 0
  %2115 = vmatpush.bf16.msra.mxu0 0
  %2116 = vmatpush.bf16.msra.mxu0 %v2051
  %2117 = vmatpush.bf16.msra.mxu0 %v2011
  %2118 = vmatmul.bf16.gmra.mxu0 %v2039
  %v2119 = vpop.f32.mrf.mxu0
  %v2120 = vadd.f32 0.0, %v2119
  %v2121 = vpop.f32.mrf.mxu0
  %2122 = vdwg.mxu0
  %2123 = vmatpush.bf16.msra.mxu0 0
  %2124 = vmatpush.bf16.msra.mxu0 0
  %2125 = vmatpush.bf16.msra.mxu0 0
  %2126 = vmatpush.bf16.msra.mxu0 0
  %2127 = vmatpush.bf16.msra.mxu0 0
  %2128 = vmatpush.bf16.msra.mxu0 0
  %2129 = vmatpush.bf16.msra.mxu0 %v2054
  %2130 = vmatpush.bf16.msra.mxu0 %v2012
  %2131 = vmatmul.bf16.gmra.mxu0 %v2039
  %v2132 = vpop.f32.mrf.mxu0
  %v2133 = vadd.f32 0.0, %v2132
  %v2134 = vpop.f32.mrf.mxu0
  %2135 = vdwg.mxu0
  %2136 = vmatpush.bf16.msra.mxu0 0
  %2137 = vmatpush.bf16.msra.mxu0 0
  %2138 = vmatpush.bf16.msra.mxu0 0
  %2139 = vmatpush.bf16.msra.mxu0 0
  %2140 = vmatpush.bf16.msra.mxu0 0
  %2141 = vmatpush.bf16.msra.mxu0 0
  %2142 = vmatpush.bf16.msra.mxu0 %v2057
  %2143 = vmatpush.bf16.msra.mxu0 %v2013
  %2144 = vmatmul.bf16.gmra.mxu0 %v2039
  %v2145 = vpop.f32.mrf.mxu0
  %v2146 = vadd.f32 0.0, %v2145
  %v2147 = vpop.f32.mrf.mxu0
  %2148 = vdwg.mxu0
  %2149 = vmatpush.bf16.msra.mxu0 0
  %2150 = vmatpush.bf16.msra.mxu0 0
  %2151 = vmatpush.bf16.msra.mxu0 0
  %2152 = vmatpush.bf16.msra.mxu0 0
  %2153 = vmatpush.bf16.msra.mxu0 0
  %2154 = vmatpush.bf16.msra.mxu0 0
  %2155 = vmatpush.bf16.msra.mxu0 %v2060
  %2156 = vmatpush.bf16.msra.mxu0 %v2014
  %2157 = vmatmul.bf16.gmra.mxu0 %v2039
  %v2158 = vpop.f32.mrf.mxu0
  %v2159 = vadd.f32 0.0, %v2158
  %v2160 = vpop.f32.mrf.mxu0
  %2161 = vdwg.mxu0
  %2162 = vmatpush.bf16.msra.mxu0 0
  %2163 = vmatpush.bf16.msra.mxu0 0
  %2164 = vmatpush.bf16.msra.mxu0 0
  %2165 = vmatpush.bf16.msra.mxu0 0
  %2166 = vmatpush.bf16.msra.mxu0 0
  %2167 = vmatpush.bf16.msra.mxu0 0
  %2168 = vmatpush.bf16.msra.mxu0 %v2063
  %2169 = vmatpush.bf16.msra.mxu0 %v2015
  %2170 = vmatmul.bf16.gmra.mxu0 %v2039
  %v2171 = vpop.f32.mrf.mxu0
  %v2172 = vadd.f32 0.0, %v2171
  %v2173 = vpop.f32.mrf.mxu0
  %2174 = vdwg.mxu0
  %2175 = vmatpush.bf16.msra.mxu0 0
  %2176 = vmatpush.bf16.msra.mxu0 0
  %2177 = vmatpush.bf16.msra.mxu0 0
  %2178 = vmatpush.bf16.msra.mxu0 0
  %2179 = vmatpush.bf16.msra.mxu0 0
  %2180 = vmatpush.bf16.msra.mxu0 0
  %2181 = vmatpush.bf16.msra.mxu0 %v2066
  %2182 = vmatpush.bf16.msra.mxu0 %v2016
  %2183 = vmatmul.bf16.gmra.mxu0 %v2039
  %v2184 = vpop.f32.mrf.mxu0
  %v2185 = vadd.f32 0.0, %v2184
  %v2186 = vpop.f32.mrf.mxu0
  %2187 = vdwg.mxu0
  %2188 = vmatpush.bf16.msra.mxu0 0
  %2189 = vmatpush.bf16.msra.mxu0 0
  %2190 = vmatpush.bf16.msra.mxu0 0
  %2191 = vmatpush.bf16.msra.mxu0 0
  %2192 = vmatpush.bf16.msra.mxu0 0
  %2193 = vmatpush.bf16.msra.mxu0 0
  %2194 = vmatpush.bf16.msra.mxu0 %v2069
  %2195 = vmatpush.bf16.msra.mxu0 %v2017
  %2196 = vmatmul.bf16.gmra.mxu0 %v2039
  %v2197 = vpop.f32.mrf.mxu0
  %v2198 = vadd.f32 0.0, %v2197
  %v2199 = vpop.f32.mrf.mxu0
  %2200 = vdwg.mxu0
  %v2201 = vadd.f32 %v1953, %v2081
  %v2202 = vadd.f32 %v1954, %v2094
  %v2203 = vadd.f32 %v1955, %v2107
  %v2204 = vadd.f32 %v1956, %v2120
  %v2205 = vadd.f32 %v1957, %v2133
  %v2206 = vadd.f32 %v1958, %v2146
  %v2207 = vadd.f32 %v1959, %v2159
  %v2208 = vadd.f32 %v1960, %v2172
  %v2209 = vadd.f32 %v1961, %v2185
  %v2210 = vadd.f32 %v1962, %v2198
  %2211 = vrot.lane.b32.xlu0 %v1445, 109
  %v2212 = vpop.permute.xlu0 %2211
  %2213 = vrot.lane.b32.xlu0 %v1446, 109
  %v2214 = vpop.permute.xlu0 %2213
  %2215 = vrot.lane.b32.xlu0 %v1447, 109
  %v2216 = vpop.permute.xlu0 %2215
  %2217 = vrot.lane.b32.xlu0 %v1448, 109
  %v2218 = vpop.permute.xlu0 %2217
  %2219 = vrot.lane.b32.xlu0 %v1449, 109
  %v2220 = vpop.permute.xlu0 %2219
  %2221 = vrot.lane.b32.xlu0 %v1450, 109
  %v2222 = vpop.permute.xlu0 %2221
  %2223 = vrot.lane.b32.xlu0 %v1451, 109
  %v2224 = vpop.permute.xlu0 %2223
  %2225 = vrot.lane.b32.xlu0 %v1452, 109
  %v2226 = vpop.permute.xlu0 %2225
  %2227 = vrot.lane.b32.xlu0 %v1453, 109
  %v2228 = vpop.permute.xlu0 %2227
  %2229 = vrot.lane.b32.xlu0 %v1454, 109
  %v2230 = vpop.permute.xlu0 %2229
  %2231 = vrot.lane.b32.xlu0 %v1455, 109
  %v2232 = vpop.permute.xlu0 %2231
  %2233 = vrot.lane.b32.xlu0 %v1456, 109
  %v2234 = vpop.permute.xlu0 %2233
  %2235 = vrot.lane.b32.xlu0 %v1457, 109
  %v2236 = vpop.permute.xlu0 %2235
  %2237 = vrot.lane.b32.xlu0 %v1458, 109
  %v2238 = vpop.permute.xlu0 %2237
  %2239 = vrot.lane.b32.xlu0 %v1459, 109
  %v2240 = vpop.permute.xlu0 %2239
  %2241 = vrot.lane.b32.xlu0 %v1460, 109
  %v2242 = vpop.permute.xlu0 %2241
  %2243 = vrot.lane.b32.xlu0 %v1461, 109
  %v2244 = vpop.permute.xlu0 %2243
  %2245 = vrot.lane.b32.xlu0 %v1462, 109
  %v2246 = vpop.permute.xlu0 %2245
  %2247 = vrot.lane.b32.xlu0 %v1463, 109
  %v2248 = vpop.permute.xlu0 %2247
  %2249 = vrot.lane.b32.xlu0 %v1464, 109
  %v2250 = vpop.permute.xlu0 %2249
  %2251 = vrot.lane.b32.xlu0 %v1465, 109
  %v2252 = vpop.permute.xlu0 %2251
  %2253 = vrot.lane.b32.xlu0 %v1466, 109
  %v2254 = vpop.permute.xlu0 %2253
  %vm2255 = vcmask 891904
  %v2256 = vsel %vm2255, %v2212, %v2214
  %v2257 = vsel %vm2255, %v2214, %v2216
  %v2258 = vsel %vm2255, %v2216, %v2218
  %v2259 = vsel %vm2255, %v2218, %v2220
  %v2260 = vsel %vm2255, %v2220, %v2222
  %v2261 = vsel %vm2255, %v2222, %v2224
  %v2262 = vsel %vm2255, %v2224, %v2226
  %v2263 = vsel %vm2255, %v2226, %v2228
  %v2264 = vsel %vm2255, %v2228, %v2230
  %v2265 = vsel %vm2255, %v2230, %v2232
  %v2266 = vsel %vm2255, %v2234, %v2236
  %v2267 = vsel %vm2255, %v2236, %v2238
  %v2268 = vsel %vm2255, %v2238, %v2240
  %v2269 = vsel %vm2255, %v2240, %v2242
  %v2270 = vsel %vm2255, %v2242, %v2244
  %v2271 = vsel %vm2255, %v2244, %v2246
  %v2272 = vsel %vm2255, %v2246, %v2248
  %v2273 = vsel %vm2255, %v2248, %v2250
  %v2274 = vsel %vm2255, %v2250, %v2252
  %v2275 = vsel %vm2255, %v2252, %v2254
  %v2287 = vsel %vm214, %v47, 0
  %v2290 = vsel %vm218, %v2266, 0
  %v2293 = vsel %vm218, %v2267, 0
  %v2296 = vsel %vm218, %v2268, 0
  %v2299 = vsel %vm218, %v2269, 0
  %v2302 = vsel %vm218, %v2270, 0
  %v2305 = vsel %vm218, %v2271, 0
  %v2308 = vsel %vm218, %v2272, 0
  %v2311 = vsel %vm218, %v2273, 0
  %v2314 = vsel %vm218, %v2274, 0
  %v2317 = vsel %vm218, %v2275, 0
  %2319 = vmatpush.bf16.msra.mxu0 0
  %2320 = vmatpush.bf16.msra.mxu0 0
  %2321 = vmatpush.bf16.msra.mxu0 0
  %2322 = vmatpush.bf16.msra.mxu0 0
  %2323 = vmatpush.bf16.msra.mxu0 0
  %2324 = vmatpush.bf16.msra.mxu0 0
  %2325 = vmatpush.bf16.msra.mxu0 %v2290
  %2326 = vmatpush.bf16.msra.mxu0 %v2256
  %2327 = vmatmul.bf16.gmra.mxu0 %v2287
  %v2328 = vpop.f32.mrf.mxu0
  %v2329 = vadd.f32 0.0, %v2328
  %v2330 = vpop.f32.mrf.mxu0
  %2331 = vdwg.mxu0
  %2332 = vmatpush.bf16.msra.mxu0 0
  %2333 = vmatpush.bf16.msra.mxu0 0
  %2334 = vmatpush.bf16.msra.mxu0 0
  %2335 = vmatpush.bf16.msra.mxu0 0
  %2336 = vmatpush.bf16.msra.mxu0 0
  %2337 = vmatpush.bf16.msra.mxu0 0
  %2338 = vmatpush.bf16.msra.mxu0 %v2293
  %2339 = vmatpush.bf16.msra.mxu0 %v2257
  %2340 = vmatmul.bf16.gmra.mxu0 %v2287
  %v2341 = vpop.f32.mrf.mxu0
  %v2342 = vadd.f32 0.0, %v2341
  %v2343 = vpop.f32.mrf.mxu0
  %2344 = vdwg.mxu0
  %2345 = vmatpush.bf16.msra.mxu0 0
  %2346 = vmatpush.bf16.msra.mxu0 0
  %2347 = vmatpush.bf16.msra.mxu0 0
  %2348 = vmatpush.bf16.msra.mxu0 0
  %2349 = vmatpush.bf16.msra.mxu0 0
  %2350 = vmatpush.bf16.msra.mxu0 0
  %2351 = vmatpush.bf16.msra.mxu0 %v2296
  %2352 = vmatpush.bf16.msra.mxu0 %v2258
  %2353 = vmatmul.bf16.gmra.mxu0 %v2287
  %v2354 = vpop.f32.mrf.mxu0
  %v2355 = vadd.f32 0.0, %v2354
  %v2356 = vpop.f32.mrf.mxu0
  %2357 = vdwg.mxu0
  %2358 = vmatpush.bf16.msra.mxu0 0
  %2359 = vmatpush.bf16.msra.mxu0 0
  %2360 = vmatpush.bf16.msra.mxu0 0
  %2361 = vmatpush.bf16.msra.mxu0 0
  %2362 = vmatpush.bf16.msra.mxu0 0
  %2363 = vmatpush.bf16.msra.mxu0 0
  %2364 = vmatpush.bf16.msra.mxu0 %v2299
  %2365 = vmatpush.bf16.msra.mxu0 %v2259
  %2366 = vmatmul.bf16.gmra.mxu0 %v2287
  %v2367 = vpop.f32.mrf.mxu0
  %v2368 = vadd.f32 0.0, %v2367
  %v2369 = vpop.f32.mrf.mxu0
  %2370 = vdwg.mxu0
  %2371 = vmatpush.bf16.msra.mxu0 0
  %2372 = vmatpush.bf16.msra.mxu0 0
  %2373 = vmatpush.bf16.msra.mxu0 0
  %2374 = vmatpush.bf16.msra.mxu0 0
  %2375 = vmatpush.bf16.msra.mxu0 0
  %2376 = vmatpush.bf16.msra.mxu0 0
  %2377 = vmatpush.bf16.msra.mxu0 %v2302
  %2378 = vmatpush.bf16.msra.mxu0 %v2260
  %2379 = vmatmul.bf16.gmra.mxu0 %v2287
  %v2380 = vpop.f32.mrf.mxu0
  %v2381 = vadd.f32 0.0, %v2380
  %v2382 = vpop.f32.mrf.mxu0
  %2383 = vdwg.mxu0
  %2384 = vmatpush.bf16.msra.mxu0 0
  %2385 = vmatpush.bf16.msra.mxu0 0
  %2386 = vmatpush.bf16.msra.mxu0 0
  %2387 = vmatpush.bf16.msra.mxu0 0
  %2388 = vmatpush.bf16.msra.mxu0 0
  %2389 = vmatpush.bf16.msra.mxu0 0
  %2390 = vmatpush.bf16.msra.mxu0 %v2305
  %2391 = vmatpush.bf16.msra.mxu0 %v2261
  %2392 = vmatmul.bf16.gmra.mxu0 %v2287
  %v2393 = vpop.f32.mrf.mxu0
  %v2394 = vadd.f32 0.0, %v2393
  %v2395 = vpop.f32.mrf.mxu0
  %2396 = vdwg.mxu0
  %2397 = vmatpush.bf16.msra.mxu0 0
  %2398 = vmatpush.bf16.msra.mxu0 0
  %2399 = vmatpush.bf16.msra.mxu0 0
  %2400 = vmatpush.bf16.msra.mxu0 0
  %2401 = vmatpush.bf16.msra.mxu0 0
  %2402 = vmatpush.bf16.msra.mxu0 0
  %2403 = vmatpush.bf16.msra.mxu0 %v2308
  %2404 = vmatpush.bf16.msra.mxu0 %v2262
  %2405 = vmatmul.bf16.gmra.mxu0 %v2287
  %v2406 = vpop.f32.mrf.mxu0
  %v2407 = vadd.f32 0.0, %v2406
  %v2408 = vpop.f32.mrf.mxu0
  %2409 = vdwg.mxu0
  %2410 = vmatpush.bf16.msra.mxu0 0
  %2411 = vmatpush.bf16.msra.mxu0 0
  %2412 = vmatpush.bf16.msra.mxu0 0
  %2413 = vmatpush.bf16.msra.mxu0 0
  %2414 = vmatpush.bf16.msra.mxu0 0
  %2415 = vmatpush.bf16.msra.mxu0 0
  %2416 = vmatpush.bf16.msra.mxu0 %v2311
  %2417 = vmatpush.bf16.msra.mxu0 %v2263
  %2418 = vmatmul.bf16.gmra.mxu0 %v2287
  %v2419 = vpop.f32.mrf.mxu0
  %v2420 = vadd.f32 0.0, %v2419
  %v2421 = vpop.f32.mrf.mxu0
  %2422 = vdwg.mxu0
  %2423 = vmatpush.bf16.msra.mxu0 0
  %2424 = vmatpush.bf16.msra.mxu0 0
  %2425 = vmatpush.bf16.msra.mxu0 0
  %2426 = vmatpush.bf16.msra.mxu0 0
  %2427 = vmatpush.bf16.msra.mxu0 0
  %2428 = vmatpush.bf16.msra.mxu0 0
  %2429 = vmatpush.bf16.msra.mxu0 %v2314
  %2430 = vmatpush.bf16.msra.mxu0 %v2264
  %2431 = vmatmul.bf16.gmra.mxu0 %v2287
  %v2432 = vpop.f32.mrf.mxu0
  %v2433 = vadd.f32 0.0, %v2432
  %v2434 = vpop.f32.mrf.mxu0
  %2435 = vdwg.mxu0
  %2436 = vmatpush.bf16.msra.mxu0 0
  %2437 = vmatpush.bf16.msra.mxu0 0
  %2438 = vmatpush.bf16.msra.mxu0 0
  %2439 = vmatpush.bf16.msra.mxu0 0
  %2440 = vmatpush.bf16.msra.mxu0 0
  %2441 = vmatpush.bf16.msra.mxu0 0
  %2442 = vmatpush.bf16.msra.mxu0 %v2317
  %2443 = vmatpush.bf16.msra.mxu0 %v2265
  %2444 = vmatmul.bf16.gmra.mxu0 %v2287
  %v2445 = vpop.f32.mrf.mxu0
  %v2446 = vadd.f32 0.0, %v2445
  %v2447 = vpop.f32.mrf.mxu0
  %2448 = vdwg.mxu0
  %v2449 = vadd.f32 %v2201, %v2329
  %v2450 = vadd.f32 %v2202, %v2342
  %v2451 = vadd.f32 %v2203, %v2355
  %v2452 = vadd.f32 %v2204, %v2368
  %v2453 = vadd.f32 %v2205, %v2381
  %v2454 = vadd.f32 %v2206, %v2394
  %v2455 = vadd.f32 %v2207, %v2407
  %v2456 = vadd.f32 %v2208, %v2420
  %v2457 = vadd.f32 %v2209, %v2433
  %v2458 = vadd.f32 %v2210, %v2446
  %v2459 = vld [vmem:[%s3] sm:$0xff]
  %2461 = vset.pattern.permute.xlu0 0
  %2462 = vperm.xlu0 %2461, %v2459
  %v2463 = vpop.permute.xlu0 %2462
  %v2465 = vadd.f32 %v2449, %v2463
  %v2466 = vadd.f32 %v2450, %v2463
  %v2467 = vadd.f32 %v2451, %v2463
  %v2468 = vadd.f32 %v2452, %v2463
  %v2469 = vadd.f32 %v2453, %v2463
  %v2470 = vadd.f32 %v2454, %v2463
  %v2471 = vadd.f32 %v2455, %v2463
  %v2472 = vadd.f32 %v2456, %v2463
  %v2473 = vadd.f32 %v2457, %v2463
  %v2474 = vadd.f32 %v2458, %v2463
  %v2475 = vld [vmem:[%s4] sm:$0xff]
  %vm2476 = vcmp.ge.f32.partialorder %v2465, 0.0
  %vm2477 = vcmp.ge.f32.partialorder %v2466, 0.0
  %vm2478 = vcmp.ge.f32.partialorder %v2467, 0.0
  %vm2479 = vcmp.ge.f32.partialorder %v2468, 0.0
  %vm2480 = vcmp.ge.f32.partialorder %v2469, 0.0
  %vm2481 = vcmp.ge.f32.partialorder %v2470, 0.0
  %vm2482 = vcmp.ge.f32.partialorder %v2471, 0.0
  %vm2483 = vcmp.ge.f32.partialorder %v2472, 0.0
  %vm2484 = vcmp.ge.f32.partialorder %v2473, 0.0
  %vm2485 = vcmp.ge.f32.partialorder %v2474, 0.0
  %2487 = vset.pattern.permute.xlu0 0
  %2488 = vperm.xlu0 %2487, %v2475
  %v2489 = vpop.permute.xlu0 %2488
  %v2491 = vmul.f32 %v2465, %v2489
  %v2492 = vmul.f32 %v2466, %v2489
  %v2493 = vmul.f32 %v2467, %v2489
  %v2494 = vmul.f32 %v2468, %v2489
  %v2495 = vmul.f32 %v2469, %v2489
  %v2496 = vmul.f32 %v2470, %v2489
  %v2497 = vmul.f32 %v2471, %v2489
  %v2498 = vmul.f32 %v2472, %v2489
  %v2499 = vmul.f32 %v2473, %v2489
  %v2500 = vmul.f32 %v2474, %v2489
  %v2501 = vsel %vm2476, %v2465, %v2491
  %v2502 = vsel %vm2477, %v2466, %v2492
  %v2503 = vsel %vm2478, %v2467, %v2493
  %v2504 = vsel %vm2479, %v2468, %v2494
  %v2505 = vsel %vm2480, %v2469, %v2495
  %v2506 = vsel %vm2481, %v2470, %v2496
  %v2507 = vsel %vm2482, %v2471, %v2497
  %v2508 = vsel %vm2483, %v2472, %v2498
  %v2509 = vsel %vm2484, %v2473, %v2499
  %v2510 = vsel %vm2485, %v2474, %v2500
  %v2513 = vperm.slane %v33, 0
  %v2514 = vperm.slane %v33, 1
  %v2515 = vperm.slane %v33, 2
  %v2516 = vperm.slane %v33, 3
  %v2517 = vperm.slane %v33, 4
  %v2518 = vperm.slane %v33, 5
  %v2519 = vperm.slane %v33, 6
  %v2520 = vperm.slane %v33, 7
  %v2521 = vperm.slane %v34, 0
  %v2522 = vperm.slane %v34, 1
  %v2533 = vmul.f32 %v2513, %v2501
  %v2534 = vmul.f32 %v2514, %v2502
  %v2535 = vmul.f32 %v2515, %v2503
  %v2536 = vmul.f32 %v2516, %v2504
  %v2537 = vmul.f32 %v2517, %v2505
  %v2538 = vmul.f32 %v2518, %v2506
  %v2539 = vmul.f32 %v2519, %v2507
  %v2540 = vmul.f32 %v2520, %v2508
  %v2541 = vmul.f32 %v2521, %v2509
  %v2542 = vmul.f32 %v2522, %v2510
  %v2543 = vpack.c.bf16 %v2534, %v2533
  %v2544 = vpack.c.bf16 %v2536, %v2535
  %v2545 = vpack.c.bf16 %v2538, %v2537
  %v2546 = vpack.c.bf16 %v2540, %v2539
  %v2547 = vpack.c.bf16 %v2542, %v2541
  %2548 = vst [vmem:[#allocation2 + $0x4] sm:$0xff] %v2543
  %2549 = vst [vmem:[#allocation2 + $0xc] sm:$0xff] %v2544
  %2550 = vst [vmem:[#allocation2 + $0x14] sm:$0xff] %v2545
  %2551 = vst [vmem:[#allocation2 + $0x1c] sm:$0xff] %v2546
  %2552 = vst [vmem:[#allocation2 + $0x24] sm:$0xff] %v2547
  loop: start=0, step=1, limit=6
  $region38: #{recurrent_block_forward.2} parent=0 // loop_pre_header
    _
  $region39: #{recurrent_block_forward.2} parent=0 // loop_header
    %s2554 = sphi 0, %s2558
    %p2555 = scmp.ge.s32.totalorder %s2554, 6
  $region40: #{recurrent_block_forward.2} parent=0 // loop_header_branch
    %2557 = sbr.rel (%p2555) target = $region44
  $region41: #{recurrent_block_forward.2} parent=0 // loop_body
    %s2559 = smul.u32 %s2554, 9
    %s2560 = smul.addr %s2559, 4
    %s2561 = scalar_lea.vmem %s5, %s2560
    %v2562 = vld [vmem:[%s2561] sm:$0xf]
    %v2563 = vld [vmem:[%s2561 + $0x4] sm:$0xf]
    %v2564 = vld [vmem:[%s2561 + $0x8] sm:$0xf]
    %v2565 = vld [vmem:[%s2561 + $0xc] sm:$0xf]
    %v2566 = vld [vmem:[%s2561 + $0x10] sm:$0xf]
    %v2567 = vld [vmem:[%s2561 + $0x14] sm:$0xf]
    %v2568 = vld [vmem:[%s2561 + $0x18] sm:$0xf]
    %v2569 = vld [vmem:[%s2561 + $0x1c] sm:$0xf]
    %v2570 = vld [vmem:[%s2561 + $0x20] sm:$0xf]
    %v2571 = vld [vmem:[#allocation2] sm:$0xff]
    %v2572 = vld [vmem:[#allocation2 + $0x8] sm:$0xff]
    %v2573 = vld [vmem:[#allocation2 + $0x10] sm:$0xff]
    %v2574 = vld [vmem:[#allocation2 + $0x18] sm:$0xff]
    %v2575 = vld [vmem:[#allocation2 + $0x20] sm:$0xff]
    %v2576 = vld [vmem:[#allocation2 + $0x28] sm:$0xf]
    %v2583 = vunpack.c.l.b16 %v2571
    %v2584 = vunpack.c.h.b16 %v2571
    %v2585 = vunpack.c.l.b16 %v2572
    %v2586 = vunpack.c.h.b16 %v2572
    %v2587 = vunpack.c.l.b16 %v2573
    %v2588 = vunpack.c.h.b16 %v2573
    %v2589 = vunpack.c.l.b16 %v2574
    %v2590 = vunpack.c.h.b16 %v2574
    %v2591 = vunpack.c.l.b16 %v2575
    %v2592 = vunpack.c.h.b16 %v2575
    %v2593 = vunpack.c.l.b16 %v2576
    %v2594 = vpack.c.b16 %v2583, %v2583
    %v2595 = vpack.c.b16 %v2584, %v2584
    %v2596 = vpack.c.b16 %v2585, %v2585
    %v2597 = vpack.c.b16 %v2586, %v2586
    %v2598 = vpack.c.b16 %v2587, %v2587
    %v2599 = vpack.c.b16 %v2588, %v2588
    %v2600 = vpack.c.b16 %v2589, %v2589
    %v2601 = vpack.c.b16 %v2590, %v2590
    %v2602 = vpack.c.b16 %v2591, %v2591
    %v2603 = vpack.c.b16 %v2592, %v2592
    %v2604 = vpack.c.b16 %v2593, %v2593
    %2605 = vrot.lane.b32.xlu0 %v2594, 18
    %v2606 = vpop.permute.xlu0 %2605
    %2607 = vrot.lane.b32.xlu0 %v2595, 18
    %v2608 = vpop.permute.xlu0 %2607
    %2609 = vrot.lane.b32.xlu0 %v2596, 18
    %v2610 = vpop.permute.xlu0 %2609
    %2611 = vrot.lane.b32.xlu0 %v2597, 18
    %v2612 = vpop.permute.xlu0 %2611
    %2613 = vrot.lane.b32.xlu0 %v2598, 18
    %v2614 = vpop.permute.xlu0 %2613
    %2615 = vrot.lane.b32.xlu0 %v2599, 18
    %v2616 = vpop.permute.xlu0 %2615
    %2617 = vrot.lane.b32.xlu0 %v2600, 18
    %v2618 = vpop.permute.xlu0 %2617
    %2619 = vrot.lane.b32.xlu0 %v2601, 18
    %v2620 = vpop.permute.xlu0 %2619
    %2621 = vrot.lane.b32.xlu0 %v2602, 18
    %v2622 = vpop.permute.xlu0 %2621
    %2623 = vrot.lane.b32.xlu0 %v2603, 18
    %v2624 = vpop.permute.xlu0 %2623
    %2625 = vrot.lane.b32.xlu0 %v2604, 18
    %v2626 = vpop.permute.xlu0 %2625
    %v2627 = vsel %vm183, %v2606, %v2608
    %v2628 = vsel %vm183, %v2608, %v2610
    %v2629 = vsel %vm183, %v2610, %v2612
    %v2630 = vsel %vm183, %v2612, %v2614
    %v2631 = vsel %vm183, %v2614, %v2616
    %v2632 = vsel %vm183, %v2616, %v2618
    %v2633 = vsel %vm183, %v2618, %v2620
    %v2634 = vsel %vm183, %v2620, %v2622
    %v2635 = vsel %vm183, %v2622, %v2624
    %v2636 = vsel %vm183, %v2624, %v2626
    %vm2637 = vcmask 64512
    %v2639 = vsel %vm2637, %v2563, 0
    %v2642 = vsel %vm218, %v2627, 0
    %v2645 = vsel %vm218, %v2628, 0
    %v2648 = vsel %vm218, %v2629, 0
    %v2651 = vsel %vm218, %v2630, 0
    %v2654 = vsel %vm218, %v2631, 0
    %v2657 = vsel %vm218, %v2632, 0
    %v2660 = vsel %vm218, %v2633, 0
    %v2663 = vsel %vm218, %v2634, 0
    %v2666 = vsel %vm218, %v2635, 0
    %v2669 = vsel %vm218, %v2636, 0
    %2671 = vmatpush.bf16.msra.mxu0 0
    %2672 = vmatpush.bf16.msra.mxu0 0
    %2673 = vmatpush.bf16.msra.mxu0 0
    %2674 = vmatpush.bf16.msra.mxu0 0
    %2675 = vmatpush.bf16.msra.mxu0 0
    %2676 = vmatpush.bf16.msra.mxu0 0
    %2677 = vmatpush.bf16.msra.mxu0 0
    %2678 = vmatpush.bf16.msra.mxu0 %v2642
    %2679 = vmatmul.bf16.gmra.mxu0 %v2639
    %v2680 = vpop.f32.mrf.mxu0
    %v2681 = vadd.f32 0.0, %v2680
    %v2682 = vpop.f32.mrf.mxu0
    %2683 = vdwg.mxu0
    %2684 = vmatpush.bf16.msra.mxu0 0
    %2685 = vmatpush.bf16.msra.mxu0 0
    %2686 = vmatpush.bf16.msra.mxu0 0
    %2687 = vmatpush.bf16.msra.mxu0 0
    %2688 = vmatpush.bf16.msra.mxu0 0
    %2689 = vmatpush.bf16.msra.mxu0 0
    %2690 = vmatpush.bf16.msra.mxu0 0
    %2691 = vmatpush.bf16.msra.mxu0 %v2645
    %2692 = vmatmul.bf16.gmra.mxu0 %v2639
    %v2693 = vpop.f32.mrf.mxu0
    %v2694 = vadd.f32 0.0, %v2693
    %v2695 = vpop.f32.mrf.mxu0
    %2696 = vdwg.mxu0
    %2697 = vmatpush.bf16.msra.mxu0 0
    %2698 = vmatpush.bf16.msra.mxu0 0
    %2699 = vmatpush.bf16.msra.mxu0 0
    %2700 = vmatpush.bf16.msra.mxu0 0
    %2701 = vmatpush.bf16.msra.mxu0 0
    %2702 = vmatpush.bf16.msra.mxu0 0
    %2703 = vmatpush.bf16.msra.mxu0 0
    %2704 = vmatpush.bf16.msra.mxu0 %v2648
    %2705 = vmatmul.bf16.gmra.mxu0 %v2639
    %v2706 = vpop.f32.mrf.mxu0
    %v2707 = vadd.f32 0.0, %v2706
    %v2708 = vpop.f32.mrf.mxu0
    %2709 = vdwg.mxu0
    %2710 = vmatpush.bf16.msra.mxu0 0
    %2711 = vmatpush.bf16.msra.mxu0 0
    %2712 = vmatpush.bf16.msra.mxu0 0
    %2713 = vmatpush.bf16.msra.mxu0 0
    %2714 = vmatpush.bf16.msra.mxu0 0
    %2715 = vmatpush.bf16.msra.mxu0 0
    %2716 = vmatpush.bf16.msra.mxu0 0
    %2717 = vmatpush.bf16.msra.mxu0 %v2651
    %2718 = vmatmul.bf16.gmra.mxu0 %v2639
    %v2719 = vpop.f32.mrf.mxu0
    %v2720 = vadd.f32 0.0, %v2719
    %v2721 = vpop.f32.mrf.mxu0
    %2722 = vdwg.mxu0
    %2723 = vmatpush.bf16.msra.mxu0 0
    %2724 = vmatpush.bf16.msra.mxu0 0
    %2725 = vmatpush.bf16.msra.mxu0 0
    %2726 = vmatpush.bf16.msra.mxu0 0
    %2727 = vmatpush.bf16.msra.mxu0 0
    %2728 = vmatpush.bf16.msra.mxu0 0
    %2729 = vmatpush.bf16.msra.mxu0 0
    %2730 = vmatpush.bf16.msra.mxu0 %v2654
    %2731 = vmatmul.bf16.gmra.mxu0 %v2639
    %v2732 = vpop.f32.mrf.mxu0
    %v2733 = vadd.f32 0.0, %v2732
    %v2734 = vpop.f32.mrf.mxu0
    %2735 = vdwg.mxu0
    %2736 = vmatpush.bf16.msra.mxu0 0
    %2737 = vmatpush.bf16.msra.mxu0 0
    %2738 = vmatpush.bf16.msra.mxu0 0
    %2739 = vmatpush.bf16.msra.mxu0 0
    %2740 = vmatpush.bf16.msra.mxu0 0
    %2741 = vmatpush.bf16.msra.mxu0 0
    %2742 = vmatpush.bf16.msra.mxu0 0
    %2743 = vmatpush.bf16.msra.mxu0 %v2657
    %2744 = vmatmul.bf16.gmra.mxu0 %v2639
    %v2745 = vpop.f32.mrf.mxu0
    %v2746 = vadd.f32 0.0, %v2745
    %v2747 = vpop.f32.mrf.mxu0
    %2748 = vdwg.mxu0
    %2749 = vmatpush.bf16.msra.mxu0 0
    %2750 = vmatpush.bf16.msra.mxu0 0
    %2751 = vmatpush.bf16.msra.mxu0 0
    %2752 = vmatpush.bf16.msra.mxu0 0
    %2753 = vmatpush.bf16.msra.mxu0 0
    %2754 = vmatpush.bf16.msra.mxu0 0
    %2755 = vmatpush.bf16.msra.mxu0 0
    %2756 = vmatpush.bf16.msra.mxu0 %v2660
    %2757 = vmatmul.bf16.gmra.mxu0 %v2639
    %v2758 = vpop.f32.mrf.mxu0
    %v2759 = vadd.f32 0.0, %v2758
    %v2760 = vpop.f32.mrf.mxu0
    %2761 = vdwg.mxu0
    %2762 = vmatpush.bf16.msra.mxu0 0
    %2763 = vmatpush.bf16.msra.mxu0 0
    %2764 = vmatpush.bf16.msra.mxu0 0
    %2765 = vmatpush.bf16.msra.mxu0 0
    %2766 = vmatpush.bf16.msra.mxu0 0
    %2767 = vmatpush.bf16.msra.mxu0 0
    %2768 = vmatpush.bf16.msra.mxu0 0
    %2769 = vmatpush.bf16.msra.mxu0 %v2663
    %2770 = vmatmul.bf16.gmra.mxu0 %v2639
    %v2771 = vpop.f32.mrf.mxu0
    %v2772 = vadd.f32 0.0, %v2771
    %v2773 = vpop.f32.mrf.mxu0
    %2774 = vdwg.mxu0
    %2775 = vmatpush.bf16.msra.mxu0 0
    %2776 = vmatpush.bf16.msra.mxu0 0
    %2777 = vmatpush.bf16.msra.mxu0 0
    %2778 = vmatpush.bf16.msra.mxu0 0
    %2779 = vmatpush.bf16.msra.mxu0 0
    %2780 = vmatpush.bf16.msra.mxu0 0
    %2781 = vmatpush.bf16.msra.mxu0 0
    %2782 = vmatpush.bf16.msra.mxu0 %v2666
    %2783 = vmatmul.bf16.gmra.mxu0 %v2639
    %v2784 = vpop.f32.mrf.mxu0
    %v2785 = vadd.f32 0.0, %v2784
    %v2786 = vpop.f32.mrf.mxu0
    %2787 = vdwg.mxu0
    %2788 = vmatpush.bf16.msra.mxu0 0
    %2789 = vmatpush.bf16.msra.mxu0 0
    %2790 = vmatpush.bf16.msra.mxu0 0
    %2791 = vmatpush.bf16.msra.mxu0 0
    %2792 = vmatpush.bf16.msra.mxu0 0
    %2793 = vmatpush.bf16.msra.mxu0 0
    %2794 = vmatpush.bf16.msra.mxu0 0
    %2795 = vmatpush.bf16.msra.mxu0 %v2669
    %2796 = vmatmul.bf16.gmra.mxu0 %v2639
    %v2797 = vpop.f32.mrf.mxu0
    %v2798 = vadd.f32 0.0, %v2797
    %v2799 = vpop.f32.mrf.mxu0
    %2800 = vdwg.mxu0
    %2801 = vrot.lane.b32.xlu0 %v2594, 19
    %v2802 = vpop.permute.xlu0 %2801
    %2803 = vrot.lane.b32.xlu0 %v2595, 19
    %v2804 = vpop.permute.xlu0 %2803
    %2805 = vrot.lane.b32.xlu0 %v2596, 19
    %v2806 = vpop.permute.xlu0 %2805
    %2807 = vrot.lane.b32.xlu0 %v2597, 19
    %v2808 = vpop.permute.xlu0 %2807
    %2809 = vrot.lane.b32.xlu0 %v2598, 19
    %v2810 = vpop.permute.xlu0 %2809
    %2811 = vrot.lane.b32.xlu0 %v2599, 19
    %v2812 = vpop.permute.xlu0 %2811
    %2813 = vrot.lane.b32.xlu0 %v2600, 19
    %v2814 = vpop.permute.xlu0 %2813
    %2815 = vrot.lane.b32.xlu0 %v2601, 19
    %v2816 = vpop.permute.xlu0 %2815
    %2817 = vrot.lane.b32.xlu0 %v2602, 19
    %v2818 = vpop.permute.xlu0 %2817
    %2819 = vrot.lane.b32.xlu0 %v2603, 19
    %v2820 = vpop.permute.xlu0 %2819
    %2821 = vrot.lane.b32.xlu0 %v2604, 19
    %v2822 = vpop.permute.xlu0 %2821
    %v2823 = vsel %vm423, %v2802, %v2804
    %v2824 = vsel %vm423, %v2804, %v2806
    %v2825 = vsel %vm423, %v2806, %v2808
    %v2826 = vsel %vm423, %v2808, %v2810
    %v2827 = vsel %vm423, %v2810, %v2812
    %v2828 = vsel %vm423, %v2812, %v2814
    %v2829 = vsel %vm423, %v2814, %v2816
    %v2830 = vsel %vm423, %v2816, %v2818
    %v2831 = vsel %vm423, %v2818, %v2820
    %v2832 = vsel %vm423, %v2820, %v2822
    %v2834 = vsel %vm2637, %v2562, 0
    %v2837 = vsel %vm218, %v2823, 0
    %v2840 = vsel %vm218, %v2824, 0
    %v2843 = vsel %vm218, %v2825, 0
    %v2846 = vsel %vm218, %v2826, 0
    %v2849 = vsel %vm218, %v2827, 0
    %v2852 = vsel %vm218, %v2828, 0
    %v2855 = vsel %vm218, %v2829, 0
    %v2858 = vsel %vm218, %v2830, 0
    %v2861 = vsel %vm218, %v2831, 0
    %v2864 = vsel %vm218, %v2832, 0
    %2866 = vmatpush.bf16.msra.mxu0 0
    %2867 = vmatpush.bf16.msra.mxu0 0
    %2868 = vmatpush.bf16.msra.mxu0 0
    %2869 = vmatpush.bf16.msra.mxu0 0
    %2870 = vmatpush.bf16.msra.mxu0 0
    %2871 = vmatpush.bf16.msra.mxu0 0
    %2872 = vmatpush.bf16.msra.mxu0 0
    %2873 = vmatpush.bf16.msra.mxu0 %v2837
    %2874 = vmatmul.bf16.gmra.mxu0 %v2834
    %v2875 = vpop.f32.mrf.mxu0
    %v2876 = vadd.f32 %v2681, %v2875
    %v2877 = vpop.f32.mrf.mxu0
    %2878 = vdwg.mxu0
    %2879 = vmatpush.bf16.msra.mxu0 0
    %2880 = vmatpush.bf16.msra.mxu0 0
    %2881 = vmatpush.bf16.msra.mxu0 0
    %2882 = vmatpush.bf16.msra.mxu0 0
    %2883 = vmatpush.bf16.msra.mxu0 0
    %2884 = vmatpush.bf16.msra.mxu0 0
    %2885 = vmatpush.bf16.msra.mxu0 0
    %2886 = vmatpush.bf16.msra.mxu0 %v2840
    %2887 = vmatmul.bf16.gmra.mxu0 %v2834
    %v2888 = vpop.f32.mrf.mxu0
    %v2889 = vadd.f32 %v2694, %v2888
    %v2890 = vpop.f32.mrf.mxu0
    %2891 = vdwg.mxu0
    %2892 = vmatpush.bf16.msra.mxu0 0
    %2893 = vmatpush.bf16.msra.mxu0 0
    %2894 = vmatpush.bf16.msra.mxu0 0
    %2895 = vmatpush.bf16.msra.mxu0 0
    %2896 = vmatpush.bf16.msra.mxu0 0
    %2897 = vmatpush.bf16.msra.mxu0 0
    %2898 = vmatpush.bf16.msra.mxu0 0
    %2899 = vmatpush.bf16.msra.mxu0 %v2843
    %2900 = vmatmul.bf16.gmra.mxu0 %v2834
    %v2901 = vpop.f32.mrf.mxu0
    %v2902 = vadd.f32 %v2707, %v2901
    %v2903 = vpop.f32.mrf.mxu0
    %2904 = vdwg.mxu0
    %2905 = vmatpush.bf16.msra.mxu0 0
    %2906 = vmatpush.bf16.msra.mxu0 0
    %2907 = vmatpush.bf16.msra.mxu0 0
    %2908 = vmatpush.bf16.msra.mxu0 0
    %2909 = vmatpush.bf16.msra.mxu0 0
    %2910 = vmatpush.bf16.msra.mxu0 0
    %2911 = vmatpush.bf16.msra.mxu0 0
    %2912 = vmatpush.bf16.msra.mxu0 %v2846
    %2913 = vmatmul.bf16.gmra.mxu0 %v2834
    %v2914 = vpop.f32.mrf.mxu0
    %v2915 = vadd.f32 %v2720, %v2914
    %v2916 = vpop.f32.mrf.mxu0
    %2917 = vdwg.mxu0
    %2918 = vmatpush.bf16.msra.mxu0 0
    %2919 = vmatpush.bf16.msra.mxu0 0
    %2920 = vmatpush.bf16.msra.mxu0 0
    %2921 = vmatpush.bf16.msra.mxu0 0
    %2922 = vmatpush.bf16.msra.mxu0 0
    %2923 = vmatpush.bf16.msra.mxu0 0
    %2924 = vmatpush.bf16.msra.mxu0 0
    %2925 = vmatpush.bf16.msra.mxu0 %v2849
    %2926 = vmatmul.bf16.gmra.mxu0 %v2834
    %v2927 = vpop.f32.mrf.mxu0
    %v2928 = vadd.f32 %v2733, %v2927
    %v2929 = vpop.f32.mrf.mxu0
    %2930 = vdwg.mxu0
    %2931 = vmatpush.bf16.msra.mxu0 0
    %2932 = vmatpush.bf16.msra.mxu0 0
    %2933 = vmatpush.bf16.msra.mxu0 0
    %2934 = vmatpush.bf16.msra.mxu0 0
    %2935 = vmatpush.bf16.msra.mxu0 0
    %2936 = vmatpush.bf16.msra.mxu0 0
    %2937 = vmatpush.bf16.msra.mxu0 0
    %2938 = vmatpush.bf16.msra.mxu0 %v2852
    %2939 = vmatmul.bf16.gmra.mxu0 %v2834
    %v2940 = vpop.f32.mrf.mxu0
    %v2941 = vadd.f32 %v2746, %v2940
    %v2942 = vpop.f32.mrf.mxu0
    %2943 = vdwg.mxu0
    %2944 = vmatpush.bf16.msra.mxu0 0
    %2945 = vmatpush.bf16.msra.mxu0 0
    %2946 = vmatpush.bf16.msra.mxu0 0
    %2947 = vmatpush.bf16.msra.mxu0 0
    %2948 = vmatpush.bf16.msra.mxu0 0
    %2949 = vmatpush.bf16.msra.mxu0 0
    %2950 = vmatpush.bf16.msra.mxu0 0
    %2951 = vmatpush.bf16.msra.mxu0 %v2855
    %2952 = vmatmul.bf16.gmra.mxu0 %v2834
    %v2953 = vpop.f32.mrf.mxu0
    %v2954 = vadd.f32 %v2759, %v2953
    %v2955 = vpop.f32.mrf.mxu0
    %2956 = vdwg.mxu0
    %2957 = vmatpush.bf16.msra.mxu0 0
    %2958 = vmatpush.bf16.msra.mxu0 0
    %2959 = vmatpush.bf16.msra.mxu0 0
    %2960 = vmatpush.bf16.msra.mxu0 0
    %2961 = vmatpush.bf16.msra.mxu0 0
    %2962 = vmatpush.bf16.msra.mxu0 0
    %2963 = vmatpush.bf16.msra.mxu0 0
    %2964 = vmatpush.bf16.msra.mxu0 %v2858
    %2965 = vmatmul.bf16.gmra.mxu0 %v2834
    %v2966 = vpop.f32.mrf.mxu0
    %v2967 = vadd.f32 %v2772, %v2966
    %v2968 = vpop.f32.mrf.mxu0
    %2969 = vdwg.mxu0
    %2970 = vmatpush.bf16.msra.mxu0 0
    %2971 = vmatpush.bf16.msra.mxu0 0
    %2972 = vmatpush.bf16.msra.mxu0 0
    %2973 = vmatpush.bf16.msra.mxu0 0
    %2974 = vmatpush.bf16.msra.mxu0 0
    %2975 = vmatpush.bf16.msra.mxu0 0
    %2976 = vmatpush.bf16.msra.mxu0 0
    %2977 = vmatpush.bf16.msra.mxu0 %v2861
    %2978 = vmatmul.bf16.gmra.mxu0 %v2834
    %v2979 = vpop.f32.mrf.mxu0
    %v2980 = vadd.f32 %v2785, %v2979
    %v2981 = vpop.f32.mrf.mxu0
    %2982 = vdwg.mxu0
    %2983 = vmatpush.bf16.msra.mxu0 0
    %2984 = vmatpush.bf16.msra.mxu0 0
    %2985 = vmatpush.bf16.msra.mxu0 0
    %2986 = vmatpush.bf16.msra.mxu0 0
    %2987 = vmatpush.bf16.msra.mxu0 0
    %2988 = vmatpush.bf16.msra.mxu0 0
    %2989 = vmatpush.bf16.msra.mxu0 0
    %2990 = vmatpush.bf16.msra.mxu0 %v2864
    %2991 = vmatmul.bf16.gmra.mxu0 %v2834
    %v2992 = vpop.f32.mrf.mxu0
    %v2993 = vadd.f32 %v2798, %v2992
    %v2994 = vpop.f32.mrf.mxu0
    %2995 = vdwg.mxu0
    %2996 = vrot.lane.b32.xlu0 %v2594, 17
    %v2997 = vpop.permute.xlu0 %2996
    %2998 = vrot.lane.b32.xlu0 %v2595, 17
    %v2999 = vpop.permute.xlu0 %2998
    %3000 = vrot.lane.b32.xlu0 %v2596, 17
    %v3001 = vpop.permute.xlu0 %3000
    %3002 = vrot.lane.b32.xlu0 %v2597, 17
    %v3003 = vpop.permute.xlu0 %3002
    %3004 = vrot.lane.b32.xlu0 %v2598, 17
    %v3005 = vpop.permute.xlu0 %3004
    %3006 = vrot.lane.b32.xlu0 %v2599, 17
    %v3007 = vpop.permute.xlu0 %3006
    %3008 = vrot.lane.b32.xlu0 %v2600, 17
    %v3009 = vpop.permute.xlu0 %3008
    %3010 = vrot.lane.b32.xlu0 %v2601, 17
    %v3011 = vpop.permute.xlu0 %3010
    %3012 = vrot.lane.b32.xlu0 %v2602, 17
    %v3013 = vpop.permute.xlu0 %3012
    %3014 = vrot.lane.b32.xlu0 %v2603, 17
    %v3015 = vpop.permute.xlu0 %3014
    %3016 = vrot.lane.b32.xlu0 %v2604, 17
    %v3017 = vpop.permute.xlu0 %3016
    %v3018 = vsel %vm661, %v2997, %v2999
    %v3019 = vsel %vm661, %v2999, %v3001
    %v3020 = vsel %vm661, %v3001, %v3003
    %v3021 = vsel %vm661, %v3003, %v3005
    %v3022 = vsel %vm661, %v3005, %v3007
    %v3023 = vsel %vm661, %v3007, %v3009
    %v3024 = vsel %vm661, %v3009, %v3011
    %v3025 = vsel %vm661, %v3011, %v3013
    %v3026 = vsel %vm661, %v3013, %v3015
    %v3027 = vsel %vm661, %v3015, %v3017
    %v3029 = vsel %vm2637, %v2564, 0
    %v3032 = vsel %vm218, %v3018, 0
    %v3035 = vsel %vm218, %v3019, 0
    %v3038 = vsel %vm218, %v3020, 0
    %v3041 = vsel %vm218, %v3021, 0
    %v3044 = vsel %vm218, %v3022, 0
    %v3047 = vsel %vm218, %v3023, 0
    %v3050 = vsel %vm218, %v3024, 0
    %v3053 = vsel %vm218, %v3025, 0
    %v3056 = vsel %vm218, %v3026, 0
    %v3059 = vsel %vm218, %v3027, 0
    %3061 = vmatpush.bf16.msra.mxu0 0
    %3062 = vmatpush.bf16.msra.mxu0 0
    %3063 = vmatpush.bf16.msra.mxu0 0
    %3064 = vmatpush.bf16.msra.mxu0 0
    %3065 = vmatpush.bf16.msra.mxu0 0
    %3066 = vmatpush.bf16.msra.mxu0 0
    %3067 = vmatpush.bf16.msra.mxu0 0
    %3068 = vmatpush.bf16.msra.mxu0 %v3032
    %3069 = vmatmul.bf16.gmra.mxu0 %v3029
    %v3070 = vpop.f32.mrf.mxu0
    %v3071 = vadd.f32 0.0, %v3070
    %v3072 = vpop.f32.mrf.mxu0
    %3073 = vdwg.mxu0
    %3074 = vmatpush.bf16.msra.mxu0 0
    %3075 = vmatpush.bf16.msra.mxu0 0
    %3076 = vmatpush.bf16.msra.mxu0 0
    %3077 = vmatpush.bf16.msra.mxu0 0
    %3078 = vmatpush.bf16.msra.mxu0 0
    %3079 = vmatpush.bf16.msra.mxu0 0
    %3080 = vmatpush.bf16.msra.mxu0 0
    %3081 = vmatpush.bf16.msra.mxu0 %v3035
    %3082 = vmatmul.bf16.gmra.mxu0 %v3029
    %v3083 = vpop.f32.mrf.mxu0
    %v3084 = vadd.f32 0.0, %v3083
    %v3085 = vpop.f32.mrf.mxu0
    %3086 = vdwg.mxu0
    %3087 = vmatpush.bf16.msra.mxu0 0
    %3088 = vmatpush.bf16.msra.mxu0 0
    %3089 = vmatpush.bf16.msra.mxu0 0
    %3090 = vmatpush.bf16.msra.mxu0 0
    %3091 = vmatpush.bf16.msra.mxu0 0
    %3092 = vmatpush.bf16.msra.mxu0 0
    %3093 = vmatpush.bf16.msra.mxu0 0
    %3094 = vmatpush.bf16.msra.mxu0 %v3038
    %3095 = vmatmul.bf16.gmra.mxu0 %v3029
    %v3096 = vpop.f32.mrf.mxu0
    %v3097 = vadd.f32 0.0, %v3096
    %v3098 = vpop.f32.mrf.mxu0
    %3099 = vdwg.mxu0
    %3100 = vmatpush.bf16.msra.mxu0 0
    %3101 = vmatpush.bf16.msra.mxu0 0
    %3102 = vmatpush.bf16.msra.mxu0 0
    %3103 = vmatpush.bf16.msra.mxu0 0
    %3104 = vmatpush.bf16.msra.mxu0 0
    %3105 = vmatpush.bf16.msra.mxu0 0
    %3106 = vmatpush.bf16.msra.mxu0 0
    %3107 = vmatpush.bf16.msra.mxu0 %v3041
    %3108 = vmatmul.bf16.gmra.mxu0 %v3029
    %v3109 = vpop.f32.mrf.mxu0
    %v3110 = vadd.f32 0.0, %v3109
    %v3111 = vpop.f32.mrf.mxu0
    %3112 = vdwg.mxu0
    %3113 = vmatpush.bf16.msra.mxu0 0
    %3114 = vmatpush.bf16.msra.mxu0 0
    %3115 = vmatpush.bf16.msra.mxu0 0
    %3116 = vmatpush.bf16.msra.mxu0 0
    %3117 = vmatpush.bf16.msra.mxu0 0
    %3118 = vmatpush.bf16.msra.mxu0 0
    %3119 = vmatpush.bf16.msra.mxu0 0
    %3120 = vmatpush.bf16.msra.mxu0 %v3044
    %3121 = vmatmul.bf16.gmra.mxu0 %v3029
    %v3122 = vpop.f32.mrf.mxu0
    %v3123 = vadd.f32 0.0, %v3122
    %v3124 = vpop.f32.mrf.mxu0
    %3125 = vdwg.mxu0
    %3126 = vmatpush.bf16.msra.mxu0 0
    %3127 = vmatpush.bf16.msra.mxu0 0
    %3128 = vmatpush.bf16.msra.mxu0 0
    %3129 = vmatpush.bf16.msra.mxu0 0
    %3130 = vmatpush.bf16.msra.mxu0 0
    %3131 = vmatpush.bf16.msra.mxu0 0
    %3132 = vmatpush.bf16.msra.mxu0 0
    %3133 = vmatpush.bf16.msra.mxu0 %v3047
    %3134 = vmatmul.bf16.gmra.mxu0 %v3029
    %v3135 = vpop.f32.mrf.mxu0
    %v3136 = vadd.f32 0.0, %v3135
    %v3137 = vpop.f32.mrf.mxu0
    %3138 = vdwg.mxu0
    %3139 = vmatpush.bf16.msra.mxu0 0
    %3140 = vmatpush.bf16.msra.mxu0 0
    %3141 = vmatpush.bf16.msra.mxu0 0
    %3142 = vmatpush.bf16.msra.mxu0 0
    %3143 = vmatpush.bf16.msra.mxu0 0
    %3144 = vmatpush.bf16.msra.mxu0 0
    %3145 = vmatpush.bf16.msra.mxu0 0
    %3146 = vmatpush.bf16.msra.mxu0 %v3050
    %3147 = vmatmul.bf16.gmra.mxu0 %v3029
    %v3148 = vpop.f32.mrf.mxu0
    %v3149 = vadd.f32 0.0, %v3148
    %v3150 = vpop.f32.mrf.mxu0
    %3151 = vdwg.mxu0
    %3152 = vmatpush.bf16.msra.mxu0 0
    %3153 = vmatpush.bf16.msra.mxu0 0
    %3154 = vmatpush.bf16.msra.mxu0 0
    %3155 = vmatpush.bf16.msra.mxu0 0
    %3156 = vmatpush.bf16.msra.mxu0 0
    %3157 = vmatpush.bf16.msra.mxu0 0
    %3158 = vmatpush.bf16.msra.mxu0 0
    %3159 = vmatpush.bf16.msra.mxu0 %v3053
    %3160 = vmatmul.bf16.gmra.mxu0 %v3029
    %v3161 = vpop.f32.mrf.mxu0
    %v3162 = vadd.f32 0.0, %v3161
    %v3163 = vpop.f32.mrf.mxu0
    %3164 = vdwg.mxu0
    %3165 = vmatpush.bf16.msra.mxu0 0
    %3166 = vmatpush.bf16.msra.mxu0 0
    %3167 = vmatpush.bf16.msra.mxu0 0
    %3168 = vmatpush.bf16.msra.mxu0 0
    %3169 = vmatpush.bf16.msra.mxu0 0
    %3170 = vmatpush.bf16.msra.mxu0 0
    %3171 = vmatpush.bf16.msra.mxu0 0
    %3172 = vmatpush.bf16.msra.mxu0 %v3056
    %3173 = vmatmul.bf16.gmra.mxu0 %v3029
    %v3174 = vpop.f32.mrf.mxu0
    %v3175 = vadd.f32 0.0, %v3174
    %v3176 = vpop.f32.mrf.mxu0
    %3177 = vdwg.mxu0
    %3178 = vmatpush.bf16.msra.mxu0 0
    %3179 = vmatpush.bf16.msra.mxu0 0
    %3180 = vmatpush.bf16.msra.mxu0 0
    %3181 = vmatpush.bf16.msra.mxu0 0
    %3182 = vmatpush.bf16.msra.mxu0 0
    %3183 = vmatpush.bf16.msra.mxu0 0
    %3184 = vmatpush.bf16.msra.mxu0 0
    %3185 = vmatpush.bf16.msra.mxu0 %v3059
    %3186 = vmatmul.bf16.gmra.mxu0 %v3029
    %v3187 = vpop.f32.mrf.mxu0
    %v3188 = vadd.f32 0.0, %v3187
    %v3189 = vpop.f32.mrf.mxu0
    %3190 = vdwg.mxu0
    %v3191 = vadd.f32 %v2876, %v3071
    %v3192 = vadd.f32 %v2889, %v3084
    %v3193 = vadd.f32 %v2902, %v3097
    %v3194 = vadd.f32 %v2915, %v3110
    %v3195 = vadd.f32 %v2928, %v3123
    %v3196 = vadd.f32 %v2941, %v3136
    %v3197 = vadd.f32 %v2954, %v3149
    %v3198 = vadd.f32 %v2967, %v3162
    %v3199 = vadd.f32 %v2980, %v3175
    %v3200 = vadd.f32 %v2993, %v3188
    %3201 = vrot.lane.b32.xlu0 %v2594, 1
    %v3202 = vpop.permute.xlu0 %3201
    %3203 = vrot.lane.b32.xlu0 %v2595, 1
    %v3204 = vpop.permute.xlu0 %3203
    %3205 = vrot.lane.b32.xlu0 %v2596, 1
    %v3206 = vpop.permute.xlu0 %3205
    %3207 = vrot.lane.b32.xlu0 %v2597, 1
    %v3208 = vpop.permute.xlu0 %3207
    %3209 = vrot.lane.b32.xlu0 %v2598, 1
    %v3210 = vpop.permute.xlu0 %3209
    %3211 = vrot.lane.b32.xlu0 %v2599, 1
    %v3212 = vpop.permute.xlu0 %3211
    %3213 = vrot.lane.b32.xlu0 %v2600, 1
    %v3214 = vpop.permute.xlu0 %3213
    %3215 = vrot.lane.b32.xlu0 %v2601, 1
    %v3216 = vpop.permute.xlu0 %3215
    %3217 = vrot.lane.b32.xlu0 %v2602, 1
    %v3218 = vpop.permute.xlu0 %3217
    %3219 = vrot.lane.b32.xlu0 %v2603, 1
    %v3220 = vpop.permute.xlu0 %3219
    %3221 = vrot.lane.b32.xlu0 %v2604, 1
    %v3222 = vpop.permute.xlu0 %3221
    %v3223 = vsel %vm909, %v3202, %v3204
    %v3224 = vsel %vm909, %v3204, %v3206
    %v3225 = vsel %vm909, %v3206, %v3208
    %v3226 = vsel %vm909, %v3208, %v3210
    %v3227 = vsel %vm909, %v3210, %v3212
    %v3228 = vsel %vm909, %v3212, %v3214
    %v3229 = vsel %vm909, %v3214, %v3216
    %v3230 = vsel %vm909, %v3216, %v3218
    %v3231 = vsel %vm909, %v3218, %v3220
    %v3232 = vsel %vm909, %v3220, %v3222
    %v3234 = vsel %vm2637, %v2565, 0
    %v3237 = vsel %vm218, %v3223, 0
    %v3240 = vsel %vm218, %v3224, 0
    %v3243 = vsel %vm218, %v3225, 0
    %v3246 = vsel %vm218, %v3226, 0
    %v3249 = vsel %vm218, %v3227, 0
    %v3252 = vsel %vm218, %v3228, 0
    %v3255 = vsel %vm218, %v3229, 0
    %v3258 = vsel %vm218, %v3230, 0
    %v3261 = vsel %vm218, %v3231, 0
    %v3264 = vsel %vm218, %v3232, 0
    %3266 = vmatpush.bf16.msra.mxu0 0
    %3267 = vmatpush.bf16.msra.mxu0 0
    %3268 = vmatpush.bf16.msra.mxu0 0
    %3269 = vmatpush.bf16.msra.mxu0 0
    %3270 = vmatpush.bf16.msra.mxu0 0
    %3271 = vmatpush.bf16.msra.mxu0 0
    %3272 = vmatpush.bf16.msra.mxu0 0
    %3273 = vmatpush.bf16.msra.mxu0 %v3237
    %3274 = vmatmul.bf16.gmra.mxu0 %v3234
    %v3275 = vpop.f32.mrf.mxu0
    %v3276 = vadd.f32 0.0, %v3275
    %v3277 = vpop.f32.mrf.mxu0
    %3278 = vdwg.mxu0
    %3279 = vmatpush.bf16.msra.mxu0 0
    %3280 = vmatpush.bf16.msra.mxu0 0
    %3281 = vmatpush.bf16.msra.mxu0 0
    %3282 = vmatpush.bf16.msra.mxu0 0
    %3283 = vmatpush.bf16.msra.mxu0 0
    %3284 = vmatpush.bf16.msra.mxu0 0
    %3285 = vmatpush.bf16.msra.mxu0 0
    %3286 = vmatpush.bf16.msra.mxu0 %v3240
    %3287 = vmatmul.bf16.gmra.mxu0 %v3234
    %v3288 = vpop.f32.mrf.mxu0
    %v3289 = vadd.f32 0.0, %v3288
    %v3290 = vpop.f32.mrf.mxu0
    %3291 = vdwg.mxu0
    %3292 = vmatpush.bf16.msra.mxu0 0
    %3293 = vmatpush.bf16.msra.mxu0 0
    %3294 = vmatpush.bf16.msra.mxu0 0
    %3295 = vmatpush.bf16.msra.mxu0 0
    %3296 = vmatpush.bf16.msra.mxu0 0
    %3297 = vmatpush.bf16.msra.mxu0 0
    %3298 = vmatpush.bf16.msra.mxu0 0
    %3299 = vmatpush.bf16.msra.mxu0 %v3243
    %3300 = vmatmul.bf16.gmra.mxu0 %v3234
    %v3301 = vpop.f32.mrf.mxu0
    %v3302 = vadd.f32 0.0, %v3301
    %v3303 = vpop.f32.mrf.mxu0
    %3304 = vdwg.mxu0
    %3305 = vmatpush.bf16.msra.mxu0 0
    %3306 = vmatpush.bf16.msra.mxu0 0
    %3307 = vmatpush.bf16.msra.mxu0 0
    %3308 = vmatpush.bf16.msra.mxu0 0
    %3309 = vmatpush.bf16.msra.mxu0 0
    %3310 = vmatpush.bf16.msra.mxu0 0
    %3311 = vmatpush.bf16.msra.mxu0 0
    %3312 = vmatpush.bf16.msra.mxu0 %v3246
    %3313 = vmatmul.bf16.gmra.mxu0 %v3234
    %v3314 = vpop.f32.mrf.mxu0
    %v3315 = vadd.f32 0.0, %v3314
    %v3316 = vpop.f32.mrf.mxu0
    %3317 = vdwg.mxu0
    %3318 = vmatpush.bf16.msra.mxu0 0
    %3319 = vmatpush.bf16.msra.mxu0 0
    %3320 = vmatpush.bf16.msra.mxu0 0
    %3321 = vmatpush.bf16.msra.mxu0 0
    %3322 = vmatpush.bf16.msra.mxu0 0
    %3323 = vmatpush.bf16.msra.mxu0 0
    %3324 = vmatpush.bf16.msra.mxu0 0
    %3325 = vmatpush.bf16.msra.mxu0 %v3249
    %3326 = vmatmul.bf16.gmra.mxu0 %v3234
    %v3327 = vpop.f32.mrf.mxu0
    %v3328 = vadd.f32 0.0, %v3327
    %v3329 = vpop.f32.mrf.mxu0
    %3330 = vdwg.mxu0
    %3331 = vmatpush.bf16.msra.mxu0 0
    %3332 = vmatpush.bf16.msra.mxu0 0
    %3333 = vmatpush.bf16.msra.mxu0 0
    %3334 = vmatpush.bf16.msra.mxu0 0
    %3335 = vmatpush.bf16.msra.mxu0 0
    %3336 = vmatpush.bf16.msra.mxu0 0
    %3337 = vmatpush.bf16.msra.mxu0 0
    %3338 = vmatpush.bf16.msra.mxu0 %v3252
    %3339 = vmatmul.bf16.gmra.mxu0 %v3234
    %v3340 = vpop.f32.mrf.mxu0
    %v3341 = vadd.f32 0.0, %v3340
    %v3342 = vpop.f32.mrf.mxu0
    %3343 = vdwg.mxu0
    %3344 = vmatpush.bf16.msra.mxu0 0
    %3345 = vmatpush.bf16.msra.mxu0 0
    %3346 = vmatpush.bf16.msra.mxu0 0
    %3347 = vmatpush.bf16.msra.mxu0 0
    %3348 = vmatpush.bf16.msra.mxu0 0
    %3349 = vmatpush.bf16.msra.mxu0 0
    %3350 = vmatpush.bf16.msra.mxu0 0
    %3351 = vmatpush.bf16.msra.mxu0 %v3255
    %3352 = vmatmul.bf16.gmra.mxu0 %v3234
    %v3353 = vpop.f32.mrf.mxu0
    %v3354 = vadd.f32 0.0, %v3353
    %v3355 = vpop.f32.mrf.mxu0
    %3356 = vdwg.mxu0
    %3357 = vmatpush.bf16.msra.mxu0 0
    %3358 = vmatpush.bf16.msra.mxu0 0
    %3359 = vmatpush.bf16.msra.mxu0 0
    %3360 = vmatpush.bf16.msra.mxu0 0
    %3361 = vmatpush.bf16.msra.mxu0 0
    %3362 = vmatpush.bf16.msra.mxu0 0
    %3363 = vmatpush.bf16.msra.mxu0 0
    %3364 = vmatpush.bf16.msra.mxu0 %v3258
    %3365 = vmatmul.bf16.gmra.mxu0 %v3234
    %v3366 = vpop.f32.mrf.mxu0
    %v3367 = vadd.f32 0.0, %v3366
    %v3368 = vpop.f32.mrf.mxu0
    %3369 = vdwg.mxu0
    %3370 = vmatpush.bf16.msra.mxu0 0
    %3371 = vmatpush.bf16.msra.mxu0 0
    %3372 = vmatpush.bf16.msra.mxu0 0
    %3373 = vmatpush.bf16.msra.mxu0 0
    %3374 = vmatpush.bf16.msra.mxu0 0
    %3375 = vmatpush.bf16.msra.mxu0 0
    %3376 = vmatpush.bf16.msra.mxu0 0
    %3377 = vmatpush.bf16.msra.mxu0 %v3261
    %3378 = vmatmul.bf16.gmra.mxu0 %v3234
    %v3379 = vpop.f32.mrf.mxu0
    %v3380 = vadd.f32 0.0, %v3379
    %v3381 = vpop.f32.mrf.mxu0
    %3382 = vdwg.mxu0
    %3383 = vmatpush.bf16.msra.mxu0 0
    %3384 = vmatpush.bf16.msra.mxu0 0
    %3385 = vmatpush.bf16.msra.mxu0 0
    %3386 = vmatpush.bf16.msra.mxu0 0
    %3387 = vmatpush.bf16.msra.mxu0 0
    %3388 = vmatpush.bf16.msra.mxu0 0
    %3389 = vmatpush.bf16.msra.mxu0 0
    %3390 = vmatpush.bf16.msra.mxu0 %v3264
    %3391 = vmatmul.bf16.gmra.mxu0 %v3234
    %v3392 = vpop.f32.mrf.mxu0
    %v3393 = vadd.f32 0.0, %v3392
    %v3394 = vpop.f32.mrf.mxu0
    %3395 = vdwg.mxu0
    %v3396 = vadd.f32 %v3191, %v3276
    %v3397 = vadd.f32 %v3192, %v3289
    %v3398 = vadd.f32 %v3193, %v3302
    %v3399 = vadd.f32 %v3194, %v3315
    %v3400 = vadd.f32 %v3195, %v3328
    %v3401 = vadd.f32 %v3196, %v3341
    %v3402 = vadd.f32 %v3197, %v3354
    %v3403 = vadd.f32 %v3198, %v3367
    %v3404 = vadd.f32 %v3199, %v3380
    %v3405 = vadd.f32 %v3200, %v3393
    %v3406 = vld [vmem:[#allocation2 + $0x4] sm:$0xff]
    %v3407 = vld [vmem:[#allocation2 + $0xc] sm:$0xff]
    %v3408 = vld [vmem:[#allocation2 + $0x14] sm:$0xff]
    %v3409 = vld [vmem:[#allocation2 + $0x1c] sm:$0xff]
    %v3410 = vld [vmem:[#allocation2 + $0x24] sm:$0xff]
    %v3416 = vunpack.c.l.b16 %v3406
    %v3417 = vunpack.c.h.b16 %v3406
    %v3418 = vunpack.c.l.b16 %v3407
    %v3419 = vunpack.c.h.b16 %v3407
    %v3420 = vunpack.c.l.b16 %v3408
    %v3421 = vunpack.c.h.b16 %v3408
    %v3422 = vunpack.c.l.b16 %v3409
    %v3423 = vunpack.c.h.b16 %v3409
    %v3424 = vunpack.c.l.b16 %v3410
    %v3425 = vunpack.c.h.b16 %v3410
    %v3426 = vpack.c.b16 %v3416, %v3416
    %v3427 = vpack.c.b16 %v3417, %v3417
    %v3428 = vpack.c.b16 %v3418, %v3418
    %v3429 = vpack.c.b16 %v3419, %v3419
    %v3430 = vpack.c.b16 %v3420, %v3420
    %v3431 = vpack.c.b16 %v3421, %v3421
    %v3432 = vpack.c.b16 %v3422, %v3422
    %v3433 = vpack.c.b16 %v3423, %v3423
    %v3434 = vpack.c.b16 %v3424, %v3424
    %v3435 = vpack.c.b16 %v3425, %v3425
    %v3437 = vsel %vm2637, %v2566, 0
    %v3440 = vsel %vm218, %v3426, 0
    %v3443 = vsel %vm218, %v3427, 0
    %v3446 = vsel %vm218, %v3428, 0
    %v3449 = vsel %vm218, %v3429, 0
    %v3452 = vsel %vm218, %v3430, 0
    %v3455 = vsel %vm218, %v3431, 0
    %v3458 = vsel %vm218, %v3432, 0
    %v3461 = vsel %vm218, %v3433, 0
    %v3464 = vsel %vm218, %v3434, 0
    %v3467 = vsel %vm218, %v3435, 0
    %3469 = vmatpush.bf16.msra.mxu0 0
    %3470 = vmatpush.bf16.msra.mxu0 0
    %3471 = vmatpush.bf16.msra.mxu0 0
    %3472 = vmatpush.bf16.msra.mxu0 0
    %3473 = vmatpush.bf16.msra.mxu0 0
    %3474 = vmatpush.bf16.msra.mxu0 0
    %3475 = vmatpush.bf16.msra.mxu0 0
    %3476 = vmatpush.bf16.msra.mxu0 %v3440
    %3477 = vmatmul.bf16.gmra.mxu0 %v3437
    %v3478 = vpop.f32.mrf.mxu0
    %v3479 = vadd.f32 0.0, %v3478
    %v3480 = vpop.f32.mrf.mxu0
    %3481 = vdwg.mxu0
    %3482 = vmatpush.bf16.msra.mxu0 0
    %3483 = vmatpush.bf16.msra.mxu0 0
    %3484 = vmatpush.bf16.msra.mxu0 0
    %3485 = vmatpush.bf16.msra.mxu0 0
    %3486 = vmatpush.bf16.msra.mxu0 0
    %3487 = vmatpush.bf16.msra.mxu0 0
    %3488 = vmatpush.bf16.msra.mxu0 0
    %3489 = vmatpush.bf16.msra.mxu0 %v3443
    %3490 = vmatmul.bf16.gmra.mxu0 %v3437
    %v3491 = vpop.f32.mrf.mxu0
    %v3492 = vadd.f32 0.0, %v3491
    %v3493 = vpop.f32.mrf.mxu0
    %3494 = vdwg.mxu0
    %3495 = vmatpush.bf16.msra.mxu0 0
    %3496 = vmatpush.bf16.msra.mxu0 0
    %3497 = vmatpush.bf16.msra.mxu0 0
    %3498 = vmatpush.bf16.msra.mxu0 0
    %3499 = vmatpush.bf16.msra.mxu0 0
    %3500 = vmatpush.bf16.msra.mxu0 0
    %3501 = vmatpush.bf16.msra.mxu0 0
    %3502 = vmatpush.bf16.msra.mxu0 %v3446
    %3503 = vmatmul.bf16.gmra.mxu0 %v3437
    %v3504 = vpop.f32.mrf.mxu0
    %v3505 = vadd.f32 0.0, %v3504
    %v3506 = vpop.f32.mrf.mxu0
    %3507 = vdwg.mxu0
    %3508 = vmatpush.bf16.msra.mxu0 0
    %3509 = vmatpush.bf16.msra.mxu0 0
    %3510 = vmatpush.bf16.msra.mxu0 0
    %3511 = vmatpush.bf16.msra.mxu0 0
    %3512 = vmatpush.bf16.msra.mxu0 0
    %3513 = vmatpush.bf16.msra.mxu0 0
    %3514 = vmatpush.bf16.msra.mxu0 0
    %3515 = vmatpush.bf16.msra.mxu0 %v3449
    %3516 = vmatmul.bf16.gmra.mxu0 %v3437
    %v3517 = vpop.f32.mrf.mxu0
    %v3518 = vadd.f32 0.0, %v3517
    %v3519 = vpop.f32.mrf.mxu0
    %3520 = vdwg.mxu0
    %3521 = vmatpush.bf16.msra.mxu0 0
    %3522 = vmatpush.bf16.msra.mxu0 0
    %3523 = vmatpush.bf16.msra.mxu0 0
    %3524 = vmatpush.bf16.msra.mxu0 0
    %3525 = vmatpush.bf16.msra.mxu0 0
    %3526 = vmatpush.bf16.msra.mxu0 0
    %3527 = vmatpush.bf16.msra.mxu0 0
    %3528 = vmatpush.bf16.msra.mxu0 %v3452
    %3529 = vmatmul.bf16.gmra.mxu0 %v3437
    %v3530 = vpop.f32.mrf.mxu0
    %v3531 = vadd.f32 0.0, %v3530
    %v3532 = vpop.f32.mrf.mxu0
    %3533 = vdwg.mxu0
    %3534 = vmatpush.bf16.msra.mxu0 0
    %3535 = vmatpush.bf16.msra.mxu0 0
    %3536 = vmatpush.bf16.msra.mxu0 0
    %3537 = vmatpush.bf16.msra.mxu0 0
    %3538 = vmatpush.bf16.msra.mxu0 0
    %3539 = vmatpush.bf16.msra.mxu0 0
    %3540 = vmatpush.bf16.msra.mxu0 0
    %3541 = vmatpush.bf16.msra.mxu0 %v3455
    %3542 = vmatmul.bf16.gmra.mxu0 %v3437
    %v3543 = vpop.f32.mrf.mxu0
    %v3544 = vadd.f32 0.0, %v3543
    %v3545 = vpop.f32.mrf.mxu0
    %3546 = vdwg.mxu0
    %3547 = vmatpush.bf16.msra.mxu0 0
    %3548 = vmatpush.bf16.msra.mxu0 0
    %3549 = vmatpush.bf16.msra.mxu0 0
    %3550 = vmatpush.bf16.msra.mxu0 0
    %3551 = vmatpush.bf16.msra.mxu0 0
    %3552 = vmatpush.bf16.msra.mxu0 0
    %3553 = vmatpush.bf16.msra.mxu0 0
    %3554 = vmatpush.bf16.msra.mxu0 %v3458
    %3555 = vmatmul.bf16.gmra.mxu0 %v3437
    %v3556 = vpop.f32.mrf.mxu0
    %v3557 = vadd.f32 0.0, %v3556
    %v3558 = vpop.f32.mrf.mxu0
    %3559 = vdwg.mxu0
    %3560 = vmatpush.bf16.msra.mxu0 0
    %3561 = vmatpush.bf16.msra.mxu0 0
    %3562 = vmatpush.bf16.msra.mxu0 0
    %3563 = vmatpush.bf16.msra.mxu0 0
    %3564 = vmatpush.bf16.msra.mxu0 0
    %3565 = vmatpush.bf16.msra.mxu0 0
    %3566 = vmatpush.bf16.msra.mxu0 0
    %3567 = vmatpush.bf16.msra.mxu0 %v3461
    %3568 = vmatmul.bf16.gmra.mxu0 %v3437
    %v3569 = vpop.f32.mrf.mxu0
    %v3570 = vadd.f32 0.0, %v3569
    %v3571 = vpop.f32.mrf.mxu0
    %3572 = vdwg.mxu0
    %3573 = vmatpush.bf16.msra.mxu0 0
    %3574 = vmatpush.bf16.msra.mxu0 0
    %3575 = vmatpush.bf16.msra.mxu0 0
    %3576 = vmatpush.bf16.msra.mxu0 0
    %3577 = vmatpush.bf16.msra.mxu0 0
    %3578 = vmatpush.bf16.msra.mxu0 0
    %3579 = vmatpush.bf16.msra.mxu0 0
    %3580 = vmatpush.bf16.msra.mxu0 %v3464
    %3581 = vmatmul.bf16.gmra.mxu0 %v3437
    %v3582 = vpop.f32.mrf.mxu0
    %v3583 = vadd.f32 0.0, %v3582
    %v3584 = vpop.f32.mrf.mxu0
    %3585 = vdwg.mxu0
    %3586 = vmatpush.bf16.msra.mxu0 0
    %3587 = vmatpush.bf16.msra.mxu0 0
    %3588 = vmatpush.bf16.msra.mxu0 0
    %3589 = vmatpush.bf16.msra.mxu0 0
    %3590 = vmatpush.bf16.msra.mxu0 0
    %3591 = vmatpush.bf16.msra.mxu0 0
    %3592 = vmatpush.bf16.msra.mxu0 0
    %3593 = vmatpush.bf16.msra.mxu0 %v3467
    %3594 = vmatmul.bf16.gmra.mxu0 %v3437
    %v3595 = vpop.f32.mrf.mxu0
    %v3596 = vadd.f32 0.0, %v3595
    %v3597 = vpop.f32.mrf.mxu0
    %3598 = vdwg.mxu0
    %v3599 = vadd.f32 %v3396, %v3479
    %v3600 = vadd.f32 %v3397, %v3492
    %v3601 = vadd.f32 %v3398, %v3505
    %v3602 = vadd.f32 %v3399, %v3518
    %v3603 = vadd.f32 %v3400, %v3531
    %v3604 = vadd.f32 %v3401, %v3544
    %v3605 = vadd.f32 %v3402, %v3557
    %v3606 = vadd.f32 %v3403, %v3570
    %v3607 = vadd.f32 %v3404, %v3583
    %v3608 = vadd.f32 %v3405, %v3596
    %v3609 = vld [vmem:[#allocation2 + $0x4] sm:$0xff]
    %v3610 = vld [vmem:[#allocation2 + $0xc] sm:$0xff]
    %v3611 = vld [vmem:[#allocation2 + $0x14] sm:$0xff]
    %v3612 = vld [vmem:[#allocation2 + $0x1c] sm:$0xff]
    %v3613 = vld [vmem:[#allocation2 + $0x24] sm:$0xff]
    %v3614 = vld [vmem:[#allocation2 + $0x2c] sm:$0xf]
    %v3621 = vunpack.c.l.b16 %v3609
    %v3622 = vunpack.c.h.b16 %v3609
    %v3623 = vunpack.c.l.b16 %v3610
    %v3624 = vunpack.c.h.b16 %v3610
    %v3625 = vunpack.c.l.b16 %v3611
    %v3626 = vunpack.c.h.b16 %v3611
    %v3627 = vunpack.c.l.b16 %v3612
    %v3628 = vunpack.c.h.b16 %v3612
    %v3629 = vunpack.c.l.b16 %v3613
    %v3630 = vunpack.c.h.b16 %v3613
    %v3631 = vunpack.c.l.b16 %v3614
    %v3632 = vpack.c.b16 %v3621, %v3621
    %v3633 = vpack.c.b16 %v3622, %v3622
    %v3634 = vpack.c.b16 %v3623, %v3623
    %v3635 = vpack.c.b16 %v3624, %v3624
    %v3636 = vpack.c.b16 %v3625, %v3625
    %v3637 = vpack.c.b16 %v3626, %v3626
    %v3638 = vpack.c.b16 %v3627, %v3627
    %v3639 = vpack.c.b16 %v3628, %v3628
    %v3640 = vpack.c.b16 %v3629, %v3629
    %v3641 = vpack.c.b16 %v3630, %v3630
    %v3642 = vpack.c.b16 %v3631, %v3631
    %3643 = vrot.lane.b32.xlu0 %v3632, 127
    %v3644 = vpop.permute.xlu0 %3643
    %3645 = vrot.lane.b32.xlu0 %v3633, 127
    %v3646 = vpop.permute.xlu0 %3645
    %3647 = vrot.lane.b32.xlu0 %v3634, 127
    %v3648 = vpop.permute.xlu0 %3647
    %3649 = vrot.lane.b32.xlu0 %v3635, 127
    %v3650 = vpop.permute.xlu0 %3649
    %3651 = vrot.lane.b32.xlu0 %v3636, 127
    %v3652 = vpop.permute.xlu0 %3651
    %3653 = vrot.lane.b32.xlu0 %v3637, 127
    %v3654 = vpop.permute.xlu0 %3653
    %3655 = vrot.lane.b32.xlu0 %v3638, 127
    %v3656 = vpop.permute.xlu0 %3655
    %3657 = vrot.lane.b32.xlu0 %v3639, 127
    %v3658 = vpop.permute.xlu0 %3657
    %3659 = vrot.lane.b32.xlu0 %v3640, 127
    %v3660 = vpop.permute.xlu0 %3659
    %3661 = vrot.lane.b32.xlu0 %v3641, 127
    %v3662 = vpop.permute.xlu0 %3661
    %3663 = vrot.lane.b32.xlu0 %v3642, 127
    %v3664 = vpop.permute.xlu0 %3663
    %v3665 = vsel %vm1511, %v3644, %v3646
    %v3666 = vsel %vm1511, %v3646, %v3648
    %v3667 = vsel %vm1511, %v3648, %v3650
    %v3668 = vsel %vm1511, %v3650, %v3652
    %v3669 = vsel %vm1511, %v3652, %v3654
    %v3670 = vsel %vm1511, %v3654, %v3656
    %v3671 = vsel %vm1511, %v3656, %v3658
    %v3672 = vsel %vm1511, %v3658, %v3660
    %v3673 = vsel %vm1511, %v3660, %v3662
    %v3674 = vsel %vm1511, %v3662, %v3664
    %v3676 = vsel %vm2637, %v2567, 0
    %v3679 = vsel %vm218, %v3665, 0
    %v3682 = vsel %vm218, %v3666, 0
    %v3685 = vsel %vm218, %v3667, 0
    %v3688 = vsel %vm218, %v3668, 0
    %v3691 = vsel %vm218, %v3669, 0
    %v3694 = vsel %vm218, %v3670, 0
    %v3697 = vsel %vm218, %v3671, 0
    %v3700 = vsel %vm218, %v3672, 0
    %v3703 = vsel %vm218, %v3673, 0
    %v3706 = vsel %vm218, %v3674, 0
    %3708 = vmatpush.bf16.msra.mxu0 0
    %3709 = vmatpush.bf16.msra.mxu0 0
    %3710 = vmatpush.bf16.msra.mxu0 0
    %3711 = vmatpush.bf16.msra.mxu0 0
    %3712 = vmatpush.bf16.msra.mxu0 0
    %3713 = vmatpush.bf16.msra.mxu0 0
    %3714 = vmatpush.bf16.msra.mxu0 0
    %3715 = vmatpush.bf16.msra.mxu0 %v3679
    %3716 = vmatmul.bf16.gmra.mxu0 %v3676
    %v3717 = vpop.f32.mrf.mxu0
    %v3718 = vadd.f32 0.0, %v3717
    %v3719 = vpop.f32.mrf.mxu0
    %3720 = vdwg.mxu0
    %3721 = vmatpush.bf16.msra.mxu0 0
    %3722 = vmatpush.bf16.msra.mxu0 0
    %3723 = vmatpush.bf16.msra.mxu0 0
    %3724 = vmatpush.bf16.msra.mxu0 0
    %3725 = vmatpush.bf16.msra.mxu0 0
    %3726 = vmatpush.bf16.msra.mxu0 0
    %3727 = vmatpush.bf16.msra.mxu0 0
    %3728 = vmatpush.bf16.msra.mxu0 %v3682
    %3729 = vmatmul.bf16.gmra.mxu0 %v3676
    %v3730 = vpop.f32.mrf.mxu0
    %v3731 = vadd.f32 0.0, %v3730
    %v3732 = vpop.f32.mrf.mxu0
    %3733 = vdwg.mxu0
    %3734 = vmatpush.bf16.msra.mxu0 0
    %3735 = vmatpush.bf16.msra.mxu0 0
    %3736 = vmatpush.bf16.msra.mxu0 0
    %3737 = vmatpush.bf16.msra.mxu0 0
    %3738 = vmatpush.bf16.msra.mxu0 0
    %3739 = vmatpush.bf16.msra.mxu0 0
    %3740 = vmatpush.bf16.msra.mxu0 0
    %3741 = vmatpush.bf16.msra.mxu0 %v3685
    %3742 = vmatmul.bf16.gmra.mxu0 %v3676
    %v3743 = vpop.f32.mrf.mxu0
    %v3744 = vadd.f32 0.0, %v3743
    %v3745 = vpop.f32.mrf.mxu0
    %3746 = vdwg.mxu0
    %3747 = vmatpush.bf16.msra.mxu0 0
    %3748 = vmatpush.bf16.msra.mxu0 0
    %3749 = vmatpush.bf16.msra.mxu0 0
    %3750 = vmatpush.bf16.msra.mxu0 0
    %3751 = vmatpush.bf16.msra.mxu0 0
    %3752 = vmatpush.bf16.msra.mxu0 0
    %3753 = vmatpush.bf16.msra.mxu0 0
    %3754 = vmatpush.bf16.msra.mxu0 %v3688
    %3755 = vmatmul.bf16.gmra.mxu0 %v3676
    %v3756 = vpop.f32.mrf.mxu0
    %v3757 = vadd.f32 0.0, %v3756
    %v3758 = vpop.f32.mrf.mxu0
    %3759 = vdwg.mxu0
    %3760 = vmatpush.bf16.msra.mxu0 0
    %3761 = vmatpush.bf16.msra.mxu0 0
    %3762 = vmatpush.bf16.msra.mxu0 0
    %3763 = vmatpush.bf16.msra.mxu0 0
    %3764 = vmatpush.bf16.msra.mxu0 0
    %3765 = vmatpush.bf16.msra.mxu0 0
    %3766 = vmatpush.bf16.msra.mxu0 0
    %3767 = vmatpush.bf16.msra.mxu0 %v3691
    %3768 = vmatmul.bf16.gmra.mxu0 %v3676
    %v3769 = vpop.f32.mrf.mxu0
    %v3770 = vadd.f32 0.0, %v3769
    %v3771 = vpop.f32.mrf.mxu0
    %3772 = vdwg.mxu0
    %3773 = vmatpush.bf16.msra.mxu0 0
    %3774 = vmatpush.bf16.msra.mxu0 0
    %3775 = vmatpush.bf16.msra.mxu0 0
    %3776 = vmatpush.bf16.msra.mxu0 0
    %3777 = vmatpush.bf16.msra.mxu0 0
    %3778 = vmatpush.bf16.msra.mxu0 0
    %3779 = vmatpush.bf16.msra.mxu0 0
    %3780 = vmatpush.bf16.msra.mxu0 %v3694
    %3781 = vmatmul.bf16.gmra.mxu0 %v3676
    %v3782 = vpop.f32.mrf.mxu0
    %v3783 = vadd.f32 0.0, %v3782
    %v3784 = vpop.f32.mrf.mxu0
    %3785 = vdwg.mxu0
    %3786 = vmatpush.bf16.msra.mxu0 0
    %3787 = vmatpush.bf16.msra.mxu0 0
    %3788 = vmatpush.bf16.msra.mxu0 0
    %3789 = vmatpush.bf16.msra.mxu0 0
    %3790 = vmatpush.bf16.msra.mxu0 0
    %3791 = vmatpush.bf16.msra.mxu0 0
    %3792 = vmatpush.bf16.msra.mxu0 0
    %3793 = vmatpush.bf16.msra.mxu0 %v3697
    %3794 = vmatmul.bf16.gmra.mxu0 %v3676
    %v3795 = vpop.f32.mrf.mxu0
    %v3796 = vadd.f32 0.0, %v3795
    %v3797 = vpop.f32.mrf.mxu0
    %3798 = vdwg.mxu0
    %3799 = vmatpush.bf16.msra.mxu0 0
    %3800 = vmatpush.bf16.msra.mxu0 0
    %3801 = vmatpush.bf16.msra.mxu0 0
    %3802 = vmatpush.bf16.msra.mxu0 0
    %3803 = vmatpush.bf16.msra.mxu0 0
    %3804 = vmatpush.bf16.msra.mxu0 0
    %3805 = vmatpush.bf16.msra.mxu0 0
    %3806 = vmatpush.bf16.msra.mxu0 %v3700
    %3807 = vmatmul.bf16.gmra.mxu0 %v3676
    %v3808 = vpop.f32.mrf.mxu0
    %v3809 = vadd.f32 0.0, %v3808
    %v3810 = vpop.f32.mrf.mxu0
    %3811 = vdwg.mxu0
    %3812 = vmatpush.bf16.msra.mxu0 0
    %3813 = vmatpush.bf16.msra.mxu0 0
    %3814 = vmatpush.bf16.msra.mxu0 0
    %3815 = vmatpush.bf16.msra.mxu0 0
    %3816 = vmatpush.bf16.msra.mxu0 0
    %3817 = vmatpush.bf16.msra.mxu0 0
    %3818 = vmatpush.bf16.msra.mxu0 0
    %3819 = vmatpush.bf16.msra.mxu0 %v3703
    %3820 = vmatmul.bf16.gmra.mxu0 %v3676
    %v3821 = vpop.f32.mrf.mxu0
    %v3822 = vadd.f32 0.0, %v3821
    %v3823 = vpop.f32.mrf.mxu0
    %3824 = vdwg.mxu0
    %3825 = vmatpush.bf16.msra.mxu0 0
    %3826 = vmatpush.bf16.msra.mxu0 0
    %3827 = vmatpush.bf16.msra.mxu0 0
    %3828 = vmatpush.bf16.msra.mxu0 0
    %3829 = vmatpush.bf16.msra.mxu0 0
    %3830 = vmatpush.bf16.msra.mxu0 0
    %3831 = vmatpush.bf16.msra.mxu0 0
    %3832 = vmatpush.bf16.msra.mxu0 %v3706
    %3833 = vmatmul.bf16.gmra.mxu0 %v3676
    %v3834 = vpop.f32.mrf.mxu0
    %v3835 = vadd.f32 0.0, %v3834
    %v3836 = vpop.f32.mrf.mxu0
    %3837 = vdwg.mxu0
    %v3838 = vadd.f32 %v3599, %v3718
    %v3839 = vadd.f32 %v3600, %v3731
    %v3840 = vadd.f32 %v3601, %v3744
    %v3841 = vadd.f32 %v3602, %v3757
    %v3842 = vadd.f32 %v3603, %v3770
    %v3843 = vadd.f32 %v3604, %v3783
    %v3844 = vadd.f32 %v3605, %v3796
    %v3845 = vadd.f32 %v3606, %v3809
    %v3846 = vadd.f32 %v3607, %v3822
    %v3847 = vadd.f32 %v3608, %v3835
    %3848 = vrot.lane.b32.xlu0 %v3632, 111
    %v3849 = vpop.permute.xlu0 %3848
    %3850 = vrot.lane.b32.xlu0 %v3633, 111
    %v3851 = vpop.permute.xlu0 %3850
    %3852 = vrot.lane.b32.xlu0 %v3634, 111
    %v3853 = vpop.permute.xlu0 %3852
    %3854 = vrot.lane.b32.xlu0 %v3635, 111
    %v3855 = vpop.permute.xlu0 %3854
    %3856 = vrot.lane.b32.xlu0 %v3636, 111
    %v3857 = vpop.permute.xlu0 %3856
    %3858 = vrot.lane.b32.xlu0 %v3637, 111
    %v3859 = vpop.permute.xlu0 %3858
    %3860 = vrot.lane.b32.xlu0 %v3638, 111
    %v3861 = vpop.permute.xlu0 %3860
    %3862 = vrot.lane.b32.xlu0 %v3639, 111
    %v3863 = vpop.permute.xlu0 %3862
    %3864 = vrot.lane.b32.xlu0 %v3640, 111
    %v3865 = vpop.permute.xlu0 %3864
    %3866 = vrot.lane.b32.xlu0 %v3641, 111
    %v3867 = vpop.permute.xlu0 %3866
    %3868 = vrot.lane.b32.xlu0 %v3642, 111
    %v3869 = vpop.permute.xlu0 %3868
    %v3870 = vsel %vm1759, %v3849, %v3851
    %v3871 = vsel %vm1759, %v3851, %v3853
    %v3872 = vsel %vm1759, %v3853, %v3855
    %v3873 = vsel %vm1759, %v3855, %v3857
    %v3874 = vsel %vm1759, %v3857, %v3859
    %v3875 = vsel %vm1759, %v3859, %v3861
    %v3876 = vsel %vm1759, %v3861, %v3863
    %v3877 = vsel %vm1759, %v3863, %v3865
    %v3878 = vsel %vm1759, %v3865, %v3867
    %v3879 = vsel %vm1759, %v3867, %v3869
    %v3881 = vsel %vm2637, %v2568, 0
    %v3884 = vsel %vm218, %v3870, 0
    %v3887 = vsel %vm218, %v3871, 0
    %v3890 = vsel %vm218, %v3872, 0
    %v3893 = vsel %vm218, %v3873, 0
    %v3896 = vsel %vm218, %v3874, 0
    %v3899 = vsel %vm218, %v3875, 0
    %v3902 = vsel %vm218, %v3876, 0
    %v3905 = vsel %vm218, %v3877, 0
    %v3908 = vsel %vm218, %v3878, 0
    %v3911 = vsel %vm218, %v3879, 0
    %3913 = vmatpush.bf16.msra.mxu0 0
    %3914 = vmatpush.bf16.msra.mxu0 0
    %3915 = vmatpush.bf16.msra.mxu0 0
    %3916 = vmatpush.bf16.msra.mxu0 0
    %3917 = vmatpush.bf16.msra.mxu0 0
    %3918 = vmatpush.bf16.msra.mxu0 0
    %3919 = vmatpush.bf16.msra.mxu0 0
    %3920 = vmatpush.bf16.msra.mxu0 %v3884
    %3921 = vmatmul.bf16.gmra.mxu0 %v3881
    %v3922 = vpop.f32.mrf.mxu0
    %v3923 = vadd.f32 0.0, %v3922
    %v3924 = vpop.f32.mrf.mxu0
    %3925 = vdwg.mxu0
    %3926 = vmatpush.bf16.msra.mxu0 0
    %3927 = vmatpush.bf16.msra.mxu0 0
    %3928 = vmatpush.bf16.msra.mxu0 0
    %3929 = vmatpush.bf16.msra.mxu0 0
    %3930 = vmatpush.bf16.msra.mxu0 0
    %3931 = vmatpush.bf16.msra.mxu0 0
    %3932 = vmatpush.bf16.msra.mxu0 0
    %3933 = vmatpush.bf16.msra.mxu0 %v3887
    %3934 = vmatmul.bf16.gmra.mxu0 %v3881
    %v3935 = vpop.f32.mrf.mxu0
    %v3936 = vadd.f32 0.0, %v3935
    %v3937 = vpop.f32.mrf.mxu0
    %3938 = vdwg.mxu0
    %3939 = vmatpush.bf16.msra.mxu0 0
    %3940 = vmatpush.bf16.msra.mxu0 0
    %3941 = vmatpush.bf16.msra.mxu0 0
    %3942 = vmatpush.bf16.msra.mxu0 0
    %3943 = vmatpush.bf16.msra.mxu0 0
    %3944 = vmatpush.bf16.msra.mxu0 0
    %3945 = vmatpush.bf16.msra.mxu0 0
    %3946 = vmatpush.bf16.msra.mxu0 %v3890
    %3947 = vmatmul.bf16.gmra.mxu0 %v3881
    %v3948 = vpop.f32.mrf.mxu0
    %v3949 = vadd.f32 0.0, %v3948
    %v3950 = vpop.f32.mrf.mxu0
    %3951 = vdwg.mxu0
    %3952 = vmatpush.bf16.msra.mxu0 0
    %3953 = vmatpush.bf16.msra.mxu0 0
    %3954 = vmatpush.bf16.msra.mxu0 0
    %3955 = vmatpush.bf16.msra.mxu0 0
    %3956 = vmatpush.bf16.msra.mxu0 0
    %3957 = vmatpush.bf16.msra.mxu0 0
    %3958 = vmatpush.bf16.msra.mxu0 0
    %3959 = vmatpush.bf16.msra.mxu0 %v3893
    %3960 = vmatmul.bf16.gmra.mxu0 %v3881
    %v3961 = vpop.f32.mrf.mxu0
    %v3962 = vadd.f32 0.0, %v3961
    %v3963 = vpop.f32.mrf.mxu0
    %3964 = vdwg.mxu0
    %3965 = vmatpush.bf16.msra.mxu0 0
    %3966 = vmatpush.bf16.msra.mxu0 0
    %3967 = vmatpush.bf16.msra.mxu0 0
    %3968 = vmatpush.bf16.msra.mxu0 0
    %3969 = vmatpush.bf16.msra.mxu0 0
    %3970 = vmatpush.bf16.msra.mxu0 0
    %3971 = vmatpush.bf16.msra.mxu0 0
    %3972 = vmatpush.bf16.msra.mxu0 %v3896
    %3973 = vmatmul.bf16.gmra.mxu0 %v3881
    %v3974 = vpop.f32.mrf.mxu0
    %v3975 = vadd.f32 0.0, %v3974
    %v3976 = vpop.f32.mrf.mxu0
    %3977 = vdwg.mxu0
    %3978 = vmatpush.bf16.msra.mxu0 0
    %3979 = vmatpush.bf16.msra.mxu0 0
    %3980 = vmatpush.bf16.msra.mxu0 0
    %3981 = vmatpush.bf16.msra.mxu0 0
    %3982 = vmatpush.bf16.msra.mxu0 0
    %3983 = vmatpush.bf16.msra.mxu0 0
    %3984 = vmatpush.bf16.msra.mxu0 0
    %3985 = vmatpush.bf16.msra.mxu0 %v3899
    %3986 = vmatmul.bf16.gmra.mxu0 %v3881
    %v3987 = vpop.f32.mrf.mxu0
    %v3988 = vadd.f32 0.0, %v3987
    %v3989 = vpop.f32.mrf.mxu0
    %3990 = vdwg.mxu0
    %3991 = vmatpush.bf16.msra.mxu0 0
    %3992 = vmatpush.bf16.msra.mxu0 0
    %3993 = vmatpush.bf16.msra.mxu0 0
    %3994 = vmatpush.bf16.msra.mxu0 0
    %3995 = vmatpush.bf16.msra.mxu0 0
    %3996 = vmatpush.bf16.msra.mxu0 0
    %3997 = vmatpush.bf16.msra.mxu0 0
    %3998 = vmatpush.bf16.msra.mxu0 %v3902
    %3999 = vmatmul.bf16.gmra.mxu0 %v3881
    %v4000 = vpop.f32.mrf.mxu0
    %v4001 = vadd.f32 0.0, %v4000
    %v4002 = vpop.f32.mrf.mxu0
    %4003 = vdwg.mxu0
    %4004 = vmatpush.bf16.msra.mxu0 0
    %4005 = vmatpush.bf16.msra.mxu0 0
    %4006 = vmatpush.bf16.msra.mxu0 0
    %4007 = vmatpush.bf16.msra.mxu0 0
    %4008 = vmatpush.bf16.msra.mxu0 0
    %4009 = vmatpush.bf16.msra.mxu0 0
    %4010 = vmatpush.bf16.msra.mxu0 0
    %4011 = vmatpush.bf16.msra.mxu0 %v3905
    %4012 = vmatmul.bf16.gmra.mxu0 %v3881
    %v4013 = vpop.f32.mrf.mxu0
    %v4014 = vadd.f32 0.0, %v4013
    %v4015 = vpop.f32.mrf.mxu0
    %4016 = vdwg.mxu0
    %4017 = vmatpush.bf16.msra.mxu0 0
    %4018 = vmatpush.bf16.msra.mxu0 0
    %4019 = vmatpush.bf16.msra.mxu0 0
    %4020 = vmatpush.bf16.msra.mxu0 0
    %4021 = vmatpush.bf16.msra.mxu0 0
    %4022 = vmatpush.bf16.msra.mxu0 0
    %4023 = vmatpush.bf16.msra.mxu0 0
    %4024 = vmatpush.bf16.msra.mxu0 %v3908
    %4025 = vmatmul.bf16.gmra.mxu0 %v3881
    %v4026 = vpop.f32.mrf.mxu0
    %v4027 = vadd.f32 0.0, %v4026
    %v4028 = vpop.f32.mrf.mxu0
    %4029 = vdwg.mxu0
    %4030 = vmatpush.bf16.msra.mxu0 0
    %4031 = vmatpush.bf16.msra.mxu0 0
    %4032 = vmatpush.bf16.msra.mxu0 0
    %4033 = vmatpush.bf16.msra.mxu0 0
    %4034 = vmatpush.bf16.msra.mxu0 0
    %4035 = vmatpush.bf16.msra.mxu0 0
    %4036 = vmatpush.bf16.msra.mxu0 0
    %4037 = vmatpush.bf16.msra.mxu0 %v3911
    %4038 = vmatmul.bf16.gmra.mxu0 %v3881
    %v4039 = vpop.f32.mrf.mxu0
    %v4040 = vadd.f32 0.0, %v4039
    %v4041 = vpop.f32.mrf.mxu0
    %4042 = vdwg.mxu0
    %v4043 = vadd.f32 %v3838, %v3923
    %v4044 = vadd.f32 %v3839, %v3936
    %v4045 = vadd.f32 %v3840, %v3949
    %v4046 = vadd.f32 %v3841, %v3962
    %v4047 = vadd.f32 %v3842, %v3975
    %v4048 = vadd.f32 %v3843, %v3988
    %v4049 = vadd.f32 %v3844, %v4001
    %v4050 = vadd.f32 %v3845, %v4014
    %v4051 = vadd.f32 %v3846, %v4027
    %v4052 = vadd.f32 %v3847, %v4040
    %4053 = vrot.lane.b32.xlu0 %v3632, 110
    %v4054 = vpop.permute.xlu0 %4053
    %4055 = vrot.lane.b32.xlu0 %v3633, 110
    %v4056 = vpop.permute.xlu0 %4055
    %4057 = vrot.lane.b32.xlu0 %v3634, 110
    %v4058 = vpop.permute.xlu0 %4057
    %4059 = vrot.lane.b32.xlu0 %v3635, 110
    %v4060 = vpop.permute.xlu0 %4059
    %4061 = vrot.lane.b32.xlu0 %v3636, 110
    %v4062 = vpop.permute.xlu0 %4061
    %4063 = vrot.lane.b32.xlu0 %v3637, 110
    %v4064 = vpop.permute.xlu0 %4063
    %4065 = vrot.lane.b32.xlu0 %v3638, 110
    %v4066 = vpop.permute.xlu0 %4065
    %4067 = vrot.lane.b32.xlu0 %v3639, 110
    %v4068 = vpop.permute.xlu0 %4067
    %4069 = vrot.lane.b32.xlu0 %v3640, 110
    %v4070 = vpop.permute.xlu0 %4069
    %4071 = vrot.lane.b32.xlu0 %v3641, 110
    %v4072 = vpop.permute.xlu0 %4071
    %4073 = vrot.lane.b32.xlu0 %v3642, 110
    %v4074 = vpop.permute.xlu0 %4073
    %v4075 = vsel %vm2007, %v4054, %v4056
    %v4076 = vsel %vm2007, %v4056, %v4058
    %v4077 = vsel %vm2007, %v4058, %v4060
    %v4078 = vsel %vm2007, %v4060, %v4062
    %v4079 = vsel %vm2007, %v4062, %v4064
    %v4080 = vsel %vm2007, %v4064, %v4066
    %v4081 = vsel %vm2007, %v4066, %v4068
    %v4082 = vsel %vm2007, %v4068, %v4070
    %v4083 = vsel %vm2007, %v4070, %v4072
    %v4084 = vsel %vm2007, %v4072, %v4074
    %v4086 = vsel %vm2637, %v2569, 0
    %v4089 = vsel %vm218, %v4075, 0
    %v4092 = vsel %vm218, %v4076, 0
    %v4095 = vsel %vm218, %v4077, 0
    %v4098 = vsel %vm218, %v4078, 0
    %v4101 = vsel %vm218, %v4079, 0
    %v4104 = vsel %vm218, %v4080, 0
    %v4107 = vsel %vm218, %v4081, 0
    %v4110 = vsel %vm218, %v4082, 0
    %v4113 = vsel %vm218, %v4083, 0
    %v4116 = vsel %vm218, %v4084, 0
    %4118 = vmatpush.bf16.msra.mxu0 0
    %4119 = vmatpush.bf16.msra.mxu0 0
    %4120 = vmatpush.bf16.msra.mxu0 0
    %4121 = vmatpush.bf16.msra.mxu0 0
    %4122 = vmatpush.bf16.msra.mxu0 0
    %4123 = vmatpush.bf16.msra.mxu0 0
    %4124 = vmatpush.bf16.msra.mxu0 0
    %4125 = vmatpush.bf16.msra.mxu0 %v4089
    %4126 = vmatmul.bf16.gmra.mxu0 %v4086
    %v4127 = vpop.f32.mrf.mxu0
    %v4128 = vadd.f32 0.0, %v4127
    %v4129 = vpop.f32.mrf.mxu0
    %4130 = vdwg.mxu0
    %4131 = vmatpush.bf16.msra.mxu0 0
    %4132 = vmatpush.bf16.msra.mxu0 0
    %4133 = vmatpush.bf16.msra.mxu0 0
    %4134 = vmatpush.bf16.msra.mxu0 0
    %4135 = vmatpush.bf16.msra.mxu0 0
    %4136 = vmatpush.bf16.msra.mxu0 0
    %4137 = vmatpush.bf16.msra.mxu0 0
    %4138 = vmatpush.bf16.msra.mxu0 %v4092
    %4139 = vmatmul.bf16.gmra.mxu0 %v4086
    %v4140 = vpop.f32.mrf.mxu0
    %v4141 = vadd.f32 0.0, %v4140
    %v4142 = vpop.f32.mrf.mxu0
    %4143 = vdwg.mxu0
    %4144 = vmatpush.bf16.msra.mxu0 0
    %4145 = vmatpush.bf16.msra.mxu0 0
    %4146 = vmatpush.bf16.msra.mxu0 0
    %4147 = vmatpush.bf16.msra.mxu0 0
    %4148 = vmatpush.bf16.msra.mxu0 0
    %4149 = vmatpush.bf16.msra.mxu0 0
    %4150 = vmatpush.bf16.msra.mxu0 0
    %4151 = vmatpush.bf16.msra.mxu0 %v4095
    %4152 = vmatmul.bf16.gmra.mxu0 %v4086
    %v4153 = vpop.f32.mrf.mxu0
    %v4154 = vadd.f32 0.0, %v4153
    %v4155 = vpop.f32.mrf.mxu0
    %4156 = vdwg.mxu0
    %4157 = vmatpush.bf16.msra.mxu0 0
    %4158 = vmatpush.bf16.msra.mxu0 0
    %4159 = vmatpush.bf16.msra.mxu0 0
    %4160 = vmatpush.bf16.msra.mxu0 0
    %4161 = vmatpush.bf16.msra.mxu0 0
    %4162 = vmatpush.bf16.msra.mxu0 0
    %4163 = vmatpush.bf16.msra.mxu0 0
    %4164 = vmatpush.bf16.msra.mxu0 %v4098
    %4165 = vmatmul.bf16.gmra.mxu0 %v4086
    %v4166 = vpop.f32.mrf.mxu0
    %v4167 = vadd.f32 0.0, %v4166
    %v4168 = vpop.f32.mrf.mxu0
    %4169 = vdwg.mxu0
    %4170 = vmatpush.bf16.msra.mxu0 0
    %4171 = vmatpush.bf16.msra.mxu0 0
    %4172 = vmatpush.bf16.msra.mxu0 0
    %4173 = vmatpush.bf16.msra.mxu0 0
    %4174 = vmatpush.bf16.msra.mxu0 0
    %4175 = vmatpush.bf16.msra.mxu0 0
    %4176 = vmatpush.bf16.msra.mxu0 0
    %4177 = vmatpush.bf16.msra.mxu0 %v4101
    %4178 = vmatmul.bf16.gmra.mxu0 %v4086
    %v4179 = vpop.f32.mrf.mxu0
    %v4180 = vadd.f32 0.0, %v4179
    %v4181 = vpop.f32.mrf.mxu0
    %4182 = vdwg.mxu0
    %4183 = vmatpush.bf16.msra.mxu0 0
    %4184 = vmatpush.bf16.msra.mxu0 0
    %4185 = vmatpush.bf16.msra.mxu0 0
    %4186 = vmatpush.bf16.msra.mxu0 0
    %4187 = vmatpush.bf16.msra.mxu0 0
    %4188 = vmatpush.bf16.msra.mxu0 0
    %4189 = vmatpush.bf16.msra.mxu0 0
    %4190 = vmatpush.bf16.msra.mxu0 %v4104
    %4191 = vmatmul.bf16.gmra.mxu0 %v4086
    %v4192 = vpop.f32.mrf.mxu0
    %v4193 = vadd.f32 0.0, %v4192
    %v4194 = vpop.f32.mrf.mxu0
    %4195 = vdwg.mxu0
    %4196 = vmatpush.bf16.msra.mxu0 0
    %4197 = vmatpush.bf16.msra.mxu0 0
    %4198 = vmatpush.bf16.msra.mxu0 0
    %4199 = vmatpush.bf16.msra.mxu0 0
    %4200 = vmatpush.bf16.msra.mxu0 0
    %4201 = vmatpush.bf16.msra.mxu0 0
    %4202 = vmatpush.bf16.msra.mxu0 0
    %4203 = vmatpush.bf16.msra.mxu0 %v4107
    %4204 = vmatmul.bf16.gmra.mxu0 %v4086
    %v4205 = vpop.f32.mrf.mxu0
    %v4206 = vadd.f32 0.0, %v4205
    %v4207 = vpop.f32.mrf.mxu0
    %4208 = vdwg.mxu0
    %4209 = vmatpush.bf16.msra.mxu0 0
    %4210 = vmatpush.bf16.msra.mxu0 0
    %4211 = vmatpush.bf16.msra.mxu0 0
    %4212 = vmatpush.bf16.msra.mxu0 0
    %4213 = vmatpush.bf16.msra.mxu0 0
    %4214 = vmatpush.bf16.msra.mxu0 0
    %4215 = vmatpush.bf16.msra.mxu0 0
    %4216 = vmatpush.bf16.msra.mxu0 %v4110
    %4217 = vmatmul.bf16.gmra.mxu0 %v4086
    %v4218 = vpop.f32.mrf.mxu0
    %v4219 = vadd.f32 0.0, %v4218
    %v4220 = vpop.f32.mrf.mxu0
    %4221 = vdwg.mxu0
    %4222 = vmatpush.bf16.msra.mxu0 0
    %4223 = vmatpush.bf16.msra.mxu0 0
    %4224 = vmatpush.bf16.msra.mxu0 0
    %4225 = vmatpush.bf16.msra.mxu0 0
    %4226 = vmatpush.bf16.msra.mxu0 0
    %4227 = vmatpush.bf16.msra.mxu0 0
    %4228 = vmatpush.bf16.msra.mxu0 0
    %4229 = vmatpush.bf16.msra.mxu0 %v4113
    %4230 = vmatmul.bf16.gmra.mxu0 %v4086
    %v4231 = vpop.f32.mrf.mxu0
    %v4232 = vadd.f32 0.0, %v4231
    %v4233 = vpop.f32.mrf.mxu0
    %4234 = vdwg.mxu0
    %4235 = vmatpush.bf16.msra.mxu0 0
    %4236 = vmatpush.bf16.msra.mxu0 0
    %4237 = vmatpush.bf16.msra.mxu0 0
    %4238 = vmatpush.bf16.msra.mxu0 0
    %4239 = vmatpush.bf16.msra.mxu0 0
    %4240 = vmatpush.bf16.msra.mxu0 0
    %4241 = vmatpush.bf16.msra.mxu0 0
    %4242 = vmatpush.bf16.msra.mxu0 %v4116
    %4243 = vmatmul.bf16.gmra.mxu0 %v4086
    %v4244 = vpop.f32.mrf.mxu0
    %v4245 = vadd.f32 0.0, %v4244
    %v4246 = vpop.f32.mrf.mxu0
    %4247 = vdwg.mxu0
    %v4248 = vadd.f32 %v4043, %v4128
    %v4249 = vadd.f32 %v4044, %v4141
    %v4250 = vadd.f32 %v4045, %v4154
    %v4251 = vadd.f32 %v4046, %v4167
    %v4252 = vadd.f32 %v4047, %v4180
    %v4253 = vadd.f32 %v4048, %v4193
    %v4254 = vadd.f32 %v4049, %v4206
    %v4255 = vadd.f32 %v4050, %v4219
    %v4256 = vadd.f32 %v4051, %v4232
    %v4257 = vadd.f32 %v4052, %v4245
    %4258 = vrot.lane.b32.xlu0 %v3632, 109
    %v4259 = vpop.permute.xlu0 %4258
    %4260 = vrot.lane.b32.xlu0 %v3633, 109
    %v4261 = vpop.permute.xlu0 %4260
    %4262 = vrot.lane.b32.xlu0 %v3634, 109
    %v4263 = vpop.permute.xlu0 %4262
    %4264 = vrot.lane.b32.xlu0 %v3635, 109
    %v4265 = vpop.permute.xlu0 %4264
    %4266 = vrot.lane.b32.xlu0 %v3636, 109
    %v4267 = vpop.permute.xlu0 %4266
    %4268 = vrot.lane.b32.xlu0 %v3637, 109
    %v4269 = vpop.permute.xlu0 %4268
    %4270 = vrot.lane.b32.xlu0 %v3638, 109
    %v4271 = vpop.permute.xlu0 %4270
    %4272 = vrot.lane.b32.xlu0 %v3639, 109
    %v4273 = vpop.permute.xlu0 %4272
    %4274 = vrot.lane.b32.xlu0 %v3640, 109
    %v4275 = vpop.permute.xlu0 %4274
    %4276 = vrot.lane.b32.xlu0 %v3641, 109
    %v4277 = vpop.permute.xlu0 %4276
    %4278 = vrot.lane.b32.xlu0 %v3642, 109
    %v4279 = vpop.permute.xlu0 %4278
    %v4280 = vsel %vm2255, %v4259, %v4261
    %v4281 = vsel %vm2255, %v4261, %v4263
    %v4282 = vsel %vm2255, %v4263, %v4265
    %v4283 = vsel %vm2255, %v4265, %v4267
    %v4284 = vsel %vm2255, %v4267, %v4269
    %v4285 = vsel %vm2255, %v4269, %v4271
    %v4286 = vsel %vm2255, %v4271, %v4273
    %v4287 = vsel %vm2255, %v4273, %v4275
    %v4288 = vsel %vm2255, %v4275, %v4277
    %v4289 = vsel %vm2255, %v4277, %v4279
    %v4291 = vsel %vm2637, %v2570, 0
    %v4294 = vsel %vm218, %v4280, 0
    %v4297 = vsel %vm218, %v4281, 0
    %v4300 = vsel %vm218, %v4282, 0
    %v4303 = vsel %vm218, %v4283, 0
    %v4306 = vsel %vm218, %v4284, 0
    %v4309 = vsel %vm218, %v4285, 0
    %v4312 = vsel %vm218, %v4286, 0
    %v4315 = vsel %vm218, %v4287, 0
    %v4318 = vsel %vm218, %v4288, 0
    %v4321 = vsel %vm218, %v4289, 0
    %4323 = vmatpush.bf16.msra.mxu0 0
    %4324 = vmatpush.bf16.msra.mxu0 0
    %4325 = vmatpush.bf16.msra.mxu0 0
    %4326 = vmatpush.bf16.msra.mxu0 0
    %4327 = vmatpush.bf16.msra.mxu0 0
    %4328 = vmatpush.bf16.msra.mxu0 0
    %4329 = vmatpush.bf16.msra.mxu0 0
    %4330 = vmatpush.bf16.msra.mxu0 %v4294
    %4331 = vmatmul.bf16.gmra.mxu0 %v4291
    %v4332 = vpop.f32.mrf.mxu0
    %v4333 = vadd.f32 0.0, %v4332
    %v4334 = vpop.f32.mrf.mxu0
    %4335 = vdwg.mxu0
    %4336 = vmatpush.bf16.msra.mxu0 0
    %4337 = vmatpush.bf16.msra.mxu0 0
    %4338 = vmatpush.bf16.msra.mxu0 0
    %4339 = vmatpush.bf16.msra.mxu0 0
    %4340 = vmatpush.bf16.msra.mxu0 0
    %4341 = vmatpush.bf16.msra.mxu0 0
    %4342 = vmatpush.bf16.msra.mxu0 0
    %4343 = vmatpush.bf16.msra.mxu0 %v4297
    %4344 = vmatmul.bf16.gmra.mxu0 %v4291
    %v4345 = vpop.f32.mrf.mxu0
    %v4346 = vadd.f32 0.0, %v4345
    %v4347 = vpop.f32.mrf.mxu0
    %4348 = vdwg.mxu0
    %4349 = vmatpush.bf16.msra.mxu0 0
    %4350 = vmatpush.bf16.msra.mxu0 0
    %4351 = vmatpush.bf16.msra.mxu0 0
    %4352 = vmatpush.bf16.msra.mxu0 0
    %4353 = vmatpush.bf16.msra.mxu0 0
    %4354 = vmatpush.bf16.msra.mxu0 0
    %4355 = vmatpush.bf16.msra.mxu0 0
    %4356 = vmatpush.bf16.msra.mxu0 %v4300
    %4357 = vmatmul.bf16.gmra.mxu0 %v4291
    %v4358 = vpop.f32.mrf.mxu0
    %v4359 = vadd.f32 0.0, %v4358
    %v4360 = vpop.f32.mrf.mxu0
    %4361 = vdwg.mxu0
    %4362 = vmatpush.bf16.msra.mxu0 0
    %4363 = vmatpush.bf16.msra.mxu0 0
    %4364 = vmatpush.bf16.msra.mxu0 0
    %4365 = vmatpush.bf16.msra.mxu0 0
    %4366 = vmatpush.bf16.msra.mxu0 0
    %4367 = vmatpush.bf16.msra.mxu0 0
    %4368 = vmatpush.bf16.msra.mxu0 0
    %4369 = vmatpush.bf16.msra.mxu0 %v4303
    %4370 = vmatmul.bf16.gmra.mxu0 %v4291
    %v4371 = vpop.f32.mrf.mxu0
    %v4372 = vadd.f32 0.0, %v4371
    %v4373 = vpop.f32.mrf.mxu0
    %4374 = vdwg.mxu0
    %4375 = vmatpush.bf16.msra.mxu0 0
    %4376 = vmatpush.bf16.msra.mxu0 0
    %4377 = vmatpush.bf16.msra.mxu0 0
    %4378 = vmatpush.bf16.msra.mxu0 0
    %4379 = vmatpush.bf16.msra.mxu0 0
    %4380 = vmatpush.bf16.msra.mxu0 0
    %4381 = vmatpush.bf16.msra.mxu0 0
    %4382 = vmatpush.bf16.msra.mxu0 %v4306
    %4383 = vmatmul.bf16.gmra.mxu0 %v4291
    %v4384 = vpop.f32.mrf.mxu0
    %v4385 = vadd.f32 0.0, %v4384
    %v4386 = vpop.f32.mrf.mxu0
    %4387 = vdwg.mxu0
    %4388 = vmatpush.bf16.msra.mxu0 0
    %4389 = vmatpush.bf16.msra.mxu0 0
    %4390 = vmatpush.bf16.msra.mxu0 0
    %4391 = vmatpush.bf16.msra.mxu0 0
    %4392 = vmatpush.bf16.msra.mxu0 0
    %4393 = vmatpush.bf16.msra.mxu0 0
    %4394 = vmatpush.bf16.msra.mxu0 0
    %4395 = vmatpush.bf16.msra.mxu0 %v4309
    %4396 = vmatmul.bf16.gmra.mxu0 %v4291
    %v4397 = vpop.f32.mrf.mxu0
    %v4398 = vadd.f32 0.0, %v4397
    %v4399 = vpop.f32.mrf.mxu0
    %4400 = vdwg.mxu0
    %4401 = vmatpush.bf16.msra.mxu0 0
    %4402 = vmatpush.bf16.msra.mxu0 0
    %4403 = vmatpush.bf16.msra.mxu0 0
    %4404 = vmatpush.bf16.msra.mxu0 0
    %4405 = vmatpush.bf16.msra.mxu0 0
    %4406 = vmatpush.bf16.msra.mxu0 0
    %4407 = vmatpush.bf16.msra.mxu0 0
    %4408 = vmatpush.bf16.msra.mxu0 %v4312
    %4409 = vmatmul.bf16.gmra.mxu0 %v4291
    %v4410 = vpop.f32.mrf.mxu0
    %v4411 = vadd.f32 0.0, %v4410
    %v4412 = vpop.f32.mrf.mxu0
    %4413 = vdwg.mxu0
    %4414 = vmatpush.bf16.msra.mxu0 0
    %4415 = vmatpush.bf16.msra.mxu0 0
    %4416 = vmatpush.bf16.msra.mxu0 0
    %4417 = vmatpush.bf16.msra.mxu0 0
    %4418 = vmatpush.bf16.msra.mxu0 0
    %4419 = vmatpush.bf16.msra.mxu0 0
    %4420 = vmatpush.bf16.msra.mxu0 0
    %4421 = vmatpush.bf16.msra.mxu0 %v4315
    %4422 = vmatmul.bf16.gmra.mxu0 %v4291
    %v4423 = vpop.f32.mrf.mxu0
    %v4424 = vadd.f32 0.0, %v4423
    %v4425 = vpop.f32.mrf.mxu0
    %4426 = vdwg.mxu0
    %4427 = vmatpush.bf16.msra.mxu0 0
    %4428 = vmatpush.bf16.msra.mxu0 0
    %4429 = vmatpush.bf16.msra.mxu0 0
    %4430 = vmatpush.bf16.msra.mxu0 0
    %4431 = vmatpush.bf16.msra.mxu0 0
    %4432 = vmatpush.bf16.msra.mxu0 0
    %4433 = vmatpush.bf16.msra.mxu0 0
    %4434 = vmatpush.bf16.msra.mxu0 %v4318
    %4435 = vmatmul.bf16.gmra.mxu0 %v4291
    %v4436 = vpop.f32.mrf.mxu0
    %v4437 = vadd.f32 0.0, %v4436
    %v4438 = vpop.f32.mrf.mxu0
    %4439 = vdwg.mxu0
    %4440 = vmatpush.bf16.msra.mxu0 0
    %4441 = vmatpush.bf16.msra.mxu0 0
    %4442 = vmatpush.bf16.msra.mxu0 0
    %4443 = vmatpush.bf16.msra.mxu0 0
    %4444 = vmatpush.bf16.msra.mxu0 0
    %4445 = vmatpush.bf16.msra.mxu0 0
    %4446 = vmatpush.bf16.msra.mxu0 0
    %4447 = vmatpush.bf16.msra.mxu0 %v4321
    %4448 = vmatmul.bf16.gmra.mxu0 %v4291
    %v4449 = vpop.f32.mrf.mxu0
    %v4450 = vadd.f32 0.0, %v4449
    %v4451 = vpop.f32.mrf.mxu0
    %4452 = vdwg.mxu0
    %v4453 = vadd.f32 %v4248, %v4333
    %v4454 = vadd.f32 %v4249, %v4346
    %v4455 = vadd.f32 %v4250, %v4359
    %v4456 = vadd.f32 %v4251, %v4372
    %v4457 = vadd.f32 %v4252, %v4385
    %v4458 = vadd.f32 %v4253, %v4398
    %v4459 = vadd.f32 %v4254, %v4411
    %v4460 = vadd.f32 %v4255, %v4424
    %v4461 = vadd.f32 %v4256, %v4437
    %v4462 = vadd.f32 %v4257, %v4450
    %s4463 = smul.u32 %s2554, 16
    %s4464 = scalar_lea.vmem %s6, %s4463
    %v4465 = vld [vmem:[%s4464] sm:$0xff]
    %v4466 = vld [vmem:[%s4464 + $0x8] sm:$0xff]
    %4468 = vset.pattern.permute.xlu0 0
    %4469 = vperm.xlu0 %4468, %v4465
    %v4470 = vpop.permute.xlu0 %4469
    %v4472 = vadd.f32 %v4453, %v4470
    %v4473 = vadd.f32 %v4454, %v4470
    %v4474 = vadd.f32 %v4455, %v4470
    %v4475 = vadd.f32 %v4456, %v4470
    %v4476 = vadd.f32 %v4457, %v4470
    %v4477 = vadd.f32 %v4458, %v4470
    %v4478 = vadd.f32 %v4459, %v4470
    %v4479 = vadd.f32 %v4460, %v4470
    %v4480 = vadd.f32 %v4461, %v4470
    %v4481 = vadd.f32 %v4462, %v4470
    %vm4482 = vcmp.ge.f32.partialorder %v4472, 0.0
    %vm4483 = vcmp.ge.f32.partialorder %v4473, 0.0
    %vm4484 = vcmp.ge.f32.partialorder %v4474, 0.0
    %vm4485 = vcmp.ge.f32.partialorder %v4475, 0.0
    %vm4486 = vcmp.ge.f32.partialorder %v4476, 0.0
    %vm4487 = vcmp.ge.f32.partialorder %v4477, 0.0
    %vm4488 = vcmp.ge.f32.partialorder %v4478, 0.0
    %vm4489 = vcmp.ge.f32.partialorder %v4479, 0.0
    %vm4490 = vcmp.ge.f32.partialorder %v4480, 0.0
    %vm4491 = vcmp.ge.f32.partialorder %v4481, 0.0
    %4493 = vset.pattern.permute.xlu0 0
    %4494 = vperm.xlu0 %4493, %v4466
    %v4495 = vpop.permute.xlu0 %4494
    %v4497 = vmul.f32 %v4472, %v4495
    %v4498 = vmul.f32 %v4473, %v4495
    %v4499 = vmul.f32 %v4474, %v4495
    %v4500 = vmul.f32 %v4475, %v4495
    %v4501 = vmul.f32 %v4476, %v4495
    %v4502 = vmul.f32 %v4477, %v4495
    %v4503 = vmul.f32 %v4478, %v4495
    %v4504 = vmul.f32 %v4479, %v4495
    %v4505 = vmul.f32 %v4480, %v4495
    %v4506 = vmul.f32 %v4481, %v4495
    %v4507 = vsel %vm4482, %v4472, %v4497
    %v4508 = vsel %vm4483, %v4473, %v4498
    %v4509 = vsel %vm4484, %v4474, %v4499
    %v4510 = vsel %vm4485, %v4475, %v4500
    %v4511 = vsel %vm4486, %v4476, %v4501
    %v4512 = vsel %vm4487, %v4477, %v4502
    %v4513 = vsel %vm4488, %v4478, %v4503
    %v4514 = vsel %vm4489, %v4479, %v4504
    %v4515 = vsel %vm4490, %v4480, %v4505
    %v4516 = vsel %vm4491, %v4481, %v4506
    %v4517 = vmul.f32 %v2513, %v4507
    %v4518 = vmul.f32 %v2514, %v4508
    %v4519 = vmul.f32 %v2515, %v4509
    %v4520 = vmul.f32 %v2516, %v4510
    %v4521 = vmul.f32 %v2517, %v4511
    %v4522 = vmul.f32 %v2518, %v4512
    %v4523 = vmul.f32 %v2519, %v4513
    %v4524 = vmul.f32 %v2520, %v4514
    %v4525 = vmul.f32 %v2521, %v4515
    %v4526 = vmul.f32 %v2522, %v4516
    %v4527 = vpack.c.bf16 %v4518, %v4517
    %v4528 = vpack.c.bf16 %v4520, %v4519
    %v4529 = vpack.c.bf16 %v4522, %v4521
    %v4530 = vpack.c.bf16 %v4524, %v4523
    %v4531 = vpack.c.bf16 %v4526, %v4525
    %4532 = vst [vmem:[#allocation3 + $0x4] sm:$0xff] %v4527
    %4533 = vst [vmem:[#allocation3 + $0xc] sm:$0xff] %v4528
    %4534 = vst [vmem:[#allocation3 + $0x14] sm:$0xff] %v4529
    %4535 = vst [vmem:[#allocation3 + $0x1c] sm:$0xff] %v4530
    %4536 = vst [vmem:[#allocation3 + $0x24] sm:$0xff] %v4531
    %s4537 = smul.addr %s2559, 4
    %s4538 = scalar_lea.vmem %s7, %s4537
    %v4539 = vld [vmem:[%s4538] sm:$0xf]
    %v4540 = vld [vmem:[%s4538 + $0x4] sm:$0xf]
    %v4541 = vld [vmem:[%s4538 + $0x8] sm:$0xf]
    %v4542 = vld [vmem:[%s4538 + $0xc] sm:$0xf]
    %v4543 = vld [vmem:[%s4538 + $0x10] sm:$0xf]
    %v4544 = vld [vmem:[%s4538 + $0x14] sm:$0xf]
    %v4545 = vld [vmem:[%s4538 + $0x18] sm:$0xf]
    %v4546 = vld [vmem:[%s4538 + $0x1c] sm:$0xf]
    %v4547 = vld [vmem:[%s4538 + $0x20] sm:$0xf]
    %v4548 = vld [vmem:[#allocation3] sm:$0xff]
    %v4549 = vld [vmem:[#allocation3 + $0x8] sm:$0xff]
    %v4550 = vld [vmem:[#allocation3 + $0x10] sm:$0xff]
    %v4551 = vld [vmem:[#allocation3 + $0x18] sm:$0xff]
    %v4552 = vld [vmem:[#allocation3 + $0x20] sm:$0xff]
    %v4553 = vld [vmem:[#allocation3 + $0x28] sm:$0xf]
    %v4560 = vunpack.c.l.b16 %v4548
    %v4561 = vunpack.c.h.b16 %v4548
    %v4562 = vunpack.c.l.b16 %v4549
    %v4563 = vunpack.c.h.b16 %v4549
    %v4564 = vunpack.c.l.b16 %v4550
    %v4565 = vunpack.c.h.b16 %v4550
    %v4566 = vunpack.c.l.b16 %v4551
    %v4567 = vunpack.c.h.b16 %v4551
    %v4568 = vunpack.c.l.b16 %v4552
    %v4569 = vunpack.c.h.b16 %v4552
    %v4570 = vunpack.c.l.b16 %v4553
    %v4571 = vpack.c.b16 %v4560, %v4560
    %v4572 = vpack.c.b16 %v4561, %v4561
    %v4573 = vpack.c.b16 %v4562, %v4562
    %v4574 = vpack.c.b16 %v4563, %v4563
    %v4575 = vpack.c.b16 %v4564, %v4564
    %v4576 = vpack.c.b16 %v4565, %v4565
    %v4577 = vpack.c.b16 %v4566, %v4566
    %v4578 = vpack.c.b16 %v4567, %v4567
    %v4579 = vpack.c.b16 %v4568, %v4568
    %v4580 = vpack.c.b16 %v4569, %v4569
    %v4581 = vpack.c.b16 %v4570, %v4570
    %4582 = vrot.lane.b32.xlu0 %v4571, 18
    %v4583 = vpop.permute.xlu0 %4582
    %4584 = vrot.lane.b32.xlu0 %v4572, 18
    %v4585 = vpop.permute.xlu0 %4584
    %4586 = vrot.lane.b32.xlu0 %v4573, 18
    %v4587 = vpop.permute.xlu0 %4586
    %4588 = vrot.lane.b32.xlu0 %v4574, 18
    %v4589 = vpop.permute.xlu0 %4588
    %4590 = vrot.lane.b32.xlu0 %v4575, 18
    %v4591 = vpop.permute.xlu0 %4590
    %4592 = vrot.lane.b32.xlu0 %v4576, 18
    %v4593 = vpop.permute.xlu0 %4592
    %4594 = vrot.lane.b32.xlu0 %v4577, 18
    %v4595 = vpop.permute.xlu0 %4594
    %4596 = vrot.lane.b32.xlu0 %v4578, 18
    %v4597 = vpop.permute.xlu0 %4596
    %4598 = vrot.lane.b32.xlu0 %v4579, 18
    %v4599 = vpop.permute.xlu0 %4598
    %4600 = vrot.lane.b32.xlu0 %v4580, 18
    %v4601 = vpop.permute.xlu0 %4600
    %4602 = vrot.lane.b32.xlu0 %v4581, 18
    %v4603 = vpop.permute.xlu0 %4602
    %v4604 = vsel %vm183, %v4583, %v4585
    %v4605 = vsel %vm183, %v4585, %v4587
    %v4606 = vsel %vm183, %v4587, %v4589
    %v4607 = vsel %vm183, %v4589, %v4591
    %v4608 = vsel %vm183, %v4591, %v4593
    %v4609 = vsel %vm183, %v4593, %v4595
    %v4610 = vsel %vm183, %v4595, %v4597
    %v4611 = vsel %vm183, %v4597, %v4599
    %v4612 = vsel %vm183, %v4599, %v4601
    %v4613 = vsel %vm183, %v4601, %v4603
    %v4615 = vsel %vm2637, %v4540, 0
    %v4618 = vsel %vm218, %v4604, 0
    %v4621 = vsel %vm218, %v4605, 0
    %v4624 = vsel %vm218, %v4606, 0
    %v4627 = vsel %vm218, %v4607, 0
    %v4630 = vsel %vm218, %v4608, 0
    %v4633 = vsel %vm218, %v4609, 0
    %v4636 = vsel %vm218, %v4610, 0
    %v4639 = vsel %vm218, %v4611, 0
    %v4642 = vsel %vm218, %v4612, 0
    %v4645 = vsel %vm218, %v4613, 0
    %4647 = vmatpush.bf16.msra.mxu0 0
    %4648 = vmatpush.bf16.msra.mxu0 0
    %4649 = vmatpush.bf16.msra.mxu0 0
    %4650 = vmatpush.bf16.msra.mxu0 0
    %4651 = vmatpush.bf16.msra.mxu0 0
    %4652 = vmatpush.bf16.msra.mxu0 0
    %4653 = vmatpush.bf16.msra.mxu0 0
    %4654 = vmatpush.bf16.msra.mxu0 %v4618
    %4655 = vmatmul.bf16.gmra.mxu0 %v4615
    %v4656 = vpop.f32.mrf.mxu0
    %v4657 = vadd.f32 0.0, %v4656
    %v4658 = vpop.f32.mrf.mxu0
    %4659 = vdwg.mxu0
    %4660 = vmatpush.bf16.msra.mxu0 0
    %4661 = vmatpush.bf16.msra.mxu0 0
    %4662 = vmatpush.bf16.msra.mxu0 0
    %4663 = vmatpush.bf16.msra.mxu0 0
    %4664 = vmatpush.bf16.msra.mxu0 0
    %4665 = vmatpush.bf16.msra.mxu0 0
    %4666 = vmatpush.bf16.msra.mxu0 0
    %4667 = vmatpush.bf16.msra.mxu0 %v4621
    %4668 = vmatmul.bf16.gmra.mxu0 %v4615
    %v4669 = vpop.f32.mrf.mxu0
    %v4670 = vadd.f32 0.0, %v4669
    %v4671 = vpop.f32.mrf.mxu0
    %4672 = vdwg.mxu0
    %4673 = vmatpush.bf16.msra.mxu0 0
    %4674 = vmatpush.bf16.msra.mxu0 0
    %4675 = vmatpush.bf16.msra.mxu0 0
    %4676 = vmatpush.bf16.msra.mxu0 0
    %4677 = vmatpush.bf16.msra.mxu0 0
    %4678 = vmatpush.bf16.msra.mxu0 0
    %4679 = vmatpush.bf16.msra.mxu0 0
    %4680 = vmatpush.bf16.msra.mxu0 %v4624
    %4681 = vmatmul.bf16.gmra.mxu0 %v4615
    %v4682 = vpop.f32.mrf.mxu0
    %v4683 = vadd.f32 0.0, %v4682
    %v4684 = vpop.f32.mrf.mxu0
    %4685 = vdwg.mxu0
    %4686 = vmatpush.bf16.msra.mxu0 0
    %4687 = vmatpush.bf16.msra.mxu0 0
    %4688 = vmatpush.bf16.msra.mxu0 0
    %4689 = vmatpush.bf16.msra.mxu0 0
    %4690 = vmatpush.bf16.msra.mxu0 0
    %4691 = vmatpush.bf16.msra.mxu0 0
    %4692 = vmatpush.bf16.msra.mxu0 0
    %4693 = vmatpush.bf16.msra.mxu0 %v4627
    %4694 = vmatmul.bf16.gmra.mxu0 %v4615
    %v4695 = vpop.f32.mrf.mxu0
    %v4696 = vadd.f32 0.0, %v4695
    %v4697 = vpop.f32.mrf.mxu0
    %4698 = vdwg.mxu0
    %4699 = vmatpush.bf16.msra.mxu0 0
    %4700 = vmatpush.bf16.msra.mxu0 0
    %4701 = vmatpush.bf16.msra.mxu0 0
    %4702 = vmatpush.bf16.msra.mxu0 0
    %4703 = vmatpush.bf16.msra.mxu0 0
    %4704 = vmatpush.bf16.msra.mxu0 0
    %4705 = vmatpush.bf16.msra.mxu0 0
    %4706 = vmatpush.bf16.msra.mxu0 %v4630
    %4707 = vmatmul.bf16.gmra.mxu0 %v4615
    %v4708 = vpop.f32.mrf.mxu0
    %v4709 = vadd.f32 0.0, %v4708
    %v4710 = vpop.f32.mrf.mxu0
    %4711 = vdwg.mxu0
    %4712 = vmatpush.bf16.msra.mxu0 0
    %4713 = vmatpush.bf16.msra.mxu0 0
    %4714 = vmatpush.bf16.msra.mxu0 0
    %4715 = vmatpush.bf16.msra.mxu0 0
    %4716 = vmatpush.bf16.msra.mxu0 0
    %4717 = vmatpush.bf16.msra.mxu0 0
    %4718 = vmatpush.bf16.msra.mxu0 0
    %4719 = vmatpush.bf16.msra.mxu0 %v4633
    %4720 = vmatmul.bf16.gmra.mxu0 %v4615
    %v4721 = vpop.f32.mrf.mxu0
    %v4722 = vadd.f32 0.0, %v4721
    %v4723 = vpop.f32.mrf.mxu0
    %4724 = vdwg.mxu0
    %4725 = vmatpush.bf16.msra.mxu0 0
    %4726 = vmatpush.bf16.msra.mxu0 0
    %4727 = vmatpush.bf16.msra.mxu0 0
    %4728 = vmatpush.bf16.msra.mxu0 0
    %4729 = vmatpush.bf16.msra.mxu0 0
    %4730 = vmatpush.bf16.msra.mxu0 0
    %4731 = vmatpush.bf16.msra.mxu0 0
    %4732 = vmatpush.bf16.msra.mxu0 %v4636
    %4733 = vmatmul.bf16.gmra.mxu0 %v4615
    %v4734 = vpop.f32.mrf.mxu0
    %v4735 = vadd.f32 0.0, %v4734
    %v4736 = vpop.f32.mrf.mxu0
    %4737 = vdwg.mxu0
    %4738 = vmatpush.bf16.msra.mxu0 0
    %4739 = vmatpush.bf16.msra.mxu0 0
    %4740 = vmatpush.bf16.msra.mxu0 0
    %4741 = vmatpush.bf16.msra.mxu0 0
    %4742 = vmatpush.bf16.msra.mxu0 0
    %4743 = vmatpush.bf16.msra.mxu0 0
    %4744 = vmatpush.bf16.msra.mxu0 0
    %4745 = vmatpush.bf16.msra.mxu0 %v4639
    %4746 = vmatmul.bf16.gmra.mxu0 %v4615
    %v4747 = vpop.f32.mrf.mxu0
    %v4748 = vadd.f32 0.0, %v4747
    %v4749 = vpop.f32.mrf.mxu0
    %4750 = vdwg.mxu0
    %4751 = vmatpush.bf16.msra.mxu0 0
    %4752 = vmatpush.bf16.msra.mxu0 0
    %4753 = vmatpush.bf16.msra.mxu0 0
    %4754 = vmatpush.bf16.msra.mxu0 0
    %4755 = vmatpush.bf16.msra.mxu0 0
    %4756 = vmatpush.bf16.msra.mxu0 0
    %4757 = vmatpush.bf16.msra.mxu0 0
    %4758 = vmatpush.bf16.msra.mxu0 %v4642
    %4759 = vmatmul.bf16.gmra.mxu0 %v4615
    %v4760 = vpop.f32.mrf.mxu0
    %v4761 = vadd.f32 0.0, %v4760
    %v4762 = vpop.f32.mrf.mxu0
    %4763 = vdwg.mxu0
    %4764 = vmatpush.bf16.msra.mxu0 0
    %4765 = vmatpush.bf16.msra.mxu0 0
    %4766 = vmatpush.bf16.msra.mxu0 0
    %4767 = vmatpush.bf16.msra.mxu0 0
    %4768 = vmatpush.bf16.msra.mxu0 0
    %4769 = vmatpush.bf16.msra.mxu0 0
    %4770 = vmatpush.bf16.msra.mxu0 0
    %4771 = vmatpush.bf16.msra.mxu0 %v4645
    %4772 = vmatmul.bf16.gmra.mxu0 %v4615
    %v4773 = vpop.f32.mrf.mxu0
    %v4774 = vadd.f32 0.0, %v4773
    %v4775 = vpop.f32.mrf.mxu0
    %4776 = vdwg.mxu0
    %4777 = vrot.lane.b32.xlu0 %v4571, 19
    %v4778 = vpop.permute.xlu0 %4777
    %4779 = vrot.lane.b32.xlu0 %v4572, 19
    %v4780 = vpop.permute.xlu0 %4779
    %4781 = vrot.lane.b32.xlu0 %v4573, 19
    %v4782 = vpop.permute.xlu0 %4781
    %4783 = vrot.lane.b32.xlu0 %v4574, 19
    %v4784 = vpop.permute.xlu0 %4783
    %4785 = vrot.lane.b32.xlu0 %v4575, 19
    %v4786 = vpop.permute.xlu0 %4785
    %4787 = vrot.lane.b32.xlu0 %v4576, 19
    %v4788 = vpop.permute.xlu0 %4787
    %4789 = vrot.lane.b32.xlu0 %v4577, 19
    %v4790 = vpop.permute.xlu0 %4789
    %4791 = vrot.lane.b32.xlu0 %v4578, 19
    %v4792 = vpop.permute.xlu0 %4791
    %4793 = vrot.lane.b32.xlu0 %v4579, 19
    %v4794 = vpop.permute.xlu0 %4793
    %4795 = vrot.lane.b32.xlu0 %v4580, 19
    %v4796 = vpop.permute.xlu0 %4795
    %4797 = vrot.lane.b32.xlu0 %v4581, 19
    %v4798 = vpop.permute.xlu0 %4797
    %v4799 = vsel %vm423, %v4778, %v4780
    %v4800 = vsel %vm423, %v4780, %v4782
    %v4801 = vsel %vm423, %v4782, %v4784
    %v4802 = vsel %vm423, %v4784, %v4786
    %v4803 = vsel %vm423, %v4786, %v4788
    %v4804 = vsel %vm423, %v4788, %v4790
    %v4805 = vsel %vm423, %v4790, %v4792
    %v4806 = vsel %vm423, %v4792, %v4794
    %v4807 = vsel %vm423, %v4794, %v4796
    %v4808 = vsel %vm423, %v4796, %v4798
    %v4810 = vsel %vm2637, %v4539, 0
    %v4813 = vsel %vm218, %v4799, 0
    %v4816 = vsel %vm218, %v4800, 0
    %v4819 = vsel %vm218, %v4801, 0
    %v4822 = vsel %vm218, %v4802, 0
    %v4825 = vsel %vm218, %v4803, 0
    %v4828 = vsel %vm218, %v4804, 0
    %v4831 = vsel %vm218, %v4805, 0
    %v4834 = vsel %vm218, %v4806, 0
    %v4837 = vsel %vm218, %v4807, 0
    %v4840 = vsel %vm218, %v4808, 0
    %4842 = vmatpush.bf16.msra.mxu0 0
    %4843 = vmatpush.bf16.msra.mxu0 0
    %4844 = vmatpush.bf16.msra.mxu0 0
    %4845 = vmatpush.bf16.msra.mxu0 0
    %4846 = vmatpush.bf16.msra.mxu0 0
    %4847 = vmatpush.bf16.msra.mxu0 0
    %4848 = vmatpush.bf16.msra.mxu0 0
    %4849 = vmatpush.bf16.msra.mxu0 %v4813
    %4850 = vmatmul.bf16.gmra.mxu0 %v4810
    %v4851 = vpop.f32.mrf.mxu0
    %v4852 = vadd.f32 %v4657, %v4851
    %v4853 = vpop.f32.mrf.mxu0
    %4854 = vdwg.mxu0
    %4855 = vmatpush.bf16.msra.mxu0 0
    %4856 = vmatpush.bf16.msra.mxu0 0
    %4857 = vmatpush.bf16.msra.mxu0 0
    %4858 = vmatpush.bf16.msra.mxu0 0
    %4859 = vmatpush.bf16.msra.mxu0 0
    %4860 = vmatpush.bf16.msra.mxu0 0
    %4861 = vmatpush.bf16.msra.mxu0 0
    %4862 = vmatpush.bf16.msra.mxu0 %v4816
    %4863 = vmatmul.bf16.gmra.mxu0 %v4810
    %v4864 = vpop.f32.mrf.mxu0
    %v4865 = vadd.f32 %v4670, %v4864
    %v4866 = vpop.f32.mrf.mxu0
    %4867 = vdwg.mxu0
    %4868 = vmatpush.bf16.msra.mxu0 0
    %4869 = vmatpush.bf16.msra.mxu0 0
    %4870 = vmatpush.bf16.msra.mxu0 0
    %4871 = vmatpush.bf16.msra.mxu0 0
    %4872 = vmatpush.bf16.msra.mxu0 0
    %4873 = vmatpush.bf16.msra.mxu0 0
    %4874 = vmatpush.bf16.msra.mxu0 0
    %4875 = vmatpush.bf16.msra.mxu0 %v4819
    %4876 = vmatmul.bf16.gmra.mxu0 %v4810
    %v4877 = vpop.f32.mrf.mxu0
    %v4878 = vadd.f32 %v4683, %v4877
    %v4879 = vpop.f32.mrf.mxu0
    %4880 = vdwg.mxu0
    %4881 = vmatpush.bf16.msra.mxu0 0
    %4882 = vmatpush.bf16.msra.mxu0 0
    %4883 = vmatpush.bf16.msra.mxu0 0
    %4884 = vmatpush.bf16.msra.mxu0 0
    %4885 = vmatpush.bf16.msra.mxu0 0
    %4886 = vmatpush.bf16.msra.mxu0 0
    %4887 = vmatpush.bf16.msra.mxu0 0
    %4888 = vmatpush.bf16.msra.mxu0 %v4822
    %4889 = vmatmul.bf16.gmra.mxu0 %v4810
    %v4890 = vpop.f32.mrf.mxu0
    %v4891 = vadd.f32 %v4696, %v4890
    %v4892 = vpop.f32.mrf.mxu0
    %4893 = vdwg.mxu0
    %4894 = vmatpush.bf16.msra.mxu0 0
    %4895 = vmatpush.bf16.msra.mxu0 0
    %4896 = vmatpush.bf16.msra.mxu0 0
    %4897 = vmatpush.bf16.msra.mxu0 0
    %4898 = vmatpush.bf16.msra.mxu0 0
    %4899 = vmatpush.bf16.msra.mxu0 0
    %4900 = vmatpush.bf16.msra.mxu0 0
    %4901 = vmatpush.bf16.msra.mxu0 %v4825
    %4902 = vmatmul.bf16.gmra.mxu0 %v4810
    %v4903 = vpop.f32.mrf.mxu0
    %v4904 = vadd.f32 %v4709, %v4903
    %v4905 = vpop.f32.mrf.mxu0
    %4906 = vdwg.mxu0
    %4907 = vmatpush.bf16.msra.mxu0 0
    %4908 = vmatpush.bf16.msra.mxu0 0
    %4909 = vmatpush.bf16.msra.mxu0 0
    %4910 = vmatpush.bf16.msra.mxu0 0
    %4911 = vmatpush.bf16.msra.mxu0 0
    %4912 = vmatpush.bf16.msra.mxu0 0
    %4913 = vmatpush.bf16.msra.mxu0 0
    %4914 = vmatpush.bf16.msra.mxu0 %v4828
    %4915 = vmatmul.bf16.gmra.mxu0 %v4810
    %v4916 = vpop.f32.mrf.mxu0
    %v4917 = vadd.f32 %v4722, %v4916
    %v4918 = vpop.f32.mrf.mxu0
    %4919 = vdwg.mxu0
    %4920 = vmatpush.bf16.msra.mxu0 0
    %4921 = vmatpush.bf16.msra.mxu0 0
    %4922 = vmatpush.bf16.msra.mxu0 0
    %4923 = vmatpush.bf16.msra.mxu0 0
    %4924 = vmatpush.bf16.msra.mxu0 0
    %4925 = vmatpush.bf16.msra.mxu0 0
    %4926 = vmatpush.bf16.msra.mxu0 0
    %4927 = vmatpush.bf16.msra.mxu0 %v4831
    %4928 = vmatmul.bf16.gmra.mxu0 %v4810
    %v4929 = vpop.f32.mrf.mxu0
    %v4930 = vadd.f32 %v4735, %v4929
    %v4931 = vpop.f32.mrf.mxu0
    %4932 = vdwg.mxu0
    %4933 = vmatpush.bf16.msra.mxu0 0
    %4934 = vmatpush.bf16.msra.mxu0 0
    %4935 = vmatpush.bf16.msra.mxu0 0
    %4936 = vmatpush.bf16.msra.mxu0 0
    %4937 = vmatpush.bf16.msra.mxu0 0
    %4938 = vmatpush.bf16.msra.mxu0 0
    %4939 = vmatpush.bf16.msra.mxu0 0
    %4940 = vmatpush.bf16.msra.mxu0 %v4834
    %4941 = vmatmul.bf16.gmra.mxu0 %v4810
    %v4942 = vpop.f32.mrf.mxu0
    %v4943 = vadd.f32 %v4748, %v4942
    %v4944 = vpop.f32.mrf.mxu0
    %4945 = vdwg.mxu0
    %4946 = vmatpush.bf16.msra.mxu0 0
    %4947 = vmatpush.bf16.msra.mxu0 0
    %4948 = vmatpush.bf16.msra.mxu0 0
    %4949 = vmatpush.bf16.msra.mxu0 0
    %4950 = vmatpush.bf16.msra.mxu0 0
    %4951 = vmatpush.bf16.msra.mxu0 0
    %4952 = vmatpush.bf16.msra.mxu0 0
    %4953 = vmatpush.bf16.msra.mxu0 %v4837
    %4954 = vmatmul.bf16.gmra.mxu0 %v4810
    %v4955 = vpop.f32.mrf.mxu0
    %v4956 = vadd.f32 %v4761, %v4955
    %v4957 = vpop.f32.mrf.mxu0
    %4958 = vdwg.mxu0
    %4959 = vmatpush.bf16.msra.mxu0 0
    %4960 = vmatpush.bf16.msra.mxu0 0
    %4961 = vmatpush.bf16.msra.mxu0 0
    %4962 = vmatpush.bf16.msra.mxu0 0
    %4963 = vmatpush.bf16.msra.mxu0 0
    %4964 = vmatpush.bf16.msra.mxu0 0
    %4965 = vmatpush.bf16.msra.mxu0 0
    %4966 = vmatpush.bf16.msra.mxu0 %v4840
    %4967 = vmatmul.bf16.gmra.mxu0 %v4810
    %v4968 = vpop.f32.mrf.mxu0
    %v4969 = vadd.f32 %v4774, %v4968
    %v4970 = vpop.f32.mrf.mxu0
    %4971 = vdwg.mxu0
    %4972 = vrot.lane.b32.xlu0 %v4571, 17
    %v4973 = vpop.permute.xlu0 %4972
    %4974 = vrot.lane.b32.xlu0 %v4572, 17
    %v4975 = vpop.permute.xlu0 %4974
    %4976 = vrot.lane.b32.xlu0 %v4573, 17
    %v4977 = vpop.permute.xlu0 %4976
    %4978 = vrot.lane.b32.xlu0 %v4574, 17
    %v4979 = vpop.permute.xlu0 %4978
    %4980 = vrot.lane.b32.xlu0 %v4575, 17
    %v4981 = vpop.permute.xlu0 %4980
    %4982 = vrot.lane.b32.xlu0 %v4576, 17
    %v4983 = vpop.permute.xlu0 %4982
    %4984 = vrot.lane.b32.xlu0 %v4577, 17
    %v4985 = vpop.permute.xlu0 %4984
    %4986 = vrot.lane.b32.xlu0 %v4578, 17
    %v4987 = vpop.permute.xlu0 %4986
    %4988 = vrot.lane.b32.xlu0 %v4579, 17
    %v4989 = vpop.permute.xlu0 %4988
    %4990 = vrot.lane.b32.xlu0 %v4580, 17
    %v4991 = vpop.permute.xlu0 %4990
    %4992 = vrot.lane.b32.xlu0 %v4581, 17
    %v4993 = vpop.permute.xlu0 %4992
    %v4994 = vsel %vm661, %v4973, %v4975
    %v4995 = vsel %vm661, %v4975, %v4977
    %v4996 = vsel %vm661, %v4977, %v4979
    %v4997 = vsel %vm661, %v4979, %v4981
    %v4998 = vsel %vm661, %v4981, %v4983
    %v4999 = vsel %vm661, %v4983, %v4985
    %v5000 = vsel %vm661, %v4985, %v4987
    %v5001 = vsel %vm661, %v4987, %v4989
    %v5002 = vsel %vm661, %v4989, %v4991
    %v5003 = vsel %vm661, %v4991, %v4993
    %v5005 = vsel %vm2637, %v4541, 0
    %v5008 = vsel %vm218, %v4994, 0
    %v5011 = vsel %vm218, %v4995, 0
    %v5014 = vsel %vm218, %v4996, 0
    %v5017 = vsel %vm218, %v4997, 0
    %v5020 = vsel %vm218, %v4998, 0
    %v5023 = vsel %vm218, %v4999, 0
    %v5026 = vsel %vm218, %v5000, 0
    %v5029 = vsel %vm218, %v5001, 0
    %v5032 = vsel %vm218, %v5002, 0
    %v5035 = vsel %vm218, %v5003, 0
    %5037 = vmatpush.bf16.msra.mxu0 0
    %5038 = vmatpush.bf16.msra.mxu0 0
    %5039 = vmatpush.bf16.msra.mxu0 0
    %5040 = vmatpush.bf16.msra.mxu0 0
    %5041 = vmatpush.bf16.msra.mxu0 0
    %5042 = vmatpush.bf16.msra.mxu0 0
    %5043 = vmatpush.bf16.msra.mxu0 0
    %5044 = vmatpush.bf16.msra.mxu0 %v5008
    %5045 = vmatmul.bf16.gmra.mxu0 %v5005
    %v5046 = vpop.f32.mrf.mxu0
    %v5047 = vadd.f32 0.0, %v5046
    %v5048 = vpop.f32.mrf.mxu0
    %5049 = vdwg.mxu0
    %5050 = vmatpush.bf16.msra.mxu0 0
    %5051 = vmatpush.bf16.msra.mxu0 0
    %5052 = vmatpush.bf16.msra.mxu0 0
    %5053 = vmatpush.bf16.msra.mxu0 0
    %5054 = vmatpush.bf16.msra.mxu0 0
    %5055 = vmatpush.bf16.msra.mxu0 0
    %5056 = vmatpush.bf16.msra.mxu0 0
    %5057 = vmatpush.bf16.msra.mxu0 %v5011
    %5058 = vmatmul.bf16.gmra.mxu0 %v5005
    %v5059 = vpop.f32.mrf.mxu0
    %v5060 = vadd.f32 0.0, %v5059
    %v5061 = vpop.f32.mrf.mxu0
    %5062 = vdwg.mxu0
    %5063 = vmatpush.bf16.msra.mxu0 0
    %5064 = vmatpush.bf16.msra.mxu0 0
    %5065 = vmatpush.bf16.msra.mxu0 0
    %5066 = vmatpush.bf16.msra.mxu0 0
    %5067 = vmatpush.bf16.msra.mxu0 0
    %5068 = vmatpush.bf16.msra.mxu0 0
    %5069 = vmatpush.bf16.msra.mxu0 0
    %5070 = vmatpush.bf16.msra.mxu0 %v5014
    %5071 = vmatmul.bf16.gmra.mxu0 %v5005
    %v5072 = vpop.f32.mrf.mxu0
    %v5073 = vadd.f32 0.0, %v5072
    %v5074 = vpop.f32.mrf.mxu0
    %5075 = vdwg.mxu0
    %5076 = vmatpush.bf16.msra.mxu0 0
    %5077 = vmatpush.bf16.msra.mxu0 0
    %5078 = vmatpush.bf16.msra.mxu0 0
    %5079 = vmatpush.bf16.msra.mxu0 0
    %5080 = vmatpush.bf16.msra.mxu0 0
    %5081 = vmatpush.bf16.msra.mxu0 0
    %5082 = vmatpush.bf16.msra.mxu0 0
    %5083 = vmatpush.bf16.msra.mxu0 %v5017
    %5084 = vmatmul.bf16.gmra.mxu0 %v5005
    %v5085 = vpop.f32.mrf.mxu0
    %v5086 = vadd.f32 0.0, %v5085
    %v5087 = vpop.f32.mrf.mxu0
    %5088 = vdwg.mxu0
    %5089 = vmatpush.bf16.msra.mxu0 0
    %5090 = vmatpush.bf16.msra.mxu0 0
    %5091 = vmatpush.bf16.msra.mxu0 0
    %5092 = vmatpush.bf16.msra.mxu0 0
    %5093 = vmatpush.bf16.msra.mxu0 0
    %5094 = vmatpush.bf16.msra.mxu0 0
    %5095 = vmatpush.bf16.msra.mxu0 0
    %5096 = vmatpush.bf16.msra.mxu0 %v5020
    %5097 = vmatmul.bf16.gmra.mxu0 %v5005
    %v5098 = vpop.f32.mrf.mxu0
    %v5099 = vadd.f32 0.0, %v5098
    %v5100 = vpop.f32.mrf.mxu0
    %5101 = vdwg.mxu0
    %5102 = vmatpush.bf16.msra.mxu0 0
    %5103 = vmatpush.bf16.msra.mxu0 0
    %5104 = vmatpush.bf16.msra.mxu0 0
    %5105 = vmatpush.bf16.msra.mxu0 0
    %5106 = vmatpush.bf16.msra.mxu0 0
    %5107 = vmatpush.bf16.msra.mxu0 0
    %5108 = vmatpush.bf16.msra.mxu0 0
    %5109 = vmatpush.bf16.msra.mxu0 %v5023
    %5110 = vmatmul.bf16.gmra.mxu0 %v5005
    %v5111 = vpop.f32.mrf.mxu0
    %v5112 = vadd.f32 0.0, %v5111
    %v5113 = vpop.f32.mrf.mxu0
    %5114 = vdwg.mxu0
    %5115 = vmatpush.bf16.msra.mxu0 0
    %5116 = vmatpush.bf16.msra.mxu0 0
    %5117 = vmatpush.bf16.msra.mxu0 0
    %5118 = vmatpush.bf16.msra.mxu0 0
    %5119 = vmatpush.bf16.msra.mxu0 0
    %5120 = vmatpush.bf16.msra.mxu0 0
    %5121 = vmatpush.bf16.msra.mxu0 0
    %5122 = vmatpush.bf16.msra.mxu0 %v5026
    %5123 = vmatmul.bf16.gmra.mxu0 %v5005
    %v5124 = vpop.f32.mrf.mxu0
    %v5125 = vadd.f32 0.0, %v5124
    %v5126 = vpop.f32.mrf.mxu0
    %5127 = vdwg.mxu0
    %5128 = vmatpush.bf16.msra.mxu0 0
    %5129 = vmatpush.bf16.msra.mxu0 0
    %5130 = vmatpush.bf16.msra.mxu0 0
    %5131 = vmatpush.bf16.msra.mxu0 0
    %5132 = vmatpush.bf16.msra.mxu0 0
    %5133 = vmatpush.bf16.msra.mxu0 0
    %5134 = vmatpush.bf16.msra.mxu0 0
    %5135 = vmatpush.bf16.msra.mxu0 %v5029
    %5136 = vmatmul.bf16.gmra.mxu0 %v5005
    %v5137 = vpop.f32.mrf.mxu0
    %v5138 = vadd.f32 0.0, %v5137
    %v5139 = vpop.f32.mrf.mxu0
    %5140 = vdwg.mxu0
    %5141 = vmatpush.bf16.msra.mxu0 0
    %5142 = vmatpush.bf16.msra.mxu0 0
    %5143 = vmatpush.bf16.msra.mxu0 0
    %5144 = vmatpush.bf16.msra.mxu0 0
    %5145 = vmatpush.bf16.msra.mxu0 0
    %5146 = vmatpush.bf16.msra.mxu0 0
    %5147 = vmatpush.bf16.msra.mxu0 0
    %5148 = vmatpush.bf16.msra.mxu0 %v5032
    %5149 = vmatmul.bf16.gmra.mxu0 %v5005
    %v5150 = vpop.f32.mrf.mxu0
    %v5151 = vadd.f32 0.0, %v5150
    %v5152 = vpop.f32.mrf.mxu0
    %5153 = vdwg.mxu0
    %5154 = vmatpush.bf16.msra.mxu0 0
    %5155 = vmatpush.bf16.msra.mxu0 0
    %5156 = vmatpush.bf16.msra.mxu0 0
    %5157 = vmatpush.bf16.msra.mxu0 0
    %5158 = vmatpush.bf16.msra.mxu0 0
    %5159 = vmatpush.bf16.msra.mxu0 0
    %5160 = vmatpush.bf16.msra.mxu0 0
    %5161 = vmatpush.bf16.msra.mxu0 %v5035
    %5162 = vmatmul.bf16.gmra.mxu0 %v5005
    %v5163 = vpop.f32.mrf.mxu0
    %v5164 = vadd.f32 0.0, %v5163
    %v5165 = vpop.f32.mrf.mxu0
    %5166 = vdwg.mxu0
    %v5167 = vadd.f32 %v4852, %v5047
    %v5168 = vadd.f32 %v4865, %v5060
    %v5169 = vadd.f32 %v4878, %v5073
    %v5170 = vadd.f32 %v4891, %v5086
    %v5171 = vadd.f32 %v4904, %v5099
    %v5172 = vadd.f32 %v4917, %v5112
    %v5173 = vadd.f32 %v4930, %v5125
    %v5174 = vadd.f32 %v4943, %v5138
    %v5175 = vadd.f32 %v4956, %v5151
    %v5176 = vadd.f32 %v4969, %v5164
    %5177 = vrot.lane.b32.xlu0 %v4571, 1
    %v5178 = vpop.permute.xlu0 %5177
    %5179 = vrot.lane.b32.xlu0 %v4572, 1
    %v5180 = vpop.permute.xlu0 %5179
    %5181 = vrot.lane.b32.xlu0 %v4573, 1
    %v5182 = vpop.permute.xlu0 %5181
    %5183 = vrot.lane.b32.xlu0 %v4574, 1
    %v5184 = vpop.permute.xlu0 %5183
    %5185 = vrot.lane.b32.xlu0 %v4575, 1
    %v5186 = vpop.permute.xlu0 %5185
    %5187 = vrot.lane.b32.xlu0 %v4576, 1
    %v5188 = vpop.permute.xlu0 %5187
    %5189 = vrot.lane.b32.xlu0 %v4577, 1
    %v5190 = vpop.permute.xlu0 %5189
    %5191 = vrot.lane.b32.xlu0 %v4578, 1
    %v5192 = vpop.permute.xlu0 %5191
    %5193 = vrot.lane.b32.xlu0 %v4579, 1
    %v5194 = vpop.permute.xlu0 %5193
    %5195 = vrot.lane.b32.xlu0 %v4580, 1
    %v5196 = vpop.permute.xlu0 %5195
    %5197 = vrot.lane.b32.xlu0 %v4581, 1
    %v5198 = vpop.permute.xlu0 %5197
    %v5199 = vsel %vm909, %v5178, %v5180
    %v5200 = vsel %vm909, %v5180, %v5182
    %v5201 = vsel %vm909, %v5182, %v5184
    %v5202 = vsel %vm909, %v5184, %v5186
    %v5203 = vsel %vm909, %v5186, %v5188
    %v5204 = vsel %vm909, %v5188, %v5190
    %v5205 = vsel %vm909, %v5190, %v5192
    %v5206 = vsel %vm909, %v5192, %v5194
    %v5207 = vsel %vm909, %v5194, %v5196
    %v5208 = vsel %vm909, %v5196, %v5198
    %v5210 = vsel %vm2637, %v4542, 0
    %v5213 = vsel %vm218, %v5199, 0
    %v5216 = vsel %vm218, %v5200, 0
    %v5219 = vsel %vm218, %v5201, 0
    %v5222 = vsel %vm218, %v5202, 0
    %v5225 = vsel %vm218, %v5203, 0
    %v5228 = vsel %vm218, %v5204, 0
    %v5231 = vsel %vm218, %v5205, 0
    %v5234 = vsel %vm218, %v5206, 0
    %v5237 = vsel %vm218, %v5207, 0
    %v5240 = vsel %vm218, %v5208, 0
    %5242 = vmatpush.bf16.msra.mxu0 0
    %5243 = vmatpush.bf16.msra.mxu0 0
    %5244 = vmatpush.bf16.msra.mxu0 0
    %5245 = vmatpush.bf16.msra.mxu0 0
    %5246 = vmatpush.bf16.msra.mxu0 0
    %5247 = vmatpush.bf16.msra.mxu0 0
    %5248 = vmatpush.bf16.msra.mxu0 0
    %5249 = vmatpush.bf16.msra.mxu0 %v5213
    %5250 = vmatmul.bf16.gmra.mxu0 %v5210
    %v5251 = vpop.f32.mrf.mxu0
    %v5252 = vadd.f32 0.0, %v5251
    %v5253 = vpop.f32.mrf.mxu0
    %5254 = vdwg.mxu0
    %5255 = vmatpush.bf16.msra.mxu0 0
    %5256 = vmatpush.bf16.msra.mxu0 0
    %5257 = vmatpush.bf16.msra.mxu0 0
    %5258 = vmatpush.bf16.msra.mxu0 0
    %5259 = vmatpush.bf16.msra.mxu0 0
    %5260 = vmatpush.bf16.msra.mxu0 0
    %5261 = vmatpush.bf16.msra.mxu0 0
    %5262 = vmatpush.bf16.msra.mxu0 %v5216
    %5263 = vmatmul.bf16.gmra.mxu0 %v5210
    %v5264 = vpop.f32.mrf.mxu0
    %v5265 = vadd.f32 0.0, %v5264
    %v5266 = vpop.f32.mrf.mxu0
    %5267 = vdwg.mxu0
    %5268 = vmatpush.bf16.msra.mxu0 0
    %5269 = vmatpush.bf16.msra.mxu0 0
    %5270 = vmatpush.bf16.msra.mxu0 0
    %5271 = vmatpush.bf16.msra.mxu0 0
    %5272 = vmatpush.bf16.msra.mxu0 0
    %5273 = vmatpush.bf16.msra.mxu0 0
    %5274 = vmatpush.bf16.msra.mxu0 0
    %5275 = vmatpush.bf16.msra.mxu0 %v5219
    %5276 = vmatmul.bf16.gmra.mxu0 %v5210
    %v5277 = vpop.f32.mrf.mxu0
    %v5278 = vadd.f32 0.0, %v5277
    %v5279 = vpop.f32.mrf.mxu0
    %5280 = vdwg.mxu0
    %5281 = vmatpush.bf16.msra.mxu0 0
    %5282 = vmatpush.bf16.msra.mxu0 0
    %5283 = vmatpush.bf16.msra.mxu0 0
    %5284 = vmatpush.bf16.msra.mxu0 0
    %5285 = vmatpush.bf16.msra.mxu0 0
    %5286 = vmatpush.bf16.msra.mxu0 0
    %5287 = vmatpush.bf16.msra.mxu0 0
    %5288 = vmatpush.bf16.msra.mxu0 %v5222
    %5289 = vmatmul.bf16.gmra.mxu0 %v5210
    %v5290 = vpop.f32.mrf.mxu0
    %v5291 = vadd.f32 0.0, %v5290
    %v5292 = vpop.f32.mrf.mxu0
    %5293 = vdwg.mxu0
    %5294 = vmatpush.bf16.msra.mxu0 0
    %5295 = vmatpush.bf16.msra.mxu0 0
    %5296 = vmatpush.bf16.msra.mxu0 0
    %5297 = vmatpush.bf16.msra.mxu0 0
    %5298 = vmatpush.bf16.msra.mxu0 0
    %5299 = vmatpush.bf16.msra.mxu0 0
    %5300 = vmatpush.bf16.msra.mxu0 0
    %5301 = vmatpush.bf16.msra.mxu0 %v5225
    %5302 = vmatmul.bf16.gmra.mxu0 %v5210
    %v5303 = vpop.f32.mrf.mxu0
    %v5304 = vadd.f32 0.0, %v5303
    %v5305 = vpop.f32.mrf.mxu0
    %5306 = vdwg.mxu0
    %5307 = vmatpush.bf16.msra.mxu0 0
    %5308 = vmatpush.bf16.msra.mxu0 0
    %5309 = vmatpush.bf16.msra.mxu0 0
    %5310 = vmatpush.bf16.msra.mxu0 0
    %5311 = vmatpush.bf16.msra.mxu0 0
    %5312 = vmatpush.bf16.msra.mxu0 0
    %5313 = vmatpush.bf16.msra.mxu0 0
    %5314 = vmatpush.bf16.msra.mxu0 %v5228
    %5315 = vmatmul.bf16.gmra.mxu0 %v5210
    %v5316 = vpop.f32.mrf.mxu0
    %v5317 = vadd.f32 0.0, %v5316
    %v5318 = vpop.f32.mrf.mxu0
    %5319 = vdwg.mxu0
    %5320 = vmatpush.bf16.msra.mxu0 0
    %5321 = vmatpush.bf16.msra.mxu0 0
    %5322 = vmatpush.bf16.msra.mxu0 0
    %5323 = vmatpush.bf16.msra.mxu0 0
    %5324 = vmatpush.bf16.msra.mxu0 0
    %5325 = vmatpush.bf16.msra.mxu0 0
    %5326 = vmatpush.bf16.msra.mxu0 0
    %5327 = vmatpush.bf16.msra.mxu0 %v5231
    %5328 = vmatmul.bf16.gmra.mxu0 %v5210
    %v5329 = vpop.f32.mrf.mxu0
    %v5330 = vadd.f32 0.0, %v5329
    %v5331 = vpop.f32.mrf.mxu0
    %5332 = vdwg.mxu0
    %5333 = vmatpush.bf16.msra.mxu0 0
    %5334 = vmatpush.bf16.msra.mxu0 0
    %5335 = vmatpush.bf16.msra.mxu0 0
    %5336 = vmatpush.bf16.msra.mxu0 0
    %5337 = vmatpush.bf16.msra.mxu0 0
    %5338 = vmatpush.bf16.msra.mxu0 0
    %5339 = vmatpush.bf16.msra.mxu0 0
    %5340 = vmatpush.bf16.msra.mxu0 %v5234
    %5341 = vmatmul.bf16.gmra.mxu0 %v5210
    %v5342 = vpop.f32.mrf.mxu0
    %v5343 = vadd.f32 0.0, %v5342
    %v5344 = vpop.f32.mrf.mxu0
    %5345 = vdwg.mxu0
    %5346 = vmatpush.bf16.msra.mxu0 0
    %5347 = vmatpush.bf16.msra.mxu0 0
    %5348 = vmatpush.bf16.msra.mxu0 0
    %5349 = vmatpush.bf16.msra.mxu0 0
    %5350 = vmatpush.bf16.msra.mxu0 0
    %5351 = vmatpush.bf16.msra.mxu0 0
    %5352 = vmatpush.bf16.msra.mxu0 0
    %5353 = vmatpush.bf16.msra.mxu0 %v5237
    %5354 = vmatmul.bf16.gmra.mxu0 %v5210
    %v5355 = vpop.f32.mrf.mxu0
    %v5356 = vadd.f32 0.0, %v5355
    %v5357 = vpop.f32.mrf.mxu0
    %5358 = vdwg.mxu0
    %5359 = vmatpush.bf16.msra.mxu0 0
    %5360 = vmatpush.bf16.msra.mxu0 0
    %5361 = vmatpush.bf16.msra.mxu0 0
    %5362 = vmatpush.bf16.msra.mxu0 0
    %5363 = vmatpush.bf16.msra.mxu0 0
    %5364 = vmatpush.bf16.msra.mxu0 0
    %5365 = vmatpush.bf16.msra.mxu0 0
    %5366 = vmatpush.bf16.msra.mxu0 %v5240
    %5367 = vmatmul.bf16.gmra.mxu0 %v5210
    %v5368 = vpop.f32.mrf.mxu0
    %v5369 = vadd.f32 0.0, %v5368
    %v5370 = vpop.f32.mrf.mxu0
    %5371 = vdwg.mxu0
    %v5372 = vadd.f32 %v5167, %v5252
    %v5373 = vadd.f32 %v5168, %v5265
    %v5374 = vadd.f32 %v5169, %v5278
    %v5375 = vadd.f32 %v5170, %v5291
    %v5376 = vadd.f32 %v5171, %v5304
    %v5377 = vadd.f32 %v5172, %v5317
    %v5378 = vadd.f32 %v5173, %v5330
    %v5379 = vadd.f32 %v5174, %v5343
    %v5380 = vadd.f32 %v5175, %v5356
    %v5381 = vadd.f32 %v5176, %v5369
    %v5382 = vld [vmem:[#allocation3 + $0x4] sm:$0xff]
    %v5383 = vld [vmem:[#allocation3 + $0xc] sm:$0xff]
    %v5384 = vld [vmem:[#allocation3 + $0x14] sm:$0xff]
    %v5385 = vld [vmem:[#allocation3 + $0x1c] sm:$0xff]
    %v5386 = vld [vmem:[#allocation3 + $0x24] sm:$0xff]
    %v5392 = vunpack.c.l.b16 %v5382
    %v5393 = vunpack.c.h.b16 %v5382
    %v5394 = vunpack.c.l.b16 %v5383
    %v5395 = vunpack.c.h.b16 %v5383
    %v5396 = vunpack.c.l.b16 %v5384
    %v5397 = vunpack.c.h.b16 %v5384
    %v5398 = vunpack.c.l.b16 %v5385
    %v5399 = vunpack.c.h.b16 %v5385
    %v5400 = vunpack.c.l.b16 %v5386
    %v5401 = vunpack.c.h.b16 %v5386
    %v5402 = vpack.c.b16 %v5392, %v5392
    %v5403 = vpack.c.b16 %v5393, %v5393
    %v5404 = vpack.c.b16 %v5394, %v5394
    %v5405 = vpack.c.b16 %v5395, %v5395
    %v5406 = vpack.c.b16 %v5396, %v5396
    %v5407 = vpack.c.b16 %v5397, %v5397
    %v5408 = vpack.c.b16 %v5398, %v5398
    %v5409 = vpack.c.b16 %v5399, %v5399
    %v5410 = vpack.c.b16 %v5400, %v5400
    %v5411 = vpack.c.b16 %v5401, %v5401
    %v5413 = vsel %vm2637, %v4543, 0
    %v5416 = vsel %vm218, %v5402, 0
    %v5419 = vsel %vm218, %v5403, 0
    %v5422 = vsel %vm218, %v5404, 0
    %v5425 = vsel %vm218, %v5405, 0
    %v5428 = vsel %vm218, %v5406, 0
    %v5431 = vsel %vm218, %v5407, 0
    %v5434 = vsel %vm218, %v5408, 0
    %v5437 = vsel %vm218, %v5409, 0
    %v5440 = vsel %vm218, %v5410, 0
    %v5443 = vsel %vm218, %v5411, 0
    %5445 = vmatpush.bf16.msra.mxu0 0
    %5446 = vmatpush.bf16.msra.mxu0 0
    %5447 = vmatpush.bf16.msra.mxu0 0
    %5448 = vmatpush.bf16.msra.mxu0 0
    %5449 = vmatpush.bf16.msra.mxu0 0
    %5450 = vmatpush.bf16.msra.mxu0 0
    %5451 = vmatpush.bf16.msra.mxu0 0
    %5452 = vmatpush.bf16.msra.mxu0 %v5416
    %5453 = vmatmul.bf16.gmra.mxu0 %v5413
    %v5454 = vpop.f32.mrf.mxu0
    %v5455 = vadd.f32 0.0, %v5454
    %v5456 = vpop.f32.mrf.mxu0
    %5457 = vdwg.mxu0
    %5458 = vmatpush.bf16.msra.mxu0 0
    %5459 = vmatpush.bf16.msra.mxu0 0
    %5460 = vmatpush.bf16.msra.mxu0 0
    %5461 = vmatpush.bf16.msra.mxu0 0
    %5462 = vmatpush.bf16.msra.mxu0 0
    %5463 = vmatpush.bf16.msra.mxu0 0
    %5464 = vmatpush.bf16.msra.mxu0 0
    %5465 = vmatpush.bf16.msra.mxu0 %v5419
    %5466 = vmatmul.bf16.gmra.mxu0 %v5413
    %v5467 = vpop.f32.mrf.mxu0
    %v5468 = vadd.f32 0.0, %v5467
    %v5469 = vpop.f32.mrf.mxu0
    %5470 = vdwg.mxu0
    %5471 = vmatpush.bf16.msra.mxu0 0
    %5472 = vmatpush.bf16.msra.mxu0 0
    %5473 = vmatpush.bf16.msra.mxu0 0
    %5474 = vmatpush.bf16.msra.mxu0 0
    %5475 = vmatpush.bf16.msra.mxu0 0
    %5476 = vmatpush.bf16.msra.mxu0 0
    %5477 = vmatpush.bf16.msra.mxu0 0
    %5478 = vmatpush.bf16.msra.mxu0 %v5422
    %5479 = vmatmul.bf16.gmra.mxu0 %v5413
    %v5480 = vpop.f32.mrf.mxu0
    %v5481 = vadd.f32 0.0, %v5480
    %v5482 = vpop.f32.mrf.mxu0
    %5483 = vdwg.mxu0
    %5484 = vmatpush.bf16.msra.mxu0 0
    %5485 = vmatpush.bf16.msra.mxu0 0
    %5486 = vmatpush.bf16.msra.mxu0 0
    %5487 = vmatpush.bf16.msra.mxu0 0
    %5488 = vmatpush.bf16.msra.mxu0 0
    %5489 = vmatpush.bf16.msra.mxu0 0
    %5490 = vmatpush.bf16.msra.mxu0 0
    %5491 = vmatpush.bf16.msra.mxu0 %v5425
    %5492 = vmatmul.bf16.gmra.mxu0 %v5413
    %v5493 = vpop.f32.mrf.mxu0
    %v5494 = vadd.f32 0.0, %v5493
    %v5495 = vpop.f32.mrf.mxu0
    %5496 = vdwg.mxu0
    %5497 = vmatpush.bf16.msra.mxu0 0
    %5498 = vmatpush.bf16.msra.mxu0 0
    %5499 = vmatpush.bf16.msra.mxu0 0
    %5500 = vmatpush.bf16.msra.mxu0 0
    %5501 = vmatpush.bf16.msra.mxu0 0
    %5502 = vmatpush.bf16.msra.mxu0 0
    %5503 = vmatpush.bf16.msra.mxu0 0
    %5504 = vmatpush.bf16.msra.mxu0 %v5428
    %5505 = vmatmul.bf16.gmra.mxu0 %v5413
    %v5506 = vpop.f32.mrf.mxu0
    %v5507 = vadd.f32 0.0, %v5506
    %v5508 = vpop.f32.mrf.mxu0
    %5509 = vdwg.mxu0
    %5510 = vmatpush.bf16.msra.mxu0 0
    %5511 = vmatpush.bf16.msra.mxu0 0
    %5512 = vmatpush.bf16.msra.mxu0 0
    %5513 = vmatpush.bf16.msra.mxu0 0
    %5514 = vmatpush.bf16.msra.mxu0 0
    %5515 = vmatpush.bf16.msra.mxu0 0
    %5516 = vmatpush.bf16.msra.mxu0 0
    %5517 = vmatpush.bf16.msra.mxu0 %v5431
    %5518 = vmatmul.bf16.gmra.mxu0 %v5413
    %v5519 = vpop.f32.mrf.mxu0
    %v5520 = vadd.f32 0.0, %v5519
    %v5521 = vpop.f32.mrf.mxu0
    %5522 = vdwg.mxu0
    %5523 = vmatpush.bf16.msra.mxu0 0
    %5524 = vmatpush.bf16.msra.mxu0 0
    %5525 = vmatpush.bf16.msra.mxu0 0
    %5526 = vmatpush.bf16.msra.mxu0 0
    %5527 = vmatpush.bf16.msra.mxu0 0
    %5528 = vmatpush.bf16.msra.mxu0 0
    %5529 = vmatpush.bf16.msra.mxu0 0
    %5530 = vmatpush.bf16.msra.mxu0 %v5434
    %5531 = vmatmul.bf16.gmra.mxu0 %v5413
    %v5532 = vpop.f32.mrf.mxu0
    %v5533 = vadd.f32 0.0, %v5532
    %v5534 = vpop.f32.mrf.mxu0
    %5535 = vdwg.mxu0
    %5536 = vmatpush.bf16.msra.mxu0 0
    %5537 = vmatpush.bf16.msra.mxu0 0
    %5538 = vmatpush.bf16.msra.mxu0 0
    %5539 = vmatpush.bf16.msra.mxu0 0
    %5540 = vmatpush.bf16.msra.mxu0 0
    %5541 = vmatpush.bf16.msra.mxu0 0
    %5542 = vmatpush.bf16.msra.mxu0 0
    %5543 = vmatpush.bf16.msra.mxu0 %v5437
    %5544 = vmatmul.bf16.gmra.mxu0 %v5413
    %v5545 = vpop.f32.mrf.mxu0
    %v5546 = vadd.f32 0.0, %v5545
    %v5547 = vpop.f32.mrf.mxu0
    %5548 = vdwg.mxu0
    %5549 = vmatpush.bf16.msra.mxu0 0
    %5550 = vmatpush.bf16.msra.mxu0 0
    %5551 = vmatpush.bf16.msra.mxu0 0
    %5552 = vmatpush.bf16.msra.mxu0 0
    %5553 = vmatpush.bf16.msra.mxu0 0
    %5554 = vmatpush.bf16.msra.mxu0 0
    %5555 = vmatpush.bf16.msra.mxu0 0
    %5556 = vmatpush.bf16.msra.mxu0 %v5440
    %5557 = vmatmul.bf16.gmra.mxu0 %v5413
    %v5558 = vpop.f32.mrf.mxu0
    %v5559 = vadd.f32 0.0, %v5558
    %v5560 = vpop.f32.mrf.mxu0
    %5561 = vdwg.mxu0
    %5562 = vmatpush.bf16.msra.mxu0 0
    %5563 = vmatpush.bf16.msra.mxu0 0
    %5564 = vmatpush.bf16.msra.mxu0 0
    %5565 = vmatpush.bf16.msra.mxu0 0
    %5566 = vmatpush.bf16.msra.mxu0 0
    %5567 = vmatpush.bf16.msra.mxu0 0
    %5568 = vmatpush.bf16.msra.mxu0 0
    %5569 = vmatpush.bf16.msra.mxu0 %v5443
    %5570 = vmatmul.bf16.gmra.mxu0 %v5413
    %v5571 = vpop.f32.mrf.mxu0
    %v5572 = vadd.f32 0.0, %v5571
    %v5573 = vpop.f32.mrf.mxu0
    %5574 = vdwg.mxu0
    %v5575 = vadd.f32 %v5372, %v5455
    %v5576 = vadd.f32 %v5373, %v5468
    %v5577 = vadd.f32 %v5374, %v5481
    %v5578 = vadd.f32 %v5375, %v5494
    %v5579 = vadd.f32 %v5376, %v5507
    %v5580 = vadd.f32 %v5377, %v5520
    %v5581 = vadd.f32 %v5378, %v5533
    %v5582 = vadd.f32 %v5379, %v5546
    %v5583 = vadd.f32 %v5380, %v5559
    %v5584 = vadd.f32 %v5381, %v5572
    %v5585 = vld [vmem:[#allocation3 + $0x4] sm:$0xff]
    %v5586 = vld [vmem:[#allocation3 + $0xc] sm:$0xff]
    %v5587 = vld [vmem:[#allocation3 + $0x14] sm:$0xff]
    %v5588 = vld [vmem:[#allocation3 + $0x1c] sm:$0xff]
    %v5589 = vld [vmem:[#allocation3 + $0x24] sm:$0xff]
    %v5590 = vld [vmem:[#allocation3 + $0x2c] sm:$0xf]
    %v5597 = vunpack.c.l.b16 %v5585
    %v5598 = vunpack.c.h.b16 %v5585
    %v5599 = vunpack.c.l.b16 %v5586
    %v5600 = vunpack.c.h.b16 %v5586
    %v5601 = vunpack.c.l.b16 %v5587
    %v5602 = vunpack.c.h.b16 %v5587
    %v5603 = vunpack.c.l.b16 %v5588
    %v5604 = vunpack.c.h.b16 %v5588
    %v5605 = vunpack.c.l.b16 %v5589
    %v5606 = vunpack.c.h.b16 %v5589
    %v5607 = vunpack.c.l.b16 %v5590
    %v5608 = vpack.c.b16 %v5597, %v5597
    %v5609 = vpack.c.b16 %v5598, %v5598
    %v5610 = vpack.c.b16 %v5599, %v5599
    %v5611 = vpack.c.b16 %v5600, %v5600
    %v5612 = vpack.c.b16 %v5601, %v5601
    %v5613 = vpack.c.b16 %v5602, %v5602
    %v5614 = vpack.c.b16 %v5603, %v5603
    %v5615 = vpack.c.b16 %v5604, %v5604
    %v5616 = vpack.c.b16 %v5605, %v5605
    %v5617 = vpack.c.b16 %v5606, %v5606
    %v5618 = vpack.c.b16 %v5607, %v5607
    %5619 = vrot.lane.b32.xlu0 %v5608, 127
    %v5620 = vpop.permute.xlu0 %5619
    %5621 = vrot.lane.b32.xlu0 %v5609, 127
    %v5622 = vpop.permute.xlu0 %5621
    %5623 = vrot.lane.b32.xlu0 %v5610, 127
    %v5624 = vpop.permute.xlu0 %5623
    %5625 = vrot.lane.b32.xlu0 %v5611, 127
    %v5626 = vpop.permute.xlu0 %5625
    %5627 = vrot.lane.b32.xlu0 %v5612, 127
    %v5628 = vpop.permute.xlu0 %5627
    %5629 = vrot.lane.b32.xlu0 %v5613, 127
    %v5630 = vpop.permute.xlu0 %5629
    %5631 = vrot.lane.b32.xlu0 %v5614, 127
    %v5632 = vpop.permute.xlu0 %5631
    %5633 = vrot.lane.b32.xlu0 %v5615, 127
    %v5634 = vpop.permute.xlu0 %5633
    %5635 = vrot.lane.b32.xlu0 %v5616, 127
    %v5636 = vpop.permute.xlu0 %5635
    %5637 = vrot.lane.b32.xlu0 %v5617, 127
    %v5638 = vpop.permute.xlu0 %5637
    %5639 = vrot.lane.b32.xlu0 %v5618, 127
    %v5640 = vpop.permute.xlu0 %5639
    %v5641 = vsel %vm1511, %v5620, %v5622
    %v5642 = vsel %vm1511, %v5622, %v5624
    %v5643 = vsel %vm1511, %v5624, %v5626
    %v5644 = vsel %vm1511, %v5626, %v5628
    %v5645 = vsel %vm1511, %v5628, %v5630
    %v5646 = vsel %vm1511, %v5630, %v5632
    %v5647 = vsel %vm1511, %v5632, %v5634
    %v5648 = vsel %vm1511, %v5634, %v5636
    %v5649 = vsel %vm1511, %v5636, %v5638
    %v5650 = vsel %vm1511, %v5638, %v5640
    %v5652 = vsel %vm2637, %v4544, 0
    %v5655 = vsel %vm218, %v5641, 0
    %v5658 = vsel %vm218, %v5642, 0
    %v5661 = vsel %vm218, %v5643, 0
    %v5664 = vsel %vm218, %v5644, 0
    %v5667 = vsel %vm218, %v5645, 0
    %v5670 = vsel %vm218, %v5646, 0
    %v5673 = vsel %vm218, %v5647, 0
    %v5676 = vsel %vm218, %v5648, 0
    %v5679 = vsel %vm218, %v5649, 0
    %v5682 = vsel %vm218, %v5650, 0
    %5684 = vmatpush.bf16.msra.mxu0 0
    %5685 = vmatpush.bf16.msra.mxu0 0
    %5686 = vmatpush.bf16.msra.mxu0 0
    %5687 = vmatpush.bf16.msra.mxu0 0
    %5688 = vmatpush.bf16.msra.mxu0 0
    %5689 = vmatpush.bf16.msra.mxu0 0
    %5690 = vmatpush.bf16.msra.mxu0 0
    %5691 = vmatpush.bf16.msra.mxu0 %v5655
    %5692 = vmatmul.bf16.gmra.mxu0 %v5652
    %v5693 = vpop.f32.mrf.mxu0
    %v5694 = vadd.f32 0.0, %v5693
    %v5695 = vpop.f32.mrf.mxu0
    %5696 = vdwg.mxu0
    %5697 = vmatpush.bf16.msra.mxu0 0
    %5698 = vmatpush.bf16.msra.mxu0 0
    %5699 = vmatpush.bf16.msra.mxu0 0
    %5700 = vmatpush.bf16.msra.mxu0 0
    %5701 = vmatpush.bf16.msra.mxu0 0
    %5702 = vmatpush.bf16.msra.mxu0 0
    %5703 = vmatpush.bf16.msra.mxu0 0
    %5704 = vmatpush.bf16.msra.mxu0 %v5658
    %5705 = vmatmul.bf16.gmra.mxu0 %v5652
    %v5706 = vpop.f32.mrf.mxu0
    %v5707 = vadd.f32 0.0, %v5706
    %v5708 = vpop.f32.mrf.mxu0
    %5709 = vdwg.mxu0
    %5710 = vmatpush.bf16.msra.mxu0 0
    %5711 = vmatpush.bf16.msra.mxu0 0
    %5712 = vmatpush.bf16.msra.mxu0 0
    %5713 = vmatpush.bf16.msra.mxu0 0
    %5714 = vmatpush.bf16.msra.mxu0 0
    %5715 = vmatpush.bf16.msra.mxu0 0
    %5716 = vmatpush.bf16.msra.mxu0 0
    %5717 = vmatpush.bf16.msra.mxu0 %v5661
    %5718 = vmatmul.bf16.gmra.mxu0 %v5652
    %v5719 = vpop.f32.mrf.mxu0
    %v5720 = vadd.f32 0.0, %v5719
    %v5721 = vpop.f32.mrf.mxu0
    %5722 = vdwg.mxu0
    %5723 = vmatpush.bf16.msra.mxu0 0
    %5724 = vmatpush.bf16.msra.mxu0 0
    %5725 = vmatpush.bf16.msra.mxu0 0
    %5726 = vmatpush.bf16.msra.mxu0 0
    %5727 = vmatpush.bf16.msra.mxu0 0
    %5728 = vmatpush.bf16.msra.mxu0 0
    %5729 = vmatpush.bf16.msra.mxu0 0
    %5730 = vmatpush.bf16.msra.mxu0 %v5664
    %5731 = vmatmul.bf16.gmra.mxu0 %v5652
    %v5732 = vpop.f32.mrf.mxu0
    %v5733 = vadd.f32 0.0, %v5732
    %v5734 = vpop.f32.mrf.mxu0
    %5735 = vdwg.mxu0
    %5736 = vmatpush.bf16.msra.mxu0 0
    %5737 = vmatpush.bf16.msra.mxu0 0
    %5738 = vmatpush.bf16.msra.mxu0 0
    %5739 = vmatpush.bf16.msra.mxu0 0
    %5740 = vmatpush.bf16.msra.mxu0 0
    %5741 = vmatpush.bf16.msra.mxu0 0
    %5742 = vmatpush.bf16.msra.mxu0 0
    %5743 = vmatpush.bf16.msra.mxu0 %v5667
    %5744 = vmatmul.bf16.gmra.mxu0 %v5652
    %v5745 = vpop.f32.mrf.mxu0
    %v5746 = vadd.f32 0.0, %v5745
    %v5747 = vpop.f32.mrf.mxu0
    %5748 = vdwg.mxu0
    %5749 = vmatpush.bf16.msra.mxu0 0
    %5750 = vmatpush.bf16.msra.mxu0 0
    %5751 = vmatpush.bf16.msra.mxu0 0
    %5752 = vmatpush.bf16.msra.mxu0 0
    %5753 = vmatpush.bf16.msra.mxu0 0
    %5754 = vmatpush.bf16.msra.mxu0 0
    %5755 = vmatpush.bf16.msra.mxu0 0
    %5756 = vmatpush.bf16.msra.mxu0 %v5670
    %5757 = vmatmul.bf16.gmra.mxu0 %v5652
    %v5758 = vpop.f32.mrf.mxu0
    %v5759 = vadd.f32 0.0, %v5758
    %v5760 = vpop.f32.mrf.mxu0
    %5761 = vdwg.mxu0
    %5762 = vmatpush.bf16.msra.mxu0 0
    %5763 = vmatpush.bf16.msra.mxu0 0
    %5764 = vmatpush.bf16.msra.mxu0 0
    %5765 = vmatpush.bf16.msra.mxu0 0
    %5766 = vmatpush.bf16.msra.mxu0 0
    %5767 = vmatpush.bf16.msra.mxu0 0
    %5768 = vmatpush.bf16.msra.mxu0 0
    %5769 = vmatpush.bf16.msra.mxu0 %v5673
    %5770 = vmatmul.bf16.gmra.mxu0 %v5652
    %v5771 = vpop.f32.mrf.mxu0
    %v5772 = vadd.f32 0.0, %v5771
    %v5773 = vpop.f32.mrf.mxu0
    %5774 = vdwg.mxu0
    %5775 = vmatpush.bf16.msra.mxu0 0
    %5776 = vmatpush.bf16.msra.mxu0 0
    %5777 = vmatpush.bf16.msra.mxu0 0
    %5778 = vmatpush.bf16.msra.mxu0 0
    %5779 = vmatpush.bf16.msra.mxu0 0
    %5780 = vmatpush.bf16.msra.mxu0 0
    %5781 = vmatpush.bf16.msra.mxu0 0
    %5782 = vmatpush.bf16.msra.mxu0 %v5676
    %5783 = vmatmul.bf16.gmra.mxu0 %v5652
    %v5784 = vpop.f32.mrf.mxu0
    %v5785 = vadd.f32 0.0, %v5784
    %v5786 = vpop.f32.mrf.mxu0
    %5787 = vdwg.mxu0
    %5788 = vmatpush.bf16.msra.mxu0 0
    %5789 = vmatpush.bf16.msra.mxu0 0
    %5790 = vmatpush.bf16.msra.mxu0 0
    %5791 = vmatpush.bf16.msra.mxu0 0
    %5792 = vmatpush.bf16.msra.mxu0 0
    %5793 = vmatpush.bf16.msra.mxu0 0
    %5794 = vmatpush.bf16.msra.mxu0 0
    %5795 = vmatpush.bf16.msra.mxu0 %v5679
    %5796 = vmatmul.bf16.gmra.mxu0 %v5652
    %v5797 = vpop.f32.mrf.mxu0
    %v5798 = vadd.f32 0.0, %v5797
    %v5799 = vpop.f32.mrf.mxu0
    %5800 = vdwg.mxu0
    %5801 = vmatpush.bf16.msra.mxu0 0
    %5802 = vmatpush.bf16.msra.mxu0 0
    %5803 = vmatpush.bf16.msra.mxu0 0
    %5804 = vmatpush.bf16.msra.mxu0 0
    %5805 = vmatpush.bf16.msra.mxu0 0
    %5806 = vmatpush.bf16.msra.mxu0 0
    %5807 = vmatpush.bf16.msra.mxu0 0
    %5808 = vmatpush.bf16.msra.mxu0 %v5682
    %5809 = vmatmul.bf16.gmra.mxu0 %v5652
    %v5810 = vpop.f32.mrf.mxu0
    %v5811 = vadd.f32 0.0, %v5810
    %v5812 = vpop.f32.mrf.mxu0
    %5813 = vdwg.mxu0
    %v5814 = vadd.f32 %v5575, %v5694
    %v5815 = vadd.f32 %v5576, %v5707
    %v5816 = vadd.f32 %v5577, %v5720
    %v5817 = vadd.f32 %v5578, %v5733
    %v5818 = vadd.f32 %v5579, %v5746
    %v5819 = vadd.f32 %v5580, %v5759
    %v5820 = vadd.f32 %v5581, %v5772
    %v5821 = vadd.f32 %v5582, %v5785
    %v5822 = vadd.f32 %v5583, %v5798
    %v5823 = vadd.f32 %v5584, %v5811
    %5824 = vrot.lane.b32.xlu0 %v5608, 111
    %v5825 = vpop.permute.xlu0 %5824
    %5826 = vrot.lane.b32.xlu0 %v5609, 111
    %v5827 = vpop.permute.xlu0 %5826
    %5828 = vrot.lane.b32.xlu0 %v5610, 111
    %v5829 = vpop.permute.xlu0 %5828
    %5830 = vrot.lane.b32.xlu0 %v5611, 111
    %v5831 = vpop.permute.xlu0 %5830
    %5832 = vrot.lane.b32.xlu0 %v5612, 111
    %v5833 = vpop.permute.xlu0 %5832
    %5834 = vrot.lane.b32.xlu0 %v5613, 111
    %v5835 = vpop.permute.xlu0 %5834
    %5836 = vrot.lane.b32.xlu0 %v5614, 111
    %v5837 = vpop.permute.xlu0 %5836
    %5838 = vrot.lane.b32.xlu0 %v5615, 111
    %v5839 = vpop.permute.xlu0 %5838
    %5840 = vrot.lane.b32.xlu0 %v5616, 111
    %v5841 = vpop.permute.xlu0 %5840
    %5842 = vrot.lane.b32.xlu0 %v5617, 111
    %v5843 = vpop.permute.xlu0 %5842
    %5844 = vrot.lane.b32.xlu0 %v5618, 111
    %v5845 = vpop.permute.xlu0 %5844
    %v5846 = vsel %vm1759, %v5825, %v5827
    %v5847 = vsel %vm1759, %v5827, %v5829
    %v5848 = vsel %vm1759, %v5829, %v5831
    %v5849 = vsel %vm1759, %v5831, %v5833
    %v5850 = vsel %vm1759, %v5833, %v5835
    %v5851 = vsel %vm1759, %v5835, %v5837
    %v5852 = vsel %vm1759, %v5837, %v5839
    %v5853 = vsel %vm1759, %v5839, %v5841
    %v5854 = vsel %vm1759, %v5841, %v5843
    %v5855 = vsel %vm1759, %v5843, %v5845
    %v5857 = vsel %vm2637, %v4545, 0
    %v5860 = vsel %vm218, %v5846, 0
    %v5863 = vsel %vm218, %v5847, 0
    %v5866 = vsel %vm218, %v5848, 0
    %v5869 = vsel %vm218, %v5849, 0
    %v5872 = vsel %vm218, %v5850, 0
    %v5875 = vsel %vm218, %v5851, 0
    %v5878 = vsel %vm218, %v5852, 0
    %v5881 = vsel %vm218, %v5853, 0
    %v5884 = vsel %vm218, %v5854, 0
    %v5887 = vsel %vm218, %v5855, 0
    %5889 = vmatpush.bf16.msra.mxu0 0
    %5890 = vmatpush.bf16.msra.mxu0 0
    %5891 = vmatpush.bf16.msra.mxu0 0
    %5892 = vmatpush.bf16.msra.mxu0 0
    %5893 = vmatpush.bf16.msra.mxu0 0
    %5894 = vmatpush.bf16.msra.mxu0 0
    %5895 = vmatpush.bf16.msra.mxu0 0
    %5896 = vmatpush.bf16.msra.mxu0 %v5860
    %5897 = vmatmul.bf16.gmra.mxu0 %v5857
    %v5898 = vpop.f32.mrf.mxu0
    %v5899 = vadd.f32 0.0, %v5898
    %v5900 = vpop.f32.mrf.mxu0
    %5901 = vdwg.mxu0
    %5902 = vmatpush.bf16.msra.mxu0 0
    %5903 = vmatpush.bf16.msra.mxu0 0
    %5904 = vmatpush.bf16.msra.mxu0 0
    %5905 = vmatpush.bf16.msra.mxu0 0
    %5906 = vmatpush.bf16.msra.mxu0 0
    %5907 = vmatpush.bf16.msra.mxu0 0
    %5908 = vmatpush.bf16.msra.mxu0 0
    %5909 = vmatpush.bf16.msra.mxu0 %v5863
    %5910 = vmatmul.bf16.gmra.mxu0 %v5857
    %v5911 = vpop.f32.mrf.mxu0
    %v5912 = vadd.f32 0.0, %v5911
    %v5913 = vpop.f32.mrf.mxu0
    %5914 = vdwg.mxu0
    %5915 = vmatpush.bf16.msra.mxu0 0
    %5916 = vmatpush.bf16.msra.mxu0 0
    %5917 = vmatpush.bf16.msra.mxu0 0
    %5918 = vmatpush.bf16.msra.mxu0 0
    %5919 = vmatpush.bf16.msra.mxu0 0
    %5920 = vmatpush.bf16.msra.mxu0 0
    %5921 = vmatpush.bf16.msra.mxu0 0
    %5922 = vmatpush.bf16.msra.mxu0 %v5866
    %5923 = vmatmul.bf16.gmra.mxu0 %v5857
    %v5924 = vpop.f32.mrf.mxu0
    %v5925 = vadd.f32 0.0, %v5924
    %v5926 = vpop.f32.mrf.mxu0
    %5927 = vdwg.mxu0
    %5928 = vmatpush.bf16.msra.mxu0 0
    %5929 = vmatpush.bf16.msra.mxu0 0
    %5930 = vmatpush.bf16.msra.mxu0 0
    %5931 = vmatpush.bf16.msra.mxu0 0
    %5932 = vmatpush.bf16.msra.mxu0 0
    %5933 = vmatpush.bf16.msra.mxu0 0
    %5934 = vmatpush.bf16.msra.mxu0 0
    %5935 = vmatpush.bf16.msra.mxu0 %v5869
    %5936 = vmatmul.bf16.gmra.mxu0 %v5857
    %v5937 = vpop.f32.mrf.mxu0
    %v5938 = vadd.f32 0.0, %v5937
    %v5939 = vpop.f32.mrf.mxu0
    %5940 = vdwg.mxu0
    %5941 = vmatpush.bf16.msra.mxu0 0
    %5942 = vmatpush.bf16.msra.mxu0 0
    %5943 = vmatpush.bf16.msra.mxu0 0
    %5944 = vmatpush.bf16.msra.mxu0 0
    %5945 = vmatpush.bf16.msra.mxu0 0
    %5946 = vmatpush.bf16.msra.mxu0 0
    %5947 = vmatpush.bf16.msra.mxu0 0
    %5948 = vmatpush.bf16.msra.mxu0 %v5872
    %5949 = vmatmul.bf16.gmra.mxu0 %v5857
    %v5950 = vpop.f32.mrf.mxu0
    %v5951 = vadd.f32 0.0, %v5950
    %v5952 = vpop.f32.mrf.mxu0
    %5953 = vdwg.mxu0
    %5954 = vmatpush.bf16.msra.mxu0 0
    %5955 = vmatpush.bf16.msra.mxu0 0
    %5956 = vmatpush.bf16.msra.mxu0 0
    %5957 = vmatpush.bf16.msra.mxu0 0
    %5958 = vmatpush.bf16.msra.mxu0 0
    %5959 = vmatpush.bf16.msra.mxu0 0
    %5960 = vmatpush.bf16.msra.mxu0 0
    %5961 = vmatpush.bf16.msra.mxu0 %v5875
    %5962 = vmatmul.bf16.gmra.mxu0 %v5857
    %v5963 = vpop.f32.mrf.mxu0
    %v5964 = vadd.f32 0.0, %v5963
    %v5965 = vpop.f32.mrf.mxu0
    %5966 = vdwg.mxu0
    %5967 = vmatpush.bf16.msra.mxu0 0
    %5968 = vmatpush.bf16.msra.mxu0 0
    %5969 = vmatpush.bf16.msra.mxu0 0
    %5970 = vmatpush.bf16.msra.mxu0 0
    %5971 = vmatpush.bf16.msra.mxu0 0
    %5972 = vmatpush.bf16.msra.mxu0 0
    %5973 = vmatpush.bf16.msra.mxu0 0
    %5974 = vmatpush.bf16.msra.mxu0 %v5878
    %5975 = vmatmul.bf16.gmra.mxu0 %v5857
    %v5976 = vpop.f32.mrf.mxu0
    %v5977 = vadd.f32 0.0, %v5976
    %v5978 = vpop.f32.mrf.mxu0
    %5979 = vdwg.mxu0
    %5980 = vmatpush.bf16.msra.mxu0 0
    %5981 = vmatpush.bf16.msra.mxu0 0
    %5982 = vmatpush.bf16.msra.mxu0 0
    %5983 = vmatpush.bf16.msra.mxu0 0
    %5984 = vmatpush.bf16.msra.mxu0 0
    %5985 = vmatpush.bf16.msra.mxu0 0
    %5986 = vmatpush.bf16.msra.mxu0 0
    %5987 = vmatpush.bf16.msra.mxu0 %v5881
    %5988 = vmatmul.bf16.gmra.mxu0 %v5857
    %v5989 = vpop.f32.mrf.mxu0
    %v5990 = vadd.f32 0.0, %v5989
    %v5991 = vpop.f32.mrf.mxu0
    %5992 = vdwg.mxu0
    %5993 = vmatpush.bf16.msra.mxu0 0
    %5994 = vmatpush.bf16.msra.mxu0 0
    %5995 = vmatpush.bf16.msra.mxu0 0
    %5996 = vmatpush.bf16.msra.mxu0 0
    %5997 = vmatpush.bf16.msra.mxu0 0
    %5998 = vmatpush.bf16.msra.mxu0 0
    %5999 = vmatpush.bf16.msra.mxu0 0
    %6000 = vmatpush.bf16.msra.mxu0 %v5884
    %6001 = vmatmul.bf16.gmra.mxu0 %v5857
    %v6002 = vpop.f32.mrf.mxu0
    %v6003 = vadd.f32 0.0, %v6002
    %v6004 = vpop.f32.mrf.mxu0
    %6005 = vdwg.mxu0
    %6006 = vmatpush.bf16.msra.mxu0 0
    %6007 = vmatpush.bf16.msra.mxu0 0
    %6008 = vmatpush.bf16.msra.mxu0 0
    %6009 = vmatpush.bf16.msra.mxu0 0
    %6010 = vmatpush.bf16.msra.mxu0 0
    %6011 = vmatpush.bf16.msra.mxu0 0
    %6012 = vmatpush.bf16.msra.mxu0 0
    %6013 = vmatpush.bf16.msra.mxu0 %v5887
    %6014 = vmatmul.bf16.gmra.mxu0 %v5857
    %v6015 = vpop.f32.mrf.mxu0
    %v6016 = vadd.f32 0.0, %v6015
    %v6017 = vpop.f32.mrf.mxu0
    %6018 = vdwg.mxu0
    %v6019 = vadd.f32 %v5814, %v5899
    %v6020 = vadd.f32 %v5815, %v5912
    %v6021 = vadd.f32 %v5816, %v5925
    %v6022 = vadd.f32 %v5817, %v5938
    %v6023 = vadd.f32 %v5818, %v5951
    %v6024 = vadd.f32 %v5819, %v5964
    %v6025 = vadd.f32 %v5820, %v5977
    %v6026 = vadd.f32 %v5821, %v5990
    %v6027 = vadd.f32 %v5822, %v6003
    %v6028 = vadd.f32 %v5823, %v6016
    %6029 = vrot.lane.b32.xlu0 %v5608, 110
    %v6030 = vpop.permute.xlu0 %6029
    %6031 = vrot.lane.b32.xlu0 %v5609, 110
    %v6032 = vpop.permute.xlu0 %6031
    %6033 = vrot.lane.b32.xlu0 %v5610, 110
    %v6034 = vpop.permute.xlu0 %6033
    %6035 = vrot.lane.b32.xlu0 %v5611, 110
    %v6036 = vpop.permute.xlu0 %6035
    %6037 = vrot.lane.b32.xlu0 %v5612, 110
    %v6038 = vpop.permute.xlu0 %6037
    %6039 = vrot.lane.b32.xlu0 %v5613, 110
    %v6040 = vpop.permute.xlu0 %6039
    %6041 = vrot.lane.b32.xlu0 %v5614, 110
    %v6042 = vpop.permute.xlu0 %6041
    %6043 = vrot.lane.b32.xlu0 %v5615, 110
    %v6044 = vpop.permute.xlu0 %6043
    %6045 = vrot.lane.b32.xlu0 %v5616, 110
    %v6046 = vpop.permute.xlu0 %6045
    %6047 = vrot.lane.b32.xlu0 %v5617, 110
    %v6048 = vpop.permute.xlu0 %6047
    %6049 = vrot.lane.b32.xlu0 %v5618, 110
    %v6050 = vpop.permute.xlu0 %6049
    %v6051 = vsel %vm2007, %v6030, %v6032
    %v6052 = vsel %vm2007, %v6032, %v6034
    %v6053 = vsel %vm2007, %v6034, %v6036
    %v6054 = vsel %vm2007, %v6036, %v6038
    %v6055 = vsel %vm2007, %v6038, %v6040
    %v6056 = vsel %vm2007, %v6040, %v6042
    %v6057 = vsel %vm2007, %v6042, %v6044
    %v6058 = vsel %vm2007, %v6044, %v6046
    %v6059 = vsel %vm2007, %v6046, %v6048
    %v6060 = vsel %vm2007, %v6048, %v6050
    %v6062 = vsel %vm2637, %v4546, 0
    %v6065 = vsel %vm218, %v6051, 0
    %v6068 = vsel %vm218, %v6052, 0
    %v6071 = vsel %vm218, %v6053, 0
    %v6074 = vsel %vm218, %v6054, 0
    %v6077 = vsel %vm218, %v6055, 0
    %v6080 = vsel %vm218, %v6056, 0
    %v6083 = vsel %vm218, %v6057, 0
    %v6086 = vsel %vm218, %v6058, 0
    %v6089 = vsel %vm218, %v6059, 0
    %v6092 = vsel %vm218, %v6060, 0
    %6094 = vmatpush.bf16.msra.mxu0 0
    %6095 = vmatpush.bf16.msra.mxu0 0
    %6096 = vmatpush.bf16.msra.mxu0 0
    %6097 = vmatpush.bf16.msra.mxu0 0
    %6098 = vmatpush.bf16.msra.mxu0 0
    %6099 = vmatpush.bf16.msra.mxu0 0
    %6100 = vmatpush.bf16.msra.mxu0 0
    %6101 = vmatpush.bf16.msra.mxu0 %v6065
    %6102 = vmatmul.bf16.gmra.mxu0 %v6062
    %v6103 = vpop.f32.mrf.mxu0
    %v6104 = vadd.f32 0.0, %v6103
    %v6105 = vpop.f32.mrf.mxu0
    %6106 = vdwg.mxu0
    %6107 = vmatpush.bf16.msra.mxu0 0
    %6108 = vmatpush.bf16.msra.mxu0 0
    %6109 = vmatpush.bf16.msra.mxu0 0
    %6110 = vmatpush.bf16.msra.mxu0 0
    %6111 = vmatpush.bf16.msra.mxu0 0
    %6112 = vmatpush.bf16.msra.mxu0 0
    %6113 = vmatpush.bf16.msra.mxu0 0
    %6114 = vmatpush.bf16.msra.mxu0 %v6068
    %6115 = vmatmul.bf16.gmra.mxu0 %v6062
    %v6116 = vpop.f32.mrf.mxu0
    %v6117 = vadd.f32 0.0, %v6116
    %v6118 = vpop.f32.mrf.mxu0
    %6119 = vdwg.mxu0
    %6120 = vmatpush.bf16.msra.mxu0 0
    %6121 = vmatpush.bf16.msra.mxu0 0
    %6122 = vmatpush.bf16.msra.mxu0 0
    %6123 = vmatpush.bf16.msra.mxu0 0
    %6124 = vmatpush.bf16.msra.mxu0 0
    %6125 = vmatpush.bf16.msra.mxu0 0
    %6126 = vmatpush.bf16.msra.mxu0 0
    %6127 = vmatpush.bf16.msra.mxu0 %v6071
    %6128 = vmatmul.bf16.gmra.mxu0 %v6062
    %v6129 = vpop.f32.mrf.mxu0
    %v6130 = vadd.f32 0.0, %v6129
    %v6131 = vpop.f32.mrf.mxu0
    %6132 = vdwg.mxu0
    %6133 = vmatpush.bf16.msra.mxu0 0
    %6134 = vmatpush.bf16.msra.mxu0 0
    %6135 = vmatpush.bf16.msra.mxu0 0
    %6136 = vmatpush.bf16.msra.mxu0 0
    %6137 = vmatpush.bf16.msra.mxu0 0
    %6138 = vmatpush.bf16.msra.mxu0 0
    %6139 = vmatpush.bf16.msra.mxu0 0
    %6140 = vmatpush.bf16.msra.mxu0 %v6074
    %6141 = vmatmul.bf16.gmra.mxu0 %v6062
    %v6142 = vpop.f32.mrf.mxu0
    %v6143 = vadd.f32 0.0, %v6142
    %v6144 = vpop.f32.mrf.mxu0
    %6145 = vdwg.mxu0
    %6146 = vmatpush.bf16.msra.mxu0 0
    %6147 = vmatpush.bf16.msra.mxu0 0
    %6148 = vmatpush.bf16.msra.mxu0 0
    %6149 = vmatpush.bf16.msra.mxu0 0
    %6150 = vmatpush.bf16.msra.mxu0 0
    %6151 = vmatpush.bf16.msra.mxu0 0
    %6152 = vmatpush.bf16.msra.mxu0 0
    %6153 = vmatpush.bf16.msra.mxu0 %v6077
    %6154 = vmatmul.bf16.gmra.mxu0 %v6062
    %v6155 = vpop.f32.mrf.mxu0
    %v6156 = vadd.f32 0.0, %v6155
    %v6157 = vpop.f32.mrf.mxu0
    %6158 = vdwg.mxu0
    %6159 = vmatpush.bf16.msra.mxu0 0
    %6160 = vmatpush.bf16.msra.mxu0 0
    %6161 = vmatpush.bf16.msra.mxu0 0
    %6162 = vmatpush.bf16.msra.mxu0 0
    %6163 = vmatpush.bf16.msra.mxu0 0
    %6164 = vmatpush.bf16.msra.mxu0 0
    %6165 = vmatpush.bf16.msra.mxu0 0
    %6166 = vmatpush.bf16.msra.mxu0 %v6080
    %6167 = vmatmul.bf16.gmra.mxu0 %v6062
    %v6168 = vpop.f32.mrf.mxu0
    %v6169 = vadd.f32 0.0, %v6168
    %v6170 = vpop.f32.mrf.mxu0
    %6171 = vdwg.mxu0
    %6172 = vmatpush.bf16.msra.mxu0 0
    %6173 = vmatpush.bf16.msra.mxu0 0
    %6174 = vmatpush.bf16.msra.mxu0 0
    %6175 = vmatpush.bf16.msra.mxu0 0
    %6176 = vmatpush.bf16.msra.mxu0 0
    %6177 = vmatpush.bf16.msra.mxu0 0
    %6178 = vmatpush.bf16.msra.mxu0 0
    %6179 = vmatpush.bf16.msra.mxu0 %v6083
    %6180 = vmatmul.bf16.gmra.mxu0 %v6062
    %v6181 = vpop.f32.mrf.mxu0
    %v6182 = vadd.f32 0.0, %v6181
    %v6183 = vpop.f32.mrf.mxu0
    %6184 = vdwg.mxu0
    %6185 = vmatpush.bf16.msra.mxu0 0
    %6186 = vmatpush.bf16.msra.mxu0 0
    %6187 = vmatpush.bf16.msra.mxu0 0
    %6188 = vmatpush.bf16.msra.mxu0 0
    %6189 = vmatpush.bf16.msra.mxu0 0
    %6190 = vmatpush.bf16.msra.mxu0 0
    %6191 = vmatpush.bf16.msra.mxu0 0
    %6192 = vmatpush.bf16.msra.mxu0 %v6086
    %6193 = vmatmul.bf16.gmra.mxu0 %v6062
    %v6194 = vpop.f32.mrf.mxu0
    %v6195 = vadd.f32 0.0, %v6194
    %v6196 = vpop.f32.mrf.mxu0
    %6197 = vdwg.mxu0
    %6198 = vmatpush.bf16.msra.mxu0 0
    %6199 = vmatpush.bf16.msra.mxu0 0
    %6200 = vmatpush.bf16.msra.mxu0 0
    %6201 = vmatpush.bf16.msra.mxu0 0
    %6202 = vmatpush.bf16.msra.mxu0 0
    %6203 = vmatpush.bf16.msra.mxu0 0
    %6204 = vmatpush.bf16.msra.mxu0 0
    %6205 = vmatpush.bf16.msra.mxu0 %v6089
    %6206 = vmatmul.bf16.gmra.mxu0 %v6062
    %v6207 = vpop.f32.mrf.mxu0
    %v6208 = vadd.f32 0.0, %v6207
    %v6209 = vpop.f32.mrf.mxu0
    %6210 = vdwg.mxu0
    %6211 = vmatpush.bf16.msra.mxu0 0
    %6212 = vmatpush.bf16.msra.mxu0 0
    %6213 = vmatpush.bf16.msra.mxu0 0
    %6214 = vmatpush.bf16.msra.mxu0 0
    %6215 = vmatpush.bf16.msra.mxu0 0
    %6216 = vmatpush.bf16.msra.mxu0 0
    %6217 = vmatpush.bf16.msra.mxu0 0
    %6218 = vmatpush.bf16.msra.mxu0 %v6092
    %6219 = vmatmul.bf16.gmra.mxu0 %v6062
    %v6220 = vpop.f32.mrf.mxu0
    %v6221 = vadd.f32 0.0, %v6220
    %v6222 = vpop.f32.mrf.mxu0
    %6223 = vdwg.mxu0
    %v6224 = vadd.f32 %v6019, %v6104
    %v6225 = vadd.f32 %v6020, %v6117
    %v6226 = vadd.f32 %v6021, %v6130
    %v6227 = vadd.f32 %v6022, %v6143
    %v6228 = vadd.f32 %v6023, %v6156
    %v6229 = vadd.f32 %v6024, %v6169
    %v6230 = vadd.f32 %v6025, %v6182
    %v6231 = vadd.f32 %v6026, %v6195
    %v6232 = vadd.f32 %v6027, %v6208
    %v6233 = vadd.f32 %v6028, %v6221
    %6234 = vrot.lane.b32.xlu0 %v5608, 109
    %v6235 = vpop.permute.xlu0 %6234
    %6236 = vrot.lane.b32.xlu0 %v5609, 109
    %v6237 = vpop.permute.xlu0 %6236
    %6238 = vrot.lane.b32.xlu0 %v5610, 109
    %v6239 = vpop.permute.xlu0 %6238
    %6240 = vrot.lane.b32.xlu0 %v5611, 109
    %v6241 = vpop.permute.xlu0 %6240
    %6242 = vrot.lane.b32.xlu0 %v5612, 109
    %v6243 = vpop.permute.xlu0 %6242
    %6244 = vrot.lane.b32.xlu0 %v5613, 109
    %v6245 = vpop.permute.xlu0 %6244
    %6246 = vrot.lane.b32.xlu0 %v5614, 109
    %v6247 = vpop.permute.xlu0 %6246
    %6248 = vrot.lane.b32.xlu0 %v5615, 109
    %v6249 = vpop.permute.xlu0 %6248
    %6250 = vrot.lane.b32.xlu0 %v5616, 109
    %v6251 = vpop.permute.xlu0 %6250
    %6252 = vrot.lane.b32.xlu0 %v5617, 109
    %v6253 = vpop.permute.xlu0 %6252
    %6254 = vrot.lane.b32.xlu0 %v5618, 109
    %v6255 = vpop.permute.xlu0 %6254
    %v6256 = vsel %vm2255, %v6235, %v6237
    %v6257 = vsel %vm2255, %v6237, %v6239
    %v6258 = vsel %vm2255, %v6239, %v6241
    %v6259 = vsel %vm2255, %v6241, %v6243
    %v6260 = vsel %vm2255, %v6243, %v6245
    %v6261 = vsel %vm2255, %v6245, %v6247
    %v6262 = vsel %vm2255, %v6247, %v6249
    %v6263 = vsel %vm2255, %v6249, %v6251
    %v6264 = vsel %vm2255, %v6251, %v6253
    %v6265 = vsel %vm2255, %v6253, %v6255
    %v6267 = vsel %vm2637, %v4547, 0
    %v6270 = vsel %vm218, %v6256, 0
    %v6273 = vsel %vm218, %v6257, 0
    %v6276 = vsel %vm218, %v6258, 0
    %v6279 = vsel %vm218, %v6259, 0
    %v6282 = vsel %vm218, %v6260, 0
    %v6285 = vsel %vm218, %v6261, 0
    %v6288 = vsel %vm218, %v6262, 0
    %v6291 = vsel %vm218, %v6263, 0
    %v6294 = vsel %vm218, %v6264, 0
    %v6297 = vsel %vm218, %v6265, 0
    %6299 = vmatpush.bf16.msra.mxu0 0
    %6300 = vmatpush.bf16.msra.mxu0 0
    %6301 = vmatpush.bf16.msra.mxu0 0
    %6302 = vmatpush.bf16.msra.mxu0 0
    %6303 = vmatpush.bf16.msra.mxu0 0
    %6304 = vmatpush.bf16.msra.mxu0 0
    %6305 = vmatpush.bf16.msra.mxu0 0
    %6306 = vmatpush.bf16.msra.mxu0 %v6270
    %6307 = vmatmul.bf16.gmra.mxu0 %v6267
    %v6308 = vpop.f32.mrf.mxu0
    %v6309 = vadd.f32 0.0, %v6308
    %v6310 = vpop.f32.mrf.mxu0
    %6311 = vdwg.mxu0
    %6312 = vmatpush.bf16.msra.mxu0 0
    %6313 = vmatpush.bf16.msra.mxu0 0
    %6314 = vmatpush.bf16.msra.mxu0 0
    %6315 = vmatpush.bf16.msra.mxu0 0
    %6316 = vmatpush.bf16.msra.mxu0 0
    %6317 = vmatpush.bf16.msra.mxu0 0
    %6318 = vmatpush.bf16.msra.mxu0 0
    %6319 = vmatpush.bf16.msra.mxu0 %v6273
    %6320 = vmatmul.bf16.gmra.mxu0 %v6267
    %v6321 = vpop.f32.mrf.mxu0
    %v6322 = vadd.f32 0.0, %v6321
    %v6323 = vpop.f32.mrf.mxu0
    %6324 = vdwg.mxu0
    %6325 = vmatpush.bf16.msra.mxu0 0
    %6326 = vmatpush.bf16.msra.mxu0 0
    %6327 = vmatpush.bf16.msra.mxu0 0
    %6328 = vmatpush.bf16.msra.mxu0 0
    %6329 = vmatpush.bf16.msra.mxu0 0
    %6330 = vmatpush.bf16.msra.mxu0 0
    %6331 = vmatpush.bf16.msra.mxu0 0
    %6332 = vmatpush.bf16.msra.mxu0 %v6276
    %6333 = vmatmul.bf16.gmra.mxu0 %v6267
    %v6334 = vpop.f32.mrf.mxu0
    %v6335 = vadd.f32 0.0, %v6334
    %v6336 = vpop.f32.mrf.mxu0
    %6337 = vdwg.mxu0
    %6338 = vmatpush.bf16.msra.mxu0 0
    %6339 = vmatpush.bf16.msra.mxu0 0
    %6340 = vmatpush.bf16.msra.mxu0 0
    %6341 = vmatpush.bf16.msra.mxu0 0
    %6342 = vmatpush.bf16.msra.mxu0 0
    %6343 = vmatpush.bf16.msra.mxu0 0
    %6344 = vmatpush.bf16.msra.mxu0 0
    %6345 = vmatpush.bf16.msra.mxu0 %v6279
    %6346 = vmatmul.bf16.gmra.mxu0 %v6267
    %v6347 = vpop.f32.mrf.mxu0
    %v6348 = vadd.f32 0.0, %v6347
    %v6349 = vpop.f32.mrf.mxu0
    %6350 = vdwg.mxu0
    %6351 = vmatpush.bf16.msra.mxu0 0
    %6352 = vmatpush.bf16.msra.mxu0 0
    %6353 = vmatpush.bf16.msra.mxu0 0
    %6354 = vmatpush.bf16.msra.mxu0 0
    %6355 = vmatpush.bf16.msra.mxu0 0
    %6356 = vmatpush.bf16.msra.mxu0 0
    %6357 = vmatpush.bf16.msra.mxu0 0
    %6358 = vmatpush.bf16.msra.mxu0 %v6282
    %6359 = vmatmul.bf16.gmra.mxu0 %v6267
    %v6360 = vpop.f32.mrf.mxu0
    %v6361 = vadd.f32 0.0, %v6360
    %v6362 = vpop.f32.mrf.mxu0
    %6363 = vdwg.mxu0
    %6364 = vmatpush.bf16.msra.mxu0 0
    %6365 = vmatpush.bf16.msra.mxu0 0
    %6366 = vmatpush.bf16.msra.mxu0 0
    %6367 = vmatpush.bf16.msra.mxu0 0
    %6368 = vmatpush.bf16.msra.mxu0 0
    %6369 = vmatpush.bf16.msra.mxu0 0
    %6370 = vmatpush.bf16.msra.mxu0 0
    %6371 = vmatpush.bf16.msra.mxu0 %v6285
    %6372 = vmatmul.bf16.gmra.mxu0 %v6267
    %v6373 = vpop.f32.mrf.mxu0
    %v6374 = vadd.f32 0.0, %v6373
    %v6375 = vpop.f32.mrf.mxu0
    %6376 = vdwg.mxu0
    %6377 = vmatpush.bf16.msra.mxu0 0
    %6378 = vmatpush.bf16.msra.mxu0 0
    %6379 = vmatpush.bf16.msra.mxu0 0
    %6380 = vmatpush.bf16.msra.mxu0 0
    %6381 = vmatpush.bf16.msra.mxu0 0
    %6382 = vmatpush.bf16.msra.mxu0 0
    %6383 = vmatpush.bf16.msra.mxu0 0
    %6384 = vmatpush.bf16.msra.mxu0 %v6288
    %6385 = vmatmul.bf16.gmra.mxu0 %v6267
    %v6386 = vpop.f32.mrf.mxu0
    %v6387 = vadd.f32 0.0, %v6386
    %v6388 = vpop.f32.mrf.mxu0
    %6389 = vdwg.mxu0
    %6390 = vmatpush.bf16.msra.mxu0 0
    %6391 = vmatpush.bf16.msra.mxu0 0
    %6392 = vmatpush.bf16.msra.mxu0 0
    %6393 = vmatpush.bf16.msra.mxu0 0
    %6394 = vmatpush.bf16.msra.mxu0 0
    %6395 = vmatpush.bf16.msra.mxu0 0
    %6396 = vmatpush.bf16.msra.mxu0 0
    %6397 = vmatpush.bf16.msra.mxu0 %v6291
    %6398 = vmatmul.bf16.gmra.mxu0 %v6267
    %v6399 = vpop.f32.mrf.mxu0
    %v6400 = vadd.f32 0.0, %v6399
    %v6401 = vpop.f32.mrf.mxu0
    %6402 = vdwg.mxu0
    %6403 = vmatpush.bf16.msra.mxu0 0
    %6404 = vmatpush.bf16.msra.mxu0 0
    %6405 = vmatpush.bf16.msra.mxu0 0
    %6406 = vmatpush.bf16.msra.mxu0 0
    %6407 = vmatpush.bf16.msra.mxu0 0
    %6408 = vmatpush.bf16.msra.mxu0 0
    %6409 = vmatpush.bf16.msra.mxu0 0
    %6410 = vmatpush.bf16.msra.mxu0 %v6294
    %6411 = vmatmul.bf16.gmra.mxu0 %v6267
    %v6412 = vpop.f32.mrf.mxu0
    %v6413 = vadd.f32 0.0, %v6412
    %v6414 = vpop.f32.mrf.mxu0
    %6415 = vdwg.mxu0
    %6416 = vmatpush.bf16.msra.mxu0 0
    %6417 = vmatpush.bf16.msra.mxu0 0
    %6418 = vmatpush.bf16.msra.mxu0 0
    %6419 = vmatpush.bf16.msra.mxu0 0
    %6420 = vmatpush.bf16.msra.mxu0 0
    %6421 = vmatpush.bf16.msra.mxu0 0
    %6422 = vmatpush.bf16.msra.mxu0 0
    %6423 = vmatpush.bf16.msra.mxu0 %v6297
    %6424 = vmatmul.bf16.gmra.mxu0 %v6267
    %v6425 = vpop.f32.mrf.mxu0
    %v6426 = vadd.f32 0.0, %v6425
    %v6427 = vpop.f32.mrf.mxu0
    %6428 = vdwg.mxu0
    %v6429 = vadd.f32 %v6224, %v6309
    %v6430 = vadd.f32 %v6225, %v6322
    %v6431 = vadd.f32 %v6226, %v6335
    %v6432 = vadd.f32 %v6227, %v6348
    %v6433 = vadd.f32 %v6228, %v6361
    %v6434 = vadd.f32 %v6229, %v6374
    %v6435 = vadd.f32 %v6230, %v6387
    %v6436 = vadd.f32 %v6231, %v6400
    %v6437 = vadd.f32 %v6232, %v6413
    %v6438 = vadd.f32 %v6233, %v6426
    %s6439 = smul.u32 %s2554, 24
    %s6440 = scalar_lea.vmem %s8, %s6439
    %v6441 = vld [vmem:[%s6440] sm:$0xff]
    %v6442 = vld [vmem:[%s6440 + $0x8] sm:$0xff]
    %v6443 = vld [vmem:[%s6440 + $0x10] sm:$0xff]
    %v6444 = vld [vmem:[#allocation2 + $0x4] sm:$0xff]
    %v6445 = vld [vmem:[#allocation2 + $0xc] sm:$0xff]
    %v6446 = vld [vmem:[#allocation2 + $0x14] sm:$0xff]
    %v6447 = vld [vmem:[#allocation2 + $0x1c] sm:$0xff]
    %v6448 = vld [vmem:[#allocation2 + $0x24] sm:$0xff]
    %v6449 = vunpack.c.l.bf16 %v6444
    %v6450 = vunpack.c.h.bf16 %v6444
    %v6451 = vunpack.c.l.bf16 %v6445
    %v6452 = vunpack.c.h.bf16 %v6445
    %v6453 = vunpack.c.l.bf16 %v6446
    %v6454 = vunpack.c.h.bf16 %v6446
    %v6455 = vunpack.c.l.bf16 %v6447
    %v6456 = vunpack.c.h.bf16 %v6447
    %v6457 = vunpack.c.l.bf16 %v6448
    %v6458 = vunpack.c.h.bf16 %v6448
    %6460 = vset.pattern.permute.xlu0 0
    %6461 = vperm.xlu0 %6460, %v6441
    %v6462 = vpop.permute.xlu0 %6461
    %v6464 = vadd.f32 %v6429, %v6462
    %v6465 = vadd.f32 %v6430, %v6462
    %v6466 = vadd.f32 %v6431, %v6462
    %v6467 = vadd.f32 %v6432, %v6462
    %v6468 = vadd.f32 %v6433, %v6462
    %v6469 = vadd.f32 %v6434, %v6462
    %v6470 = vadd.f32 %v6435, %v6462
    %v6471 = vadd.f32 %v6436, %v6462
    %v6472 = vadd.f32 %v6437, %v6462
    %v6473 = vadd.f32 %v6438, %v6462
    %6475 = vset.pattern.permute.xlu0 0
    %6476 = vperm.xlu0 %6475, %v6442
    %v6477 = vpop.permute.xlu0 %6476
    %v6479 = vmul.f32 %v6464, %v6477
    %v6480 = vmul.f32 %v6465, %v6477
    %v6481 = vmul.f32 %v6466, %v6477
    %v6482 = vmul.f32 %v6467, %v6477
    %v6483 = vmul.f32 %v6468, %v6477
    %v6484 = vmul.f32 %v6469, %v6477
    %v6485 = vmul.f32 %v6470, %v6477
    %v6486 = vmul.f32 %v6471, %v6477
    %v6487 = vmul.f32 %v6472, %v6477
    %v6488 = vmul.f32 %v6473, %v6477
    %v6489 = vadd.f32 %v6479, %v6449
    %v6490 = vadd.f32 %v6480, %v6450
    %v6491 = vadd.f32 %v6481, %v6451
    %v6492 = vadd.f32 %v6482, %v6452
    %v6493 = vadd.f32 %v6483, %v6453
    %v6494 = vadd.f32 %v6484, %v6454
    %v6495 = vadd.f32 %v6485, %v6455
    %v6496 = vadd.f32 %v6486, %v6456
    %v6497 = vadd.f32 %v6487, %v6457
    %v6498 = vadd.f32 %v6488, %v6458
    %vm6499 = vcmp.ge.f32.partialorder %v6489, 0.0
    %vm6500 = vcmp.ge.f32.partialorder %v6490, 0.0
    %vm6501 = vcmp.ge.f32.partialorder %v6491, 0.0
    %vm6502 = vcmp.ge.f32.partialorder %v6492, 0.0
    %vm6503 = vcmp.ge.f32.partialorder %v6493, 0.0
    %vm6504 = vcmp.ge.f32.partialorder %v6494, 0.0
    %vm6505 = vcmp.ge.f32.partialorder %v6495, 0.0
    %vm6506 = vcmp.ge.f32.partialorder %v6496, 0.0
    %vm6507 = vcmp.ge.f32.partialorder %v6497, 0.0
    %vm6508 = vcmp.ge.f32.partialorder %v6498, 0.0
    %6510 = vset.pattern.permute.xlu0 0
    %6511 = vperm.xlu0 %6510, %v6443
    %v6512 = vpop.permute.xlu0 %6511
    %v6514 = vmul.f32 %v6489, %v6512
    %v6515 = vmul.f32 %v6490, %v6512
    %v6516 = vmul.f32 %v6491, %v6512
    %v6517 = vmul.f32 %v6492, %v6512
    %v6518 = vmul.f32 %v6493, %v6512
    %v6519 = vmul.f32 %v6494, %v6512
    %v6520 = vmul.f32 %v6495, %v6512
    %v6521 = vmul.f32 %v6496, %v6512
    %v6522 = vmul.f32 %v6497, %v6512
    %v6523 = vmul.f32 %v6498, %v6512
    %v6524 = vsel %vm6499, %v6489, %v6514
    %v6525 = vsel %vm6500, %v6490, %v6515
    %v6526 = vsel %vm6501, %v6491, %v6516
    %v6527 = vsel %vm6502, %v6492, %v6517
    %v6528 = vsel %vm6503, %v6493, %v6518
    %v6529 = vsel %vm6504, %v6494, %v6519
    %v6530 = vsel %vm6505, %v6495, %v6520
    %v6531 = vsel %vm6506, %v6496, %v6521
    %v6532 = vsel %vm6507, %v6497, %v6522
    %v6533 = vsel %vm6508, %v6498, %v6523
    %v6534 = vmul.f32 %v2513, %v6524
    %v6535 = vmul.f32 %v2514, %v6525
    %v6536 = vmul.f32 %v2515, %v6526
    %v6537 = vmul.f32 %v2516, %v6527
    %v6538 = vmul.f32 %v2517, %v6528
    %v6539 = vmul.f32 %v2518, %v6529
    %v6540 = vmul.f32 %v2519, %v6530
    %v6541 = vmul.f32 %v2520, %v6531
    %v6542 = vmul.f32 %v2521, %v6532
    %v6543 = vmul.f32 %v2522, %v6533
    %p6544 = scmp.lt.s32.totalorder %s2554, 5
    // Predicated region
    $region45: #{recurrent_block_forward.2} parent=41 // pred_check
      %p6545 = pneg %p6544
    $region46: #{recurrent_block_forward.2} parent=41 // pred_check_branch
      %6547 = sbr.rel (%p6545) target = $region48
    $region47: #{recurrent_block_forward.2} parent=41 // pred_region
      %v6548 = vpack.c.bf16 %v6535, %v6534
      %v6549 = vpack.c.bf16 %v6537, %v6536
      %v6550 = vpack.c.bf16 %v6539, %v6538
      %v6551 = vpack.c.bf16 %v6541, %v6540
      %v6552 = vpack.c.bf16 %v6543, %v6542
      %6553 = vst [vmem:[#allocation2 + $0x4] sm:$0xff] %v6548
      %6554 = vst [vmem:[#allocation2 + $0xc] sm:$0xff] %v6549
      %6555 = vst [vmem:[#allocation2 + $0x14] sm:$0xff] %v6550
      %6556 = vst [vmem:[#allocation2 + $0x1c] sm:$0xff] %v6551
      %6557 = vst [vmem:[#allocation2 + $0x24] sm:$0xff] %v6552
    $region48: #{recurrent_block_forward.2} parent=41 // pred_fallthru
      _
    %p6558 = scmp.eq.s32.totalorder %s2554, 5
    // Predicated region
    $region49: #{recurrent_block_forward.2} parent=41 // pred_check
      %p6559 = pneg %p6558
    $region50: #{recurrent_block_forward.2} parent=41 // pred_check_branch
      %6561 = sbr.rel (%p6559) target = $region52
    $region51: #{recurrent_block_forward.2} parent=41 // pred_region
      %6562 = vst [vmem:[%s9] sm:$0xff] %v6534
      %6563 = vst [vmem:[%s9 + $0x8] sm:$0xff] %v6535
      %6564 = vst [vmem:[%s9 + $0x10] sm:$0xff] %v6536
      %6565 = vst [vmem:[%s9 + $0x18] sm:$0xff] %v6537
      %6566 = vst [vmem:[%s9 + $0x20] sm:$0xff] %v6538
      %6567 = vst [vmem:[%s9 + $0x28] sm:$0xff] %v6539
      %6568 = vst [vmem:[%s9 + $0x30] sm:$0xff] %v6540
      %6569 = vst [vmem:[%s9 + $0x38] sm:$0xff] %v6541
      %6570 = vst [vmem:[%s9 + $0x40] sm:$0xff] %v6542
      %6571 = vst [vmem:[%s9 + $0x48] sm:$0xff] %v6543
    $region52: #{recurrent_block_forward.2} parent=41 // pred_fallthru
      _
  $region42: #{recurrent_block_forward.2} parent=0 // loop_footer
    %s2558 = sadd.s32 1, %s2554
  $region43: #{recurrent_block_forward.2} parent=0 // loop_footer_branch
    %2553 = sbr.rel target = $region39
  $region44: #{recurrent_block_forward.2} parent=0 // loop_exit
    _
  // Predicated region
  $region53: #{recurrent_block_forward.2} parent=0 // pred_check
    _
  $region54: #{recurrent_block_forward.2} parent=0 // pred_check_branch
    %6573 = sbr.rel (0) target = $region56
  $region55: #{recurrent_block_forward.2} parent=0 // pred_region
    _
  $region56: #{recurrent_block_forward.2} parent=0 // pred_fallthru
    _
  // Predicated region
  $region57: #{recurrent_block_forward.2} parent=0 // pred_check
    _
  $region58: #{recurrent_block_forward.2} parent=0 // pred_check_branch
    %6575 = sbr.rel (0) target = $region60
  $region59: #{recurrent_block_forward.2} parent=0 // pred_region
    _
  $region60: #{recurrent_block_forward.2} parent=0 // pred_fallthru
    _

</llo_original>
